<compile_context>
chip_gen: v7x
topology: tpu7x:2x2x1
jax: 0.10.0
libtpu: 0.0.40
codegen_flags: <defaults>
</compile_context>

<pallas_src>
import functools
import math

import jax
import jax.numpy as jnp
from jax.experimental import pallas as pl
from jax.experimental.pallas import tpu as pltpu

_TILE_N = 512  # rows per grid step for per-point layers (bf16 activations)


# ----------------------------------------------------------------------------
# small helpers
# ----------------------------------------------------------------------------
def _round_up(x, m):
    return ((x + m - 1) // m) * m


def _pad_rows(x, npad):
    n = x.shape[0]
    if npad == n:
        return x
    return jnp.pad(x, ((0, npad - n), (0, 0)))


# ----------------------------------------------------------------------------
# Fused XConv kernel:  relu(sum_i feat_i @ w_i + pos*w_pos + b_h) @ w_o + b_o
# ----------------------------------------------------------------------------
def _xconv_kernel(*refs, n_feats, relu_out):
    feat_refs = refs[:n_feats]
    pos_ref = refs[n_feats]
    w_refs = refs[n_feats + 1: 2 * n_feats + 1]
    w_pos_ref, b_h_ref, w_o_ref, b_o_ref, o_ref = refs[2 * n_feats + 1:]

    tn = pos_ref.shape[0]
    hdim = b_h_ref.shape[1]

    acc = jnp.zeros((tn, hdim), jnp.float32)
    for fr, wr in zip(feat_refs, w_refs):
        acc = acc + jnp.dot(fr[...], wr[...], preferred_element_type=jnp.float32)

    # pos has K=3: three broadcast FMAs on the VPU instead of an MXU matmul.
    p = pos_ref[...]
    wp = w_pos_ref[...]
    acc = (acc
           + p[:, 0:1] * wp[0:1, :]
           + p[:, 1:2] * wp[1:2, :]
           + p[:, 2:3] * wp[2:3, :])

    hid = jnp.maximum(acc + b_h_ref[...], 0.0).astype(jnp.bfloat16)
    y = jnp.dot(hid, w_o_ref[...], preferred_element_type=jnp.float32) + b_o_ref[...]
    if relu_out:
        y = jnp.maximum(y, 0.0)
    o_ref[...] = y.astype(o_ref.dtype)


def pallas_xconv(feat_list, pos, w_feats, w_pos, b_h, w_o, b_o, *, relu_out):
    n = pos.shape[0]
    tile_n = min(_TILE_N, _round_up(n, 8))
    npad = _round_up(n, tile_n)

    feats_p = [_pad_rows(f, npad) for f in feat_list]
    pos_p = _pad_rows(pos, npad)
    hdim = b_h.shape[1]
    cout = b_o.shape[1]
    n_feats = len(feat_list)

    def row_spec(c):
        return pl.BlockSpec((tile_n, c), lambda i: (i, 0))

    def full_spec(shape):
        return pl.BlockSpec(shape, lambda i: (0, 0))

    in_specs = ([row_spec(f.shape[1]) for f in feats_p]
                + [row_spec(3)]
                + [full_spec(w.shape) for w in w_feats]
                + [full_spec(w_pos.shape), full_spec(b_h.shape),
                   full_spec(w_o.shape), full_spec(b_o.shape)])

    k_total = sum(f.shape[1] for f in feat_list) + 3
    flops = 2 * npad * (k_total * hdim + hdim * cout)
    bytes_accessed = int(
        sum(f.size * f.dtype.itemsize for f in feats_p)
        + pos_p.size * pos_p.dtype.itemsize
        + sum(w.size * w.dtype.itemsize for w in w_feats)
        + w_pos.size * 4 + b_h.size * 4 + b_o.size * 4
        + w_o.size * 2
        + npad * cout * 2)

    out = pl.pallas_call(
        functools.partial(_xconv_kernel, n_feats=n_feats, relu_out=relu_out),
        out_shape=jax.ShapeDtypeStruct((npad, cout), jnp.bfloat16),
        grid=(npad // tile_n,),
        in_specs=in_specs,
        out_specs=pl.BlockSpec((tile_n, cout), lambda i: (i, 0)),
        compiler_params=pltpu.CompilerParams(dimension_semantics=("parallel",)),
        cost_estimate=pl.CostEstimate(flops=flops, transcendentals=0,
                                      bytes_accessed=bytes_accessed),
    )(*feats_p, pos_p, *w_feats, w_pos, b_h, w_o, b_o)
    return out[:n]


def xconv_apply(p, feat_list, pos, *, relu_out=True):
    """Simplified XConv: per-point MLP on [feats..., pos] -> hidden -> out.

    TODO(synk): true torch_geometric XConv (kNN neighborhood grouping + learned
    X-transform) has no clean Pallas equivalent; only its dense matmul hot path
    (lift MLP + output projection) is reproduced, fused into one kernel.
    """
    # Split the fused-concat hidden weight row-wise per source tensor (no
    # activation concat is ever materialized).
    w_slices, off = [], 0
    for f in feat_list:
        cf = f.shape[1]
        w_slices.append(p["w_f"][off:off + cf])
        off += cf
    # Duplicate sources (same array fed twice, e.g. feats[-1] in the first
    # decoder layer): x@Wa + x@Wb == x@(Wa+Wb) -> merge to one dot + one DMA.
    merged_f, merged_w = [], []
    for f, w in zip(feat_list, w_slices):
        for j, g in enumerate(merged_f):
            if g is f:
                merged_w[j] = (merged_w[j].astype(jnp.float32)
                               + w.astype(jnp.float32)).astype(jnp.bfloat16)
                break
        else:
            merged_f.append(f)
            merged_w.append(w)
    feats = [f.astype(jnp.bfloat16) for f in merged_f]
    return pallas_xconv(feats, pos.astype(jnp.float32), merged_w,
                        p["w_pos"], p["b_h"], p["w_o"], p["b_o"],
                        relu_out=relu_out)


# ----------------------------------------------------------------------------
# Fused global branch: global_mean_pool -> lin1 -> ReLU -> lin2 -> ReLU
# ----------------------------------------------------------------------------
def _global_branch_kernel(onehot_ref, x_ref, inv_ref, w1_ref, b1_ref,
                          w2_ref, b2_ref, o_ref, acc_ref):
    @pl.when(pl.program_id(0) == 0)
    def _():
        acc_ref[...] = jnp.zeros_like(acc_ref)

    acc_ref[...] += jnp.dot(onehot_ref[...], x_ref[...],
                            preferred_element_type=jnp.float32)

    @pl.when(pl.program_id(0) == pl.num_programs(0) - 1)
    def _():
        mean = (acc_ref[...] * inv_ref[...]).astype(jnp.bfloat16)
        h1 = jnp.dot(mean, w1_ref[...], preferred_element_type=jnp.float32) + b1_ref[...]
        h1 = jnp.maximum(h1, 0.0).astype(jnp.bfloat16)
        h2 = jnp.dot(h1, w2_ref[...], preferred_element_type=jnp.float32) + b2_ref[...]
        o_ref[...] = jnp.maximum(h2, 0.0).astype(o_ref.dtype)


def pallas_global_branch(x, batch, num_graphs, lin1, lin2):
    """per-graph mean (segmented via one-hot matmul, tiled+accumulated over N)
    followed by lin1/lin2, all in one kernel; intermediates stay in VMEM."""
    n, c = x.shape
    tile_n = min(1024, _round_up(n, 8))
    npad = _round_up(n, tile_n)
    x_p = _pad_rows(x.astype(jnp.bfloat16), npad)

    onehot_f32 = (batch[None, :] ==
                  jnp.arange(num_graphs, dtype=batch.dtype)[:, None]).astype(jnp.float32)
    counts = jnp.sum(onehot_f32, axis=1, keepdims=True)
    inv = 1.0 / jnp.maximum(counts, 1.0)
    onehot = jnp.pad(onehot_f32.astype(jnp.bfloat16), ((0, 0), (0, npad - n)))

    w1, b1 = lin1["w"], lin1["b"]
    w2, b2 = lin2["w"], lin2["b"]
    c2 = w2.shape[1]

    return pl.pallas_call(
        _global_branch_kernel,
        out_shape=jax.ShapeDtypeStruct((num_graphs, c2), jnp.bfloat16),
        grid=(npad // tile_n,),
        in_specs=[pl.BlockSpec((num_graphs, tile_n), lambda i: (0, i)),
                  pl.BlockSpec((tile_n, c), lambda i: (i, 0)),
                  pl.BlockSpec((num_graphs, 1), lambda i: (0, 0)),
                  pl.BlockSpec(w1.shape, lambda i: (0, 0)),
                  pl.BlockSpec(b1.shape, lambda i: (0, 0)),
                  pl.BlockSpec(w2.shape, lambda i: (0, 0)),
                  pl.BlockSpec(b2.shape, lambda i: (0, 0))],
        out_specs=pl.BlockSpec((num_graphs, c2), lambda i: (0, 0)),
        scratch_shapes=[pltpu.VMEM((num_graphs, c), jnp.float32)],
        compiler_params=pltpu.CompilerParams(dimension_semantics=("arbitrary",)),
    )(onehot, x_p, inv, w1, b1, w2, b2)


# ----------------------------------------------------------------------------
# Fused fc head: Conv1d(k=1,no bias)+BN(folded)+ReLU+[Dropout=id]+Conv1d(k=1)
# Output kept lane-dense (num_classes zero-padded to 128), sliced in JAX.
# ----------------------------------------------------------------------------
def _head_kernel(x_ref, w1_ref, b1_ref, w2_ref, b2_ref, o_ref):
    h = jnp.dot(x_ref[...], w1_ref[...], preferred_element_type=jnp.float32) + b1_ref[...]
    h = jnp.maximum(h, 0.0).astype(jnp.bfloat16)
    # TODO(synk): Dropout(0.5) is identity in eval mode and omitted.
    y = jnp.dot(h, w2_ref[...], preferred_element_type=jnp.float32) + b2_ref[...]
    o_ref[...] = y.astype(o_ref.dtype)


def pallas_head(x, head_params, num_classes):
    n, c = x.shape
    w1, b1 = head_params["w1"], head_params["b1"]
    w2, b2 = head_params["w2"], head_params["b2"]     # already padded to 128 lanes
    tile_n = min(_TILE_N, _round_up(n, 8))
    npad = _round_up(n, tile_n)
    x_p = _pad_rows(x.astype(jnp.bfloat16), npad)
    cpad = w2.shape[1]

    out = pl.pallas_call(
        _head_kernel,
        out_shape=jax.ShapeDtypeStruct((npad, cpad), jnp.float32),
        grid=(npad // tile_n,),
        in_specs=[pl.BlockSpec((tile_n, c), lambda i: (i, 0)),
                  pl.BlockSpec(w1.shape, lambda i: (0, 0)),
                  pl.BlockSpec(b1.shape, lambda i: (0, 0)),
                  pl.BlockSpec(w2.shape, lambda i: (0, 0)),
                  pl.BlockSpec(b2.shape, lambda i: (0, 0))],
        out_specs=pl.BlockSpec((tile_n, cpad), lambda i: (i, 0)),
        compiler_params=pltpu.CompilerParams(dimension_semantics=("parallel",)),
    )(x_p, w1, b1, w2, b2)
    return out[:n, :num_classes]


# ----------------------------------------------------------------------------
# Graph glue (plain JAX)
# ----------------------------------------------------------------------------
def downsample_idx(n_per_graph, num_graphs, ratio):
    """fps()-style subsample indices.

    TODO(synk): farthest-point sampling is sequential / data-dependent; a
    deterministic strided per-graph subsample is used instead.
    """
    keep = max(1, int(math.ceil(ratio * n_per_graph)))
    local = jnp.round(jnp.linspace(0.0, n_per_graph - 1, keep)).astype(jnp.int32)
    offs = jnp.arange(num_graphs, dtype=jnp.int32) * n_per_graph
    return (offs[:, None] + local[None, :]).reshape(-1), keep


def knn_interpolate(x, pos_x, batch_x, pos_y, batch_y, k=3):
    """Inverse-distance weighted k-NN interpolation (k=3), plain JAX glue.

    TODO(synk): the O(N^2) neighbor search (top_k over pairwise distances)
    stays in XLA; at large N it should become its own tiled Pallas kernel.
    """
    d2 = jnp.sum((pos_y[:, None, :] - pos_x[None, :, :]) ** 2, axis=-1)
    same = batch_y[:, None] == batch_x[None, :]
    d2 = jnp.where(same, d2, jnp.inf)
    neg_vals, idx = jax.lax.top_k(-d2, k)
    d2k = -neg_vals
    w = jnp.where(jnp.isfinite(d2k), 1.0 / jnp.maximum(d2k, 1e-16), 0.0)
    wsum = jnp.sum(w, axis=1, keepdims=True)
    w = w / jnp.maximum(wsum, 1e-16)          # guard: empty same-graph neighborhood
    y = jnp.sum(x[idx].astype(jnp.float32) * w[..., None], axis=1)
    return y.astype(jnp.bfloat16)


# ----------------------------------------------------------------------------
# Parameter init (deterministic, synthetic) + one-time prep (bf16 cast, split)
# ----------------------------------------------------------------------------
def _init_linear(key, cin, cout, scale=0.05):
    kw, kb = jax.random.split(key)
    return {"w": jax.random.normal(kw, (cin, cout), jnp.float32) * scale,
            "b": jax.random.normal(kb, (cout,), jnp.float32) * scale}


def _init_xconv(key, cin, hidden, cout):
    k1, k2 = jax.random.split(key)
    l1 = _init_linear(k1, cin + 3, hidden)    # +3: positions are always appended
    l2 = _init_linear(k2, hidden, cout)
    return {"w_h": l1["w"], "b_h": l1["b"], "w_o": l2["w"], "b_o": l2["b"]}


def _init_head(key, cin, hidden, num_classes):
    k1, k2, k3, k4 = jax.random.split(key, 4)
    w1 = jax.random.normal(k1, (cin, hidden), jnp.float32) * 0.05
    gamma = 1.0 + 0.01 * jax.random.normal(k2, (hidden,), jnp.float32)
    beta = 0.01 * jax.random.normal(k3, (hidden,), jnp.float32)
    running_mean = jnp.zeros((hidden,), jnp.float32)
    running_var = jnp.ones((hidden,), jnp.float32)
    scale = gamma / jnp.sqrt(running_var + 1e-5)
    l2 = _init_linear(k4, hidden, num_classes)
    return {"w1": w1 * scale[None, :],               # BN folded into conv weight
            "b1": beta - running_mean * scale,       # BN folded into conv bias
            "w2": l2["w"], "b2": l2["b"]}


def init_net(key, num_classes):
    forward_down = [64, 96, 192, 384]
    forward_up = [384, 192, 96, 96]
    hidden_down, hidden_up = 32, 256
    down_in = [0, 64, 96, 192]
    up_in = [128 + 384 + 384, 384 + 192, 192 + 96, 96 + 64]
    keys = jax.random.split(key, 11)
    down = [_init_xconv(keys[i], down_in[i], hidden_down, forward_down[i]) for i in range(4)]
    up = [_init_xconv(keys[4 + i], up_in[i], hidden_up, forward_up[i]) for i in range(4)]
    lin1 = _init_linear(keys[8], 384, 256)
    lin2 = _init_linear(keys[9], 256, 128)
    # TODO(synk): the reference declares Conv1d(128, ...) while the decoder
    # produces 96 channels (inconsistent PyTorch source); head input taken
    # from the actual decoder output width (96) -> 128 -> num_classes.
    head = _init_head(keys[10], forward_up[-1], 128, num_classes)
    return {"down": down, "up": up, "lin1": lin1, "lin2": lin2, "head": head}


def prepare_params(params, num_classes):
    """One-time cast/split outside the hot path: bf16 weights, f32 biases,
    pos rows kept f32, head output padded to a lane-dense 128 width."""
    def prep_xconv(p):
        w_h = p["w_h"]
        return {"w_f": w_h[:-3].astype(jnp.bfloat16),
                "w_pos": w_h[-3:].astype(jnp.float32),
                "b_h": p["b_h"].reshape(1, -1).astype(jnp.float32),
                "w_o": p["w_o"].astype(jnp.bfloat16),
                "b_o": p["b_o"].reshape(1, -1).astype(jnp.float32)}

    cpad = max(128, _round_up(num_classes, 128))
    w2 = params["head"]["w2"]
    w2p = jnp.zeros((w2.shape[0], cpad), jnp.float32).at[:, :num_classes].set(w2)
    b2p = jnp.zeros((1, cpad), jnp.float32).at[:, :num_classes].set(
        params["head"]["b2"].reshape(1, -1))

    return {
        "down": [prep_xconv(p) for p in params["down"]],
        "up": [prep_xconv(p) for p in params["up"]],
        "lin1": {"w": params["lin1"]["w"].astype(jnp.bfloat16),
                 "b": params["lin1"]["b"].reshape(1, -1).astype(jnp.float32)},
        "lin2": {"w": params["lin2"]["w"].astype(jnp.bfloat16),
                 "b": params["lin2"]["b"].reshape(1, -1).astype(jnp.float32)},
        "head": {"w1": params["head"]["w1"].astype(jnp.bfloat16),
                 "b1": params["head"]["b1"].reshape(1, -1).astype(jnp.float32),
                 "w2": w2p.astype(jnp.bfloat16),
                 "b2": b2p},
    }


# ----------------------------------------------------------------------------
# Forward pass
# ----------------------------------------------------------------------------
def net_forward(params, pos, batch, num_graphs, n_per_graph, num_classes):
    down_sample = [1, 0.375, 0.375, 1, 1]
    pos = pos.astype(jnp.float32)

    feats, poss, batches = [], [], []
    x = xconv_apply(params["down"][0], [], pos, relu_out=True)        # [N, 64]
    feats.append(x); poss.append(pos); batches.append(batch)

    x_l, p_l, b_l = x, pos, batch
    npg = n_per_graph
    for layer in range(1, 4):
        if down_sample[layer] != 1:
            idx, npg = downsample_idx(npg, num_graphs, down_sample[layer])
            x_l, p_l, b_l = x_l[idx], p_l[idx], b_l[idx]
        x_l = xconv_apply(params["down"][layer], [x_l], p_l, relu_out=True)
        feats.append(x_l); poss.append(p_l); batches.append(b_l)

    # global context branch (single fused kernel)
    x_glob = pallas_global_branch(feats[-1], batches[-1], num_graphs,
                                  params["lin1"], params["lin2"])     # [B, 128]
    x_con_glob = x_glob[batches[-1]]                                  # [N3, 128]

    # decoder (interpolation applied before the skip concat so point counts
    # line up -- the reference ordering is internally inconsistent).  Skip
    # concats are never materialized: sources are fed separately to the kernel.
    cur_pos, cur_batch = poss[-1], batches[-1]
    up_srcs = [x_con_glob, feats[-1]]
    for layer in range(4):
        lvl = 3 - layer
        if up_srcs[0].shape[0] != feats[lvl].shape[0]:
            up = knn_interpolate(up_srcs[0], cur_pos, cur_batch,
                                 poss[lvl], batches[lvl], k=3)
            cur_pos, cur_batch = poss[lvl], batches[lvl]
            up_srcs = [up]
        up_srcs = up_srcs + [feats[lvl]]
        up = xconv_apply(params["up"][layer], up_srcs, cur_pos, relu_out=True)
        up_srcs = [up]

    out = pallas_head(up, params["head"], num_classes)                # [N, C]
    return out.T   # [num_classes, N]  (matches out.squeeze(0) in the reference)


# ----------------------------------------------------------------------------
if __name__ == "__main__":
    num_graphs = 2
    n_per_graph = 32
    num_classes = 10

    key = jax.random.PRNGKey(0)
    kpos, kparam = jax.random.split(key)
    pos = jax.random.normal(kpos, (num_graphs * n_per_graph, 3), jnp.float32)
    batch = jnp.repeat(jnp.arange(num_graphs, dtype=jnp.int32), n_per_graph)

    params = prepare_params(init_net(kparam, num_classes), num_classes)
    fwd = jax.jit(net_forward, static_argnums=(3, 4, 5))
    out = jax.block_until_ready(fwd(params, pos, batch,
                                    num_graphs, n_per_graph, num_classes))

    assert out.shape == (num_classes, num_graphs * n_per_graph), out.shape
    assert bool(jnp.all(jnp.isfinite(out)))
    print("KERNEL_OK")
</pallas_src>

<mosaic_0001>
module attributes {stable_mosaic.version = 11 : i64} {
  func.func @_xconv_kernel(%arg0: i32, %arg1: memref<64x3xf32, #tpu.memory_space<vmem>>, %arg2: memref<3x32xf32, #tpu.memory_space<vmem>>, %arg3: memref<1x32xf32, #tpu.memory_space<vmem>>, %arg4: memref<32x64xbf16, #tpu.memory_space<vmem>>, %arg5: memref<1x64xf32, #tpu.memory_space<vmem>>, %arg6: memref<64x64xbf16, #tpu.memory_space<vmem>>) attributes {dimension_semantics = [#tpu.dimension_semantics<parallel>], iteration_bounds = array<i64: 1>, scalar_prefetch = 0 : i64, scratch_operands = 0 : i64, tpu.core_type = #tpu.core_type<tc>, window_params = [{transform_indices = @transform_0, window_bounds = array<i64: 64, 3>}, {pipeline_mode = #tpu.pipeline_mode<synchronous>, transform_indices = @transform_1, window_bounds = array<i64: 3, 32>}, {pipeline_mode = #tpu.pipeline_mode<synchronous>, transform_indices = @transform_2, window_bounds = array<i64: 1, 32>}, {pipeline_mode = #tpu.pipeline_mode<synchronous>, transform_indices = @transform_3, window_bounds = array<i64: 32, 64>}, {pipeline_mode = #tpu.pipeline_mode<synchronous>, transform_indices = @transform_4, window_bounds = array<i64: 1, 64>}, {transform_indices = @transform_5, window_bounds = array<i64: 64, 64>}]} {
    %cst = arith.constant 0.000000e+00 : f32
    %0 = vector.broadcast %cst : f32 to vector<64x32xf32>
    %c0 = arith.constant 0 : index
    %c0_0 = arith.constant 0 : index
    %1 = vector.load %arg1[%c0, %c0_0] : memref<64x3xf32, #tpu.memory_space<vmem>>, vector<64x3xf32>
    %c0_1 = arith.constant 0 : index
    %c0_2 = arith.constant 0 : index
    %2 = vector.load %arg2[%c0_1, %c0_2] : memref<3x32xf32, #tpu.memory_space<vmem>>, vector<3x32xf32>
    %3 = vector.extract_strided_slice %1 {offsets = [0, 0], sizes = [64, 1], strides = [1, 1]} : vector<64x3xf32> to vector<64x1xf32>
    %4 = vector.extract_strided_slice %2 {offsets = [0, 0], sizes = [1, 32], strides = [1, 1]} : vector<3x32xf32> to vector<1x32xf32>
    %5 = vector.broadcast %3 : vector<64x1xf32> to vector<64x32xf32>
    %6 = vector.broadcast %4 : vector<1x32xf32> to vector<64x32xf32>
    %7 = arith.mulf %5, %6 : vector<64x32xf32>
    %8 = arith.addf %0, %7 : vector<64x32xf32>
    %9 = vector.extract_strided_slice %1 {offsets = [0, 1], sizes = [64, 1], strides = [1, 1]} : vector<64x3xf32> to vector<64x1xf32>
    %10 = vector.extract_strided_slice %2 {offsets = [1, 0], sizes = [1, 32], strides = [1, 1]} : vector<3x32xf32> to vector<1x32xf32>
    %11 = vector.broadcast %9 : vector<64x1xf32> to vector<64x32xf32>
    %12 = vector.broadcast %10 : vector<1x32xf32> to vector<64x32xf32>
    %13 = arith.mulf %11, %12 : vector<64x32xf32>
    %14 = arith.addf %8, %13 : vector<64x32xf32>
    %15 = vector.extract_strided_slice %1 {offsets = [0, 2], sizes = [64, 1], strides = [1, 1]} : vector<64x3xf32> to vector<64x1xf32>
    %16 = vector.extract_strided_slice %2 {offsets = [2, 0], sizes = [1, 32], strides = [1, 1]} : vector<3x32xf32> to vector<1x32xf32>
    %17 = vector.broadcast %15 : vector<64x1xf32> to vector<64x32xf32>
    %18 = vector.broadcast %16 : vector<1x32xf32> to vector<64x32xf32>
    %19 = arith.mulf %17, %18 : vector<64x32xf32>
    %20 = arith.addf %14, %19 : vector<64x32xf32>
    %c0_3 = arith.constant 0 : index
    %c0_4 = arith.constant 0 : index
    %21 = vector.load %arg3[%c0_3, %c0_4] : memref<1x32xf32, #tpu.memory_space<vmem>>, vector<1x32xf32>
    %22 = vector.broadcast %21 : vector<1x32xf32> to vector<64x32xf32>
    %23 = arith.addf %20, %22 : vector<64x32xf32>
    %cst_5 = arith.constant 0.000000e+00 : f32
    %24 = vector.broadcast %cst_5 : f32 to vector<64x32xf32>
    %25 = arith.maximumf %23, %24 : vector<64x32xf32>
    %26 = arith.truncf %25 : vector<64x32xf32> to vector<64x32xbf16>
    %c0_6 = arith.constant 0 : index
    %c0_7 = arith.constant 0 : index
    %27 = vector.load %arg4[%c0_6, %c0_7] : memref<32x64xbf16, #tpu.memory_space<vmem>>, vector<32x64xbf16>
    %cst_8 = arith.constant dense<0.000000e+00> : vector<64x64xf32>
    %28 = tpu.matmul %26, %27, %cst_8 {dimension_numbers = #tpu.dot_dimension_numbers<[1], [0], [0], [1], [0, 0, 1, 1], [], []>} : vector<64x32xbf16>, vector<32x64xbf16>, vector<64x64xf32> -> vector<64x64xf32>
    %c0_9 = arith.constant 0 : index
    %c0_10 = arith.constant 0 : index
    %29 = vector.load %arg5[%c0_9, %c0_10] : memref<1x64xf32, #tpu.memory_space<vmem>>, vector<1x64xf32>
    %30 = vector.broadcast %29 : vector<1x64xf32> to vector<64x64xf32>
    %31 = arith.addf %28, %30 : vector<64x64xf32>
    %cst_11 = arith.constant 0.000000e+00 : f32
    %32 = vector.broadcast %cst_11 : f32 to vector<64x64xf32>
    %33 = arith.maximumf %31, %32 : vector<64x64xf32>
    %34 = arith.truncf %33 : vector<64x64xf32> to vector<64x64xbf16>
    %c0_12 = arith.constant 0 : index
    %c0_13 = arith.constant 0 : index
    %35 = vector.load %arg6[%c0_12, %c0_13] : memref<64x64xbf16, #tpu.memory_space<vmem>>, vector<64x64xbf16>
    tpu.vector_store %arg6[%c0_12, %c0_13], %34 {strides = array<i32>} : memref<64x64xbf16, #tpu.memory_space<vmem>>, vector<64x64xbf16>,
    return
  }
  func.func @transform_0(%arg0: i32) -> (i32, i32) {
    %c0_i32 = arith.constant 0 : i32
    %c0_i32_0 = arith.constant 0 : i32
    return %arg0, %c0_i32 : i32, i32
  }
  func.func @transform_1(%arg0: i32) -> (i32, i32) {
    %c0_i32 = arith.constant 0 : i32
    %c0_i32_0 = arith.constant 0 : i32
    %c0_i32_1 = arith.constant 0 : i32
    return %c0_i32, %c0_i32_0 : i32, i32
  }
  func.func @transform_2(%arg0: i32) -> (i32, i32) {
    %c0_i32 = arith.constant 0 : i32
    %c0_i32_0 = arith.constant 0 : i32
    %c0_i32_1 = arith.constant 0 : i32
    return %c0_i32, %c0_i32_0 : i32, i32
  }
  func.func @transform_3(%arg0: i32) -> (i32, i32) {
    %c0_i32 = arith.constant 0 : i32
    %c0_i32_0 = arith.constant 0 : i32
    %c0_i32_1 = arith.constant 0 : i32
    return %c0_i32, %c0_i32_0 : i32, i32
  }
  func.func @transform_4(%arg0: i32) -> (i32, i32) {
    %c0_i32 = arith.constant 0 : i32
    %c0_i32_0 = arith.constant 0 : i32
    %c0_i32_1 = arith.constant 0 : i32
    return %c0_i32, %c0_i32_0 : i32, i32
  }
  func.func @transform_5(%arg0: i32) -> (i32, i32) {
    %c0_i32 = arith.constant 0 : i32
    %c0_i32_0 = arith.constant 0 : i32
    return %arg0, %c0_i32 : i32, i32
  }
}

module attributes {stable_mosaic.version = 11 : i64} {
  func.func @_xconv_kernel(%arg0: i32, %arg1: memref<24x64xbf16, #tpu.memory_space<vmem>>, %arg2: memref<24x3xf32, #tpu.memory_space<vmem>>, %arg3: memref<64x32xbf16, #tpu.memory_space<vmem>>, %arg4: memref<3x32xf32, #tpu.memory_space<vmem>>, %arg5: memref<1x32xf32, #tpu.memory_space<vmem>>, %arg6: memref<32x96xbf16, #tpu.memory_space<vmem>>, %arg7: memref<1x96xf32, #tpu.memory_space<vmem>>, %arg8: memref<24x96xbf16, #tpu.memory_space<vmem>>) attributes {dimension_semantics = [#tpu.dimension_semantics<parallel>], iteration_bounds = array<i64: 1>, scalar_prefetch = 0 : i64, scratch_operands = 0 : i64, tpu.core_type = #tpu.core_type<tc>, window_params = [{transform_indices = @transform_0, window_bounds = array<i64: 24, 64>}, {transform_indices = @transform_1, window_bounds = array<i64: 24, 3>}, {pipeline_mode = #tpu.pipeline_mode<synchronous>, transform_indices = @transform_2, window_bounds = array<i64: 64, 32>}, {pipeline_mode = #tpu.pipeline_mode<synchronous>, transform_indices = @transform_3, window_bounds = array<i64: 3, 32>}, {pipeline_mode = #tpu.pipeline_mode<synchronous>, transform_indices = @transform_4, window_bounds = array<i64: 1, 32>}, {pipeline_mode = #tpu.pipeline_mode<synchronous>, transform_indices = @transform_5, window_bounds = array<i64: 32, 96>}, {pipeline_mode = #tpu.pipeline_mode<synchronous>, transform_indices = @transform_6, window_bounds = array<i64: 1, 96>}, {transform_indices = @transform_7, window_bounds = array<i64: 24, 96>}]} {
    %cst = arith.constant 0.000000e+00 : f32
    %0 = vector.broadcast %cst : f32 to vector<24x32xf32>
    %c0 = arith.constant 0 : index
    %c0_0 = arith.constant 0 : index
    %1 = vector.load %arg1[%c0, %c0_0] : memref<24x64xbf16, #tpu.memory_space<vmem>>, vector<24x64xbf16>
    %c0_1 = arith.constant 0 : index
    %c0_2 = arith.constant 0 : index
    %2 = vector.load %arg3[%c0_1, %c0_2] : memref<64x32xbf16, #tpu.memory_space<vmem>>, vector<64x32xbf16>
    %cst_3 = arith.constant dense<0.000000e+00> : vector<24x32xf32>
    %3 = tpu.matmul %1, %2, %cst_3 {dimension_numbers = #tpu.dot_dimension_numbers<[1], [0], [0], [1], [0, 0, 1, 1], [], []>} : vector<24x64xbf16>, vector<64x32xbf16>, vector<24x32xf32> -> vector<24x32xf32>
    %4 = arith.addf %0, %3 : vector<24x32xf32>
    %c0_4 = arith.constant 0 : index
    %c0_5 = arith.constant 0 : index
    %5 = vector.load %arg2[%c0_4, %c0_5] : memref<24x3xf32, #tpu.memory_space<vmem>>, vector<24x3xf32>
    %c0_6 = arith.constant 0 : index
    %c0_7 = arith.constant 0 : index
    %6 = vector.load %arg4[%c0_6, %c0_7] : memref<3x32xf32, #tpu.memory_space<vmem>>, vector<3x32xf32>
    %7 = vector.extract_strided_slice %5 {offsets = [0, 0], sizes = [24, 1], strides = [1, 1]} : vector<24x3xf32> to vector<24x1xf32>
    %8 = vector.extract_strided_slice %6 {offsets = [0, 0], sizes = [1, 32], strides = [1, 1]} : vector<3x32xf32> to vector<1x32xf32>
    %9 = vector.broadcast %7 : vector<24x1xf32> to vector<24x32xf32>
    %10 = vector.broadcast %8 : vector<1x32xf32> to vector<24x32xf32>
    %11 = arith.mulf %9, %10 : vector<24x32xf32>
    %12 = arith.addf %4, %11 : vector<24x32xf32>
    %13 = vector.extract_strided_slice %5 {offsets = [0, 1], sizes = [24, 1], strides = [1, 1]} : vector<24x3xf32> to vector<24x1xf32>
    %14 = vector.extract_strided_slice %6 {offsets = [1, 0], sizes = [1, 32], strides = [1, 1]} : vector<3x32xf32> to vector<1x32xf32>
    %15 = vector.broadcast %13 : vector<24x1xf32> to vector<24x32xf32>
    %16 = vector.broadcast %14 : vector<1x32xf32> to vector<24x32xf32>
    %17 = arith.mulf %15, %16 : vector<24x32xf32>
    %18 = arith.addf %12, %17 : vector<24x32xf32>
    %19 = vector.extract_strided_slice %5 {offsets = [0, 2], sizes = [24, 1], strides = [1, 1]} : vector<24x3xf32> to vector<24x1xf32>
    %20 = vector.extract_strided_slice %6 {offsets = [2, 0], sizes = [1, 32], strides = [1, 1]} : vector<3x32xf32> to vector<1x32xf32>
    %21 = vector.broadcast %19 : vector<24x1xf32> to vector<24x32xf32>
    %22 = vector.broadcast %20 : vector<1x32xf32> to vector<24x32xf32>
    %23 = arith.mulf %21, %22 : vector<24x32xf32>
    %24 = arith.addf %18, %23 : vector<24x32xf32>
    %c0_8 = arith.constant 0 : index
    %c0_9 = arith.constant 0 : index
    %25 = vector.load %arg5[%c0_8, %c0_9] : memref<1x32xf32, #tpu.memory_space<vmem>>, vector<1x32xf32>
    %26 = vector.broadcast %25 : vector<1x32xf32> to vector<24x32xf32>
    %27 = arith.addf %24, %26 : vector<24x32xf32>
    %cst_10 = arith.constant 0.000000e+00 : f32
    %28 = vector.broadcast %cst_10 : f32 to vector<24x32xf32>
    %29 = arith.maximumf %27, %28 : vector<24x32xf32>
    %30 = arith.truncf %29 : vector<24x32xf32> to vector<24x32xbf16>
    %c0_11 = arith.constant 0 : index
    %c0_12 = arith.constant 0 : index
    %31 = vector.load %arg6[%c0_11, %c0_12] : memref<32x96xbf16, #tpu.memory_space<vmem>>, vector<32x96xbf16>
    %cst_13 = arith.constant dense<0.000000e+00> : vector<24x96xf32>
    %32 = tpu.matmul %30, %31, %cst_13 {dimension_numbers = #tpu.dot_dimension_numbers<[1], [0], [0], [1], [0, 0, 1, 1], [], []>} : vector<24x32xbf16>, vector<32x96xbf16>, vector<24x96xf32> -> vector<24x96xf32>
    %c0_14 = arith.constant 0 : index
    %c0_15 = arith.constant 0 : index
    %33 = vector.load %arg7[%c0_14, %c0_15] : memref<1x96xf32, #tpu.memory_space<vmem>>, vector<1x96xf32>
    %34 = vector.broadcast %33 : vector<1x96xf32> to vector<24x96xf32>
    %35 = arith.addf %32, %34 : vector<24x96xf32>
    %cst_16 = arith.constant 0.000000e+00 : f32
    %36 = vector.broadcast %cst_16 : f32 to vector<24x96xf32>
    %37 = arith.maximumf %35, %36 : vector<24x96xf32>
    %38 = arith.truncf %37 : vector<24x96xf32> to vector<24x96xbf16>
    %c0_17 = arith.constant 0 : index
    %c0_18 = arith.constant 0 : index
    %39 = vector.load %arg8[%c0_17, %c0_18] : memref<24x96xbf16, #tpu.memory_space<vmem>>, vector<24x96xbf16>
    tpu.vector_store %arg8[%c0_17, %c0_18], %38 {strides = array<i32>} : memref<24x96xbf16, #tpu.memory_space<vmem>>, vector<24x96xbf16>,
    return
  }
  func.func @transform_0(%arg0: i32) -> (i32, i32) {
    %c0_i32 = arith.constant 0 : i32
    %c0_i32_0 = arith.constant 0 : i32
    return %arg0, %c0_i32 : i32, i32
  }
  func.func @transform_1(%arg0: i32) -> (i32, i32) {
    %c0_i32 = arith.constant 0 : i32
    %c0_i32_0 = arith.constant 0 : i32
    return %arg0, %c0_i32 : i32, i32
  }
  func.func @transform_2(%arg0: i32) -> (i32, i32) {
    %c0_i32 = arith.constant 0 : i32
    %c0_i32_0 = arith.constant 0 : i32
    %c0_i32_1 = arith.constant 0 : i32
    return %c0_i32, %c0_i32_0 : i32, i32
  }
  func.func @transform_3(%arg0: i32) -> (i32, i32) {
    %c0_i32 = arith.constant 0 : i32
    %c0_i32_0 = arith.constant 0 : i32
    %c0_i32_1 = arith.constant 0 : i32
    return %c0_i32, %c0_i32_0 : i32, i32
  }
  func.func @transform_4(%arg0: i32) -> (i32, i32) {
    %c0_i32 = arith.constant 0 : i32
    %c0_i32_0 = arith.constant 0 : i32
    %c0_i32_1 = arith.constant 0 : i32
    return %c0_i32, %c0_i32_0 : i32, i32
  }
  func.func @transform_5(%arg0: i32) -> (i32, i32) {
    %c0_i32 = arith.constant 0 : i32
    %c0_i32_0 = arith.constant 0 : i32
    %c0_i32_1 = arith.constant 0 : i32
    return %c0_i32, %c0_i32_0 : i32, i32
  }
  func.func @transform_6(%arg0: i32) -> (i32, i32) {
    %c0_i32 = arith.constant 0 : i32
    %c0_i32_0 = arith.constant 0 : i32
    %c0_i32_1 = arith.constant 0 : i32
    return %c0_i32, %c0_i32_0 : i32, i32
  }
  func.func @transform_7(%arg0: i32) -> (i32, i32) {
    %c0_i32 = arith.constant 0 : i32
    %c0_i32_0 = arith.constant 0 : i32
    return %arg0, %c0_i32 : i32, i32
  }
}

module attributes {stable_mosaic.version = 11 : i64} {
  func.func @_xconv_kernel(%arg0: i32, %arg1: memref<16x96xbf16, #tpu.memory_space<vmem>>, %arg2: memref<16x3xf32, #tpu.memory_space<vmem>>, %arg3: memref<96x32xbf16, #tpu.memory_space<vmem>>, %arg4: memref<3x32xf32, #tpu.memory_space<vmem>>, %arg5: memref<1x32xf32, #tpu.memory_space<vmem>>, %arg6: memref<32x192xbf16, #tpu.memory_space<vmem>>, %arg7: memref<1x192xf32, #tpu.memory_space<vmem>>, %arg8: memref<16x192xbf16, #tpu.memory_space<vmem>>) attributes {dimension_semantics = [#tpu.dimension_semantics<parallel>], iteration_bounds = array<i64: 1>, scalar_prefetch = 0 : i64, scratch_operands = 0 : i64, tpu.core_type = #tpu.core_type<tc>, window_params = [{transform_indices = @transform_0, window_bounds = array<i64: 16, 96>}, {transform_indices = @transform_1, window_bounds = array<i64: 16, 3>}, {pipeline_mode = #tpu.pipeline_mode<synchronous>, transform_indices = @transform_2, window_bounds = array<i64: 96, 32>}, {pipeline_mode = #tpu.pipeline_mode<synchronous>, transform_indices = @transform_3, window_bounds = array<i64: 3, 32>}, {pipeline_mode = #tpu.pipeline_mode<synchronous>, transform_indices = @transform_4, window_bounds = array<i64: 1, 32>}, {pipeline_mode = #tpu.pipeline_mode<synchronous>, transform_indices = @transform_5, window_bounds = array<i64: 32, 192>}, {pipeline_mode = #tpu.pipeline_mode<synchronous>, transform_indices = @transform_6, window_bounds = array<i64: 1, 192>}, {transform_indices = @transform_7, window_bounds = array<i64: 16, 192>}]} {
    %cst = arith.constant 0.000000e+00 : f32
    %0 = vector.broadcast %cst : f32 to vector<16x32xf32>
    %c0 = arith.constant 0 : index
    %c0_0 = arith.constant 0 : index
    %1 = vector.load %arg1[%c0, %c0_0] : memref<16x96xbf16, #tpu.memory_space<vmem>>, vector<16x96xbf16>
    %c0_1 = arith.constant 0 : index
    %c0_2 = arith.constant 0 : index
    %2 = vector.load %arg3[%c0_1, %c0_2] : memref<96x32xbf16, #tpu.memory_space<vmem>>, vector<96x32xbf16>
    %cst_3 = arith.constant dense<0.000000e+00> : vector<16x32xf32>
    %3 = tpu.matmul %1, %2, %cst_3 {dimension_numbers = #tpu.dot_dimension_numbers<[1], [0], [0], [1], [0, 0, 1, 1], [], []>} : vector<16x96xbf16>, vector<96x32xbf16>, vector<16x32xf32> -> vector<16x32xf32>
    %4 = arith.addf %0, %3 : vector<16x32xf32>
    %c0_4 = arith.constant 0 : index
    %c0_5 = arith.constant 0 : index
    %5 = vector.load %arg2[%c0_4, %c0_5] : memref<16x3xf32, #tpu.memory_space<vmem>>, vector<16x3xf32>
    %c0_6 = arith.constant 0 : index
    %c0_7 = arith.constant 0 : index
    %6 = vector.load %arg4[%c0_6, %c0_7] : memref<3x32xf32, #tpu.memory_space<vmem>>, vector<3x32xf32>
    %7 = vector.extract_strided_slice %5 {offsets = [0, 0], sizes = [16, 1], strides = [1, 1]} : vector<16x3xf32> to vector<16x1xf32>
    %8 = vector.extract_strided_slice %6 {offsets = [0, 0], sizes = [1, 32], strides = [1, 1]} : vector<3x32xf32> to vector<1x32xf32>
    %9 = vector.broadcast %7 : vector<16x1xf32> to vector<16x32xf32>
    %10 = vector.broadcast %8 : vector<1x32xf32> to vector<16x32xf32>
    %11 = arith.mulf %9, %10 : vector<16x32xf32>
    %12 = arith.addf %4, %11 : vector<16x32xf32>
    %13 = vector.extract_strided_slice %5 {offsets = [0, 1], sizes = [16, 1], strides = [1, 1]} : vector<16x3xf32> to vector<16x1xf32>
    %14 = vector.extract_strided_slice %6 {offsets = [1, 0], sizes = [1, 32], strides = [1, 1]} : vector<3x32xf32> to vector<1x32xf32>
    %15 = vector.broadcast %13 : vector<16x1xf32> to vector<16x32xf32>
    %16 = vector.broadcast %14 : vector<1x32xf32> to vector<16x32xf32>
    %17 = arith.mulf %15, %16 : vector<16x32xf32>
    %18 = arith.addf %12, %17 : vector<16x32xf32>
    %19 = vector.extract_strided_slice %5 {offsets = [0, 2], sizes = [16, 1], strides = [1, 1]} : vector<16x3xf32> to vector<16x1xf32>
    %20 = vector.extract_strided_slice %6 {offsets = [2, 0], sizes = [1, 32], strides = [1, 1]} : vector<3x32xf32> to vector<1x32xf32>
    %21 = vector.broadcast %19 : vector<16x1xf32> to vector<16x32xf32>
    %22 = vector.broadcast %20 : vector<1x32xf32> to vector<16x32xf32>
    %23 = arith.mulf %21, %22 : vector<16x32xf32>
    %24 = arith.addf %18, %23 : vector<16x32xf32>
    %c0_8 = arith.constant 0 : index
    %c0_9 = arith.constant 0 : index
    %25 = vector.load %arg5[%c0_8, %c0_9] : memref<1x32xf32, #tpu.memory_space<vmem>>, vector<1x32xf32>
    %26 = vector.broadcast %25 : vector<1x32xf32> to vector<16x32xf32>
    %27 = arith.addf %24, %26 : vector<16x32xf32>
    %cst_10 = arith.constant 0.000000e+00 : f32
    %28 = vector.broadcast %cst_10 : f32 to vector<16x32xf32>
    %29 = arith.maximumf %27, %28 : vector<16x32xf32>
    %30 = arith.truncf %29 : vector<16x32xf32> to vector<16x32xbf16>
    %c0_11 = arith.constant 0 : index
    %c0_12 = arith.constant 0 : index
    %31 = vector.load %arg6[%c0_11, %c0_12] : memref<32x192xbf16, #tpu.memory_space<vmem>>, vector<32x192xbf16>
    %cst_13 = arith.constant dense<0.000000e+00> : vector<16x192xf32>
    %32 = tpu.matmul %30, %31, %cst_13 {dimension_numbers = #tpu.dot_dimension_numbers<[1], [0], [0], [1], [0, 0, 1, 1], [], []>} : vector<16x32xbf16>, vector<32x192xbf16>, vector<16x192xf32> -> vector<16x192xf32>
    %c0_14 = arith.constant 0 : index
    %c0_15 = arith.constant 0 : index
    %33 = vector.load %arg7[%c0_14, %c0_15] : memref<1x192xf32, #tpu.memory_space<vmem>>, vector<1x192xf32>
    %34 = vector.broadcast %33 : vector<1x192xf32> to vector<16x192xf32>
    %35 = arith.addf %32, %34 : vector<16x192xf32>
    %cst_16 = arith.constant 0.000000e+00 : f32
    %36 = vector.broadcast %cst_16 : f32 to vector<16x192xf32>
    %37 = arith.maximumf %35, %36 : vector<16x192xf32>
    %38 = arith.truncf %37 : vector<16x192xf32> to vector<16x192xbf16>
    %c0_17 = arith.constant 0 : index
    %c0_18 = arith.constant 0 : index
    %39 = vector.load %arg8[%c0_17, %c0_18] : memref<16x192xbf16, #tpu.memory_space<vmem>>, vector<16x192xbf16>
    tpu.vector_store %arg8[%c0_17, %c0_18], %38 {strides = array<i32>} : memref<16x192xbf16, #tpu.memory_space<vmem>>, vector<16x192xbf16>,
    return
  }
  func.func @transform_0(%arg0: i32) -> (i32, i32) {
    %c0_i32 = arith.constant 0 : i32
    %c0_i32_0 = arith.constant 0 : i32
    return %arg0, %c0_i32 : i32, i32
  }
  func.func @transform_1(%arg0: i32) -> (i32, i32) {
    %c0_i32 = arith.constant 0 : i32
    %c0_i32_0 = arith.constant 0 : i32
    return %arg0, %c0_i32 : i32, i32
  }
  func.func @transform_2(%arg0: i32) -> (i32, i32) {
    %c0_i32 = arith.constant 0 : i32
    %c0_i32_0 = arith.constant 0 : i32
    %c0_i32_1 = arith.constant 0 : i32
    return %c0_i32, %c0_i32_0 : i32, i32
  }
  func.func @transform_3(%arg0: i32) -> (i32, i32) {
    %c0_i32 = arith.constant 0 : i32
    %c0_i32_0 = arith.constant 0 : i32
    %c0_i32_1 = arith.constant 0 : i32
    return %c0_i32, %c0_i32_0 : i32, i32
  }
  func.func @transform_4(%arg0: i32) -> (i32, i32) {
    %c0_i32 = arith.constant 0 : i32
    %c0_i32_0 = arith.constant 0 : i32
    %c0_i32_1 = arith.constant 0 : i32
    return %c0_i32, %c0_i32_0 : i32, i32
  }
  func.func @transform_5(%arg0: i32) -> (i32, i32) {
    %c0_i32 = arith.constant 0 : i32
    %c0_i32_0 = arith.constant 0 : i32
    %c0_i32_1 = arith.constant 0 : i32
    return %c0_i32, %c0_i32_0 : i32, i32
  }
  func.func @transform_6(%arg0: i32) -> (i32, i32) {
    %c0_i32 = arith.constant 0 : i32
    %c0_i32_0 = arith.constant 0 : i32
    %c0_i32_1 = arith.constant 0 : i32
    return %c0_i32, %c0_i32_0 : i32, i32
  }
  func.func @transform_7(%arg0: i32) -> (i32, i32) {
    %c0_i32 = arith.constant 0 : i32
    %c0_i32_0 = arith.constant 0 : i32
    return %arg0, %c0_i32 : i32, i32
  }
}

module attributes {stable_mosaic.version = 11 : i64} {
  func.func @_xconv_kernel(%arg0: i32, %arg1: memref<16x192xbf16, #tpu.memory_space<vmem>>, %arg2: memref<16x3xf32, #tpu.memory_space<vmem>>, %arg3: memref<192x32xbf16, #tpu.memory_space<vmem>>, %arg4: memref<3x32xf32, #tpu.memory_space<vmem>>, %arg5: memref<1x32xf32, #tpu.memory_space<vmem>>, %arg6: memref<32x384xbf16, #tpu.memory_space<vmem>>, %arg7: memref<1x384xf32, #tpu.memory_space<vmem>>, %arg8: memref<16x384xbf16, #tpu.memory_space<vmem>>) attributes {dimension_semantics = [#tpu.dimension_semantics<parallel>], iteration_bounds = array<i64: 1>, scalar_prefetch = 0 : i64, scratch_operands = 0 : i64, tpu.core_type = #tpu.core_type<tc>, window_params = [{transform_indices = @transform_0, window_bounds = array<i64: 16, 192>}, {transform_indices = @transform_1, window_bounds = array<i64: 16, 3>}, {pipeline_mode = #tpu.pipeline_mode<synchronous>, transform_indices = @transform_2, window_bounds = array<i64: 192, 32>}, {pipeline_mode = #tpu.pipeline_mode<synchronous>, transform_indices = @transform_3, window_bounds = array<i64: 3, 32>}, {pipeline_mode = #tpu.pipeline_mode<synchronous>, transform_indices = @transform_4, window_bounds = array<i64: 1, 32>}, {pipeline_mode = #tpu.pipeline_mode<synchronous>, transform_indices = @transform_5, window_bounds = array<i64: 32, 384>}, {pipeline_mode = #tpu.pipeline_mode<synchronous>, transform_indices = @transform_6, window_bounds = array<i64: 1, 384>}, {transform_indices = @transform_7, window_bounds = array<i64: 16, 384>}]} {
    %cst = arith.constant 0.000000e+00 : f32
    %0 = vector.broadcast %cst : f32 to vector<16x32xf32>
    %c0 = arith.constant 0 : index
    %c0_0 = arith.constant 0 : index
    %1 = vector.load %arg1[%c0, %c0_0] : memref<16x192xbf16, #tpu.memory_space<vmem>>, vector<16x192xbf16>
    %c0_1 = arith.constant 0 : index
    %c0_2 = arith.constant 0 : index
    %2 = vector.load %arg3[%c0_1, %c0_2] : memref<192x32xbf16, #tpu.memory_space<vmem>>, vector<192x32xbf16>
    %cst_3 = arith.constant dense<0.000000e+00> : vector<16x32xf32>
    %3 = tpu.matmul %1, %2, %cst_3 {dimension_numbers = #tpu.dot_dimension_numbers<[1], [0], [0], [1], [0, 0, 1, 1], [], []>} : vector<16x192xbf16>, vector<192x32xbf16>, vector<16x32xf32> -> vector<16x32xf32>
    %4 = arith.addf %0, %3 : vector<16x32xf32>
    %c0_4 = arith.constant 0 : index
    %c0_5 = arith.constant 0 : index
    %5 = vector.load %arg2[%c0_4, %c0_5] : memref<16x3xf32, #tpu.memory_space<vmem>>, vector<16x3xf32>
    %c0_6 = arith.constant 0 : index
    %c0_7 = arith.constant 0 : index
    %6 = vector.load %arg4[%c0_6, %c0_7] : memref<3x32xf32, #tpu.memory_space<vmem>>, vector<3x32xf32>
    %7 = vector.extract_strided_slice %5 {offsets = [0, 0], sizes = [16, 1], strides = [1, 1]} : vector<16x3xf32> to vector<16x1xf32>
    %8 = vector.extract_strided_slice %6 {offsets = [0, 0], sizes = [1, 32], strides = [1, 1]} : vector<3x32xf32> to vector<1x32xf32>
    %9 = vector.broadcast %7 : vector<16x1xf32> to vector<16x32xf32>
    %10 = vector.broadcast %8 : vector<1x32xf32> to vector<16x32xf32>
    %11 = arith.mulf %9, %10 : vector<16x32xf32>
    %12 = arith.addf %4, %11 : vector<16x32xf32>
    %13 = vector.extract_strided_slice %5 {offsets = [0, 1], sizes = [16, 1], strides = [1, 1]} : vector<16x3xf32> to vector<16x1xf32>
    %14 = vector.extract_strided_slice %6 {offsets = [1, 0], sizes = [1, 32], strides = [1, 1]} : vector<3x32xf32> to vector<1x32xf32>
    %15 = vector.broadcast %13 : vector<16x1xf32> to vector<16x32xf32>
    %16 = vector.broadcast %14 : vector<1x32xf32> to vector<16x32xf32>
    %17 = arith.mulf %15, %16 : vector<16x32xf32>
    %18 = arith.addf %12, %17 : vector<16x32xf32>
    %19 = vector.extract_strided_slice %5 {offsets = [0, 2], sizes = [16, 1], strides = [1, 1]} : vector<16x3xf32> to vector<16x1xf32>
    %20 = vector.extract_strided_slice %6 {offsets = [2, 0], sizes = [1, 32], strides = [1, 1]} : vector<3x32xf32> to vector<1x32xf32>
    %21 = vector.broadcast %19 : vector<16x1xf32> to vector<16x32xf32>
    %22 = vector.broadcast %20 : vector<1x32xf32> to vector<16x32xf32>
    %23 = arith.mulf %21, %22 : vector<16x32xf32>
    %24 = arith.addf %18, %23 : vector<16x32xf32>
    %c0_8 = arith.constant 0 : index
    %c0_9 = arith.constant 0 : index
    %25 = vector.load %arg5[%c0_8, %c0_9] : memref<1x32xf32, #tpu.memory_space<vmem>>, vector<1x32xf32>
    %26 = vector.broadcast %25 : vector<1x32xf32> to vector<16x32xf32>
    %27 = arith.addf %24, %26 : vector<16x32xf32>
    %cst_10 = arith.constant 0.000000e+00 : f32
    %28 = vector.broadcast %cst_10 : f32 to vector<16x32xf32>
    %29 = arith.maximumf %27, %28 : vector<16x32xf32>
    %30 = arith.truncf %29 : vector<16x32xf32> to vector<16x32xbf16>
    %c0_11 = arith.constant 0 : index
    %c0_12 = arith.constant 0 : index
    %31 = vector.load %arg6[%c0_11, %c0_12] : memref<32x384xbf16, #tpu.memory_space<vmem>>, vector<32x384xbf16>
    %cst_13 = arith.constant dense<0.000000e+00> : vector<16x384xf32>
    %32 = tpu.matmul %30, %31, %cst_13 {dimension_numbers = #tpu.dot_dimension_numbers<[1], [0], [0], [1], [0, 0, 1, 1], [], []>} : vector<16x32xbf16>, vector<32x384xbf16>, vector<16x384xf32> -> vector<16x384xf32>
    %c0_14 = arith.constant 0 : index
    %c0_15 = arith.constant 0 : index
    %33 = vector.load %arg7[%c0_14, %c0_15] : memref<1x384xf32, #tpu.memory_space<vmem>>, vector<1x384xf32>
    %34 = vector.broadcast %33 : vector<1x384xf32> to vector<16x384xf32>
    %35 = arith.addf %32, %34 : vector<16x384xf32>
    %cst_16 = arith.constant 0.000000e+00 : f32
    %36 = vector.broadcast %cst_16 : f32 to vector<16x384xf32>
    %37 = arith.maximumf %35, %36 : vector<16x384xf32>
    %38 = arith.truncf %37 : vector<16x384xf32> to vector<16x384xbf16>
    %c0_17 = arith.constant 0 : index
    %c0_18 = arith.constant 0 : index
    %39 = vector.load %arg8[%c0_17, %c0_18] : memref<16x384xbf16, #tpu.memory_space<vmem>>, vector<16x384xbf16>
    tpu.vector_store %arg8[%c0_17, %c0_18], %38 {strides = array<i32>} : memref<16x384xbf16, #tpu.memory_space<vmem>>, vector<16x384xbf16>,
    return
  }
  func.func @transform_0(%arg0: i32) -> (i32, i32) {
    %c0_i32 = arith.constant 0 : i32
    %c0_i32_0 = arith.constant 0 : i32
    return %arg0, %c0_i32 : i32, i32
  }
  func.func @transform_1(%arg0: i32) -> (i32, i32) {
    %c0_i32 = arith.constant 0 : i32
    %c0_i32_0 = arith.constant 0 : i32
    return %arg0, %c0_i32 : i32, i32
  }
  func.func @transform_2(%arg0: i32) -> (i32, i32) {
    %c0_i32 = arith.constant 0 : i32
    %c0_i32_0 = arith.constant 0 : i32
    %c0_i32_1 = arith.constant 0 : i32
    return %c0_i32, %c0_i32_0 : i32, i32
  }
  func.func @transform_3(%arg0: i32) -> (i32, i32) {
    %c0_i32 = arith.constant 0 : i32
    %c0_i32_0 = arith.constant 0 : i32
    %c0_i32_1 = arith.constant 0 : i32
    return %c0_i32, %c0_i32_0 : i32, i32
  }
  func.func @transform_4(%arg0: i32) -> (i32, i32) {
    %c0_i32 = arith.constant 0 : i32
    %c0_i32_0 = arith.constant 0 : i32
    %c0_i32_1 = arith.constant 0 : i32
    return %c0_i32, %c0_i32_0 : i32, i32
  }
  func.func @transform_5(%arg0: i32) -> (i32, i32) {
    %c0_i32 = arith.constant 0 : i32
    %c0_i32_0 = arith.constant 0 : i32
    %c0_i32_1 = arith.constant 0 : i32
    return %c0_i32, %c0_i32_0 : i32, i32
  }
  func.func @transform_6(%arg0: i32) -> (i32, i32) {
    %c0_i32 = arith.constant 0 : i32
    %c0_i32_0 = arith.constant 0 : i32
    %c0_i32_1 = arith.constant 0 : i32
    return %c0_i32, %c0_i32_0 : i32, i32
  }
  func.func @transform_7(%arg0: i32) -> (i32, i32) {
    %c0_i32 = arith.constant 0 : i32
    %c0_i32_0 = arith.constant 0 : i32
    return %arg0, %c0_i32 : i32, i32
  }
}

module attributes {stable_mosaic.version = 11 : i64} {
  func.func @_global_branch_kernel(%arg0: i32, %arg1: memref<2x16xbf16, #tpu.memory_space<vmem>>, %arg2: memref<16x384xbf16, #tpu.memory_space<vmem>>, %arg3: memref<2x1xf32, #tpu.memory_space<vmem>>, %arg4: memref<384x256xbf16, #tpu.memory_space<vmem>>, %arg5: memref<1x256xf32, #tpu.memory_space<vmem>>, %arg6: memref<256x128xbf16, #tpu.memory_space<vmem>>, %arg7: memref<1x128xf32, #tpu.memory_space<vmem>>, %arg8: memref<2x128xbf16, #tpu.memory_space<vmem>>, %arg9: memref<2x384xf32, #tpu.memory_space<vmem>>) attributes {dimension_semantics = [#tpu.dimension_semantics<arbitrary>], iteration_bounds = array<i64: 1>, scalar_prefetch = 0 : i64, scratch_operands = 1 : i64, tpu.core_type = #tpu.core_type<tc>, window_params = [{transform_indices = @transform_0, window_bounds = array<i64: 2, 16>}, {transform_indices = @transform_1, window_bounds = array<i64: 16, 384>}, {pipeline_mode = #tpu.pipeline_mode<synchronous>, transform_indices = @transform_2, window_bounds = array<i64: 2, 1>}, {pipeline_mode = #tpu.pipeline_mode<synchronous>, transform_indices = @transform_3, window_bounds = array<i64: 384, 256>}, {pipeline_mode = #tpu.pipeline_mode<synchronous>, transform_indices = @transform_4, window_bounds = array<i64: 1, 256>}, {pipeline_mode = #tpu.pipeline_mode<synchronous>, transform_indices = @transform_5, window_bounds = array<i64: 256, 128>}, {pipeline_mode = #tpu.pipeline_mode<synchronous>, transform_indices = @transform_6, window_bounds = array<i64: 1, 128>}, {pipeline_mode = #tpu.pipeline_mode<synchronous>, transform_indices = @transform_7, window_bounds = array<i64: 2, 128>}]} {
    %c0_i32 = arith.constant 0 : i32
    %0 = arith.cmpi eq, %arg0, %c0_i32 : i32
    %1 = arith.extui %0 : i1 to i32
    %c0_i32_0 = arith.constant 0 : i32
    %2 = arith.cmpi ne, %1, %c0_i32_0 : i32
    scf.if %2 {
      %cst_10 = arith.constant 0.000000e+00 : f32
      %12 = vector.broadcast %cst_10 : f32 to vector<2x384xf32>
      %c0_11 = arith.constant 0 : index
      %c0_12 = arith.constant 0 : index
      %13 = vector.load %arg9[%c0_11, %c0_12] : memref<2x384xf32, #tpu.memory_space<vmem>>, vector<2x384xf32>
      tpu.vector_store %arg9[%c0_11, %c0_12], %12 {strides = array<i32>} : memref<2x384xf32, #tpu.memory_space<vmem>>, vector<2x384xf32>,
    } else {
    }
    %c0 = arith.constant 0 : index
    %c0_1 = arith.constant 0 : index
    %3 = vector.load %arg9[%c0, %c0_1] : memref<2x384xf32, #tpu.memory_space<vmem>>, vector<2x384xf32>
    %c0_2 = arith.constant 0 : index
    %c0_3 = arith.constant 0 : index
    %4 = vector.load %arg1[%c0_2, %c0_3] : memref<2x16xbf16, #tpu.memory_space<vmem>>, vector<2x16xbf16>
    %c0_4 = arith.constant 0 : index
    %c0_5 = arith.constant 0 : index
    %5 = vector.load %arg2[%c0_4, %c0_5] : memref<16x384xbf16, #tpu.memory_space<vmem>>, vector<16x384xbf16>
    %cst = arith.constant dense<0.000000e+00> : vector<2x384xf32>
    %6 = tpu.matmul %4, %5, %cst {dimension_numbers = #tpu.dot_dimension_numbers<[1], [0], [0], [1], [0, 0, 1, 1], [], []>} : vector<2x16xbf16>, vector<16x384xbf16>, vector<2x384xf32> -> vector<2x384xf32>
    %7 = arith.addf %3, %6 : vector<2x384xf32>
    %c0_6 = arith.constant 0 : index
    %c0_7 = arith.constant 0 : index
    %8 = vector.load %arg9[%c0_6, %c0_7] : memref<2x384xf32, #tpu.memory_space<vmem>>, vector<2x384xf32>
    tpu.vector_store %arg9[%c0_6, %c0_7], %7 {strides = array<i32>} : memref<2x384xf32, #tpu.memory_space<vmem>>, vector<2x384xf32>,
    %c0_i32_8 = arith.constant 0 : i32
    %9 = arith.cmpi eq, %arg0, %c0_i32_8 : i32
    %10 = arith.extui %9 : i1 to i32
    %c0_i32_9 = arith.constant 0 : i32
    %11 = arith.cmpi ne, %10, %c0_i32_9 : i32
    scf.if %11 {
      %c0_10 = arith.constant 0 : index
      %c0_11 = arith.constant 0 : index
      %12 = vector.load %arg9[%c0_10, %c0_11] : memref<2x384xf32, #tpu.memory_space<vmem>>, vector<2x384xf32>
      %c0_12 = arith.constant 0 : index
      %c0_13 = arith.constant 0 : index
      %13 = vector.load %arg3[%c0_12, %c0_13] : memref<2x1xf32, #tpu.memory_space<vmem>>, vector<2x1xf32>
      %14 = vector.broadcast %13 : vector<2x1xf32> to vector<2x384xf32>
      %15 = arith.mulf %12, %14 : vector<2x384xf32>
      %16 = arith.truncf %15 : vector<2x384xf32> to vector<2x384xbf16>
      %c0_14 = arith.constant 0 : index
      %c0_15 = arith.constant 0 : index
      %17 = vector.load %arg4[%c0_14, %c0_15] : memref<384x256xbf16, #tpu.memory_space<vmem>>, vector<384x256xbf16>
      %cst_16 = arith.constant dense<0.000000e+00> : vector<2x256xf32>
      %18 = tpu.matmul %16, %17, %cst_16 {dimension_numbers = #tpu.dot_dimension_numbers<[1], [0], [0], [1], [0, 0, 1, 1], [], []>} : vector<2x384xbf16>, vector<384x256xbf16>, vector<2x256xf32> -> vector<2x256xf32>
      %c0_17 = arith.constant 0 : index
      %c0_18 = arith.constant 0 : index
      %19 = vector.load %arg5[%c0_17, %c0_18] : memref<1x256xf32, #tpu.memory_space<vmem>>, vector<1x256xf32>
      %20 = vector.broadcast %19 : vector<1x256xf32> to vector<2x256xf32>
      %21 = arith.addf %18, %20 : vector<2x256xf32>
      %cst_19 = arith.constant 0.000000e+00 : f32
      %22 = vector.broadcast %cst_19 : f32 to vector<2x256xf32>
      %23 = arith.maximumf %21, %22 : vector<2x256xf32>
      %24 = arith.truncf %23 : vector<2x256xf32> to vector<2x256xbf16>
      %c0_20 = arith.constant 0 : index
      %c0_21 = arith.constant 0 : index
      %25 = vector.load %arg6[%c0_20, %c0_21] : memref<256x128xbf16, #tpu.memory_space<vmem>>, vector<256x128xbf16>
      %cst_22 = arith.constant dense<0.000000e+00> : vector<2x128xf32>
      %26 = tpu.matmul %24, %25, %cst_22 {dimension_numbers = #tpu.dot_dimension_numbers<[1], [0], [0], [1], [0, 0, 1, 1], [], []>} : vector<2x256xbf16>, vector<256x128xbf16>, vector<2x128xf32> -> vector<2x128xf32>
      %c0_23 = arith.constant 0 : index
      %c0_24 = arith.constant 0 : index
      %27 = vector.load %arg7[%c0_23, %c0_24] : memref<1x128xf32, #tpu.memory_space<vmem>>, vector<1x128xf32>
      %28 = vector.broadcast %27 : vector<1x128xf32> to vector<2x128xf32>
      %29 = arith.addf %26, %28 : vector<2x128xf32>
      %cst_25 = arith.constant 0.000000e+00 : f32
      %30 = vector.broadcast %cst_25 : f32 to vector<2x128xf32>
      %31 = arith.maximumf %29, %30 : vector<2x128xf32>
      %32 = arith.truncf %31 : vector<2x128xf32> to vector<2x128xbf16>
      %c0_26 = arith.constant 0 : index
      %c0_27 = arith.constant 0 : index
      %33 = vector.load %arg8[%c0_26, %c0_27] : memref<2x128xbf16, #tpu.memory_space<vmem>>, vector<2x128xbf16>
      tpu.vector_store %arg8[%c0_26, %c0_27], %32 {strides = array<i32>} : memref<2x128xbf16, #tpu.memory_space<vmem>>, vector<2x128xbf16>,
    } else {
    }
    return
  }
  func.func @transform_0(%arg0: i32) -> (i32, i32) {
    %c0_i32 = arith.constant 0 : i32
    %c0_i32_0 = arith.constant 0 : i32
    return %c0_i32, %arg0 : i32, i32
  }
  func.func @transform_1(%arg0: i32) -> (i32, i32) {
    %c0_i32 = arith.constant 0 : i32
    %c0_i32_0 = arith.constant 0 : i32
    return %arg0, %c0_i32 : i32, i32
  }
  func.func @transform_2(%arg0: i32) -> (i32, i32) {
    %c0_i32 = arith.constant 0 : i32
    %c0_i32_0 = arith.constant 0 : i32
    %c0_i32_1 = arith.constant 0 : i32
    return %c0_i32, %c0_i32_0 : i32, i32
  }
  func.func @transform_3(%arg0: i32) -> (i32, i32) {
    %c0_i32 = arith.constant 0 : i32
    %c0_i32_0 = arith.constant 0 : i32
    %c0_i32_1 = arith.constant 0 : i32
    return %c0_i32, %c0_i32_0 : i32, i32
  }
  func.func @transform_4(%arg0: i32) -> (i32, i32) {
    %c0_i32 = arith.constant 0 : i32
    %c0_i32_0 = arith.constant 0 : i32
    %c0_i32_1 = arith.constant 0 : i32
    return %c0_i32, %c0_i32_0 : i32, i32
  }
  func.func @transform_5(%arg0: i32) -> (i32, i32) {
    %c0_i32 = arith.constant 0 : i32
    %c0_i32_0 = arith.constant 0 : i32
    %c0_i32_1 = arith.constant 0 : i32
    return %c0_i32, %c0_i32_0 : i32, i32
  }
  func.func @transform_6(%arg0: i32) -> (i32, i32) {
    %c0_i32 = arith.constant 0 : i32
    %c0_i32_0 = arith.constant 0 : i32
    %c0_i32_1 = arith.constant 0 : i32
    return %c0_i32, %c0_i32_0 : i32, i32
  }
  func.func @transform_7(%arg0: i32) -> (i32, i32) {
    %c0_i32 = arith.constant 0 : i32
    %c0_i32_0 = arith.constant 0 : i32
    %c0_i32_1 = arith.constant 0 : i32
    return %c0_i32, %c0_i32_0 : i32, i32
  }
}

module attributes {stable_mosaic.version = 11 : i64} {
  func.func @_xconv_kernel(%arg0: i32, %arg1: memref<16x128xbf16, #tpu.memory_space<vmem>>, %arg2: memref<16x384xbf16, #tpu.memory_space<vmem>>, %arg3: memref<16x3xf32, #tpu.memory_space<vmem>>, %arg4: memref<128x256xbf16, #tpu.memory_space<vmem>>, %arg5: memref<384x256xbf16, #tpu.memory_space<vmem>>, %arg6: memref<3x256xf32, #tpu.memory_space<vmem>>, %arg7: memref<1x256xf32, #tpu.memory_space<vmem>>, %arg8: memref<256x384xbf16, #tpu.memory_space<vmem>>, %arg9: memref<1x384xf32, #tpu.memory_space<vmem>>, %arg10: memref<16x384xbf16, #tpu.memory_space<vmem>>) attributes {dimension_semantics = [#tpu.dimension_semantics<parallel>], iteration_bounds = array<i64: 1>, scalar_prefetch = 0 : i64, scratch_operands = 0 : i64, tpu.core_type = #tpu.core_type<tc>, window_params = [{transform_indices = @transform_0, window_bounds = array<i64: 16, 128>}, {transform_indices = @transform_1, window_bounds = array<i64: 16, 384>}, {transform_indices = @transform_2, window_bounds = array<i64: 16, 3>}, {pipeline_mode = #tpu.pipeline_mode<synchronous>, transform_indices = @transform_3, window_bounds = array<i64: 128, 256>}, {pipeline_mode = #tpu.pipeline_mode<synchronous>, transform_indices = @transform_4, window_bounds = array<i64: 384, 256>}, {pipeline_mode = #tpu.pipeline_mode<synchronous>, transform_indices = @transform_5, window_bounds = array<i64: 3, 256>}, {pipeline_mode = #tpu.pipeline_mode<synchronous>, transform_indices = @transform_6, window_bounds = array<i64: 1, 256>}, {pipeline_mode = #tpu.pipeline_mode<synchronous>, transform_indices = @transform_7, window_bounds = array<i64: 256, 384>}, {pipeline_mode = #tpu.pipeline_mode<synchronous>, transform_indices = @transform_8, window_bounds = array<i64: 1, 384>}, {transform_indices = @transform_9, window_bounds = array<i64: 16, 384>}]} {
    %cst = arith.constant 0.000000e+00 : f32
    %0 = vector.broadcast %cst : f32 to vector<16x256xf32>
    %c0 = arith.constant 0 : index
    %c0_0 = arith.constant 0 : index
    %1 = vector.load %arg1[%c0, %c0_0] : memref<16x128xbf16, #tpu.memory_space<vmem>>, vector<16x128xbf16>
    %c0_1 = arith.constant 0 : index
    %c0_2 = arith.constant 0 : index
    %2 = vector.load %arg4[%c0_1, %c0_2] : memref<128x256xbf16, #tpu.memory_space<vmem>>, vector<128x256xbf16>
    %cst_3 = arith.constant dense<0.000000e+00> : vector<16x256xf32>
    %3 = tpu.matmul %1, %2, %cst_3 {dimension_numbers = #tpu.dot_dimension_numbers<[1], [0], [0], [1], [0, 0, 1, 1], [], []>} : vector<16x128xbf16>, vector<128x256xbf16>, vector<16x256xf32> -> vector<16x256xf32>
    %4 = arith.addf %0, %3 : vector<16x256xf32>
    %c0_4 = arith.constant 0 : index
    %c0_5 = arith.constant 0 : index
    %5 = vector.load %arg2[%c0_4, %c0_5] : memref<16x384xbf16, #tpu.memory_space<vmem>>, vector<16x384xbf16>
    %c0_6 = arith.constant 0 : index
    %c0_7 = arith.constant 0 : index
    %6 = vector.load %arg5[%c0_6, %c0_7] : memref<384x256xbf16, #tpu.memory_space<vmem>>, vector<384x256xbf16>
    %cst_8 = arith.constant dense<0.000000e+00> : vector<16x256xf32>
    %7 = tpu.matmul %5, %6, %cst_8 {dimension_numbers = #tpu.dot_dimension_numbers<[1], [0], [0], [1], [0, 0, 1, 1], [], []>} : vector<16x384xbf16>, vector<384x256xbf16>, vector<16x256xf32> -> vector<16x256xf32>
    %8 = arith.addf %4, %7 : vector<16x256xf32>
    %c0_9 = arith.constant 0 : index
    %c0_10 = arith.constant 0 : index
    %9 = vector.load %arg3[%c0_9, %c0_10] : memref<16x3xf32, #tpu.memory_space<vmem>>, vector<16x3xf32>
    %c0_11 = arith.constant 0 : index
    %c0_12 = arith.constant 0 : index
    %10 = vector.load %arg6[%c0_11, %c0_12] : memref<3x256xf32, #tpu.memory_space<vmem>>, vector<3x256xf32>
    %11 = vector.extract_strided_slice %9 {offsets = [0, 0], sizes = [16, 1], strides = [1, 1]} : vector<16x3xf32> to vector<16x1xf32>
    %12 = vector.extract_strided_slice %10 {offsets = [0, 0], sizes = [1, 256], strides = [1, 1]} : vector<3x256xf32> to vector<1x256xf32>
    %13 = vector.broadcast %11 : vector<16x1xf32> to vector<16x256xf32>
    %14 = vector.broadcast %12 : vector<1x256xf32> to vector<16x256xf32>
    %15 = arith.mulf %13, %14 : vector<16x256xf32>
    %16 = arith.addf %8, %15 : vector<16x256xf32>
    %17 = vector.extract_strided_slice %9 {offsets = [0, 1], sizes = [16, 1], strides = [1, 1]} : vector<16x3xf32> to vector<16x1xf32>
    %18 = vector.extract_strided_slice %10 {offsets = [1, 0], sizes = [1, 256], strides = [1, 1]} : vector<3x256xf32> to vector<1x256xf32>
    %19 = vector.broadcast %17 : vector<16x1xf32> to vector<16x256xf32>
    %20 = vector.broadcast %18 : vector<1x256xf32> to vector<16x256xf32>
    %21 = arith.mulf %19, %20 : vector<16x256xf32>
    %22 = arith.addf %16, %21 : vector<16x256xf32>
    %23 = vector.extract_strided_slice %9 {offsets = [0, 2], sizes = [16, 1], strides = [1, 1]} : vector<16x3xf32> to vector<16x1xf32>
    %24 = vector.extract_strided_slice %10 {offsets = [2, 0], sizes = [1, 256], strides = [1, 1]} : vector<3x256xf32> to vector<1x256xf32>
    %25 = vector.broadcast %23 : vector<16x1xf32> to vector<16x256xf32>
    %26 = vector.broadcast %24 : vector<1x256xf32> to vector<16x256xf32>
    %27 = arith.mulf %25, %26 : vector<16x256xf32>
    %28 = arith.addf %22, %27 : vector<16x256xf32>
    %c0_13 = arith.constant 0 : index
    %c0_14 = arith.constant 0 : index
    %29 = vector.load %arg7[%c0_13, %c0_14] : memref<1x256xf32, #tpu.memory_space<vmem>>, vector<1x256xf32>
    %30 = vector.broadcast %29 : vector<1x256xf32> to vector<16x256xf32>
    %31 = arith.addf %28, %30 : vector<16x256xf32>
    %cst_15 = arith.constant 0.000000e+00 : f32
    %32 = vector.broadcast %cst_15 : f32 to vector<16x256xf32>
    %33 = arith.maximumf %31, %32 : vector<16x256xf32>
    %34 = arith.truncf %33 : vector<16x256xf32> to vector<16x256xbf16>
    %c0_16 = arith.constant 0 : index
    %c0_17 = arith.constant 0 : index
    %35 = vector.load %arg8[%c0_16, %c0_17] : memref<256x384xbf16, #tpu.memory_space<vmem>>, vector<256x384xbf16>
    %cst_18 = arith.constant dense<0.000000e+00> : vector<16x384xf32>
    %36 = tpu.matmul %34, %35, %cst_18 {dimension_numbers = #tpu.dot_dimension_numbers<[1], [0], [0], [1], [0, 0, 1, 1], [], []>} : vector<16x256xbf16>, vector<256x384xbf16>, vector<16x384xf32> -> vector<16x384xf32>
    %c0_19 = arith.constant 0 : index
    %c0_20 = arith.constant 0 : index
    %37 = vector.load %arg9[%c0_19, %c0_20] : memref<1x384xf32, #tpu.memory_space<vmem>>, vector<1x384xf32>
    %38 = vector.broadcast %37 : vector<1x384xf32> to vector<16x384xf32>
    %39 = arith.addf %36, %38 : vector<16x384xf32>
    %cst_21 = arith.constant 0.000000e+00 : f32
    %40 = vector.broadcast %cst_21 : f32 to vector<16x384xf32>
    %41 = arith.maximumf %39, %40 : vector<16x384xf32>
    %42 = arith.truncf %41 : vector<16x384xf32> to vector<16x384xbf16>
    %c0_22 = arith.constant 0 : index
    %c0_23 = arith.constant 0 : index
    %43 = vector.load %arg10[%c0_22, %c0_23] : memref<16x384xbf16, #tpu.memory_space<vmem>>, vector<16x384xbf16>
    tpu.vector_store %arg10[%c0_22, %c0_23], %42 {strides = array<i32>} : memref<16x384xbf16, #tpu.memory_space<vmem>>, vector<16x384xbf16>,
    return
  }
  func.func @transform_0(%arg0: i32) -> (i32, i32) {
    %c0_i32 = arith.constant 0 : i32
    %c0_i32_0 = arith.constant 0 : i32
    return %arg0, %c0_i32 : i32, i32
  }
  func.func @transform_1(%arg0: i32) -> (i32, i32) {
    %c0_i32 = arith.constant 0 : i32
    %c0_i32_0 = arith.constant 0 : i32
    return %arg0, %c0_i32 : i32, i32
  }
  func.func @transform_2(%arg0: i32) -> (i32, i32) {
    %c0_i32 = arith.constant 0 : i32
    %c0_i32_0 = arith.constant 0 : i32
    return %arg0, %c0_i32 : i32, i32
  }
  func.func @transform_3(%arg0: i32) -> (i32, i32) {
    %c0_i32 = arith.constant 0 : i32
    %c0_i32_0 = arith.constant 0 : i32
    %c0_i32_1 = arith.constant 0 : i32
    return %c0_i32, %c0_i32_0 : i32, i32
  }
  func.func @transform_4(%arg0: i32) -> (i32, i32) {
    %c0_i32 = arith.constant 0 : i32
    %c0_i32_0 = arith.constant 0 : i32
    %c0_i32_1 = arith.constant 0 : i32
    return %c0_i32, %c0_i32_0 : i32, i32
  }
  func.func @transform_5(%arg0: i32) -> (i32, i32) {
    %c0_i32 = arith.constant 0 : i32
    %c0_i32_0 = arith.constant 0 : i32
    %c0_i32_1 = arith.constant 0 : i32
    return %c0_i32, %c0_i32_0 : i32, i32
  }
  func.func @transform_6(%arg0: i32) -> (i32, i32) {
    %c0_i32 = arith.constant 0 : i32
    %c0_i32_0 = arith.constant 0 : i32
    %c0_i32_1 = arith.constant 0 : i32
    return %c0_i32, %c0_i32_0 : i32, i32
  }
  func.func @transform_7(%arg0: i32) -> (i32, i32) {
    %c0_i32 = arith.constant 0 : i32
    %c0_i32_0 = arith.constant 0 : i32
    %c0_i32_1 = arith.constant 0 : i32
    return %c0_i32, %c0_i32_0 : i32, i32
  }
  func.func @transform_8(%arg0: i32) -> (i32, i32) {
    %c0_i32 = arith.constant 0 : i32
    %c0_i32_0 = arith.constant 0 : i32
    %c0_i32_1 = arith.constant 0 : i32
    return %c0_i32, %c0_i32_0 : i32, i32
  }
  func.func @transform_9(%arg0: i32) -> (i32, i32) {
    %c0_i32 = arith.constant 0 : i32
    %c0_i32_0 = arith.constant 0 : i32
    return %arg0, %c0_i32 : i32, i32
  }
}

module attributes {stable_mosaic.version = 11 : i64} {
  func.func @_xconv_kernel(%arg0: i32, %arg1: memref<16x384xbf16, #tpu.memory_space<vmem>>, %arg2: memref<16x192xbf16, #tpu.memory_space<vmem>>, %arg3: memref<16x3xf32, #tpu.memory_space<vmem>>, %arg4: memref<384x256xbf16, #tpu.memory_space<vmem>>, %arg5: memref<192x256xbf16, #tpu.memory_space<vmem>>, %arg6: memref<3x256xf32, #tpu.memory_space<vmem>>, %arg7: memref<1x256xf32, #tpu.memory_space<vmem>>, %arg8: memref<256x192xbf16, #tpu.memory_space<vmem>>, %arg9: memref<1x192xf32, #tpu.memory_space<vmem>>, %arg10: memref<16x192xbf16, #tpu.memory_space<vmem>>) attributes {dimension_semantics = [#tpu.dimension_semantics<parallel>], iteration_bounds = array<i64: 1>, scalar_prefetch = 0 : i64, scratch_operands = 0 : i64, tpu.core_type = #tpu.core_type<tc>, window_params = [{transform_indices = @transform_0, window_bounds = array<i64: 16, 384>}, {transform_indices = @transform_1, window_bounds = array<i64: 16, 192>}, {transform_indices = @transform_2, window_bounds = array<i64: 16, 3>}, {pipeline_mode = #tpu.pipeline_mode<synchronous>, transform_indices = @transform_3, window_bounds = array<i64: 384, 256>}, {pipeline_mode = #tpu.pipeline_mode<synchronous>, transform_indices = @transform_4, window_bounds = array<i64: 192, 256>}, {pipeline_mode = #tpu.pipeline_mode<synchronous>, transform_indices = @transform_5, window_bounds = array<i64: 3, 256>}, {pipeline_mode = #tpu.pipeline_mode<synchronous>, transform_indices = @transform_6, window_bounds = array<i64: 1, 256>}, {pipeline_mode = #tpu.pipeline_mode<synchronous>, transform_indices = @transform_7, window_bounds = array<i64: 256, 192>}, {pipeline_mode = #tpu.pipeline_mode<synchronous>, transform_indices = @transform_8, window_bounds = array<i64: 1, 192>}, {transform_indices = @transform_9, window_bounds = array<i64: 16, 192>}]} {
    %cst = arith.constant 0.000000e+00 : f32
    %0 = vector.broadcast %cst : f32 to vector<16x256xf32>
    %c0 = arith.constant 0 : index
    %c0_0 = arith.constant 0 : index
    %1 = vector.load %arg1[%c0, %c0_0] : memref<16x384xbf16, #tpu.memory_space<vmem>>, vector<16x384xbf16>
    %c0_1 = arith.constant 0 : index
    %c0_2 = arith.constant 0 : index
    %2 = vector.load %arg4[%c0_1, %c0_2] : memref<384x256xbf16, #tpu.memory_space<vmem>>, vector<384x256xbf16>
    %cst_3 = arith.constant dense<0.000000e+00> : vector<16x256xf32>
    %3 = tpu.matmul %1, %2, %cst_3 {dimension_numbers = #tpu.dot_dimension_numbers<[1], [0], [0], [1], [0, 0, 1, 1], [], []>} : vector<16x384xbf16>, vector<384x256xbf16>, vector<16x256xf32> -> vector<16x256xf32>
    %4 = arith.addf %0, %3 : vector<16x256xf32>
    %c0_4 = arith.constant 0 : index
    %c0_5 = arith.constant 0 : index
    %5 = vector.load %arg2[%c0_4, %c0_5] : memref<16x192xbf16, #tpu.memory_space<vmem>>, vector<16x192xbf16>
    %c0_6 = arith.constant 0 : index
    %c0_7 = arith.constant 0 : index
    %6 = vector.load %arg5[%c0_6, %c0_7] : memref<192x256xbf16, #tpu.memory_space<vmem>>, vector<192x256xbf16>
    %cst_8 = arith.constant dense<0.000000e+00> : vector<16x256xf32>
    %7 = tpu.matmul %5, %6, %cst_8 {dimension_numbers = #tpu.dot_dimension_numbers<[1], [0], [0], [1], [0, 0, 1, 1], [], []>} : vector<16x192xbf16>, vector<192x256xbf16>, vector<16x256xf32> -> vector<16x256xf32>
    %8 = arith.addf %4, %7 : vector<16x256xf32>
    %c0_9 = arith.constant 0 : index
    %c0_10 = arith.constant 0 : index
    %9 = vector.load %arg3[%c0_9, %c0_10] : memref<16x3xf32, #tpu.memory_space<vmem>>, vector<16x3xf32>
    %c0_11 = arith.constant 0 : index
    %c0_12 = arith.constant 0 : index
    %10 = vector.load %arg6[%c0_11, %c0_12] : memref<3x256xf32, #tpu.memory_space<vmem>>, vector<3x256xf32>
    %11 = vector.extract_strided_slice %9 {offsets = [0, 0], sizes = [16, 1], strides = [1, 1]} : vector<16x3xf32> to vector<16x1xf32>
    %12 = vector.extract_strided_slice %10 {offsets = [0, 0], sizes = [1, 256], strides = [1, 1]} : vector<3x256xf32> to vector<1x256xf32>
    %13 = vector.broadcast %11 : vector<16x1xf32> to vector<16x256xf32>
    %14 = vector.broadcast %12 : vector<1x256xf32> to vector<16x256xf32>
    %15 = arith.mulf %13, %14 : vector<16x256xf32>
    %16 = arith.addf %8, %15 : vector<16x256xf32>
    %17 = vector.extract_strided_slice %9 {offsets = [0, 1], sizes = [16, 1], strides = [1, 1]} : vector<16x3xf32> to vector<16x1xf32>
    %18 = vector.extract_strided_slice %10 {offsets = [1, 0], sizes = [1, 256], strides = [1, 1]} : vector<3x256xf32> to vector<1x256xf32>
    %19 = vector.broadcast %17 : vector<16x1xf32> to vector<16x256xf32>
    %20 = vector.broadcast %18 : vector<1x256xf32> to vector<16x256xf32>
    %21 = arith.mulf %19, %20 : vector<16x256xf32>
    %22 = arith.addf %16, %21 : vector<16x256xf32>
    %23 = vector.extract_strided_slice %9 {offsets = [0, 2], sizes = [16, 1], strides = [1, 1]} : vector<16x3xf32> to vector<16x1xf32>
    %24 = vector.extract_strided_slice %10 {offsets = [2, 0], sizes = [1, 256], strides = [1, 1]} : vector<3x256xf32> to vector<1x256xf32>
    %25 = vector.broadcast %23 : vector<16x1xf32> to vector<16x256xf32>
    %26 = vector.broadcast %24 : vector<1x256xf32> to vector<16x256xf32>
    %27 = arith.mulf %25, %26 : vector<16x256xf32>
    %28 = arith.addf %22, %27 : vector<16x256xf32>
    %c0_13 = arith.constant 0 : index
    %c0_14 = arith.constant 0 : index
    %29 = vector.load %arg7[%c0_13, %c0_14] : memref<1x256xf32, #tpu.memory_space<vmem>>, vector<1x256xf32>
    %30 = vector.broadcast %29 : vector<1x256xf32> to vector<16x256xf32>
    %31 = arith.addf %28, %30 : vector<16x256xf32>
    %cst_15 = arith.constant 0.000000e+00 : f32
    %32 = vector.broadcast %cst_15 : f32 to vector<16x256xf32>
    %33 = arith.maximumf %31, %32 : vector<16x256xf32>
    %34 = arith.truncf %33 : vector<16x256xf32> to vector<16x256xbf16>
    %c0_16 = arith.constant 0 : index
    %c0_17 = arith.constant 0 : index
    %35 = vector.load %arg8[%c0_16, %c0_17] : memref<256x192xbf16, #tpu.memory_space<vmem>>, vector<256x192xbf16>
    %cst_18 = arith.constant dense<0.000000e+00> : vector<16x192xf32>
    %36 = tpu.matmul %34, %35, %cst_18 {dimension_numbers = #tpu.dot_dimension_numbers<[1], [0], [0], [1], [0, 0, 1, 1], [], []>} : vector<16x256xbf16>, vector<256x192xbf16>, vector<16x192xf32> -> vector<16x192xf32>
    %c0_19 = arith.constant 0 : index
    %c0_20 = arith.constant 0 : index
    %37 = vector.load %arg9[%c0_19, %c0_20] : memref<1x192xf32, #tpu.memory_space<vmem>>, vector<1x192xf32>
    %38 = vector.broadcast %37 : vector<1x192xf32> to vector<16x192xf32>
    %39 = arith.addf %36, %38 : vector<16x192xf32>
    %cst_21 = arith.constant 0.000000e+00 : f32
    %40 = vector.broadcast %cst_21 : f32 to vector<16x192xf32>
    %41 = arith.maximumf %39, %40 : vector<16x192xf32>
    %42 = arith.truncf %41 : vector<16x192xf32> to vector<16x192xbf16>
    %c0_22 = arith.constant 0 : index
    %c0_23 = arith.constant 0 : index
    %43 = vector.load %arg10[%c0_22, %c0_23] : memref<16x192xbf16, #tpu.memory_space<vmem>>, vector<16x192xbf16>
    tpu.vector_store %arg10[%c0_22, %c0_23], %42 {strides = array<i32>} : memref<16x192xbf16, #tpu.memory_space<vmem>>, vector<16x192xbf16>,
    return
  }
  func.func @transform_0(%arg0: i32) -> (i32, i32) {
    %c0_i32 = arith.constant 0 : i32
    %c0_i32_0 = arith.constant 0 : i32
    return %arg0, %c0_i32 : i32, i32
  }
  func.func @transform_1(%arg0: i32) -> (i32, i32) {
    %c0_i32 = arith.constant 0 : i32
    %c0_i32_0 = arith.constant 0 : i32
    return %arg0, %c0_i32 : i32, i32
  }
  func.func @transform_2(%arg0: i32) -> (i32, i32) {
    %c0_i32 = arith.constant 0 : i32
    %c0_i32_0 = arith.constant 0 : i32
    return %arg0, %c0_i32 : i32, i32
  }
  func.func @transform_3(%arg0: i32) -> (i32, i32) {
    %c0_i32 = arith.constant 0 : i32
    %c0_i32_0 = arith.constant 0 : i32
    %c0_i32_1 = arith.constant 0 : i32
    return %c0_i32, %c0_i32_0 : i32, i32
  }
  func.func @transform_4(%arg0: i32) -> (i32, i32) {
    %c0_i32 = arith.constant 0 : i32
    %c0_i32_0 = arith.constant 0 : i32
    %c0_i32_1 = arith.constant 0 : i32
    return %c0_i32, %c0_i32_0 : i32, i32
  }
  func.func @transform_5(%arg0: i32) -> (i32, i32) {
    %c0_i32 = arith.constant 0 : i32
    %c0_i32_0 = arith.constant 0 : i32
    %c0_i32_1 = arith.constant 0 : i32
    return %c0_i32, %c0_i32_0 : i32, i32
  }
  func.func @transform_6(%arg0: i32) -> (i32, i32) {
    %c0_i32 = arith.constant 0 : i32
    %c0_i32_0 = arith.constant 0 : i32
    %c0_i32_1 = arith.constant 0 : i32
    return %c0_i32, %c0_i32_0 : i32, i32
  }
  func.func @transform_7(%arg0: i32) -> (i32, i32) {
    %c0_i32 = arith.constant 0 : i32
    %c0_i32_0 = arith.constant 0 : i32
    %c0_i32_1 = arith.constant 0 : i32
    return %c0_i32, %c0_i32_0 : i32, i32
  }
  func.func @transform_8(%arg0: i32) -> (i32, i32) {
    %c0_i32 = arith.constant 0 : i32
    %c0_i32_0 = arith.constant 0 : i32
    %c0_i32_1 = arith.constant 0 : i32
    return %c0_i32, %c0_i32_0 : i32, i32
  }
  func.func @transform_9(%arg0: i32) -> (i32, i32) {
    %c0_i32 = arith.constant 0 : i32
    %c0_i32_0 = arith.constant 0 : i32
    return %arg0, %c0_i32 : i32, i32
  }
}

module attributes {stable_mosaic.version = 11 : i64} {
  func.func @_xconv_kernel(%arg0: i32, %arg1: memref<24x192xbf16, #tpu.memory_space<vmem>>, %arg2: memref<24x96xbf16, #tpu.memory_space<vmem>>, %arg3: memref<24x3xf32, #tpu.memory_space<vmem>>, %arg4: memref<192x256xbf16, #tpu.memory_space<vmem>>, %arg5: memref<96x256xbf16, #tpu.memory_space<vmem>>, %arg6: memref<3x256xf32, #tpu.memory_space<vmem>>, %arg7: memref<1x256xf32, #tpu.memory_space<vmem>>, %arg8: memref<256x96xbf16, #tpu.memory_space<vmem>>, %arg9: memref<1x96xf32, #tpu.memory_space<vmem>>, %arg10: memref<24x96xbf16, #tpu.memory_space<vmem>>) attributes {dimension_semantics = [#tpu.dimension_semantics<parallel>], iteration_bounds = array<i64: 1>, scalar_prefetch = 0 : i64, scratch_operands = 0 : i64, tpu.core_type = #tpu.core_type<tc>, window_params = [{transform_indices = @transform_0, window_bounds = array<i64: 24, 192>}, {transform_indices = @transform_1, window_bounds = array<i64: 24, 96>}, {transform_indices = @transform_2, window_bounds = array<i64: 24, 3>}, {pipeline_mode = #tpu.pipeline_mode<synchronous>, transform_indices = @transform_3, window_bounds = array<i64: 192, 256>}, {pipeline_mode = #tpu.pipeline_mode<synchronous>, transform_indices = @transform_4, window_bounds = array<i64: 96, 256>}, {pipeline_mode = #tpu.pipeline_mode<synchronous>, transform_indices = @transform_5, window_bounds = array<i64: 3, 256>}, {pipeline_mode = #tpu.pipeline_mode<synchronous>, transform_indices = @transform_6, window_bounds = array<i64: 1, 256>}, {pipeline_mode = #tpu.pipeline_mode<synchronous>, transform_indices = @transform_7, window_bounds = array<i64: 256, 96>}, {pipeline_mode = #tpu.pipeline_mode<synchronous>, transform_indices = @transform_8, window_bounds = array<i64: 1, 96>}, {transform_indices = @transform_9, window_bounds = array<i64: 24, 96>}]} {
    %cst = arith.constant 0.000000e+00 : f32
    %0 = vector.broadcast %cst : f32 to vector<24x256xf32>
    %c0 = arith.constant 0 : index
    %c0_0 = arith.constant 0 : index
    %1 = vector.load %arg1[%c0, %c0_0] : memref<24x192xbf16, #tpu.memory_space<vmem>>, vector<24x192xbf16>
    %c0_1 = arith.constant 0 : index
    %c0_2 = arith.constant 0 : index
    %2 = vector.load %arg4[%c0_1, %c0_2] : memref<192x256xbf16, #tpu.memory_space<vmem>>, vector<192x256xbf16>
    %cst_3 = arith.constant dense<0.000000e+00> : vector<24x256xf32>
    %3 = tpu.matmul %1, %2, %cst_3 {dimension_numbers = #tpu.dot_dimension_numbers<[1], [0], [0], [1], [0, 0, 1, 1], [], []>} : vector<24x192xbf16>, vector<192x256xbf16>, vector<24x256xf32> -> vector<24x256xf32>
    %4 = arith.addf %0, %3 : vector<24x256xf32>
    %c0_4 = arith.constant 0 : index
    %c0_5 = arith.constant 0 : index
    %5 = vector.load %arg2[%c0_4, %c0_5] : memref<24x96xbf16, #tpu.memory_space<vmem>>, vector<24x96xbf16>
    %c0_6 = arith.constant 0 : index
    %c0_7 = arith.constant 0 : index
    %6 = vector.load %arg5[%c0_6, %c0_7] : memref<96x256xbf16, #tpu.memory_space<vmem>>, vector<96x256xbf16>
    %cst_8 = arith.constant dense<0.000000e+00> : vector<24x256xf32>
    %7 = tpu.matmul %5, %6, %cst_8 {dimension_numbers = #tpu.dot_dimension_numbers<[1], [0], [0], [1], [0, 0, 1, 1], [], []>} : vector<24x96xbf16>, vector<96x256xbf16>, vector<24x256xf32> -> vector<24x256xf32>
    %8 = arith.addf %4, %7 : vector<24x256xf32>
    %c0_9 = arith.constant 0 : index
    %c0_10 = arith.constant 0 : index
    %9 = vector.load %arg3[%c0_9, %c0_10] : memref<24x3xf32, #tpu.memory_space<vmem>>, vector<24x3xf32>
    %c0_11 = arith.constant 0 : index
    %c0_12 = arith.constant 0 : index
    %10 = vector.load %arg6[%c0_11, %c0_12] : memref<3x256xf32, #tpu.memory_space<vmem>>, vector<3x256xf32>
    %11 = vector.extract_strided_slice %9 {offsets = [0, 0], sizes = [24, 1], strides = [1, 1]} : vector<24x3xf32> to vector<24x1xf32>
    %12 = vector.extract_strided_slice %10 {offsets = [0, 0], sizes = [1, 256], strides = [1, 1]} : vector<3x256xf32> to vector<1x256xf32>
    %13 = vector.broadcast %11 : vector<24x1xf32> to vector<24x256xf32>
    %14 = vector.broadcast %12 : vector<1x256xf32> to vector<24x256xf32>
    %15 = arith.mulf %13, %14 : vector<24x256xf32>
    %16 = arith.addf %8, %15 : vector<24x256xf32>
    %17 = vector.extract_strided_slice %9 {offsets = [0, 1], sizes = [24, 1], strides = [1, 1]} : vector<24x3xf32> to vector<24x1xf32>
    %18 = vector.extract_strided_slice %10 {offsets = [1, 0], sizes = [1, 256], strides = [1, 1]} : vector<3x256xf32> to vector<1x256xf32>
    %19 = vector.broadcast %17 : vector<24x1xf32> to vector<24x256xf32>
    %20 = vector.broadcast %18 : vector<1x256xf32> to vector<24x256xf32>
    %21 = arith.mulf %19, %20 : vector<24x256xf32>
    %22 = arith.addf %16, %21 : vector<24x256xf32>
    %23 = vector.extract_strided_slice %9 {offsets = [0, 2], sizes = [24, 1], strides = [1, 1]} : vector<24x3xf32> to vector<24x1xf32>
    %24 = vector.extract_strided_slice %10 {offsets = [2, 0], sizes = [1, 256], strides = [1, 1]} : vector<3x256xf32> to vector<1x256xf32>
    %25 = vector.broadcast %23 : vector<24x1xf32> to vector<24x256xf32>
    %26 = vector.broadcast %24 : vector<1x256xf32> to vector<24x256xf32>
    %27 = arith.mulf %25, %26 : vector<24x256xf32>
    %28 = arith.addf %22, %27 : vector<24x256xf32>
    %c0_13 = arith.constant 0 : index
    %c0_14 = arith.constant 0 : index
    %29 = vector.load %arg7[%c0_13, %c0_14] : memref<1x256xf32, #tpu.memory_space<vmem>>, vector<1x256xf32>
    %30 = vector.broadcast %29 : vector<1x256xf32> to vector<24x256xf32>
    %31 = arith.addf %28, %30 : vector<24x256xf32>
    %cst_15 = arith.constant 0.000000e+00 : f32
    %32 = vector.broadcast %cst_15 : f32 to vector<24x256xf32>
    %33 = arith.maximumf %31, %32 : vector<24x256xf32>
    %34 = arith.truncf %33 : vector<24x256xf32> to vector<24x256xbf16>
    %c0_16 = arith.constant 0 : index
    %c0_17 = arith.constant 0 : index
    %35 = vector.load %arg8[%c0_16, %c0_17] : memref<256x96xbf16, #tpu.memory_space<vmem>>, vector<256x96xbf16>
    %cst_18 = arith.constant dense<0.000000e+00> : vector<24x96xf32>
    %36 = tpu.matmul %34, %35, %cst_18 {dimension_numbers = #tpu.dot_dimension_numbers<[1], [0], [0], [1], [0, 0, 1, 1], [], []>} : vector<24x256xbf16>, vector<256x96xbf16>, vector<24x96xf32> -> vector<24x96xf32>
    %c0_19 = arith.constant 0 : index
    %c0_20 = arith.constant 0 : index
    %37 = vector.load %arg9[%c0_19, %c0_20] : memref<1x96xf32, #tpu.memory_space<vmem>>, vector<1x96xf32>
    %38 = vector.broadcast %37 : vector<1x96xf32> to vector<24x96xf32>
    %39 = arith.addf %36, %38 : vector<24x96xf32>
    %cst_21 = arith.constant 0.000000e+00 : f32
    %40 = vector.broadcast %cst_21 : f32 to vector<24x96xf32>
    %41 = arith.maximumf %39, %40 : vector<24x96xf32>
    %42 = arith.truncf %41 : vector<24x96xf32> to vector<24x96xbf16>
    %c0_22 = arith.constant 0 : index
    %c0_23 = arith.constant 0 : index
    %43 = vector.load %arg10[%c0_22, %c0_23] : memref<24x96xbf16, #tpu.memory_space<vmem>>, vector<24x96xbf16>
    tpu.vector_store %arg10[%c0_22, %c0_23], %42 {strides = array<i32>} : memref<24x96xbf16, #tpu.memory_space<vmem>>, vector<24x96xbf16>,
    return
  }
  func.func @transform_0(%arg0: i32) -> (i32, i32) {
    %c0_i32 = arith.constant 0 : i32
    %c0_i32_0 = arith.constant 0 : i32
    return %arg0, %c0_i32 : i32, i32
  }
  func.func @transform_1(%arg0: i32) -> (i32, i32) {
    %c0_i32 = arith.constant 0 : i32
    %c0_i32_0 = arith.constant 0 : i32
    return %arg0, %c0_i32 : i32, i32
  }
  func.func @transform_2(%arg0: i32) -> (i32, i32) {
    %c0_i32 = arith.constant 0 : i32
    %c0_i32_0 = arith.constant 0 : i32
    return %arg0, %c0_i32 : i32, i32
  }
  func.func @transform_3(%arg0: i32) -> (i32, i32) {
    %c0_i32 = arith.constant 0 : i32
    %c0_i32_0 = arith.constant 0 : i32
    %c0_i32_1 = arith.constant 0 : i32
    return %c0_i32, %c0_i32_0 : i32, i32
  }
  func.func @transform_4(%arg0: i32) -> (i32, i32) {
    %c0_i32 = arith.constant 0 : i32
    %c0_i32_0 = arith.constant 0 : i32
    %c0_i32_1 = arith.constant 0 : i32
    return %c0_i32, %c0_i32_0 : i32, i32
  }
  func.func @transform_5(%arg0: i32) -> (i32, i32) {
    %c0_i32 = arith.constant 0 : i32
    %c0_i32_0 = arith.constant 0 : i32
    %c0_i32_1 = arith.constant 0 : i32
    return %c0_i32, %c0_i32_0 : i32, i32
  }
  func.func @transform_6(%arg0: i32) -> (i32, i32) {
    %c0_i32 = arith.constant 0 : i32
    %c0_i32_0 = arith.constant 0 : i32
    %c0_i32_1 = arith.constant 0 : i32
    return %c0_i32, %c0_i32_0 : i32, i32
  }
  func.func @transform_7(%arg0: i32) -> (i32, i32) {
    %c0_i32 = arith.constant 0 : i32
    %c0_i32_0 = arith.constant 0 : i32
    %c0_i32_1 = arith.constant 0 : i32
    return %c0_i32, %c0_i32_0 : i32, i32
  }
  func.func @transform_8(%arg0: i32) -> (i32, i32) {
    %c0_i32 = arith.constant 0 : i32
    %c0_i32_0 = arith.constant 0 : i32
    %c0_i32_1 = arith.constant 0 : i32
    return %c0_i32, %c0_i32_0 : i32, i32
  }
  func.func @transform_9(%arg0: i32) -> (i32, i32) {
    %c0_i32 = arith.constant 0 : i32
    %c0_i32_0 = arith.constant 0 : i32
    return %arg0, %c0_i32 : i32, i32
  }
}

module attributes {stable_mosaic.version = 11 : i64} {
  func.func @_xconv_kernel(%arg0: i32, %arg1: memref<64x96xbf16, #tpu.memory_space<vmem>>, %arg2: memref<64x64xbf16, #tpu.memory_space<vmem>>, %arg3: memref<64x3xf32, #tpu.memory_space<vmem>>, %arg4: memref<96x256xbf16, #tpu.memory_space<vmem>>, %arg5: memref<64x256xbf16, #tpu.memory_space<vmem>>, %arg6: memref<3x256xf32, #tpu.memory_space<vmem>>, %arg7: memref<1x256xf32, #tpu.memory_space<vmem>>, %arg8: memref<256x96xbf16, #tpu.memory_space<vmem>>, %arg9: memref<1x96xf32, #tpu.memory_space<vmem>>, %arg10: memref<64x96xbf16, #tpu.memory_space<vmem>>) attributes {dimension_semantics = [#tpu.dimension_semantics<parallel>], iteration_bounds = array<i64: 1>, scalar_prefetch = 0 : i64, scratch_operands = 0 : i64, tpu.core_type = #tpu.core_type<tc>, window_params = [{transform_indices = @transform_0, window_bounds = array<i64: 64, 96>}, {transform_indices = @transform_1, window_bounds = array<i64: 64, 64>}, {transform_indices = @transform_2, window_bounds = array<i64: 64, 3>}, {pipeline_mode = #tpu.pipeline_mode<synchronous>, transform_indices = @transform_3, window_bounds = array<i64: 96, 256>}, {pipeline_mode = #tpu.pipeline_mode<synchronous>, transform_indices = @transform_4, window_bounds = array<i64: 64, 256>}, {pipeline_mode = #tpu.pipeline_mode<synchronous>, transform_indices = @transform_5, window_bounds = array<i64: 3, 256>}, {pipeline_mode = #tpu.pipeline_mode<synchronous>, transform_indices = @transform_6, window_bounds = array<i64: 1, 256>}, {pipeline_mode = #tpu.pipeline_mode<synchronous>, transform_indices = @transform_7, window_bounds = array<i64: 256, 96>}, {pipeline_mode = #tpu.pipeline_mode<synchronous>, transform_indices = @transform_8, window_bounds = array<i64: 1, 96>}, {transform_indices = @transform_9, window_bounds = array<i64: 64, 96>}]} {
    %cst = arith.constant 0.000000e+00 : f32
    %0 = vector.broadcast %cst : f32 to vector<64x256xf32>
    %c0 = arith.constant 0 : index
    %c0_0 = arith.constant 0 : index
    %1 = vector.load %arg1[%c0, %c0_0] : memref<64x96xbf16, #tpu.memory_space<vmem>>, vector<64x96xbf16>
    %c0_1 = arith.constant 0 : index
    %c0_2 = arith.constant 0 : index
    %2 = vector.load %arg4[%c0_1, %c0_2] : memref<96x256xbf16, #tpu.memory_space<vmem>>, vector<96x256xbf16>
    %cst_3 = arith.constant dense<0.000000e+00> : vector<64x256xf32>
    %3 = tpu.matmul %1, %2, %cst_3 {dimension_numbers = #tpu.dot_dimension_numbers<[1], [0], [0], [1], [0, 0, 1, 1], [], []>} : vector<64x96xbf16>, vector<96x256xbf16>, vector<64x256xf32> -> vector<64x256xf32>
    %4 = arith.addf %0, %3 : vector<64x256xf32>
    %c0_4 = arith.constant 0 : index
    %c0_5 = arith.constant 0 : index
    %5 = vector.load %arg2[%c0_4, %c0_5] : memref<64x64xbf16, #tpu.memory_space<vmem>>, vector<64x64xbf16>
    %c0_6 = arith.constant 0 : index
    %c0_7 = arith.constant 0 : index
    %6 = vector.load %arg5[%c0_6, %c0_7] : memref<64x256xbf16, #tpu.memory_space<vmem>>, vector<64x256xbf16>
    %cst_8 = arith.constant dense<0.000000e+00> : vector<64x256xf32>
    %7 = tpu.matmul %5, %6, %cst_8 {dimension_numbers = #tpu.dot_dimension_numbers<[1], [0], [0], [1], [0, 0, 1, 1], [], []>} : vector<64x64xbf16>, vector<64x256xbf16>, vector<64x256xf32> -> vector<64x256xf32>
    %8 = arith.addf %4, %7 : vector<64x256xf32>
    %c0_9 = arith.constant 0 : index
    %c0_10 = arith.constant 0 : index
    %9 = vector.load %arg3[%c0_9, %c0_10] : memref<64x3xf32, #tpu.memory_space<vmem>>, vector<64x3xf32>
    %c0_11 = arith.constant 0 : index
    %c0_12 = arith.constant 0 : index
    %10 = vector.load %arg6[%c0_11, %c0_12] : memref<3x256xf32, #tpu.memory_space<vmem>>, vector<3x256xf32>
    %11 = vector.extract_strided_slice %9 {offsets = [0, 0], sizes = [64, 1], strides = [1, 1]} : vector<64x3xf32> to vector<64x1xf32>
    %12 = vector.extract_strided_slice %10 {offsets = [0, 0], sizes = [1, 256], strides = [1, 1]} : vector<3x256xf32> to vector<1x256xf32>
    %13 = vector.broadcast %11 : vector<64x1xf32> to vector<64x256xf32>
    %14 = vector.broadcast %12 : vector<1x256xf32> to vector<64x256xf32>
    %15 = arith.mulf %13, %14 : vector<64x256xf32>
    %16 = arith.addf %8, %15 : vector<64x256xf32>
    %17 = vector.extract_strided_slice %9 {offsets = [0, 1], sizes = [64, 1], strides = [1, 1]} : vector<64x3xf32> to vector<64x1xf32>
    %18 = vector.extract_strided_slice %10 {offsets = [1, 0], sizes = [1, 256], strides = [1, 1]} : vector<3x256xf32> to vector<1x256xf32>
    %19 = vector.broadcast %17 : vector<64x1xf32> to vector<64x256xf32>
    %20 = vector.broadcast %18 : vector<1x256xf32> to vector<64x256xf32>
    %21 = arith.mulf %19, %20 : vector<64x256xf32>
    %22 = arith.addf %16, %21 : vector<64x256xf32>
    %23 = vector.extract_strided_slice %9 {offsets = [0, 2], sizes = [64, 1], strides = [1, 1]} : vector<64x3xf32> to vector<64x1xf32>
    %24 = vector.extract_strided_slice %10 {offsets = [2, 0], sizes = [1, 256], strides = [1, 1]} : vector<3x256xf32> to vector<1x256xf32>
    %25 = vector.broadcast %23 : vector<64x1xf32> to vector<64x256xf32>
    %26 = vector.broadcast %24 : vector<1x256xf32> to vector<64x256xf32>
    %27 = arith.mulf %25, %26 : vector<64x256xf32>
    %28 = arith.addf %22, %27 : vector<64x256xf32>
    %c0_13 = arith.constant 0 : index
    %c0_14 = arith.constant 0 : index
    %29 = vector.load %arg7[%c0_13, %c0_14] : memref<1x256xf32, #tpu.memory_space<vmem>>, vector<1x256xf32>
    %30 = vector.broadcast %29 : vector<1x256xf32> to vector<64x256xf32>
    %31 = arith.addf %28, %30 : vector<64x256xf32>
    %cst_15 = arith.constant 0.000000e+00 : f32
    %32 = vector.broadcast %cst_15 : f32 to vector<64x256xf32>
    %33 = arith.maximumf %31, %32 : vector<64x256xf32>
    %34 = arith.truncf %33 : vector<64x256xf32> to vector<64x256xbf16>
    %c0_16 = arith.constant 0 : index
    %c0_17 = arith.constant 0 : index
    %35 = vector.load %arg8[%c0_16, %c0_17] : memref<256x96xbf16, #tpu.memory_space<vmem>>, vector<256x96xbf16>
    %cst_18 = arith.constant dense<0.000000e+00> : vector<64x96xf32>
    %36 = tpu.matmul %34, %35, %cst_18 {dimension_numbers = #tpu.dot_dimension_numbers<[1], [0], [0], [1], [0, 0, 1, 1], [], []>} : vector<64x256xbf16>, vector<256x96xbf16>, vector<64x96xf32> -> vector<64x96xf32>
    %c0_19 = arith.constant 0 : index
    %c0_20 = arith.constant 0 : index
    %37 = vector.load %arg9[%c0_19, %c0_20] : memref<1x96xf32, #tpu.memory_space<vmem>>, vector<1x96xf32>
    %38 = vector.broadcast %37 : vector<1x96xf32> to vector<64x96xf32>
    %39 = arith.addf %36, %38 : vector<64x96xf32>
    %cst_21 = arith.constant 0.000000e+00 : f32
    %40 = vector.broadcast %cst_21 : f32 to vector<64x96xf32>
    %41 = arith.maximumf %39, %40 : vector<64x96xf32>
    %42 = arith.truncf %41 : vector<64x96xf32> to vector<64x96xbf16>
    %c0_22 = arith.constant 0 : index
    %c0_23 = arith.constant 0 : index
    %43 = vector.load %arg10[%c0_22, %c0_23] : memref<64x96xbf16, #tpu.memory_space<vmem>>, vector<64x96xbf16>
    tpu.vector_store %arg10[%c0_22, %c0_23], %42 {strides = array<i32>} : memref<64x96xbf16, #tpu.memory_space<vmem>>, vector<64x96xbf16>,
    return
  }
  func.func @transform_0(%arg0: i32) -> (i32, i32) {
    %c0_i32 = arith.constant 0 : i32
    %c0_i32_0 = arith.constant 0 : i32
    return %arg0, %c0_i32 : i32, i32
  }
  func.func @transform_1(%arg0: i32) -> (i32, i32) {
    %c0_i32 = arith.constant 0 : i32
    %c0_i32_0 = arith.constant 0 : i32
    return %arg0, %c0_i32 : i32, i32
  }
  func.func @transform_2(%arg0: i32) -> (i32, i32) {
    %c0_i32 = arith.constant 0 : i32
    %c0_i32_0 = arith.constant 0 : i32
    return %arg0, %c0_i32 : i32, i32
  }
  func.func @transform_3(%arg0: i32) -> (i32, i32) {
    %c0_i32 = arith.constant 0 : i32
    %c0_i32_0 = arith.constant 0 : i32
    %c0_i32_1 = arith.constant 0 : i32
    return %c0_i32, %c0_i32_0 : i32, i32
  }
  func.func @transform_4(%arg0: i32) -> (i32, i32) {
    %c0_i32 = arith.constant 0 : i32
    %c0_i32_0 = arith.constant 0 : i32
    %c0_i32_1 = arith.constant 0 : i32
    return %c0_i32, %c0_i32_0 : i32, i32
  }
  func.func @transform_5(%arg0: i32) -> (i32, i32) {
    %c0_i32 = arith.constant 0 : i32
    %c0_i32_0 = arith.constant 0 : i32
    %c0_i32_1 = arith.constant 0 : i32
    return %c0_i32, %c0_i32_0 : i32, i32
  }
  func.func @transform_6(%arg0: i32) -> (i32, i32) {
    %c0_i32 = arith.constant 0 : i32
    %c0_i32_0 = arith.constant 0 : i32
    %c0_i32_1 = arith.constant 0 : i32
    return %c0_i32, %c0_i32_0 : i32, i32
  }
  func.func @transform_7(%arg0: i32) -> (i32, i32) {
    %c0_i32 = arith.constant 0 : i32
    %c0_i32_0 = arith.constant 0 : i32
    %c0_i32_1 = arith.constant 0 : i32
    return %c0_i32, %c0_i32_0 : i32, i32
  }
  func.func @transform_8(%arg0: i32) -> (i32, i32) {
    %c0_i32 = arith.constant 0 : i32
    %c0_i32_0 = arith.constant 0 : i32
    %c0_i32_1 = arith.constant 0 : i32
    return %c0_i32, %c0_i32_0 : i32, i32
  }
  func.func @transform_9(%arg0: i32) -> (i32, i32) {
    %c0_i32 = arith.constant 0 : i32
    %c0_i32_0 = arith.constant 0 : i32
    return %arg0, %c0_i32 : i32, i32
  }
}

module attributes {stable_mosaic.version = 11 : i64} {
  func.func @_head_kernel(%arg0: i32, %arg1: memref<64x96xbf16, #tpu.memory_space<vmem>>, %arg2: memref<96x128xbf16, #tpu.memory_space<vmem>>, %arg3: memref<1x128xf32, #tpu.memory_space<vmem>>, %arg4: memref<128x128xbf16, #tpu.memory_space<vmem>>, %arg5: memref<1x128xf32, #tpu.memory_space<vmem>>, %arg6: memref<64x128xf32, #tpu.memory_space<vmem>>) attributes {dimension_semantics = [#tpu.dimension_semantics<parallel>], iteration_bounds = array<i64: 1>, scalar_prefetch = 0 : i64, scratch_operands = 0 : i64, tpu.core_type = #tpu.core_type<tc>, window_params = [{transform_indices = @transform_0, window_bounds = array<i64: 64, 96>}, {pipeline_mode = #tpu.pipeline_mode<synchronous>, transform_indices = @transform_1, window_bounds = array<i64: 96, 128>}, {pipeline_mode = #tpu.pipeline_mode<synchronous>, transform_indices = @transform_2, window_bounds = array<i64: 1, 128>}, {pipeline_mode = #tpu.pipeline_mode<synchronous>, transform_indices = @transform_3, window_bounds = array<i64: 128, 128>}, {pipeline_mode = #tpu.pipeline_mode<synchronous>, transform_indices = @transform_4, window_bounds = array<i64: 1, 128>}, {transform_indices = @transform_5, window_bounds = array<i64: 64, 128>}]} {
    %c0 = arith.constant 0 : index
    %c0_0 = arith.constant 0 : index
    %0 = vector.load %arg1[%c0, %c0_0] : memref<64x96xbf16, #tpu.memory_space<vmem>>, vector<64x96xbf16>
    %c0_1 = arith.constant 0 : index
    %c0_2 = arith.constant 0 : index
    %1 = vector.load %arg2[%c0_1, %c0_2] : memref<96x128xbf16, #tpu.memory_space<vmem>>, vector<96x128xbf16>
    %cst = arith.constant dense<0.000000e+00> : vector<64x128xf32>
    %2 = tpu.matmul %0, %1, %cst {dimension_numbers = #tpu.dot_dimension_numbers<[1], [0], [0], [1], [0, 0, 1, 1], [], []>} : vector<64x96xbf16>, vector<96x128xbf16>, vector<64x128xf32> -> vector<64x128xf32>
    %c0_3 = arith.constant 0 : index
    %c0_4 = arith.constant 0 : index
    %3 = vector.load %arg3[%c0_3, %c0_4] : memref<1x128xf32, #tpu.memory_space<vmem>>, vector<1x128xf32>
    %4 = vector.broadcast %3 : vector<1x128xf32> to vector<64x128xf32>
    %5 = arith.addf %2, %4 : vector<64x128xf32>
    %cst_5 = arith.constant 0.000000e+00 : f32
    %6 = vector.broadcast %cst_5 : f32 to vector<64x128xf32>
    %7 = arith.maximumf %5, %6 : vector<64x128xf32>
    %8 = arith.truncf %7 : vector<64x128xf32> to vector<64x128xbf16>
    %c0_6 = arith.constant 0 : index
    %c0_7 = arith.constant 0 : index
    %9 = vector.load %arg4[%c0_6, %c0_7] : memref<128x128xbf16, #tpu.memory_space<vmem>>, vector<128x128xbf16>
    %cst_8 = arith.constant dense<0.000000e+00> : vector<64x128xf32>
    %10 = tpu.matmul %8, %9, %cst_8 {dimension_numbers = #tpu.dot_dimension_numbers<[1], [0], [0], [1], [0, 0, 1, 1], [], []>} : vector<64x128xbf16>, vector<128x128xbf16>, vector<64x128xf32> -> vector<64x128xf32>
    %c0_9 = arith.constant 0 : index
    %c0_10 = arith.constant 0 : index
    %11 = vector.load %arg5[%c0_9, %c0_10] : memref<1x128xf32, #tpu.memory_space<vmem>>, vector<1x128xf32>
    %12 = vector.broadcast %11 : vector<1x128xf32> to vector<64x128xf32>
    %13 = arith.addf %10, %12 : vector<64x128xf32>
    %c0_11 = arith.constant 0 : index
    %c0_12 = arith.constant 0 : index
    %14 = vector.load %arg6[%c0_11, %c0_12] : memref<64x128xf32, #tpu.memory_space<vmem>>, vector<64x128xf32>
    tpu.vector_store %arg6[%c0_11, %c0_12], %13 {strides = array<i32>} : memref<64x128xf32, #tpu.memory_space<vmem>>, vector<64x128xf32>,
    return
  }
  func.func @transform_0(%arg0: i32) -> (i32, i32) {
    %c0_i32 = arith.constant 0 : i32
    %c0_i32_0 = arith.constant 0 : i32
    return %arg0, %c0_i32 : i32, i32
  }
  func.func @transform_1(%arg0: i32) -> (i32, i32) {
    %c0_i32 = arith.constant 0 : i32
    %c0_i32_0 = arith.constant 0 : i32
    %c0_i32_1 = arith.constant 0 : i32
    return %c0_i32, %c0_i32_0 : i32, i32
  }
  func.func @transform_2(%arg0: i32) -> (i32, i32) {
    %c0_i32 = arith.constant 0 : i32
    %c0_i32_0 = arith.constant 0 : i32
    %c0_i32_1 = arith.constant 0 : i32
    return %c0_i32, %c0_i32_0 : i32, i32
  }
  func.func @transform_3(%arg0: i32) -> (i32, i32) {
    %c0_i32 = arith.constant 0 : i32
    %c0_i32_0 = arith.constant 0 : i32
    %c0_i32_1 = arith.constant 0 : i32
    return %c0_i32, %c0_i32_0 : i32, i32
  }
  func.func @transform_4(%arg0: i32) -> (i32, i32) {
    %c0_i32 = arith.constant 0 : i32
    %c0_i32_0 = arith.constant 0 : i32
    %c0_i32_1 = arith.constant 0 : i32
    return %c0_i32, %c0_i32_0 : i32, i32
  }
  func.func @transform_5(%arg0: i32) -> (i32, i32) {
    %c0_i32 = arith.constant 0 : i32
    %c0_i32_0 = arith.constant 0 : i32
    return %arg0, %c0_i32 : i32, i32
  }
}

</mosaic_0001>

<llo_original>
// kernel: net_forward.10
$region0: #{net_forward.10}
  #allocation0 [shape = 'u32[]', space=smem, size = 0x4, offset = 0x4, fixed_abs, tag = 'smem constant byte address 0x4 - core index']
  #allocation1 [shape = 'u32[144,128]{1,0:T(1,128)}', space=vmem, size = 0x12000, scoped, tag = 'internal scratch']
  %s0 = inlined_call_operand.vmem [shape: f32[64,3], index: 0, kind: input, shape index: {}]
  %s1 = inlined_call_operand.vmem [shape: f32[3,32], index: 1, kind: input, shape index: {}]
  %s2 = inlined_call_operand.vmem [shape: f32[1,32], index: 2, kind: input, shape index: {}]
  %s3 = inlined_call_operand.vmem [shape: bf16[32,64], index: 3, kind: input, shape index: {}]
  %s4 = inlined_call_operand.vmem [shape: f32[1,64], index: 4, kind: input, shape index: {}]
  %s5 = inlined_call_operand.vmem [shape: bf16[64,64], index: 5, kind: output, shape index: {}]
  %s6 = sld [smem:[#allocation0]]
  $region30: #{net_forward.10} parent=0
    _
  %s8 = ssub.s32 1, %s6
  %s9 = scalar_select 0, %s8, %s6
  // Predicated region
  $region2: #{net_forward.10} parent=0 // pred_check
    _
  $region3: #{net_forward.10} parent=0 // pred_check_branch
    %11 = sbr.rel (0) target = $region5
  $region4: #{net_forward.10} parent=0 // pred_region
    _
  $region5: #{net_forward.10} parent=0 // pred_fallthru
    _
  // Predicated region
  $region6: #{net_forward.10} parent=0 // pred_check
    _
  $region7: #{net_forward.10} parent=0 // pred_check_branch
    %13 = sbr.rel (0) target = $region9
  $region8: #{net_forward.10} parent=0 // pred_region
    _
  $region9: #{net_forward.10} parent=0 // pred_fallthru
    _
  // Predicated region
  $region10: #{net_forward.10} parent=0 // pred_check
    _
  $region11: #{net_forward.10} parent=0 // pred_check_branch
    %15 = sbr.rel (0) target = $region13
  $region12: #{net_forward.10} parent=0 // pred_region
    _
  $region13: #{net_forward.10} parent=0 // pred_fallthru
    _
  // Predicated region
  $region14: #{net_forward.10} parent=0 // pred_check
    _
  $region15: #{net_forward.10} parent=0 // pred_check_branch
    %17 = sbr.rel (0) target = $region17
  $region16: #{net_forward.10} parent=0 // pred_region
    _
  $region17: #{net_forward.10} parent=0 // pred_fallthru
    _
  // Predicated region
  $region18: #{net_forward.10} parent=0 // pred_check
    _
  $region19: #{net_forward.10} parent=0 // pred_check_branch
    %19 = sbr.rel (0) target = $region21
  $region20: #{net_forward.10} parent=0 // pred_region
    _
  $region21: #{net_forward.10} parent=0 // pred_fallthru
    _
  %v21 = vld [vmem:[%s0] sm:$0xff]
  %v22 = vld [vmem:[%s0 + $0x8] sm:$0xff]
  %v23 = vld [vmem:[%s0 + $0x10] sm:$0xff]
  %v24 = vld [vmem:[%s0 + $0x18] sm:$0xff]
  %v25 = vld [vmem:[%s0 + $0x20] sm:$0xff]
  %v26 = vld [vmem:[%s0 + $0x28] sm:$0xff]
  %v27 = vld [vmem:[%s0 + $0x30] sm:$0xff]
  %v28 = vld [vmem:[%s0 + $0x38] sm:$0xff]
  %v29 = vld [vmem:[%s1] sm:$0x7]
  %31 = vset.pattern.permute.xlu0 0
  %32 = vperm.xlu0 %31, %v21
  %v33 = vpop.permute.xlu0 %32
  %36 = vset.pattern.permute.xlu0 0
  %37 = vperm.xlu0 %36, %v22
  %v38 = vpop.permute.xlu0 %37
  %41 = vset.pattern.permute.xlu0 0
  %42 = vperm.xlu0 %41, %v23
  %v43 = vpop.permute.xlu0 %42
  %46 = vset.pattern.permute.xlu0 0
  %47 = vperm.xlu0 %46, %v24
  %v48 = vpop.permute.xlu0 %47
  %51 = vset.pattern.permute.xlu0 0
  %52 = vperm.xlu0 %51, %v25
  %v53 = vpop.permute.xlu0 %52
  %56 = vset.pattern.permute.xlu0 0
  %57 = vperm.xlu0 %56, %v26
  %v58 = vpop.permute.xlu0 %57
  %61 = vset.pattern.permute.xlu0 0
  %62 = vperm.xlu0 %61, %v27
  %v63 = vpop.permute.xlu0 %62
  %66 = vset.pattern.permute.xlu0 0
  %67 = vperm.xlu0 %66, %v28
  %v68 = vpop.permute.xlu0 %67
  %v70 = vlaneseq
  %v71 = vshrl.u32 %v70, 7
  %v72 = vsub.s32 0, %v71
  %v73 = vrot.slane %v29, %v72
  %v74 = vmul.f32 %v33, %v73
  %v75 = vmul.f32 %v38, %v73
  %v76 = vmul.f32 %v43, %v73
  %v77 = vmul.f32 %v48, %v73
  %v78 = vmul.f32 %v53, %v73
  %v79 = vmul.f32 %v58, %v73
  %v80 = vmul.f32 %v63, %v73
  %v81 = vmul.f32 %v68, %v73
  %v82 = vadd.f32 %v74, 0.0
  %v83 = vadd.f32 %v75, 0.0
  %v84 = vadd.f32 %v76, 0.0
  %v85 = vadd.f32 %v77, 0.0
  %v86 = vadd.f32 %v78, 0.0
  %v87 = vadd.f32 %v79, 0.0
  %v88 = vadd.f32 %v80, 0.0
  %v89 = vadd.f32 %v81, 0.0
  %90 = vset.pattern.permute.xlu0 1
  %91 = vperm.xlu0 %90, %v21
  %v92 = vpop.permute.xlu0 %91
  %94 = vset.pattern.permute.xlu0 1
  %95 = vperm.xlu0 %94, %v22
  %v96 = vpop.permute.xlu0 %95
  %98 = vset.pattern.permute.xlu0 1
  %99 = vperm.xlu0 %98, %v23
  %v100 = vpop.permute.xlu0 %99
  %102 = vset.pattern.permute.xlu0 1
  %103 = vperm.xlu0 %102, %v24
  %v104 = vpop.permute.xlu0 %103
  %106 = vset.pattern.permute.xlu0 1
  %107 = vperm.xlu0 %106, %v25
  %v108 = vpop.permute.xlu0 %107
  %110 = vset.pattern.permute.xlu0 1
  %111 = vperm.xlu0 %110, %v26
  %v112 = vpop.permute.xlu0 %111
  %114 = vset.pattern.permute.xlu0 1
  %115 = vperm.xlu0 %114, %v27
  %v116 = vpop.permute.xlu0 %115
  %118 = vset.pattern.permute.xlu0 1
  %119 = vperm.xlu0 %118, %v28
  %v120 = vpop.permute.xlu0 %119
  %v122 = vlaneseq
  %v123 = vshrl.u32 %v122, 7
  %v124 = vsub.s32 1, %v123
  %v125 = vrot.slane %v29, %v124
  %v126 = vmul.f32 %v92, %v125
  %v127 = vmul.f32 %v96, %v125
  %v128 = vmul.f32 %v100, %v125
  %v129 = vmul.f32 %v104, %v125
  %v130 = vmul.f32 %v108, %v125
  %v131 = vmul.f32 %v112, %v125
  %v132 = vmul.f32 %v116, %v125
  %v133 = vmul.f32 %v120, %v125
  %v134 = vadd.f32 %v82, %v126
  %v135 = vadd.f32 %v83, %v127
  %v136 = vadd.f32 %v84, %v128
  %v137 = vadd.f32 %v85, %v129
  %v138 = vadd.f32 %v86, %v130
  %v139 = vadd.f32 %v87, %v131
  %v140 = vadd.f32 %v88, %v132
  %v141 = vadd.f32 %v89, %v133
  %142 = vset.pattern.permute.xlu0 2
  %143 = vperm.xlu0 %142, %v21
  %v144 = vpop.permute.xlu0 %143
  %146 = vset.pattern.permute.xlu0 2
  %147 = vperm.xlu0 %146, %v22
  %v148 = vpop.permute.xlu0 %147
  %150 = vset.pattern.permute.xlu0 2
  %151 = vperm.xlu0 %150, %v23
  %v152 = vpop.permute.xlu0 %151
  %154 = vset.pattern.permute.xlu0 2
  %155 = vperm.xlu0 %154, %v24
  %v156 = vpop.permute.xlu0 %155
  %158 = vset.pattern.permute.xlu0 2
  %159 = vperm.xlu0 %158, %v25
  %v160 = vpop.permute.xlu0 %159
  %162 = vset.pattern.permute.xlu0 2
  %163 = vperm.xlu0 %162, %v26
  %v164 = vpop.permute.xlu0 %163
  %166 = vset.pattern.permute.xlu0 2
  %167 = vperm.xlu0 %166, %v27
  %v168 = vpop.permute.xlu0 %167
  %170 = vset.pattern.permute.xlu0 2
  %171 = vperm.xlu0 %170, %v28
  %v172 = vpop.permute.xlu0 %171
  %v174 = vlaneseq
  %v175 = vshrl.u32 %v174, 7
  %v176 = vsub.s32 2, %v175
  %v177 = vrot.slane %v29, %v176
  %v178 = vmul.f32 %v144, %v177
  %v179 = vmul.f32 %v148, %v177
  %v180 = vmul.f32 %v152, %v177
  %v181 = vmul.f32 %v156, %v177
  %v182 = vmul.f32 %v160, %v177
  %v183 = vmul.f32 %v164, %v177
  %v184 = vmul.f32 %v168, %v177
  %v185 = vmul.f32 %v172, %v177
  %v186 = vadd.f32 %v134, %v178
  %v187 = vadd.f32 %v135, %v179
  %v188 = vadd.f32 %v136, %v180
  %v189 = vadd.f32 %v137, %v181
  %v190 = vadd.f32 %v138, %v182
  %v191 = vadd.f32 %v139, %v183
  %v192 = vadd.f32 %v140, %v184
  %v193 = vadd.f32 %v141, %v185
  %v194 = vld [vmem:[%s2] sm:$0x1]
  %v196 = vlaneseq
  %v197 = vshrl.u32 %v196, 7
  %v198 = vsub.s32 0, %v197
  %v199 = vrot.slane %v194, %v198
  %v201 = vadd.f32 %v186, %v199
  %v202 = vadd.f32 %v187, %v199
  %v203 = vadd.f32 %v188, %v199
  %v204 = vadd.f32 %v189, %v199
  %v205 = vadd.f32 %v190, %v199
  %v206 = vadd.f32 %v191, %v199
  %v207 = vadd.f32 %v192, %v199
  %v208 = vadd.f32 %v193, %v199
  %v209 = vmax.f32 %v201, 0.0
  %v210 = vmax.f32 %v202, 0.0
  %v211 = vmax.f32 %v203, 0.0
  %v212 = vmax.f32 %v204, 0.0
  %v213 = vmax.f32 %v205, 0.0
  %v214 = vmax.f32 %v206, 0.0
  %v215 = vmax.f32 %v207, 0.0
  %v216 = vmax.f32 %v208, 0.0
  %v217 = vpack.c.bf16 %v210, %v209
  %v218 = vpack.c.bf16 %v212, %v211
  %v219 = vpack.c.bf16 %v214, %v213
  %v220 = vpack.c.bf16 %v216, %v215
  %v221 = vld [vmem:[%s3] sm:$0xf]
  %v222 = vld [vmem:[%s3 + $0x4] sm:$0xf]
  %v223 = vld [vmem:[%s3 + $0x8] sm:$0xf]
  %v224 = vld [vmem:[%s3 + $0xc] sm:$0xf]
  %v225 = vld [vmem:[%s4] sm:$0x1]
  %v227 = vlaneseq
  %v228 = vshrl.u32 %v227, 7
  %v229 = vsub.s32 0, %v228
  %v230 = vrot.slane %v225, %v229
  %v236 = vunpack.c.l.b16 %v221
  %v237 = vunpack.c.l.b16 %v222
  %v238 = vunpack.c.l.b16 %v223
  %v239 = vunpack.c.l.b16 %v224
  %v240 = vpack.c.b16 %v237, %v236
  %v241 = vpack.c.b16 %v239, %v238
  %vm244 = vcmask 261120
  %v246 = vsel %vm244, %v217, 0
  %v249 = vsel %vm244, %v218, 0
  %v252 = vsel %vm244, %v219, 0
  %v255 = vsel %vm244, %v220, 0
  %257 = vmatprep.subr.bf16.mxu0 0
  %258 = vmatpush1.bf16.msra.mxu0 %v240
  %259 = vmatprep.subr.bf16.mxu0 0
  %260 = vmatpush1.bf16.msra.mxu0 %v241
  %261 = vmatprep.subr.bf16.mxu0 0
  %262 = vmatpush1.bf16.msra.mxu0 0
  %263 = vmatprep.subr.bf16.mxu0 0
  %264 = vmatpush1.bf16.msra.mxu0 0
  %265 = vmatprep.subr.bf16.mxu0 0
  %266 = vmatpush1.bf16.msra.mxu0 0
  %267 = vmatprep.subr.bf16.mxu0 0
  %268 = vmatpush1.bf16.msra.mxu0 0
  %269 = vmatprep.subr.bf16.mxu0 0
  %270 = vmatpush1.bf16.msra.mxu0 0
  %271 = vmatprep.subr.bf16.mxu0 0
  %272 = vmatpush1.bf16.msra.mxu0 0
  %273 = vmatprep.subr.bf16.mxu0 0
  %274 = vmatpush1.bf16.msra.mxu0 0
  %275 = vmatprep.subr.bf16.mxu0 0
  %276 = vmatpush1.bf16.msra.mxu0 0
  %277 = vmatprep.subr.bf16.mxu0 0
  %278 = vmatpush1.bf16.msra.mxu0 0
  %279 = vmatprep.subr.bf16.mxu0 0
  %280 = vmatpush1.bf16.msra.mxu0 0
  %281 = vmatprep.subr.bf16.mxu0 0
  %282 = vmatpush1.bf16.msra.mxu0 0
  %283 = vmatprep.subr.bf16.mxu0 0
  %284 = vmatpush1.bf16.msra.mxu0 0
  %285 = vmatprep.subr.bf16.mxu0 0
  %286 = vmatpush1.bf16.msra.mxu0 0
  %287 = vmatprep.subr.bf16.mxu0 0
  %288 = vmatpush1.bf16.msra.mxu0 0
  %289 = vmatprep.mubr.bf16.mxu0 0
  %290 = vmatmul.mubr.bf16.gmra.mrb[0].mxu0 %v246
  %v291 = vpop.f32.mrb[0].mxu0
  %v292 = vadd.f32 %v230, %v291
  %v293 = vpop.f32.mrb[0].mxu0
  %v294 = vpop.f32.mrb[0].mxu0
  %v295 = vadd.f32 %v230, %v294
  %v296 = vpop.f32.mrb[0].mxu0
  %297 = vmatprep.mubr.bf16.mxu0 0
  %298 = vmatmul.mubr.bf16.gmra.mrb[0].mxu0 %v249
  %v299 = vpop.f32.mrb[0].mxu0
  %v300 = vadd.f32 %v230, %v299
  %v301 = vpop.f32.mrb[0].mxu0
  %v302 = vpop.f32.mrb[0].mxu0
  %v303 = vadd.f32 %v230, %v302
  %v304 = vpop.f32.mrb[0].mxu0
  %305 = vmatprep.mubr.bf16.mxu0 0
  %306 = vmatmul.mubr.bf16.gmra.mrb[0].mxu0 %v252
  %v307 = vpop.f32.mrb[0].mxu0
  %v308 = vadd.f32 %v230, %v307
  %v309 = vpop.f32.mrb[0].mxu0
  %v310 = vpop.f32.mrb[0].mxu0
  %v311 = vadd.f32 %v230, %v310
  %v312 = vpop.f32.mrb[0].mxu0
  %313 = vmatprep.mubr.bf16.mxu0 0
  %314 = vmatmul.mubr.bf16.gmra.mrb[0].mxu0 %v255
  %v315 = vpop.f32.mrb[0].mxu0
  %v316 = vadd.f32 %v230, %v315
  %v317 = vpop.f32.mrb[0].mxu0
  %v318 = vpop.f32.mrb[0].mxu0
  %v319 = vadd.f32 %v230, %v318
  %v320 = vpop.f32.mrb[0].mxu0
  %321 = vdwg.mxu0
  %v322 = vmax.f32 %v292, 0.0
  %v323 = vmax.f32 %v295, 0.0
  %v324 = vmax.f32 %v300, 0.0
  %v325 = vmax.f32 %v303, 0.0
  %v326 = vmax.f32 %v308, 0.0
  %v327 = vmax.f32 %v311, 0.0
  %v328 = vmax.f32 %v316, 0.0
  %v329 = vmax.f32 %v319, 0.0
  %v330 = vpack.c.bf16 %v323, %v322
  %v331 = vpack.c.bf16 %v325, %v324
  %v332 = vpack.c.bf16 %v327, %v326
  %v333 = vpack.c.bf16 %v329, %v328
  %v338 = vunpack.c.l.b16 %v330
  %v339 = vunpack.c.h.b16 %v330
  %v340 = vunpack.c.l.b16 %v331
  %v341 = vunpack.c.h.b16 %v331
  %v342 = vunpack.c.l.b16 %v332
  %v343 = vunpack.c.h.b16 %v332
  %v344 = vunpack.c.l.b16 %v333
  %v345 = vunpack.c.h.b16 %v333
  %v346 = vpack.c.b16 %v338, %v338
  %v347 = vpack.c.b16 %v339, %v339
  %v348 = vpack.c.b16 %v340, %v340
  %v349 = vpack.c.b16 %v341, %v341
  %v350 = vpack.c.b16 %v342, %v342
  %v351 = vpack.c.b16 %v343, %v343
  %v352 = vpack.c.b16 %v344, %v344
  %v353 = vpack.c.b16 %v345, %v345
  %vm362 = vcmask 519168
  %363 = vst.msk [vmem:[%s5] sm:$0xf] %vm362, %v346
  %364 = vst.msk [vmem:[%s5 + $0x4] sm:$0xf] %vm362, %v347
  %365 = vst.msk [vmem:[%s5 + $0x8] sm:$0xf] %vm362, %v348
  %366 = vst.msk [vmem:[%s5 + $0xc] sm:$0xf] %vm362, %v349
  %367 = vst.msk [vmem:[%s5 + $0x10] sm:$0xf] %vm362, %v350
  %368 = vst.msk [vmem:[%s5 + $0x14] sm:$0xf] %vm362, %v351
  %369 = vst.msk [vmem:[%s5 + $0x18] sm:$0xf] %vm362, %v352
  %370 = vst.msk [vmem:[%s5 + $0x1c] sm:$0xf] %vm362, %v353
  // Predicated region
  $region22: #{net_forward.10} parent=0 // pred_check
    _
  $region23: #{net_forward.10} parent=0 // pred_check_branch
    %372 = sbr.rel (0) target = $region25
  $region24: #{net_forward.10} parent=0 // pred_region
    _
  $region25: #{net_forward.10} parent=0 // pred_fallthru
    _
  // Predicated region
  $region26: #{net_forward.10} parent=0 // pred_check
    _
  $region27: #{net_forward.10} parent=0 // pred_check_branch
    %374 = sbr.rel (0) target = $region29
  $region28: #{net_forward.10} parent=0 // pred_region
    _
  $region29: #{net_forward.10} parent=0 // pred_fallthru
    _

// kernel: net_forward.11
$region0: #{net_forward.11}
  #allocation0 [shape = 'u32[]', space=smem, size = 0x4, offset = 0x4, fixed_abs, tag = 'smem constant byte address 0x4 - core index']
  #allocation1 [shape = 'u32[144,128]{1,0:T(1,128)}', space=vmem, size = 0x12000, scoped, tag = 'internal scratch']
  %s0 = inlined_call_operand.vmem [shape: bf16[24,64], index: 0, kind: input, shape index: {}]
  %s1 = inlined_call_operand.vmem [shape: f32[24,3], index: 1, kind: input, shape index: {}]
  %s2 = inlined_call_operand.vmem [shape: bf16[64,32], index: 2, kind: input, shape index: {}]
  %s3 = inlined_call_operand.vmem [shape: f32[3,32], index: 3, kind: input, shape index: {}]
  %s4 = inlined_call_operand.vmem [shape: f32[1,32], index: 4, kind: input, shape index: {}]
  %s5 = inlined_call_operand.vmem [shape: bf16[32,96], index: 5, kind: input, shape index: {}]
  %s6 = inlined_call_operand.vmem [shape: f32[1,96], index: 6, kind: input, shape index: {}]
  %s7 = inlined_call_operand.vmem [shape: bf16[24,96], index: 7, kind: output, shape index: {}]
  %s8 = sld [smem:[#allocation0]]
  $region38: #{net_forward.11} parent=0
    _
  %s10 = ssub.s32 1, %s8
  %s11 = scalar_select 0, %s10, %s8
  // Predicated region
  $region2: #{net_forward.11} parent=0 // pred_check
    _
  $region3: #{net_forward.11} parent=0 // pred_check_branch
    %13 = sbr.rel (0) target = $region5
  $region4: #{net_forward.11} parent=0 // pred_region
    _
  $region5: #{net_forward.11} parent=0 // pred_fallthru
    _
  // Predicated region
  $region6: #{net_forward.11} parent=0 // pred_check
    _
  $region7: #{net_forward.11} parent=0 // pred_check_branch
    %15 = sbr.rel (0) target = $region9
  $region8: #{net_forward.11} parent=0 // pred_region
    _
  $region9: #{net_forward.11} parent=0 // pred_fallthru
    _
  // Predicated region
  $region10: #{net_forward.11} parent=0 // pred_check
    _
  $region11: #{net_forward.11} parent=0 // pred_check_branch
    %17 = sbr.rel (0) target = $region13
  $region12: #{net_forward.11} parent=0 // pred_region
    _
  $region13: #{net_forward.11} parent=0 // pred_fallthru
    _
  // Predicated region
  $region14: #{net_forward.11} parent=0 // pred_check
    _
  $region15: #{net_forward.11} parent=0 // pred_check_branch
    %19 = sbr.rel (0) target = $region17
  $region16: #{net_forward.11} parent=0 // pred_region
    _
  $region17: #{net_forward.11} parent=0 // pred_fallthru
    _
  // Predicated region
  $region18: #{net_forward.11} parent=0 // pred_check
    _
  $region19: #{net_forward.11} parent=0 // pred_check_branch
    %21 = sbr.rel (0) target = $region21
  $region20: #{net_forward.11} parent=0 // pred_region
    _
  $region21: #{net_forward.11} parent=0 // pred_fallthru
    _
  // Predicated region
  $region22: #{net_forward.11} parent=0 // pred_check
    _
  $region23: #{net_forward.11} parent=0 // pred_check_branch
    %23 = sbr.rel (0) target = $region25
  $region24: #{net_forward.11} parent=0 // pred_region
    _
  $region25: #{net_forward.11} parent=0 // pred_fallthru
    _
  // Predicated region
  $region26: #{net_forward.11} parent=0 // pred_check
    _
  $region27: #{net_forward.11} parent=0 // pred_check_branch
    %25 = sbr.rel (0) target = $region29
  $region28: #{net_forward.11} parent=0 // pred_region
    _
  $region29: #{net_forward.11} parent=0 // pred_fallthru
    _
  %v27 = vld [vmem:[%s0] sm:$0xf]
  %v28 = vld [vmem:[%s0 + $0x4] sm:$0xf]
  %v29 = vld [vmem:[%s0 + $0x8] sm:$0xf]
  %v30 = vld [vmem:[%s2] sm:$0xf]
  %v31 = vld [vmem:[%s2 + $0x4] sm:$0xf]
  %v32 = vld [vmem:[%s2 + $0x8] sm:$0xf]
  %v33 = vld [vmem:[%s2 + $0xc] sm:$0xf]
  %v34 = vld [vmem:[%s2 + $0x10] sm:$0xf]
  %v35 = vld [vmem:[%s2 + $0x14] sm:$0xf]
  %v36 = vld [vmem:[%s2 + $0x18] sm:$0xf]
  %v37 = vld [vmem:[%s2 + $0x1c] sm:$0xf]
  %v38 = vld [vmem:[%s1] sm:$0xff]
  %v39 = vld [vmem:[%s1 + $0x8] sm:$0xff]
  %v40 = vld [vmem:[%s1 + $0x10] sm:$0xff]
  %v41 = vld [vmem:[%s3] sm:$0x7]
  %43 = vset.pattern.permute.xlu0 0
  %44 = vperm.xlu0 %43, %v38
  %v45 = vpop.permute.xlu0 %44
  %48 = vset.pattern.permute.xlu0 0
  %49 = vperm.xlu0 %48, %v39
  %v50 = vpop.permute.xlu0 %49
  %53 = vset.pattern.permute.xlu0 0
  %54 = vperm.xlu0 %53, %v40
  %v55 = vpop.permute.xlu0 %54
  %v57 = vlaneseq
  %v58 = vshrl.u32 %v57, 7
  %v59 = vsub.s32 0, %v58
  %v60 = vrot.slane %v41, %v59
  %v61 = vmul.f32 %v45, %v60
  %v62 = vmul.f32 %v50, %v60
  %v63 = vmul.f32 %v55, %v60
  %v67 = vunpack.c.l.b16 %v27
  %v68 = vunpack.c.l.b16 %v28
  %v69 = vunpack.c.l.b16 %v29
  %v70 = vpack.c.b16 %v68, %v67
  %v71 = vpack.c.b16 %v69, %v69
  %v80 = vunpack.c.l.b16 %v30
  %v81 = vunpack.c.l.b16 %v31
  %v82 = vunpack.c.l.b16 %v32
  %v83 = vunpack.c.l.b16 %v33
  %v84 = vunpack.c.l.b16 %v34
  %v85 = vunpack.c.l.b16 %v35
  %v86 = vunpack.c.l.b16 %v36
  %v87 = vunpack.c.l.b16 %v37
  %v88 = vpack.c.b16 %v81, %v80
  %v89 = vpack.c.b16 %v83, %v82
  %v90 = vpack.c.b16 %v85, %v84
  %v91 = vpack.c.b16 %v87, %v86
  %vm96 = vcmask 523264
  %v98 = vsel %vm96, %v70, 0
  %v101 = vsel %vm96, %v71, 0
  %103 = vmatprep.subr.bf16.mxu0 0
  %104 = vmatpush1.bf16.msra.mxu0 %v88
  %105 = vmatprep.subr.bf16.mxu0 0
  %106 = vmatpush1.bf16.msra.mxu0 %v89
  %107 = vmatprep.subr.bf16.mxu0 0
  %108 = vmatpush1.bf16.msra.mxu0 %v90
  %109 = vmatprep.subr.bf16.mxu0 0
  %110 = vmatpush1.bf16.msra.mxu0 %v91
  %111 = vmatprep.subr.bf16.mxu0 0
  %112 = vmatpush1.bf16.msra.mxu0 0
  %113 = vmatprep.subr.bf16.mxu0 0
  %114 = vmatpush1.bf16.msra.mxu0 0
  %115 = vmatprep.subr.bf16.mxu0 0
  %116 = vmatpush1.bf16.msra.mxu0 0
  %117 = vmatprep.subr.bf16.mxu0 0
  %118 = vmatpush1.bf16.msra.mxu0 0
  %119 = vmatprep.subr.bf16.mxu0 0
  %120 = vmatpush1.bf16.msra.mxu0 0
  %121 = vmatprep.subr.bf16.mxu0 0
  %122 = vmatpush1.bf16.msra.mxu0 0
  %123 = vmatprep.subr.bf16.mxu0 0
  %124 = vmatpush1.bf16.msra.mxu0 0
  %125 = vmatprep.subr.bf16.mxu0 0
  %126 = vmatpush1.bf16.msra.mxu0 0
  %127 = vmatprep.subr.bf16.mxu0 0
  %128 = vmatpush1.bf16.msra.mxu0 0
  %129 = vmatprep.subr.bf16.mxu0 0
  %130 = vmatpush1.bf16.msra.mxu0 0
  %131 = vmatprep.subr.bf16.mxu0 0
  %132 = vmatpush1.bf16.msra.mxu0 0
  %133 = vmatprep.subr.bf16.mxu0 0
  %134 = vmatpush1.bf16.msra.mxu0 0
  %135 = vmatprep.mubr.bf16.mxu0 0
  %136 = vmatmul.mubr.bf16.gmra.mrb[0].mxu0 %v98
  %v137 = vpop.f32.mrb[0].mxu0
  %v138 = vadd.f32 %v61, %v137
  %v139 = vpop.f32.mrb[0].mxu0
  %v140 = vpop.f32.mrb[0].mxu0
  %v141 = vadd.f32 %v62, %v140
  %v142 = vpop.f32.mrb[0].mxu0
  %143 = vmatprep.mubr.bf16.mxu0 0
  %144 = vmatmul.mubr.bf16.gmra.mrb[0].mxu0 %v101
  %v145 = vpop.f32.mrb[0].mxu0
  %v146 = vadd.f32 %v63, %v145
  %v147 = vpop.f32.mrb[0].mxu0
  %v148 = vpop.f32.mrb[0].mxu0
  %v149 = vpop.f32.mrb[0].mxu0
  %150 = vdwg.mxu0
  %151 = vset.pattern.permute.xlu0 1
  %152 = vperm.xlu0 %151, %v38
  %v153 = vpop.permute.xlu0 %152
  %155 = vset.pattern.permute.xlu0 1
  %156 = vperm.xlu0 %155, %v39
  %v157 = vpop.permute.xlu0 %156
  %159 = vset.pattern.permute.xlu0 1
  %160 = vperm.xlu0 %159, %v40
  %v161 = vpop.permute.xlu0 %160
  %v163 = vlaneseq
  %v164 = vshrl.u32 %v163, 7
  %v165 = vsub.s32 1, %v164
  %v166 = vrot.slane %v41, %v165
  %v167 = vmul.f32 %v153, %v166
  %v168 = vmul.f32 %v157, %v166
  %v169 = vmul.f32 %v161, %v166
  %v170 = vadd.f32 %v138, %v167
  %v171 = vadd.f32 %v141, %v168
  %v172 = vadd.f32 %v146, %v169
  %173 = vset.pattern.permute.xlu0 2
  %174 = vperm.xlu0 %173, %v38
  %v175 = vpop.permute.xlu0 %174
  %177 = vset.pattern.permute.xlu0 2
  %178 = vperm.xlu0 %177, %v39
  %v179 = vpop.permute.xlu0 %178
  %181 = vset.pattern.permute.xlu0 2
  %182 = vperm.xlu0 %181, %v40
  %v183 = vpop.permute.xlu0 %182
  %v185 = vlaneseq
  %v186 = vshrl.u32 %v185, 7
  %v187 = vsub.s32 2, %v186
  %v188 = vrot.slane %v41, %v187
  %v189 = vmul.f32 %v175, %v188
  %v190 = vmul.f32 %v179, %v188
  %v191 = vmul.f32 %v183, %v188
  %v192 = vadd.f32 %v170, %v189
  %v193 = vadd.f32 %v171, %v190
  %v194 = vadd.f32 %v172, %v191
  %v195 = vld [vmem:[%s4] sm:$0x1]
  %v197 = vlaneseq
  %v198 = vshrl.u32 %v197, 7
  %v199 = vsub.s32 0, %v198
  %v200 = vrot.slane %v195, %v199
  %v202 = vadd.f32 %v192, %v200
  %v203 = vadd.f32 %v193, %v200
  %v204 = vadd.f32 %v194, %v200
  %v205 = vmax.f32 %v202, 0.0
  %v206 = vmax.f32 %v203, 0.0
  %v207 = vmax.f32 %v204, 0.0
  %v208 = vpack.c.bf16 %v206, %v205
  %v209 = vpack.c.bf16 %v207, %v207
  %v210 = vld [vmem:[%s5] sm:$0xf]
  %v211 = vld [vmem:[%s5 + $0x4] sm:$0xf]
  %v212 = vld [vmem:[%s5 + $0x8] sm:$0xf]
  %v213 = vld [vmem:[%s5 + $0xc] sm:$0xf]
  %v214 = vld [vmem:[%s6] sm:$0x1]
  %v216 = vlaneseq
  %v217 = vshrl.u32 %v216, 7
  %v218 = vsub.s32 0, %v217
  %v219 = vrot.slane %v214, %v218
  %v225 = vunpack.c.l.b16 %v210
  %v226 = vunpack.c.l.b16 %v211
  %v227 = vunpack.c.l.b16 %v212
  %v228 = vunpack.c.l.b16 %v213
  %v229 = vpack.c.b16 %v226, %v225
  %v230 = vpack.c.b16 %v228, %v227
  %vm233 = vcmask 261120
  %v235 = vsel %vm233, %v208, 0
  %v238 = vsel %vm233, %v209, 0
  %240 = vmatprep.subr.bf16.mxu0 0
  %241 = vmatpush1.bf16.msra.mxu0 %v229
  %242 = vmatprep.subr.bf16.mxu0 0
  %243 = vmatpush1.bf16.msra.mxu0 %v230
  %244 = vmatprep.subr.bf16.mxu0 0
  %245 = vmatpush1.bf16.msra.mxu0 0
  %246 = vmatprep.subr.bf16.mxu0 0
  %247 = vmatpush1.bf16.msra.mxu0 0
  %248 = vmatprep.subr.bf16.mxu0 0
  %249 = vmatpush1.bf16.msra.mxu0 0
  %250 = vmatprep.subr.bf16.mxu0 0
  %251 = vmatpush1.bf16.msra.mxu0 0
  %252 = vmatprep.subr.bf16.mxu0 0
  %253 = vmatpush1.bf16.msra.mxu0 0
  %254 = vmatprep.subr.bf16.mxu0 0
  %255 = vmatpush1.bf16.msra.mxu0 0
  %256 = vmatprep.subr.bf16.mxu0 0
  %257 = vmatpush1.bf16.msra.mxu0 0
  %258 = vmatprep.subr.bf16.mxu0 0
  %259 = vmatpush1.bf16.msra.mxu0 0
  %260 = vmatprep.subr.bf16.mxu0 0
  %261 = vmatpush1.bf16.msra.mxu0 0
  %262 = vmatprep.subr.bf16.mxu0 0
  %263 = vmatpush1.bf16.msra.mxu0 0
  %264 = vmatprep.subr.bf16.mxu0 0
  %265 = vmatpush1.bf16.msra.mxu0 0
  %266 = vmatprep.subr.bf16.mxu0 0
  %267 = vmatpush1.bf16.msra.mxu0 0
  %268 = vmatprep.subr.bf16.mxu0 0
  %269 = vmatpush1.bf16.msra.mxu0 0
  %270 = vmatprep.subr.bf16.mxu0 0
  %271 = vmatpush1.bf16.msra.mxu0 0
  %272 = vmatprep.mubr.bf16.mxu0 0
  %273 = vmatmul.mubr.bf16.gmra.mrb[0].mxu0 %v235
  %v274 = vpop.f32.mrb[0].mxu0
  %v275 = vadd.f32 %v219, %v274
  %v276 = vpop.f32.mrb[0].mxu0
  %v277 = vpop.f32.mrb[0].mxu0
  %v278 = vadd.f32 %v219, %v277
  %v279 = vpop.f32.mrb[0].mxu0
  %280 = vmatprep.mubr.bf16.mxu0 0
  %281 = vmatmul.mubr.bf16.gmra.mrb[0].mxu0 %v238
  %v282 = vpop.f32.mrb[0].mxu0
  %v283 = vadd.f32 %v219, %v282
  %v284 = vpop.f32.mrb[0].mxu0
  %v285 = vpop.f32.mrb[0].mxu0
  %v286 = vpop.f32.mrb[0].mxu0
  %287 = vdwg.mxu0
  %v288 = vmax.f32 %v275, 0.0
  %v289 = vmax.f32 %v278, 0.0
  %v290 = vmax.f32 %v283, 0.0
  %v291 = vpack.c.bf16 %v289, %v288
  %v292 = vpack.c.bf16 %v290, %v290
  %v295 = vunpack.c.l.b16 %v291
  %v296 = vunpack.c.h.b16 %v291
  %v297 = vunpack.c.l.b16 %v292
  %v298 = vpack.c.b16 %v295, %v295
  %v299 = vpack.c.b16 %v296, %v296
  %v300 = vpack.c.b16 %v297, %v297
  %vm304 = vcmask 781312
  %305 = vst.msk [vmem:[%s7] sm:$0xf] %vm304, %v298
  %306 = vst.msk [vmem:[%s7 + $0x4] sm:$0xf] %vm304, %v299
  %307 = vst.msk [vmem:[%s7 + $0x8] sm:$0xf] %vm304, %v300
  // Predicated region
  $region30: #{net_forward.11} parent=0 // pred_check
    _
  $region31: #{net_forward.11} parent=0 // pred_check_branch
    %309 = sbr.rel (0) target = $region33
  $region32: #{net_forward.11} parent=0 // pred_region
    _
  $region33: #{net_forward.11} parent=0 // pred_fallthru
    _
  // Predicated region
  $region34: #{net_forward.11} parent=0 // pred_check
    _
  $region35: #{net_forward.11} parent=0 // pred_check_branch
    %311 = sbr.rel (0) target = $region37
  $region36: #{net_forward.11} parent=0 // pred_region
    _
  $region37: #{net_forward.11} parent=0 // pred_fallthru
    _

// kernel: net_forward.12
$region0: #{net_forward.12}
  #allocation0 [shape = 'u32[]', space=smem, size = 0x4, offset = 0x4, fixed_abs, tag = 'smem constant byte address 0x4 - core index']
  #allocation1 [shape = 'u32[144,128]{1,0:T(1,128)}', space=vmem, size = 0x12000, scoped, tag = 'internal scratch']
  %s0 = inlined_call_operand.vmem [shape: bf16[16,96], index: 0, kind: input, shape index: {}]
  %s1 = inlined_call_operand.vmem [shape: f32[16,3], index: 1, kind: input, shape index: {}]
  %s2 = inlined_call_operand.vmem [shape: bf16[96,32], index: 2, kind: input, shape index: {}]
  %s3 = inlined_call_operand.vmem [shape: f32[3,32], index: 3, kind: input, shape index: {}]
  %s4 = inlined_call_operand.vmem [shape: f32[1,32], index: 4, kind: input, shape index: {}]
  %s5 = inlined_call_operand.vmem [shape: bf16[32,192], index: 5, kind: input, shape index: {}]
  %s6 = inlined_call_operand.vmem [shape: f32[1,192], index: 6, kind: input, shape index: {}]
  %s7 = inlined_call_operand.vmem [shape: bf16[16,192], index: 7, kind: output, shape index: {}]
  %s8 = sld [smem:[#allocation0]]
  $region38: #{net_forward.12} parent=0
    _
  %s10 = ssub.s32 1, %s8
  %s11 = scalar_select 0, %s10, %s8
  // Predicated region
  $region2: #{net_forward.12} parent=0 // pred_check
    _
  $region3: #{net_forward.12} parent=0 // pred_check_branch
    %13 = sbr.rel (0) target = $region5
  $region4: #{net_forward.12} parent=0 // pred_region
    _
  $region5: #{net_forward.12} parent=0 // pred_fallthru
    _
  // Predicated region
  $region6: #{net_forward.12} parent=0 // pred_check
    _
  $region7: #{net_forward.12} parent=0 // pred_check_branch
    %15 = sbr.rel (0) target = $region9
  $region8: #{net_forward.12} parent=0 // pred_region
    _
  $region9: #{net_forward.12} parent=0 // pred_fallthru
    _
  // Predicated region
  $region10: #{net_forward.12} parent=0 // pred_check
    _
  $region11: #{net_forward.12} parent=0 // pred_check_branch
    %17 = sbr.rel (0) target = $region13
  $region12: #{net_forward.12} parent=0 // pred_region
    _
  $region13: #{net_forward.12} parent=0 // pred_fallthru
    _
  // Predicated region
  $region14: #{net_forward.12} parent=0 // pred_check
    _
  $region15: #{net_forward.12} parent=0 // pred_check_branch
    %19 = sbr.rel (0) target = $region17
  $region16: #{net_forward.12} parent=0 // pred_region
    _
  $region17: #{net_forward.12} parent=0 // pred_fallthru
    _
  // Predicated region
  $region18: #{net_forward.12} parent=0 // pred_check
    _
  $region19: #{net_forward.12} parent=0 // pred_check_branch
    %21 = sbr.rel (0) target = $region21
  $region20: #{net_forward.12} parent=0 // pred_region
    _
  $region21: #{net_forward.12} parent=0 // pred_fallthru
    _
  // Predicated region
  $region22: #{net_forward.12} parent=0 // pred_check
    _
  $region23: #{net_forward.12} parent=0 // pred_check_branch
    %23 = sbr.rel (0) target = $region25
  $region24: #{net_forward.12} parent=0 // pred_region
    _
  $region25: #{net_forward.12} parent=0 // pred_fallthru
    _
  // Predicated region
  $region26: #{net_forward.12} parent=0 // pred_check
    _
  $region27: #{net_forward.12} parent=0 // pred_check_branch
    %25 = sbr.rel (0) target = $region29
  $region28: #{net_forward.12} parent=0 // pred_region
    _
  $region29: #{net_forward.12} parent=0 // pred_fallthru
    _
  %v27 = vld [vmem:[%s0] sm:$0xf]
  %v28 = vld [vmem:[%s0 + $0x4] sm:$0xf]
  %v29 = vld [vmem:[%s2] sm:$0xf]
  %v30 = vld [vmem:[%s2 + $0x4] sm:$0xf]
  %v31 = vld [vmem:[%s2 + $0x8] sm:$0xf]
  %v32 = vld [vmem:[%s2 + $0xc] sm:$0xf]
  %v33 = vld [vmem:[%s2 + $0x10] sm:$0xf]
  %v34 = vld [vmem:[%s2 + $0x14] sm:$0xf]
  %v35 = vld [vmem:[%s2 + $0x18] sm:$0xf]
  %v36 = vld [vmem:[%s2 + $0x1c] sm:$0xf]
  %v37 = vld [vmem:[%s2 + $0x20] sm:$0xf]
  %v38 = vld [vmem:[%s2 + $0x24] sm:$0xf]
  %v39 = vld [vmem:[%s2 + $0x28] sm:$0xf]
  %v40 = vld [vmem:[%s2 + $0x2c] sm:$0xf]
  %v41 = vld [vmem:[%s1] sm:$0xff]
  %v42 = vld [vmem:[%s1 + $0x8] sm:$0xff]
  %v43 = vld [vmem:[%s3] sm:$0x7]
  %45 = vset.pattern.permute.xlu0 0
  %46 = vperm.xlu0 %45, %v41
  %v47 = vpop.permute.xlu0 %46
  %50 = vset.pattern.permute.xlu0 0
  %51 = vperm.xlu0 %50, %v42
  %v52 = vpop.permute.xlu0 %51
  %v54 = vlaneseq
  %v55 = vshrl.u32 %v54, 7
  %v56 = vsub.s32 0, %v55
  %v57 = vrot.slane %v43, %v56
  %v58 = vmul.f32 %v47, %v57
  %v59 = vmul.f32 %v52, %v57
  %v62 = vunpack.c.l.b16 %v27
  %v63 = vunpack.c.l.b16 %v28
  %v64 = vpack.c.b16 %v63, %v62
  %v77 = vunpack.c.l.b16 %v29
  %v78 = vunpack.c.l.b16 %v30
  %v79 = vunpack.c.l.b16 %v31
  %v80 = vunpack.c.l.b16 %v32
  %v81 = vunpack.c.l.b16 %v33
  %v82 = vunpack.c.l.b16 %v34
  %v83 = vunpack.c.l.b16 %v35
  %v84 = vunpack.c.l.b16 %v36
  %v85 = vunpack.c.l.b16 %v37
  %v86 = vunpack.c.l.b16 %v38
  %v87 = vunpack.c.l.b16 %v39
  %v88 = vunpack.c.l.b16 %v40
  %v89 = vpack.c.b16 %v78, %v77
  %v90 = vpack.c.b16 %v80, %v79
  %v91 = vpack.c.b16 %v82, %v81
  %v92 = vpack.c.b16 %v84, %v83
  %v93 = vpack.c.b16 %v86, %v85
  %v94 = vpack.c.b16 %v88, %v87
  %vm101 = vcmask 785408
  %v103 = vsel %vm101, %v64, 0
  %105 = vmatprep.subr.bf16.mxu0 0
  %106 = vmatpush1.bf16.msra.mxu0 %v89
  %107 = vmatprep.subr.bf16.mxu0 0
  %108 = vmatpush1.bf16.msra.mxu0 %v90
  %109 = vmatprep.subr.bf16.mxu0 0
  %110 = vmatpush1.bf16.msra.mxu0 %v91
  %111 = vmatprep.subr.bf16.mxu0 0
  %112 = vmatpush1.bf16.msra.mxu0 %v92
  %113 = vmatprep.subr.bf16.mxu0 0
  %114 = vmatpush1.bf16.msra.mxu0 %v93
  %115 = vmatprep.subr.bf16.mxu0 0
  %116 = vmatpush1.bf16.msra.mxu0 %v94
  %117 = vmatprep.subr.bf16.mxu0 0
  %118 = vmatpush1.bf16.msra.mxu0 0
  %119 = vmatprep.subr.bf16.mxu0 0
  %120 = vmatpush1.bf16.msra.mxu0 0
  %121 = vmatprep.subr.bf16.mxu0 0
  %122 = vmatpush1.bf16.msra.mxu0 0
  %123 = vmatprep.subr.bf16.mxu0 0
  %124 = vmatpush1.bf16.msra.mxu0 0
  %125 = vmatprep.subr.bf16.mxu0 0
  %126 = vmatpush1.bf16.msra.mxu0 0
  %127 = vmatprep.subr.bf16.mxu0 0
  %128 = vmatpush1.bf16.msra.mxu0 0
  %129 = vmatprep.subr.bf16.mxu0 0
  %130 = vmatpush1.bf16.msra.mxu0 0
  %131 = vmatprep.subr.bf16.mxu0 0
  %132 = vmatpush1.bf16.msra.mxu0 0
  %133 = vmatprep.subr.bf16.mxu0 0
  %134 = vmatpush1.bf16.msra.mxu0 0
  %135 = vmatprep.subr.bf16.mxu0 0
  %136 = vmatpush1.bf16.msra.mxu0 0
  %137 = vmatprep.mubr.bf16.mxu0 0
  %138 = vmatmul.mubr.bf16.gmra.mrb[0].mxu0 %v103
  %v139 = vpop.f32.mrb[0].mxu0
  %v140 = vadd.f32 %v58, %v139
  %v141 = vpop.f32.mrb[0].mxu0
  %v142 = vpop.f32.mrb[0].mxu0
  %v143 = vadd.f32 %v59, %v142
  %v144 = vpop.f32.mrb[0].mxu0
  %145 = vdwg.mxu0
  %146 = vset.pattern.permute.xlu0 1
  %147 = vperm.xlu0 %146, %v41
  %v148 = vpop.permute.xlu0 %147
  %150 = vset.pattern.permute.xlu0 1
  %151 = vperm.xlu0 %150, %v42
  %v152 = vpop.permute.xlu0 %151
  %v154 = vlaneseq
  %v155 = vshrl.u32 %v154, 7
  %v156 = vsub.s32 1, %v155
  %v157 = vrot.slane %v43, %v156
  %v158 = vmul.f32 %v148, %v157
  %v159 = vmul.f32 %v152, %v157
  %v160 = vadd.f32 %v140, %v158
  %v161 = vadd.f32 %v143, %v159
  %162 = vset.pattern.permute.xlu0 2
  %163 = vperm.xlu0 %162, %v41
  %v164 = vpop.permute.xlu0 %163
  %166 = vset.pattern.permute.xlu0 2
  %167 = vperm.xlu0 %166, %v42
  %v168 = vpop.permute.xlu0 %167
  %v170 = vlaneseq
  %v171 = vshrl.u32 %v170, 7
  %v172 = vsub.s32 2, %v171
  %v173 = vrot.slane %v43, %v172
  %v174 = vmul.f32 %v164, %v173
  %v175 = vmul.f32 %v168, %v173
  %v176 = vadd.f32 %v160, %v174
  %v177 = vadd.f32 %v161, %v175
  %v178 = vld [vmem:[%s4] sm:$0x1]
  %v180 = vlaneseq
  %v181 = vshrl.u32 %v180, 7
  %v182 = vsub.s32 0, %v181
  %v183 = vrot.slane %v178, %v182
  %v185 = vadd.f32 %v176, %v183
  %v186 = vadd.f32 %v177, %v183
  %v187 = vmax.f32 %v185, 0.0
  %v188 = vmax.f32 %v186, 0.0
  %v189 = vpack.c.bf16 %v188, %v187
  %v190 = vld [vmem:[%s5] sm:$0xff]
  %v191 = vld [vmem:[%s5 + $0x8] sm:$0xff]
  %v192 = vld [vmem:[%s5 + $0x10] sm:$0xff]
  %v193 = vld [vmem:[%s5 + $0x18] sm:$0xff]
  %v194 = vld [vmem:[%s6] sm:$0x3]
  %v196 = vlaneseq
  %v197 = vshrl.u32 %v196, 7
  %v198 = vsub.s32 0, %v197
  %v199 = vrot.slane %v194, %v198
  %v200 = vlaneseq
  %v201 = vshrl.u32 %v200, 7
  %v202 = vsub.s32 1, %v201
  %v203 = vrot.slane %v194, %v202
  %v210 = vunpack.c.l.b16 %v190
  %v211 = vunpack.c.h.b16 %v190
  %v212 = vunpack.c.l.b16 %v191
  %v213 = vunpack.c.h.b16 %v191
  %v214 = vunpack.c.l.b16 %v192
  %v215 = vunpack.c.h.b16 %v192
  %v216 = vunpack.c.l.b16 %v193
  %v217 = vunpack.c.h.b16 %v193
  %v218 = vpack.c.b16 %v212, %v210
  %v219 = vpack.c.b16 %v213, %v211
  %v220 = vpack.c.b16 %v216, %v214
  %v221 = vpack.c.b16 %v217, %v215
  %vm226 = vcmask 261120
  %v228 = vsel %vm226, %v189, 0
  %230 = vmatprep.subr.bf16.mxu0 %v219
  %231 = vmatpush1.bf16.msra.mxu0 %v218
  %232 = vmatprep.subr.bf16.mxu0 %v221
  %233 = vmatpush1.bf16.msra.mxu0 %v220
  %234 = vmatprep.subr.bf16.mxu0 0
  %235 = vmatpush1.bf16.msra.mxu0 0
  %236 = vmatprep.subr.bf16.mxu0 0
  %237 = vmatpush1.bf16.msra.mxu0 0
  %238 = vmatprep.subr.bf16.mxu0 0
  %239 = vmatpush1.bf16.msra.mxu0 0
  %240 = vmatprep.subr.bf16.mxu0 0
  %241 = vmatpush1.bf16.msra.mxu0 0
  %242 = vmatprep.subr.bf16.mxu0 0
  %243 = vmatpush1.bf16.msra.mxu0 0
  %244 = vmatprep.subr.bf16.mxu0 0
  %245 = vmatpush1.bf16.msra.mxu0 0
  %246 = vmatprep.subr.bf16.mxu0 0
  %247 = vmatpush1.bf16.msra.mxu0 0
  %248 = vmatprep.subr.bf16.mxu0 0
  %249 = vmatpush1.bf16.msra.mxu0 0
  %250 = vmatprep.subr.bf16.mxu0 0
  %251 = vmatpush1.bf16.msra.mxu0 0
  %252 = vmatprep.subr.bf16.mxu0 0
  %253 = vmatpush1.bf16.msra.mxu0 0
  %254 = vmatprep.subr.bf16.mxu0 0
  %255 = vmatpush1.bf16.msra.mxu0 0
  %256 = vmatprep.subr.bf16.mxu0 0
  %257 = vmatpush1.bf16.msra.mxu0 0
  %258 = vmatprep.subr.bf16.mxu0 0
  %259 = vmatpush1.bf16.msra.mxu0 0
  %260 = vmatprep.subr.bf16.mxu0 0
  %261 = vmatpush1.bf16.msra.mxu0 0
  %262 = vmatprep.mubr.bf16.mxu0 0
  %263 = vmatmul.mubr.bf16.gmra.mrb[0].mxu0 %v228
  %v264 = vpop.f32.mrb[0].mxu0
  %v265 = vadd.f32 %v199, %v264
  %v266 = vpop.f32.mrb[0].mxu0
  %v267 = vadd.f32 %v203, %v266
  %v268 = vpop.f32.mrb[0].mxu0
  %v269 = vadd.f32 %v199, %v268
  %v270 = vpop.f32.mrb[0].mxu0
  %v271 = vadd.f32 %v203, %v270
  %272 = vdwg.mxu0
  %v273 = vmax.f32 %v265, 0.0
  %v274 = vmax.f32 %v267, 0.0
  %v275 = vmax.f32 %v269, 0.0
  %v276 = vmax.f32 %v271, 0.0
  %v277 = vpack.c.bf16 %v275, %v273
  %v278 = vpack.c.bf16 %v276, %v274
  %v281 = vunpack.c.l.b16 %v277
  %v282 = vunpack.c.l.b16 %v278
  %v283 = vunpack.c.h.b16 %v277
  %v284 = vunpack.c.h.b16 %v278
  %v285 = vpack.c.b16 %v282, %v281
  %v286 = vpack.c.b16 %v284, %v283
  %vm289 = vcmask 1043456
  %vm290 = vcmask 523268
  %vm291 = vmor %vm290, %vm289
  %292 = vst.msk [vmem:[%s7] sm:$0xff] %vm291, %v285
  %293 = vst.msk [vmem:[%s7 + $0x8] sm:$0xff] %vm291, %v286
  // Predicated region
  $region30: #{net_forward.12} parent=0 // pred_check
    _
  $region31: #{net_forward.12} parent=0 // pred_check_branch
    %295 = sbr.rel (0) target = $region33
  $region32: #{net_forward.12} parent=0 // pred_region
    _
  $region33: #{net_forward.12} parent=0 // pred_fallthru
    _
  // Predicated region
  $region34: #{net_forward.12} parent=0 // pred_check
    _
  $region35: #{net_forward.12} parent=0 // pred_check_branch
    %297 = sbr.rel (0) target = $region37
  $region36: #{net_forward.12} parent=0 // pred_region
    _
  $region37: #{net_forward.12} parent=0 // pred_fallthru
    _

// kernel: net_forward.13
$region0: #{net_forward.13}
  #allocation0 [shape = 'u32[]', space=smem, size = 0x4, offset = 0x4, fixed_abs, tag = 'smem constant byte address 0x4 - core index']
  #allocation1 [shape = 'u32[144,128]{1,0:T(1,128)}', space=vmem, size = 0x12000, scoped, tag = 'internal scratch']
  %s0 = inlined_call_operand.vmem [shape: bf16[16,192], index: 0, kind: input, shape index: {}]
  %s1 = inlined_call_operand.vmem [shape: f32[16,3], index: 1, kind: input, shape index: {}]
  %s2 = inlined_call_operand.vmem [shape: bf16[192,32], index: 2, kind: input, shape index: {}]
  %s3 = inlined_call_operand.vmem [shape: f32[3,32], index: 3, kind: input, shape index: {}]
  %s4 = inlined_call_operand.vmem [shape: f32[1,32], index: 4, kind: input, shape index: {}]
  %s5 = inlined_call_operand.vmem [shape: bf16[32,384], index: 5, kind: input, shape index: {}]
  %s6 = inlined_call_operand.vmem [shape: f32[1,384], index: 6, kind: input, shape index: {}]
  %s7 = inlined_call_operand.vmem [shape: bf16[16,384], index: 7, kind: output, shape index: {}]
  %s8 = sld [smem:[#allocation0]]
  $region38: #{net_forward.13} parent=0
    _
  %s10 = ssub.s32 1, %s8
  %s11 = scalar_select 0, %s10, %s8
  // Predicated region
  $region2: #{net_forward.13} parent=0 // pred_check
    _
  $region3: #{net_forward.13} parent=0 // pred_check_branch
    %13 = sbr.rel (0) target = $region5
  $region4: #{net_forward.13} parent=0 // pred_region
    _
  $region5: #{net_forward.13} parent=0 // pred_fallthru
    _
  // Predicated region
  $region6: #{net_forward.13} parent=0 // pred_check
    _
  $region7: #{net_forward.13} parent=0 // pred_check_branch
    %15 = sbr.rel (0) target = $region9
  $region8: #{net_forward.13} parent=0 // pred_region
    _
  $region9: #{net_forward.13} parent=0 // pred_fallthru
    _
  // Predicated region
  $region10: #{net_forward.13} parent=0 // pred_check
    _
  $region11: #{net_forward.13} parent=0 // pred_check_branch
    %17 = sbr.rel (0) target = $region13
  $region12: #{net_forward.13} parent=0 // pred_region
    _
  $region13: #{net_forward.13} parent=0 // pred_fallthru
    _
  // Predicated region
  $region14: #{net_forward.13} parent=0 // pred_check
    _
  $region15: #{net_forward.13} parent=0 // pred_check_branch
    %19 = sbr.rel (0) target = $region17
  $region16: #{net_forward.13} parent=0 // pred_region
    _
  $region17: #{net_forward.13} parent=0 // pred_fallthru
    _
  // Predicated region
  $region18: #{net_forward.13} parent=0 // pred_check
    _
  $region19: #{net_forward.13} parent=0 // pred_check_branch
    %21 = sbr.rel (0) target = $region21
  $region20: #{net_forward.13} parent=0 // pred_region
    _
  $region21: #{net_forward.13} parent=0 // pred_fallthru
    _
  // Predicated region
  $region22: #{net_forward.13} parent=0 // pred_check
    _
  $region23: #{net_forward.13} parent=0 // pred_check_branch
    %23 = sbr.rel (0) target = $region25
  $region24: #{net_forward.13} parent=0 // pred_region
    _
  $region25: #{net_forward.13} parent=0 // pred_fallthru
    _
  // Predicated region
  $region26: #{net_forward.13} parent=0 // pred_check
    _
  $region27: #{net_forward.13} parent=0 // pred_check_branch
    %25 = sbr.rel (0) target = $region29
  $region28: #{net_forward.13} parent=0 // pred_region
    _
  $region29: #{net_forward.13} parent=0 // pred_fallthru
    _
  %v27 = vld [vmem:[%s0] sm:$0xff]
  %v28 = vld [vmem:[%s0 + $0x8] sm:$0xff]
  %v29 = vld [vmem:[%s2] sm:$0xf]
  %v30 = vld [vmem:[%s2 + $0x4] sm:$0xf]
  %v31 = vld [vmem:[%s2 + $0x8] sm:$0xf]
  %v32 = vld [vmem:[%s2 + $0xc] sm:$0xf]
  %v33 = vld [vmem:[%s2 + $0x10] sm:$0xf]
  %v34 = vld [vmem:[%s2 + $0x14] sm:$0xf]
  %v35 = vld [vmem:[%s2 + $0x18] sm:$0xf]
  %v36 = vld [vmem:[%s2 + $0x1c] sm:$0xf]
  %v37 = vld [vmem:[%s2 + $0x20] sm:$0xf]
  %v38 = vld [vmem:[%s2 + $0x24] sm:$0xf]
  %v39 = vld [vmem:[%s2 + $0x28] sm:$0xf]
  %v40 = vld [vmem:[%s2 + $0x2c] sm:$0xf]
  %v41 = vld [vmem:[%s2 + $0x30] sm:$0xf]
  %v42 = vld [vmem:[%s2 + $0x34] sm:$0xf]
  %v43 = vld [vmem:[%s2 + $0x38] sm:$0xf]
  %v44 = vld [vmem:[%s2 + $0x3c] sm:$0xf]
  %v45 = vld [vmem:[%s2 + $0x40] sm:$0xf]
  %v46 = vld [vmem:[%s2 + $0x44] sm:$0xf]
  %v47 = vld [vmem:[%s2 + $0x48] sm:$0xf]
  %v48 = vld [vmem:[%s2 + $0x4c] sm:$0xf]
  %v49 = vld [vmem:[%s2 + $0x50] sm:$0xf]
  %v50 = vld [vmem:[%s2 + $0x54] sm:$0xf]
  %v51 = vld [vmem:[%s2 + $0x58] sm:$0xf]
  %v52 = vld [vmem:[%s2 + $0x5c] sm:$0xf]
  %v53 = vld [vmem:[%s1] sm:$0xff]
  %v54 = vld [vmem:[%s1 + $0x8] sm:$0xff]
  %v55 = vld [vmem:[%s3] sm:$0x7]
  %57 = vset.pattern.permute.xlu0 0
  %58 = vperm.xlu0 %57, %v53
  %v59 = vpop.permute.xlu0 %58
  %62 = vset.pattern.permute.xlu0 0
  %63 = vperm.xlu0 %62, %v54
  %v64 = vpop.permute.xlu0 %63
  %v66 = vlaneseq
  %v67 = vshrl.u32 %v66, 7
  %v68 = vsub.s32 0, %v67
  %v69 = vrot.slane %v55, %v68
  %v70 = vmul.f32 %v59, %v69
  %v71 = vmul.f32 %v64, %v69
  %v74 = vunpack.c.l.b16 %v27
  %v75 = vunpack.c.h.b16 %v27
  %v76 = vunpack.c.l.b16 %v28
  %v77 = vunpack.c.h.b16 %v28
  %v78 = vpack.c.b16 %v76, %v74
  %v79 = vpack.c.b16 %v77, %v75
  %v105 = vunpack.c.l.b16 %v29
  %v106 = vunpack.c.l.b16 %v30
  %v107 = vunpack.c.l.b16 %v31
  %v108 = vunpack.c.l.b16 %v32
  %v109 = vunpack.c.l.b16 %v33
  %v110 = vunpack.c.l.b16 %v34
  %v111 = vunpack.c.l.b16 %v35
  %v112 = vunpack.c.l.b16 %v36
  %v113 = vunpack.c.l.b16 %v37
  %v114 = vunpack.c.l.b16 %v38
  %v115 = vunpack.c.l.b16 %v39
  %v116 = vunpack.c.l.b16 %v40
  %v117 = vunpack.c.l.b16 %v41
  %v118 = vunpack.c.l.b16 %v42
  %v119 = vunpack.c.l.b16 %v43
  %v120 = vunpack.c.l.b16 %v44
  %v121 = vunpack.c.l.b16 %v45
  %v122 = vunpack.c.l.b16 %v46
  %v123 = vunpack.c.l.b16 %v47
  %v124 = vunpack.c.l.b16 %v48
  %v125 = vunpack.c.l.b16 %v49
  %v126 = vunpack.c.l.b16 %v50
  %v127 = vunpack.c.l.b16 %v51
  %v128 = vunpack.c.l.b16 %v52
  %v129 = vpack.c.b16 %v106, %v105
  %v130 = vpack.c.b16 %v108, %v107
  %v131 = vpack.c.b16 %v110, %v109
  %v132 = vpack.c.b16 %v112, %v111
  %v133 = vpack.c.b16 %v114, %v113
  %v134 = vpack.c.b16 %v116, %v115
  %v135 = vpack.c.b16 %v118, %v117
  %v136 = vpack.c.b16 %v120, %v119
  %v137 = vpack.c.b16 %v122, %v121
  %v138 = vpack.c.b16 %v124, %v123
  %v139 = vpack.c.b16 %v126, %v125
  %v140 = vpack.c.b16 %v128, %v127
  %vm153 = vcmask 523264
  %v155 = vsel %vm153, %v79, 0
  %157 = vmatprep.subr.bf16.mxu0 0
  %158 = vmatpush1.bf16.msra.mxu0 %v129
  %159 = vmatprep.subr.bf16.mxu0 0
  %160 = vmatpush1.bf16.msra.mxu0 %v130
  %161 = vmatprep.subr.bf16.mxu0 0
  %162 = vmatpush1.bf16.msra.mxu0 %v131
  %163 = vmatprep.subr.bf16.mxu0 0
  %164 = vmatpush1.bf16.msra.mxu0 %v132
  %165 = vmatprep.subr.bf16.mxu0 0
  %166 = vmatpush1.bf16.msra.mxu0 %v133
  %167 = vmatprep.subr.bf16.mxu0 0
  %168 = vmatpush1.bf16.msra.mxu0 %v134
  %169 = vmatprep.subr.bf16.mxu0 0
  %170 = vmatpush1.bf16.msra.mxu0 %v135
  %171 = vmatprep.subr.bf16.mxu0 0
  %172 = vmatpush1.bf16.msra.mxu0 %v136
  %173 = vmatprep.subr.bf16.mxu0 0
  %174 = vmatpush1.bf16.msra.mxu0 %v137
  %175 = vmatprep.subr.bf16.mxu0 0
  %176 = vmatpush1.bf16.msra.mxu0 %v138
  %177 = vmatprep.subr.bf16.mxu0 0
  %178 = vmatpush1.bf16.msra.mxu0 %v139
  %179 = vmatprep.subr.bf16.mxu0 0
  %180 = vmatpush1.bf16.msra.mxu0 %v140
  %181 = vmatprep.subr.bf16.mxu0 0
  %182 = vmatpush1.bf16.msra.mxu0 0
  %183 = vmatprep.subr.bf16.mxu0 0
  %184 = vmatpush1.bf16.msra.mxu0 0
  %185 = vmatprep.subr.bf16.mxu0 0
  %186 = vmatpush1.bf16.msra.mxu0 0
  %187 = vmatprep.subr.bf16.mxu0 0
  %188 = vmatpush1.bf16.msra.mxu0 0
  %189 = vmatprep.mubr.bf16.mxu0 %v155
  %190 = vmatmul.mubr.bf16.gmra.mrb[0].mxu0 %v78
  %v191 = vpop.f32.mrb[0].mxu0
  %v192 = vadd.f32 %v70, %v191
  %v193 = vpop.f32.mrb[0].mxu0
  %v194 = vpop.f32.mrb[0].mxu0
  %v195 = vadd.f32 %v71, %v194
  %v196 = vpop.f32.mrb[0].mxu0
  %197 = vdwg.mxu0
  %198 = vset.pattern.permute.xlu0 1
  %199 = vperm.xlu0 %198, %v53
  %v200 = vpop.permute.xlu0 %199
  %202 = vset.pattern.permute.xlu0 1
  %203 = vperm.xlu0 %202, %v54
  %v204 = vpop.permute.xlu0 %203
  %v206 = vlaneseq
  %v207 = vshrl.u32 %v206, 7
  %v208 = vsub.s32 1, %v207
  %v209 = vrot.slane %v55, %v208
  %v210 = vmul.f32 %v200, %v209
  %v211 = vmul.f32 %v204, %v209
  %v212 = vadd.f32 %v192, %v210
  %v213 = vadd.f32 %v195, %v211
  %214 = vset.pattern.permute.xlu0 2
  %215 = vperm.xlu0 %214, %v53
  %v216 = vpop.permute.xlu0 %215
  %218 = vset.pattern.permute.xlu0 2
  %219 = vperm.xlu0 %218, %v54
  %v220 = vpop.permute.xlu0 %219
  %v222 = vlaneseq
  %v223 = vshrl.u32 %v222, 7
  %v224 = vsub.s32 2, %v223
  %v225 = vrot.slane %v55, %v224
  %v226 = vmul.f32 %v216, %v225
  %v227 = vmul.f32 %v220, %v225
  %v228 = vadd.f32 %v212, %v226
  %v229 = vadd.f32 %v213, %v227
  %v230 = vld [vmem:[%s4] sm:$0x1]
  %v232 = vlaneseq
  %v233 = vshrl.u32 %v232, 7
  %v234 = vsub.s32 0, %v233
  %v235 = vrot.slane %v230, %v234
  %v237 = vadd.f32 %v228, %v235
  %v238 = vadd.f32 %v229, %v235
  %v239 = vmax.f32 %v237, 0.0
  %v240 = vmax.f32 %v238, 0.0
  %v241 = vpack.c.bf16 %v240, %v239
  %v242 = vld [vmem:[%s5] sm:$0xff]
  %v243 = vld [vmem:[%s5 + $0x8] sm:$0xf]
  %v244 = vld [vmem:[%s5 + $0xc] sm:$0xff]
  %v245 = vld [vmem:[%s5 + $0x14] sm:$0xf]
  %v246 = vld [vmem:[%s5 + $0x18] sm:$0xff]
  %v247 = vld [vmem:[%s5 + $0x20] sm:$0xf]
  %v248 = vld [vmem:[%s5 + $0x24] sm:$0xff]
  %v249 = vld [vmem:[%s5 + $0x2c] sm:$0xf]
  %v250 = vld [vmem:[%s6] sm:$0x7]
  %v252 = vlaneseq
  %v253 = vshrl.u32 %v252, 7
  %v254 = vsub.s32 0, %v253
  %v255 = vrot.slane %v250, %v254
  %v256 = vlaneseq
  %v257 = vshrl.u32 %v256, 7
  %v258 = vsub.s32 1, %v257
  %v259 = vrot.slane %v250, %v258
  %v260 = vlaneseq
  %v261 = vshrl.u32 %v260, 7
  %v262 = vsub.s32 2, %v261
  %v263 = vrot.slane %v250, %v262
  %v275 = vunpack.c.l.b16 %v242
  %v276 = vunpack.c.h.b16 %v242
  %v277 = vunpack.c.l.b16 %v243
  %v278 = vunpack.c.l.b16 %v244
  %v279 = vunpack.c.h.b16 %v244
  %v280 = vunpack.c.l.b16 %v245
  %v281 = vunpack.c.l.b16 %v246
  %v282 = vunpack.c.h.b16 %v246
  %v283 = vunpack.c.l.b16 %v247
  %v284 = vunpack.c.l.b16 %v248
  %v285 = vunpack.c.h.b16 %v248
  %v286 = vunpack.c.l.b16 %v249
  %v287 = vpack.c.b16 %v278, %v275
  %v288 = vpack.c.b16 %v279, %v276
  %v289 = vpack.c.b16 %v280, %v277
  %v290 = vpack.c.b16 %v284, %v281
  %v291 = vpack.c.b16 %v285, %v282
  %v292 = vpack.c.b16 %v286, %v283
  %vm299 = vcmask 261120
  %v301 = vsel %vm299, %v241, 0
  %303 = vmatprep.subr.bf16.mxu0 %v288
  %304 = vmatpush1.bf16.msra.mxu0 %v287
  %305 = vmatprep.subr.bf16.mxu0 %v291
  %306 = vmatpush1.bf16.msra.mxu0 %v290
  %307 = vmatprep.subr.bf16.mxu0 0
  %308 = vmatpush1.bf16.msra.mxu0 0
  %309 = vmatprep.subr.bf16.mxu0 0
  %310 = vmatpush1.bf16.msra.mxu0 0
  %311 = vmatprep.subr.bf16.mxu0 0
  %312 = vmatpush1.bf16.msra.mxu0 0
  %313 = vmatprep.subr.bf16.mxu0 0
  %314 = vmatpush1.bf16.msra.mxu0 0
  %315 = vmatprep.subr.bf16.mxu0 0
  %316 = vmatpush1.bf16.msra.mxu0 0
  %317 = vmatprep.subr.bf16.mxu0 0
  %318 = vmatpush1.bf16.msra.mxu0 0
  %319 = vmatprep.subr.bf16.mxu0 0
  %320 = vmatpush1.bf16.msra.mxu0 0
  %321 = vmatprep.subr.bf16.mxu0 0
  %322 = vmatpush1.bf16.msra.mxu0 0
  %323 = vmatprep.subr.bf16.mxu0 0
  %324 = vmatpush1.bf16.msra.mxu0 0
  %325 = vmatprep.subr.bf16.mxu0 0
  %326 = vmatpush1.bf16.msra.mxu0 0
  %327 = vmatprep.subr.bf16.mxu0 0
  %328 = vmatpush1.bf16.msra.mxu0 0
  %329 = vmatprep.subr.bf16.mxu0 0
  %330 = vmatpush1.bf16.msra.mxu0 0
  %331 = vmatprep.subr.bf16.mxu0 0
  %332 = vmatpush1.bf16.msra.mxu0 0
  %333 = vmatprep.subr.bf16.mxu0 0
  %334 = vmatpush1.bf16.msra.mxu0 0
  %335 = vmatprep.mubr.bf16.mxu0 0
  %336 = vmatmul.mubr.bf16.gmra.mrb[0].mxu0 %v301
  %v337 = vpop.f32.mrb[0].mxu0
  %v338 = vadd.f32 %v255, %v337
  %v339 = vpop.f32.mrb[0].mxu0
  %v340 = vadd.f32 %v259, %v339
  %v341 = vpop.f32.mrb[0].mxu0
  %v342 = vadd.f32 %v255, %v341
  %v343 = vpop.f32.mrb[0].mxu0
  %v344 = vadd.f32 %v259, %v343
  %345 = vdwg.mxu0
  %346 = vmatprep.subr.bf16.mxu0 0
  %347 = vmatpush1.bf16.msra.mxu0 %v289
  %348 = vmatprep.subr.bf16.mxu0 0
  %349 = vmatpush1.bf16.msra.mxu0 %v292
  %350 = vmatprep.subr.bf16.mxu0 0
  %351 = vmatpush1.bf16.msra.mxu0 0
  %352 = vmatprep.subr.bf16.mxu0 0
  %353 = vmatpush1.bf16.msra.mxu0 0
  %354 = vmatprep.subr.bf16.mxu0 0
  %355 = vmatpush1.bf16.msra.mxu0 0
  %356 = vmatprep.subr.bf16.mxu0 0
  %357 = vmatpush1.bf16.msra.mxu0 0
  %358 = vmatprep.subr.bf16.mxu0 0
  %359 = vmatpush1.bf16.msra.mxu0 0
  %360 = vmatprep.subr.bf16.mxu0 0
  %361 = vmatpush1.bf16.msra.mxu0 0
  %362 = vmatprep.subr.bf16.mxu0 0
  %363 = vmatpush1.bf16.msra.mxu0 0
  %364 = vmatprep.subr.bf16.mxu0 0
  %365 = vmatpush1.bf16.msra.mxu0 0
  %366 = vmatprep.subr.bf16.mxu0 0
  %367 = vmatpush1.bf16.msra.mxu0 0
  %368 = vmatprep.subr.bf16.mxu0 0
  %369 = vmatpush1.bf16.msra.mxu0 0
  %370 = vmatprep.subr.bf16.mxu0 0
  %371 = vmatpush1.bf16.msra.mxu0 0
  %372 = vmatprep.subr.bf16.mxu0 0
  %373 = vmatpush1.bf16.msra.mxu0 0
  %374 = vmatprep.subr.bf16.mxu0 0
  %375 = vmatpush1.bf16.msra.mxu0 0
  %376 = vmatprep.subr.bf16.mxu0 0
  %377 = vmatpush1.bf16.msra.mxu0 0
  %378 = vmatprep.mubr.bf16.mxu0 0
  %379 = vmatmul.mubr.bf16.gmra.mrb[0].mxu0 %v301
  %v380 = vpop.f32.mrb[0].mxu0
  %v381 = vadd.f32 %v263, %v380
  %v382 = vpop.f32.mrb[0].mxu0
  %v383 = vpop.f32.mrb[0].mxu0
  %v384 = vadd.f32 %v263, %v383
  %v385 = vpop.f32.mrb[0].mxu0
  %386 = vdwg.mxu0
  %v387 = vmax.f32 %v338, 0.0
  %v388 = vmax.f32 %v340, 0.0
  %v389 = vmax.f32 %v381, 0.0
  %v390 = vmax.f32 %v342, 0.0
  %v391 = vmax.f32 %v344, 0.0
  %v392 = vmax.f32 %v384, 0.0
  %v393 = vpack.c.bf16 %v390, %v387
  %v394 = vpack.c.bf16 %v391, %v388
  %v395 = vpack.c.bf16 %v392, %v389
  %v399 = vunpack.c.l.b16 %v393
  %v400 = vunpack.c.l.b16 %v394
  %v401 = vunpack.c.l.b16 %v395
  %v402 = vunpack.c.h.b16 %v393
  %v403 = vunpack.c.h.b16 %v394
  %v404 = vunpack.c.h.b16 %v395
  %v405 = vpack.c.b16 %v400, %v399
  %v406 = vpack.c.b16 %v401, %v401
  %v407 = vpack.c.b16 %v403, %v402
  %v408 = vpack.c.b16 %v404, %v404
  %413 = vst [vmem:[%s7] sm:$0xff] %v405
  %414 = vst [vmem:[%s7 + $0x8] sm:$0xf] %v406
  %415 = vst [vmem:[%s7 + $0xc] sm:$0xff] %v407
  %416 = vst [vmem:[%s7 + $0x14] sm:$0xf] %v408
  // Predicated region
  $region30: #{net_forward.13} parent=0 // pred_check
    _
  $region31: #{net_forward.13} parent=0 // pred_check_branch
    %418 = sbr.rel (0) target = $region33
  $region32: #{net_forward.13} parent=0 // pred_region
    _
  $region33: #{net_forward.13} parent=0 // pred_fallthru
    _
  // Predicated region
  $region34: #{net_forward.13} parent=0 // pred_check
    _
  $region35: #{net_forward.13} parent=0 // pred_check_branch
    %420 = sbr.rel (0) target = $region37
  $region36: #{net_forward.13} parent=0 // pred_region
    _
  $region37: #{net_forward.13} parent=0 // pred_fallthru
    _

// kernel: net_forward.14
$region0: #{net_forward.14}
  #allocation0 [shape = 'u32[]', space=smem, size = 0x4, offset = 0x4, fixed_abs, tag = 'smem constant byte address 0x4 - core index']
  #allocation1 [shape = 'u32[144,128]{1,0:T(1,128)}', space=vmem, size = 0x12000, scoped, tag = 'internal scratch']
  #allocation2 [shape = 'f32[2,384]{1,0:T(2,128)}', space=vmem, size = 0xc00, scoped, tag = 'scratch operand']
  %s0 = inlined_call_operand.vmem [shape: bf16[2,16], index: 0, kind: input, shape index: {}]
  %s1 = inlined_call_operand.vmem [shape: bf16[16,384], index: 1, kind: input, shape index: {}]
  %s2 = inlined_call_operand.vmem [shape: f32[2,1], index: 2, kind: input, shape index: {}]
  %s3 = inlined_call_operand.vmem [shape: bf16[384,256], index: 3, kind: input, shape index: {}]
  %s4 = inlined_call_operand.vmem [shape: f32[1,256], index: 4, kind: input, shape index: {}]
  %s5 = inlined_call_operand.vmem [shape: bf16[256,128], index: 5, kind: input, shape index: {}]
  %s6 = inlined_call_operand.vmem [shape: f32[1,128], index: 6, kind: input, shape index: {}]
  %s7 = inlined_call_operand.vmem [shape: bf16[2,128], index: 7, kind: output, shape index: {}]
  %s8 = sld [smem:[#allocation0]]
  $region46: #{net_forward.14} parent=0
    _
  %s10 = ssub.s32 1, %s8
  %s11 = scalar_select 0, %s10, %s8
  // Predicated region
  $region2: #{net_forward.14} parent=0 // pred_check
    _
  $region3: #{net_forward.14} parent=0 // pred_check_branch
    %13 = sbr.rel (0) target = $region5
  $region4: #{net_forward.14} parent=0 // pred_region
    _
  $region5: #{net_forward.14} parent=0 // pred_fallthru
    _
  // Predicated region
  $region6: #{net_forward.14} parent=0 // pred_check
    _
  $region7: #{net_forward.14} parent=0 // pred_check_branch
    %15 = sbr.rel (0) target = $region9
  $region8: #{net_forward.14} parent=0 // pred_region
    _
  $region9: #{net_forward.14} parent=0 // pred_fallthru
    _
  // Predicated region
  $region10: #{net_forward.14} parent=0 // pred_check
    _
  $region11: #{net_forward.14} parent=0 // pred_check_branch
    %17 = sbr.rel (0) target = $region13
  $region12: #{net_forward.14} parent=0 // pred_region
    _
  $region13: #{net_forward.14} parent=0 // pred_fallthru
    _
  // Predicated region
  $region14: #{net_forward.14} parent=0 // pred_check
    _
  $region15: #{net_forward.14} parent=0 // pred_check_branch
    %19 = sbr.rel (0) target = $region17
  $region16: #{net_forward.14} parent=0 // pred_region
    _
  $region17: #{net_forward.14} parent=0 // pred_fallthru
    _
  // Predicated region
  $region18: #{net_forward.14} parent=0 // pred_check
    _
  $region19: #{net_forward.14} parent=0 // pred_check_branch
    %21 = sbr.rel (0) target = $region21
  $region20: #{net_forward.14} parent=0 // pred_region
    _
  $region21: #{net_forward.14} parent=0 // pred_fallthru
    _
  // Predicated region
  $region22: #{net_forward.14} parent=0 // pred_check
    _
  $region23: #{net_forward.14} parent=0 // pred_check_branch
    %23 = sbr.rel (0) target = $region25
  $region24: #{net_forward.14} parent=0 // pred_region
    _
  $region25: #{net_forward.14} parent=0 // pred_fallthru
    _
  // Predicated region
  $region26: #{net_forward.14} parent=0 // pred_check
    _
  $region27: #{net_forward.14} parent=0 // pred_check_branch
    %25 = sbr.rel (0) target = $region29
  $region28: #{net_forward.14} parent=0 // pred_region
    _
  $region29: #{net_forward.14} parent=0 // pred_fallthru
    _
  %p27 = scmp.eq.s32.totalorder 0, 0
  // Predicated region
  $region30: #{net_forward.14} parent=0 // pred_check
    %p28 = pneg %p27
  $region31: #{net_forward.14} parent=0 // pred_check_branch
    %30 = sbr.rel (%p28) target = $region33
  $region32: #{net_forward.14} parent=0 // pred_region
    %31 = vst [vmem:[#allocation2] sm:$0x3f] 0.0
  $region33: #{net_forward.14} parent=0 // pred_fallthru
    _
  %v32 = vld [vmem:[#allocation2] sm:$0x3f]
  %v33 = vld [vmem:[%s0] sm:$0x1]
  %v34 = vld [vmem:[%s1] sm:$0xff]
  %v35 = vld [vmem:[%s1 + $0x8] sm:$0xf]
  %v36 = vld [vmem:[%s1 + $0xc] sm:$0xff]
  %v37 = vld [vmem:[%s1 + $0x14] sm:$0xf]
  %v42 = vunpack.c.l.b16 %v34
  %v43 = vunpack.c.h.b16 %v34
  %v44 = vunpack.c.l.b16 %v35
  %v45 = vunpack.c.l.b16 %v36
  %v46 = vunpack.c.h.b16 %v36
  %v47 = vunpack.c.l.b16 %v37
  %v48 = vpack.c.b16 %v45, %v42
  %v49 = vpack.c.b16 %v46, %v43
  %v50 = vpack.c.b16 %v47, %v44
  %vm54 = vcmask 130048
  %v56 = vsel %vm54, %v33, 0
  %58 = vmatprep.subr.bf16.mxu0 %v49
  %59 = vmatpush1.bf16.msra.mxu0 %v48
  %60 = vmatprep.subr.bf16.mxu0 0
  %61 = vmatpush1.bf16.msra.mxu0 0
  %62 = vmatprep.subr.bf16.mxu0 0
  %63 = vmatpush1.bf16.msra.mxu0 0
  %64 = vmatprep.subr.bf16.mxu0 0
  %65 = vmatpush1.bf16.msra.mxu0 0
  %66 = vmatprep.subr.bf16.mxu0 0
  %67 = vmatpush1.bf16.msra.mxu0 0
  %68 = vmatprep.subr.bf16.mxu0 0
  %69 = vmatpush1.bf16.msra.mxu0 0
  %70 = vmatprep.subr.bf16.mxu0 0
  %71 = vmatpush1.bf16.msra.mxu0 0
  %72 = vmatprep.subr.bf16.mxu0 0
  %73 = vmatpush1.bf16.msra.mxu0 0
  %74 = vmatprep.subr.bf16.mxu0 0
  %75 = vmatpush1.bf16.msra.mxu0 0
  %76 = vmatprep.subr.bf16.mxu0 0
  %77 = vmatpush1.bf16.msra.mxu0 0
  %78 = vmatprep.subr.bf16.mxu0 0
  %79 = vmatpush1.bf16.msra.mxu0 0
  %80 = vmatprep.subr.bf16.mxu0 0
  %81 = vmatpush1.bf16.msra.mxu0 0
  %82 = vmatprep.subr.bf16.mxu0 0
  %83 = vmatpush1.bf16.msra.mxu0 0
  %84 = vmatprep.subr.bf16.mxu0 0
  %85 = vmatpush1.bf16.msra.mxu0 0
  %86 = vmatprep.subr.bf16.mxu0 0
  %87 = vmatpush1.bf16.msra.mxu0 0
  %88 = vmatprep.subr.bf16.mxu0 0
  %89 = vmatpush1.bf16.msra.mxu0 0
  %90 = vmatprep.mubr.bf16.mxu0 0
  %91 = vmatmul.mubr.bf16.gmra.mrb[0].mxu0 %v56
  %v92 = vpop.f32.mrb[0].mxu0
  %v93 = vadd.f32 0.0, %v92
  %v94 = vpop.f32.mrb[0].mxu0
  %v95 = vadd.f32 0.0, %v94
  %v96 = vpop.f32.mrb[0].mxu0
  %v97 = vpop.f32.mrb[0].mxu0
  %98 = vdwg.mxu0
  %99 = vmatprep.subr.bf16.mxu0 0
  %100 = vmatpush1.bf16.msra.mxu0 %v50
  %101 = vmatprep.subr.bf16.mxu0 0
  %102 = vmatpush1.bf16.msra.mxu0 0
  %103 = vmatprep.subr.bf16.mxu0 0
  %104 = vmatpush1.bf16.msra.mxu0 0
  %105 = vmatprep.subr.bf16.mxu0 0
  %106 = vmatpush1.bf16.msra.mxu0 0
  %107 = vmatprep.subr.bf16.mxu0 0
  %108 = vmatpush1.bf16.msra.mxu0 0
  %109 = vmatprep.subr.bf16.mxu0 0
  %110 = vmatpush1.bf16.msra.mxu0 0
  %111 = vmatprep.subr.bf16.mxu0 0
  %112 = vmatpush1.bf16.msra.mxu0 0
  %113 = vmatprep.subr.bf16.mxu0 0
  %114 = vmatpush1.bf16.msra.mxu0 0
  %115 = vmatprep.subr.bf16.mxu0 0
  %116 = vmatpush1.bf16.msra.mxu0 0
  %117 = vmatprep.subr.bf16.mxu0 0
  %118 = vmatpush1.bf16.msra.mxu0 0
  %119 = vmatprep.subr.bf16.mxu0 0
  %120 = vmatpush1.bf16.msra.mxu0 0
  %121 = vmatprep.subr.bf16.mxu0 0
  %122 = vmatpush1.bf16.msra.mxu0 0
  %123 = vmatprep.subr.bf16.mxu0 0
  %124 = vmatpush1.bf16.msra.mxu0 0
  %125 = vmatprep.subr.bf16.mxu0 0
  %126 = vmatpush1.bf16.msra.mxu0 0
  %127 = vmatprep.subr.bf16.mxu0 0
  %128 = vmatpush1.bf16.msra.mxu0 0
  %129 = vmatprep.subr.bf16.mxu0 0
  %130 = vmatpush1.bf16.msra.mxu0 0
  %131 = vmatprep.mubr.bf16.mxu0 0
  %132 = vmatmul.mubr.bf16.gmra.mrb[0].mxu0 %v56
  %v133 = vpop.f32.mrb[0].mxu0
  %v134 = vadd.f32 0.0, %v133
  %v135 = vpop.f32.mrb[0].mxu0
  %v136 = vpop.f32.mrb[0].mxu0
  %v137 = vpop.f32.mrb[0].mxu0
  %138 = vdwg.mxu0
  %v142 = vcombine.low %v93, %v95
  %v144 = vunpack.c.l.s4 1983009808
  %v145 = vunpack.c.0.s8 %v144
  %v146 = vlaneseq
  %v147 = vshrl.u32 %v146, 7
  %v148 = vsub.s32 %v145, %v147
  %v149 = vrot.slane %v142, %v148
  %v151 = vunpack.c.l.s4 1983009808
  %v152 = vunpack.c.0.s8 %v151
  %v153 = vlaneseq
  %v154 = vshrl.u32 %v153, 7
  %v155 = vsub.s32 %v152, %v154
  %v156 = vrot.slane %v134, %v155
  %v157 = vcombine.low %v149, %v156
  %v159 = vadd.f32 %v32, %v157
  %160 = vst [vmem:[#allocation2] sm:$0x3f] %v159
  // Predicated region
  $region34: #{net_forward.14} parent=0 // pred_check
    %p161 = pneg %p27
  $region35: #{net_forward.14} parent=0 // pred_check_branch
    %163 = sbr.rel (%p161) target = $region37
  $region36: #{net_forward.14} parent=0 // pred_region
    %v164 = vld [vmem:[#allocation2] sm:$0x3f]
    %v165 = vld [vmem:[%s2] sm:$0x3]
    %167 = vset.pattern.permute.xlu0 0
    %168 = vperm.xlu0 %167, %v165
    %v169 = vpop.permute.xlu0 %168
    %v171 = vunpack.c.l.s4 269488144
    %v172 = vunpack.c.0.s8 %v171
    %v173 = vlaneseq
    %v174 = vshrl.u32 %v173, 7
    %v175 = vsub.s32 %v172, %v174
    %v176 = vrot.slane %v169, %v175
    %v178 = vmul.f32 %v164, %v176
    %v180 = vcombine.high %v178, %v178
    %v182 = vunpack.c.l.s4 1983009808
    %v183 = vunpack.c.0.s8 %v182
    %v184 = vlaneseq
    %v185 = vshrl.u32 %v184, 7
    %v186 = vsub.s32 %v183, %v185
    %v187 = vrot.slane %v178, %v186
    %v189 = vunpack.c.l.s4 1983009808
    %v190 = vunpack.c.0.s8 %v189
    %v191 = vlaneseq
    %v192 = vshrl.u32 %v191, 7
    %v193 = vsub.s32 %v190, %v192
    %v194 = vrot.slane %v180, %v193
    %v195 = vcombine.high %v187, %v187
    %v199 = vpack.c.bf16 %v187, %v187
    %v200 = vpack.c.bf16 %v195, %v195
    %v201 = vpack.c.bf16 %v194, %v194
    %v202 = vld [vmem:[%s3] sm:$0xff]
    %v203 = vld [vmem:[%s3 + $0x8] sm:$0xff]
    %v204 = vld [vmem:[%s3 + $0x10] sm:$0xff]
    %v205 = vld [vmem:[%s3 + $0x18] sm:$0xff]
    %v206 = vld [vmem:[%s3 + $0x20] sm:$0xff]
    %v207 = vld [vmem:[%s3 + $0x28] sm:$0xff]
    %v208 = vld [vmem:[%s3 + $0x30] sm:$0xff]
    %v209 = vld [vmem:[%s3 + $0x38] sm:$0xff]
    %v210 = vld [vmem:[%s3 + $0x40] sm:$0xff]
    %v211 = vld [vmem:[%s3 + $0x48] sm:$0xff]
    %v212 = vld [vmem:[%s3 + $0x50] sm:$0xff]
    %v213 = vld [vmem:[%s3 + $0x58] sm:$0xff]
    %v214 = vld [vmem:[%s3 + $0x60] sm:$0xff]
    %v215 = vld [vmem:[%s3 + $0x68] sm:$0xff]
    %v216 = vld [vmem:[%s3 + $0x70] sm:$0xff]
    %v217 = vld [vmem:[%s3 + $0x78] sm:$0xff]
    %v218 = vld [vmem:[%s3 + $0x80] sm:$0xff]
    %v219 = vld [vmem:[%s3 + $0x88] sm:$0xff]
    %v220 = vld [vmem:[%s3 + $0x90] sm:$0xff]
    %v221 = vld [vmem:[%s3 + $0x98] sm:$0xff]
    %v222 = vld [vmem:[%s3 + $0xa0] sm:$0xff]
    %v223 = vld [vmem:[%s3 + $0xa8] sm:$0xff]
    %v224 = vld [vmem:[%s3 + $0xb0] sm:$0xff]
    %v225 = vld [vmem:[%s3 + $0xb8] sm:$0xff]
    %v226 = vld [vmem:[%s3 + $0xc0] sm:$0xff]
    %v227 = vld [vmem:[%s3 + $0xc8] sm:$0xff]
    %v228 = vld [vmem:[%s3 + $0xd0] sm:$0xff]
    %v229 = vld [vmem:[%s3 + $0xd8] sm:$0xff]
    %v230 = vld [vmem:[%s3 + $0xe0] sm:$0xff]
    %v231 = vld [vmem:[%s3 + $0xe8] sm:$0xff]
    %v232 = vld [vmem:[%s3 + $0xf0] sm:$0xff]
    %v233 = vld [vmem:[%s3 + $0xf8] sm:$0xff]
    %v234 = vld [vmem:[%s3 + $0x100] sm:$0xff]
    %v235 = vld [vmem:[%s3 + $0x108] sm:$0xff]
    %v236 = vld [vmem:[%s3 + $0x110] sm:$0xff]
    %v237 = vld [vmem:[%s3 + $0x118] sm:$0xff]
    %v238 = vld [vmem:[%s3 + $0x120] sm:$0xff]
    %v239 = vld [vmem:[%s3 + $0x128] sm:$0xff]
    %v240 = vld [vmem:[%s3 + $0x130] sm:$0xff]
    %v241 = vld [vmem:[%s3 + $0x138] sm:$0xff]
    %v242 = vld [vmem:[%s3 + $0x140] sm:$0xff]
    %v243 = vld [vmem:[%s3 + $0x148] sm:$0xff]
    %v244 = vld [vmem:[%s3 + $0x150] sm:$0xff]
    %v245 = vld [vmem:[%s3 + $0x158] sm:$0xff]
    %v246 = vld [vmem:[%s3 + $0x160] sm:$0xff]
    %v247 = vld [vmem:[%s3 + $0x168] sm:$0xff]
    %v248 = vld [vmem:[%s3 + $0x170] sm:$0xff]
    %v249 = vld [vmem:[%s3 + $0x178] sm:$0xff]
    %v250 = vld [vmem:[%s4] sm:$0x3]
    %v252 = vlaneseq
    %v253 = vshrl.u32 %v252, 7
    %v254 = vsub.s32 0, %v253
    %v255 = vrot.slane %v250, %v254
    %v256 = vlaneseq
    %v257 = vshrl.u32 %v256, 7
    %v258 = vsub.s32 1, %v257
    %v259 = vrot.slane %v250, %v258
    %v310 = vunpack.c.l.b16 %v202
    %v311 = vunpack.c.h.b16 %v202
    %v312 = vunpack.c.l.b16 %v203
    %v313 = vunpack.c.h.b16 %v203
    %v314 = vunpack.c.l.b16 %v204
    %v315 = vunpack.c.h.b16 %v204
    %v316 = vunpack.c.l.b16 %v205
    %v317 = vunpack.c.h.b16 %v205
    %v318 = vunpack.c.l.b16 %v206
    %v319 = vunpack.c.h.b16 %v206
    %v320 = vunpack.c.l.b16 %v207
    %v321 = vunpack.c.h.b16 %v207
    %v322 = vunpack.c.l.b16 %v208
    %v323 = vunpack.c.h.b16 %v208
    %v324 = vunpack.c.l.b16 %v209
    %v325 = vunpack.c.h.b16 %v209
    %v326 = vunpack.c.l.b16 %v210
    %v327 = vunpack.c.h.b16 %v210
    %v328 = vunpack.c.l.b16 %v211
    %v329 = vunpack.c.h.b16 %v211
    %v330 = vunpack.c.l.b16 %v212
    %v331 = vunpack.c.h.b16 %v212
    %v332 = vunpack.c.l.b16 %v213
    %v333 = vunpack.c.h.b16 %v213
    %v334 = vunpack.c.l.b16 %v214
    %v335 = vunpack.c.h.b16 %v214
    %v336 = vunpack.c.l.b16 %v215
    %v337 = vunpack.c.h.b16 %v215
    %v338 = vunpack.c.l.b16 %v216
    %v339 = vunpack.c.h.b16 %v216
    %v340 = vunpack.c.l.b16 %v217
    %v341 = vunpack.c.h.b16 %v217
    %v342 = vunpack.c.l.b16 %v218
    %v343 = vunpack.c.h.b16 %v218
    %v344 = vunpack.c.l.b16 %v219
    %v345 = vunpack.c.h.b16 %v219
    %v346 = vunpack.c.l.b16 %v220
    %v347 = vunpack.c.h.b16 %v220
    %v348 = vunpack.c.l.b16 %v221
    %v349 = vunpack.c.h.b16 %v221
    %v350 = vunpack.c.l.b16 %v222
    %v351 = vunpack.c.h.b16 %v222
    %v352 = vunpack.c.l.b16 %v223
    %v353 = vunpack.c.h.b16 %v223
    %v354 = vunpack.c.l.b16 %v224
    %v355 = vunpack.c.h.b16 %v224
    %v356 = vunpack.c.l.b16 %v225
    %v357 = vunpack.c.h.b16 %v225
    %v358 = vunpack.c.l.b16 %v226
    %v359 = vunpack.c.h.b16 %v226
    %v360 = vunpack.c.l.b16 %v227
    %v361 = vunpack.c.h.b16 %v227
    %v362 = vunpack.c.l.b16 %v228
    %v363 = vunpack.c.h.b16 %v228
    %v364 = vunpack.c.l.b16 %v229
    %v365 = vunpack.c.h.b16 %v229
    %v366 = vunpack.c.l.b16 %v230
    %v367 = vunpack.c.h.b16 %v230
    %v368 = vunpack.c.l.b16 %v231
    %v369 = vunpack.c.h.b16 %v231
    %v370 = vunpack.c.l.b16 %v232
    %v371 = vunpack.c.h.b16 %v232
    %v372 = vunpack.c.l.b16 %v233
    %v373 = vunpack.c.h.b16 %v233
    %v374 = vunpack.c.l.b16 %v234
    %v375 = vunpack.c.h.b16 %v234
    %v376 = vunpack.c.l.b16 %v235
    %v377 = vunpack.c.h.b16 %v235
    %v378 = vunpack.c.l.b16 %v236
    %v379 = vunpack.c.h.b16 %v236
    %v380 = vunpack.c.l.b16 %v237
    %v381 = vunpack.c.h.b16 %v237
    %v382 = vunpack.c.l.b16 %v238
    %v383 = vunpack.c.h.b16 %v238
    %v384 = vunpack.c.l.b16 %v239
    %v385 = vunpack.c.h.b16 %v239
    %v386 = vunpack.c.l.b16 %v240
    %v387 = vunpack.c.h.b16 %v240
    %v388 = vunpack.c.l.b16 %v241
    %v389 = vunpack.c.h.b16 %v241
    %v390 = vunpack.c.l.b16 %v242
    %v391 = vunpack.c.h.b16 %v242
    %v392 = vunpack.c.l.b16 %v243
    %v393 = vunpack.c.h.b16 %v243
    %v394 = vunpack.c.l.b16 %v244
    %v395 = vunpack.c.h.b16 %v244
    %v396 = vunpack.c.l.b16 %v245
    %v397 = vunpack.c.h.b16 %v245
    %v398 = vunpack.c.l.b16 %v246
    %v399 = vunpack.c.h.b16 %v246
    %v400 = vunpack.c.l.b16 %v247
    %v401 = vunpack.c.h.b16 %v247
    %v402 = vunpack.c.l.b16 %v248
    %v403 = vunpack.c.h.b16 %v248
    %v404 = vunpack.c.l.b16 %v249
    %v405 = vunpack.c.h.b16 %v249
    %v406 = vpack.c.b16 %v312, %v310
    %v407 = vpack.c.b16 %v313, %v311
    %v408 = vpack.c.b16 %v316, %v314
    %v409 = vpack.c.b16 %v317, %v315
    %v410 = vpack.c.b16 %v320, %v318
    %v411 = vpack.c.b16 %v321, %v319
    %v412 = vpack.c.b16 %v324, %v322
    %v413 = vpack.c.b16 %v325, %v323
    %v414 = vpack.c.b16 %v328, %v326
    %v415 = vpack.c.b16 %v329, %v327
    %v416 = vpack.c.b16 %v332, %v330
    %v417 = vpack.c.b16 %v333, %v331
    %v418 = vpack.c.b16 %v336, %v334
    %v419 = vpack.c.b16 %v337, %v335
    %v420 = vpack.c.b16 %v340, %v338
    %v421 = vpack.c.b16 %v341, %v339
    %v422 = vpack.c.b16 %v344, %v342
    %v423 = vpack.c.b16 %v345, %v343
    %v424 = vpack.c.b16 %v348, %v346
    %v425 = vpack.c.b16 %v349, %v347
    %v426 = vpack.c.b16 %v352, %v350
    %v427 = vpack.c.b16 %v353, %v351
    %v428 = vpack.c.b16 %v356, %v354
    %v429 = vpack.c.b16 %v357, %v355
    %v430 = vpack.c.b16 %v360, %v358
    %v431 = vpack.c.b16 %v361, %v359
    %v432 = vpack.c.b16 %v364, %v362
    %v433 = vpack.c.b16 %v365, %v363
    %v434 = vpack.c.b16 %v368, %v366
    %v435 = vpack.c.b16 %v369, %v367
    %v436 = vpack.c.b16 %v372, %v370
    %v437 = vpack.c.b16 %v373, %v371
    %v438 = vpack.c.b16 %v376, %v374
    %v439 = vpack.c.b16 %v377, %v375
    %v440 = vpack.c.b16 %v380, %v378
    %v441 = vpack.c.b16 %v381, %v379
    %v442 = vpack.c.b16 %v384, %v382
    %v443 = vpack.c.b16 %v385, %v383
    %v444 = vpack.c.b16 %v388, %v386
    %v445 = vpack.c.b16 %v389, %v387
    %v446 = vpack.c.b16 %v392, %v390
    %v447 = vpack.c.b16 %v393, %v391
    %v448 = vpack.c.b16 %v396, %v394
    %v449 = vpack.c.b16 %v397, %v395
    %v450 = vpack.c.b16 %v400, %v398
    %v451 = vpack.c.b16 %v401, %v399
    %v452 = vpack.c.b16 %v404, %v402
    %v453 = vpack.c.b16 %v405, %v403
    %502 = vmatprep.subr.bf16.mxu0 %v407
    %503 = vmatpush1.bf16.msra.mxu0 %v406
    %504 = vmatprep.subr.bf16.mxu0 %v409
    %505 = vmatpush1.bf16.msra.mxu0 %v408
    %506 = vmatprep.subr.bf16.mxu0 %v411
    %507 = vmatpush1.bf16.msra.mxu0 %v410
    %508 = vmatprep.subr.bf16.mxu0 %v413
    %509 = vmatpush1.bf16.msra.mxu0 %v412
    %510 = vmatprep.subr.bf16.mxu0 %v415
    %511 = vmatpush1.bf16.msra.mxu0 %v414
    %512 = vmatprep.subr.bf16.mxu0 %v417
    %513 = vmatpush1.bf16.msra.mxu0 %v416
    %514 = vmatprep.subr.bf16.mxu0 %v419
    %515 = vmatpush1.bf16.msra.mxu0 %v418
    %516 = vmatprep.subr.bf16.mxu0 %v421
    %517 = vmatpush1.bf16.msra.mxu0 %v420
    %518 = vmatprep.subr.bf16.mxu0 %v423
    %519 = vmatpush1.bf16.msra.mxu0 %v422
    %520 = vmatprep.subr.bf16.mxu0 %v425
    %521 = vmatpush1.bf16.msra.mxu0 %v424
    %522 = vmatprep.subr.bf16.mxu0 %v427
    %523 = vmatpush1.bf16.msra.mxu0 %v426
    %524 = vmatprep.subr.bf16.mxu0 %v429
    %525 = vmatpush1.bf16.msra.mxu0 %v428
    %526 = vmatprep.subr.bf16.mxu0 %v431
    %527 = vmatpush1.bf16.msra.mxu0 %v430
    %528 = vmatprep.subr.bf16.mxu0 %v433
    %529 = vmatpush1.bf16.msra.mxu0 %v432
    %530 = vmatprep.subr.bf16.mxu0 %v435
    %531 = vmatpush1.bf16.msra.mxu0 %v434
    %532 = vmatprep.subr.bf16.mxu0 %v437
    %533 = vmatpush1.bf16.msra.mxu0 %v436
    %534 = vmatprep.mubr.bf16.mxu0 %v200
    %535 = vmatmul.mubr.bf16.gmra.mrb[0].mxu0 %v199
    %v536 = vpop.f32.mrb[0].mxu0
    %v537 = vadd.f32 %v255, %v536
    %v538 = vpop.f32.mrb[0].mxu0
    %v539 = vadd.f32 %v259, %v538
    %v540 = vpop.f32.mrb[0].mxu0
    %v541 = vpop.f32.mrb[0].mxu0
    %542 = vdwg.mxu0
    %543 = vmatprep.subr.bf16.mxu0 %v439
    %544 = vmatpush1.bf16.msra.mxu0 %v438
    %545 = vmatprep.subr.bf16.mxu0 %v441
    %546 = vmatpush1.bf16.msra.mxu0 %v440
    %547 = vmatprep.subr.bf16.mxu0 %v443
    %548 = vmatpush1.bf16.msra.mxu0 %v442
    %549 = vmatprep.subr.bf16.mxu0 %v445
    %550 = vmatpush1.bf16.msra.mxu0 %v444
    %551 = vmatprep.subr.bf16.mxu0 %v447
    %552 = vmatpush1.bf16.msra.mxu0 %v446
    %553 = vmatprep.subr.bf16.mxu0 %v449
    %554 = vmatpush1.bf16.msra.mxu0 %v448
    %555 = vmatprep.subr.bf16.mxu0 %v451
    %556 = vmatpush1.bf16.msra.mxu0 %v450
    %557 = vmatprep.subr.bf16.mxu0 %v453
    %558 = vmatpush1.bf16.msra.mxu0 %v452
    %559 = vmatprep.subr.bf16.mxu0 0
    %560 = vmatpush1.bf16.msra.mxu0 0
    %561 = vmatprep.subr.bf16.mxu0 0
    %562 = vmatpush1.bf16.msra.mxu0 0
    %563 = vmatprep.subr.bf16.mxu0 0
    %564 = vmatpush1.bf16.msra.mxu0 0
    %565 = vmatprep.subr.bf16.mxu0 0
    %566 = vmatpush1.bf16.msra.mxu0 0
    %567 = vmatprep.subr.bf16.mxu0 0
    %568 = vmatpush1.bf16.msra.mxu0 0
    %569 = vmatprep.subr.bf16.mxu0 0
    %570 = vmatpush1.bf16.msra.mxu0 0
    %571 = vmatprep.subr.bf16.mxu0 0
    %572 = vmatpush1.bf16.msra.mxu0 0
    %573 = vmatprep.subr.bf16.mxu0 0
    %574 = vmatpush1.bf16.msra.mxu0 0
    %575 = vmatprep.mubr.bf16.mxu0 0
    %576 = vmatmul.mubr.bf16.gmra.mrb[0].mxu0 %v201
    %v577 = vpop.f32.mrb[0].mxu0
    %v578 = vadd.f32 %v537, %v577
    %v579 = vpop.f32.mrb[0].mxu0
    %v580 = vadd.f32 %v539, %v579
    %v581 = vpop.f32.mrb[0].mxu0
    %v582 = vpop.f32.mrb[0].mxu0
    %583 = vdwg.mxu0
    %v584 = vmax.f32 %v578, 0.0
    %v585 = vmax.f32 %v580, 0.0
    %v586 = vpack.c.bf16 %v584, %v584
    %v587 = vpack.c.bf16 %v585, %v585
    %v588 = vld [vmem:[%s5] sm:$0xf]
    %v589 = vld [vmem:[%s5 + $0x4] sm:$0xf]
    %v590 = vld [vmem:[%s5 + $0x8] sm:$0xf]
    %v591 = vld [vmem:[%s5 + $0xc] sm:$0xf]
    %v592 = vld [vmem:[%s5 + $0x10] sm:$0xf]
    %v593 = vld [vmem:[%s5 + $0x14] sm:$0xf]
    %v594 = vld [vmem:[%s5 + $0x18] sm:$0xf]
    %v595 = vld [vmem:[%s5 + $0x1c] sm:$0xf]
    %v596 = vld [vmem:[%s5 + $0x20] sm:$0xf]
    %v597 = vld [vmem:[%s5 + $0x24] sm:$0xf]
    %v598 = vld [vmem:[%s5 + $0x28] sm:$0xf]
    %v599 = vld [vmem:[%s5 + $0x2c] sm:$0xf]
    %v600 = vld [vmem:[%s5 + $0x30] sm:$0xf]
    %v601 = vld [vmem:[%s5 + $0x34] sm:$0xf]
    %v602 = vld [vmem:[%s5 + $0x38] sm:$0xf]
    %v603 = vld [vmem:[%s5 + $0x3c] sm:$0xf]
    %v604 = vld [vmem:[%s5 + $0x40] sm:$0xf]
    %v605 = vld [vmem:[%s5 + $0x44] sm:$0xf]
    %v606 = vld [vmem:[%s5 + $0x48] sm:$0xf]
    %v607 = vld [vmem:[%s5 + $0x4c] sm:$0xf]
    %v608 = vld [vmem:[%s5 + $0x50] sm:$0xf]
    %v609 = vld [vmem:[%s5 + $0x54] sm:$0xf]
    %v610 = vld [vmem:[%s5 + $0x58] sm:$0xf]
    %v611 = vld [vmem:[%s5 + $0x5c] sm:$0xf]
    %v612 = vld [vmem:[%s5 + $0x60] sm:$0xf]
    %v613 = vld [vmem:[%s5 + $0x64] sm:$0xf]
    %v614 = vld [vmem:[%s5 + $0x68] sm:$0xf]
    %v615 = vld [vmem:[%s5 + $0x6c] sm:$0xf]
    %v616 = vld [vmem:[%s5 + $0x70] sm:$0xf]
    %v617 = vld [vmem:[%s5 + $0x74] sm:$0xf]
    %v618 = vld [vmem:[%s5 + $0x78] sm:$0xf]
    %v619 = vld [vmem:[%s5 + $0x7c] sm:$0xf]
    %v620 = vld [vmem:[%s6] sm:$0x1]
    %v622 = vlaneseq
    %v623 = vshrl.u32 %v622, 7
    %v624 = vsub.s32 0, %v623
    %v625 = vrot.slane %v620, %v624
    %v659 = vunpack.c.l.b16 %v588
    %v660 = vunpack.c.l.b16 %v589
    %v661 = vunpack.c.l.b16 %v590
    %v662 = vunpack.c.l.b16 %v591
    %v663 = vunpack.c.l.b16 %v592
    %v664 = vunpack.c.l.b16 %v593
    %v665 = vunpack.c.l.b16 %v594
    %v666 = vunpack.c.l.b16 %v595
    %v667 = vunpack.c.l.b16 %v596
    %v668 = vunpack.c.l.b16 %v597
    %v669 = vunpack.c.l.b16 %v598
    %v670 = vunpack.c.l.b16 %v599
    %v671 = vunpack.c.l.b16 %v600
    %v672 = vunpack.c.l.b16 %v601
    %v673 = vunpack.c.l.b16 %v602
    %v674 = vunpack.c.l.b16 %v603
    %v675 = vunpack.c.l.b16 %v604
    %v676 = vunpack.c.l.b16 %v605
    %v677 = vunpack.c.l.b16 %v606
    %v678 = vunpack.c.l.b16 %v607
    %v679 = vunpack.c.l.b16 %v608
    %v680 = vunpack.c.l.b16 %v609
    %v681 = vunpack.c.l.b16 %v610
    %v682 = vunpack.c.l.b16 %v611
    %v683 = vunpack.c.l.b16 %v612
    %v684 = vunpack.c.l.b16 %v613
    %v685 = vunpack.c.l.b16 %v614
    %v686 = vunpack.c.l.b16 %v615
    %v687 = vunpack.c.l.b16 %v616
    %v688 = vunpack.c.l.b16 %v617
    %v689 = vunpack.c.l.b16 %v618
    %v690 = vunpack.c.l.b16 %v619
    %v691 = vpack.c.b16 %v660, %v659
    %v692 = vpack.c.b16 %v662, %v661
    %v693 = vpack.c.b16 %v664, %v663
    %v694 = vpack.c.b16 %v666, %v665
    %v695 = vpack.c.b16 %v668, %v667
    %v696 = vpack.c.b16 %v670, %v669
    %v697 = vpack.c.b16 %v672, %v671
    %v698 = vpack.c.b16 %v674, %v673
    %v699 = vpack.c.b16 %v676, %v675
    %v700 = vpack.c.b16 %v678, %v677
    %v701 = vpack.c.b16 %v680, %v679
    %v702 = vpack.c.b16 %v682, %v681
    %v703 = vpack.c.b16 %v684, %v683
    %v704 = vpack.c.b16 %v686, %v685
    %v705 = vpack.c.b16 %v688, %v687
    %v706 = vpack.c.b16 %v690, %v689
    %723 = vmatprep.subr.bf16.mxu0 0
    %724 = vmatpush1.bf16.msra.mxu0 %v691
    %725 = vmatprep.subr.bf16.mxu0 0
    %726 = vmatpush1.bf16.msra.mxu0 %v692
    %727 = vmatprep.subr.bf16.mxu0 0
    %728 = vmatpush1.bf16.msra.mxu0 %v693
    %729 = vmatprep.subr.bf16.mxu0 0
    %730 = vmatpush1.bf16.msra.mxu0 %v694
    %731 = vmatprep.subr.bf16.mxu0 0
    %732 = vmatpush1.bf16.msra.mxu0 %v695
    %733 = vmatprep.subr.bf16.mxu0 0
    %734 = vmatpush1.bf16.msra.mxu0 %v696
    %735 = vmatprep.subr.bf16.mxu0 0
    %736 = vmatpush1.bf16.msra.mxu0 %v697
    %737 = vmatprep.subr.bf16.mxu0 0
    %738 = vmatpush1.bf16.msra.mxu0 %v698
    %739 = vmatprep.subr.bf16.mxu0 0
    %740 = vmatpush1.bf16.msra.mxu0 %v699
    %741 = vmatprep.subr.bf16.mxu0 0
    %742 = vmatpush1.bf16.msra.mxu0 %v700
    %743 = vmatprep.subr.bf16.mxu0 0
    %744 = vmatpush1.bf16.msra.mxu0 %v701
    %745 = vmatprep.subr.bf16.mxu0 0
    %746 = vmatpush1.bf16.msra.mxu0 %v702
    %747 = vmatprep.subr.bf16.mxu0 0
    %748 = vmatpush1.bf16.msra.mxu0 %v703
    %749 = vmatprep.subr.bf16.mxu0 0
    %750 = vmatpush1.bf16.msra.mxu0 %v704
    %751 = vmatprep.subr.bf16.mxu0 0
    %752 = vmatpush1.bf16.msra.mxu0 %v705
    %753 = vmatprep.subr.bf16.mxu0 0
    %754 = vmatpush1.bf16.msra.mxu0 %v706
    %755 = vmatprep.mubr.bf16.mxu0 %v587
    %756 = vmatmul.mubr.bf16.gmra.mrb[0].mxu0 %v586
    %v757 = vpop.f32.mrb[0].mxu0
    %v758 = vadd.f32 %v625, %v757
    %v759 = vpop.f32.mrb[0].mxu0
    %v760 = vpop.f32.mrb[0].mxu0
    %v761 = vpop.f32.mrb[0].mxu0
    %762 = vdwg.mxu0
    %v763 = vmax.f32 %v758, 0.0
    %v764 = vpack.c.bf16 %v763, %v763
    %765 = vst [vmem:[%s7] sm:$0x1] %v764
  $region37: #{net_forward.14} parent=0 // pred_fallthru
    _
  // Predicated region
  $region38: #{net_forward.14} parent=0 // pred_check
    _
  $region39: #{net_forward.14} parent=0 // pred_check_branch
    %767 = sbr.rel (0) target = $region41
  $region40: #{net_forward.14} parent=0 // pred_region
    _
  $region41: #{net_forward.14} parent=0 // pred_fallthru
    _
  // Predicated region
  $region42: #{net_forward.14} parent=0 // pred_check
    _
  $region43: #{net_forward.14} parent=0 // pred_check_branch
    %769 = sbr.rel (0) target = $region45
  $region44: #{net_forward.14} parent=0 // pred_region
    _
  $region45: #{net_forward.14} parent=0 // pred_fallthru
    _

// kernel: net_forward.15
$region0: #{net_forward.15}
  #allocation0 [shape = 'u32[]', space=smem, size = 0x4, offset = 0x4, fixed_abs, tag = 'smem constant byte address 0x4 - core index']
  #allocation1 [shape = 'u32[144,128]{1,0:T(1,128)}', space=vmem, size = 0x12000, scoped, tag = 'internal scratch']
  %s0 = inlined_call_operand.vmem [shape: bf16[16,128], index: 0, kind: input, shape index: {}]
  %s1 = inlined_call_operand.vmem [shape: bf16[16,384], index: 1, kind: input, shape index: {}]
  %s2 = inlined_call_operand.vmem [shape: f32[16,3], index: 2, kind: input, shape index: {}]
  %s3 = inlined_call_operand.vmem [shape: bf16[128,256], index: 3, kind: input, shape index: {}]
  %s4 = inlined_call_operand.vmem [shape: bf16[384,256], index: 4, kind: input, shape index: {}]
  %s5 = inlined_call_operand.vmem [shape: f32[3,256], index: 5, kind: input, shape index: {}]
  %s6 = inlined_call_operand.vmem [shape: f32[1,256], index: 6, kind: input, shape index: {}]
  %s7 = inlined_call_operand.vmem [shape: bf16[256,384], index: 7, kind: input, shape index: {}]
  %s8 = inlined_call_operand.vmem [shape: f32[1,384], index: 8, kind: input, shape index: {}]
  %s9 = inlined_call_operand.vmem [shape: bf16[16,384], index: 9, kind: output, shape index: {}]
  %s10 = sld [smem:[#allocation0]]
  $region46: #{net_forward.15} parent=0
    _
  %s12 = ssub.s32 1, %s10
  %s13 = scalar_select 0, %s12, %s10
  // Predicated region
  $region2: #{net_forward.15} parent=0 // pred_check
    _
  $region3: #{net_forward.15} parent=0 // pred_check_branch
    %15 = sbr.rel (0) target = $region5
  $region4: #{net_forward.15} parent=0 // pred_region
    _
  $region5: #{net_forward.15} parent=0 // pred_fallthru
    _
  // Predicated region
  $region6: #{net_forward.15} parent=0 // pred_check
    _
  $region7: #{net_forward.15} parent=0 // pred_check_branch
    %17 = sbr.rel (0) target = $region9
  $region8: #{net_forward.15} parent=0 // pred_region
    _
  $region9: #{net_forward.15} parent=0 // pred_fallthru
    _
  // Predicated region
  $region10: #{net_forward.15} parent=0 // pred_check
    _
  $region11: #{net_forward.15} parent=0 // pred_check_branch
    %19 = sbr.rel (0) target = $region13
  $region12: #{net_forward.15} parent=0 // pred_region
    _
  $region13: #{net_forward.15} parent=0 // pred_fallthru
    _
  // Predicated region
  $region14: #{net_forward.15} parent=0 // pred_check
    _
  $region15: #{net_forward.15} parent=0 // pred_check_branch
    %21 = sbr.rel (0) target = $region17
  $region16: #{net_forward.15} parent=0 // pred_region
    _
  $region17: #{net_forward.15} parent=0 // pred_fallthru
    _
  // Predicated region
  $region18: #{net_forward.15} parent=0 // pred_check
    _
  $region19: #{net_forward.15} parent=0 // pred_check_branch
    %23 = sbr.rel (0) target = $region21
  $region20: #{net_forward.15} parent=0 // pred_region
    _
  $region21: #{net_forward.15} parent=0 // pred_fallthru
    _
  // Predicated region
  $region22: #{net_forward.15} parent=0 // pred_check
    _
  $region23: #{net_forward.15} parent=0 // pred_check_branch
    %25 = sbr.rel (0) target = $region25
  $region24: #{net_forward.15} parent=0 // pred_region
    _
  $region25: #{net_forward.15} parent=0 // pred_fallthru
    _
  // Predicated region
  $region26: #{net_forward.15} parent=0 // pred_check
    _
  $region27: #{net_forward.15} parent=0 // pred_check_branch
    %27 = sbr.rel (0) target = $region29
  $region28: #{net_forward.15} parent=0 // pred_region
    _
  $region29: #{net_forward.15} parent=0 // pred_fallthru
    _
  // Predicated region
  $region30: #{net_forward.15} parent=0 // pred_check
    _
  $region31: #{net_forward.15} parent=0 // pred_check_branch
    %29 = sbr.rel (0) target = $region33
  $region32: #{net_forward.15} parent=0 // pred_region
    _
  $region33: #{net_forward.15} parent=0 // pred_fallthru
    _
  // Predicated region
  $region34: #{net_forward.15} parent=0 // pred_check
    _
  $region35: #{net_forward.15} parent=0 // pred_check_branch
    %31 = sbr.rel (0) target = $region37
  $region36: #{net_forward.15} parent=0 // pred_region
    _
  $region37: #{net_forward.15} parent=0 // pred_fallthru
    _
  %v33 = vld [vmem:[%s0] sm:$0xf]
  %v34 = vld [vmem:[%s0 + $0x4] sm:$0xf]
  %v35 = vld [vmem:[%s3] sm:$0xff]
  %v36 = vld [vmem:[%s3 + $0x8] sm:$0xff]
  %v37 = vld [vmem:[%s3 + $0x10] sm:$0xff]
  %v38 = vld [vmem:[%s3 + $0x18] sm:$0xff]
  %v39 = vld [vmem:[%s3 + $0x20] sm:$0xff]
  %v40 = vld [vmem:[%s3 + $0x28] sm:$0xff]
  %v41 = vld [vmem:[%s3 + $0x30] sm:$0xff]
  %v42 = vld [vmem:[%s3 + $0x38] sm:$0xff]
  %v43 = vld [vmem:[%s3 + $0x40] sm:$0xff]
  %v44 = vld [vmem:[%s3 + $0x48] sm:$0xff]
  %v45 = vld [vmem:[%s3 + $0x50] sm:$0xff]
  %v46 = vld [vmem:[%s3 + $0x58] sm:$0xff]
  %v47 = vld [vmem:[%s3 + $0x60] sm:$0xff]
  %v48 = vld [vmem:[%s3 + $0x68] sm:$0xff]
  %v49 = vld [vmem:[%s3 + $0x70] sm:$0xff]
  %v50 = vld [vmem:[%s3 + $0x78] sm:$0xff]
  %v51 = vld [vmem:[%s1] sm:$0xff]
  %v52 = vld [vmem:[%s1 + $0x8] sm:$0xf]
  %v53 = vld [vmem:[%s1 + $0xc] sm:$0xff]
  %v54 = vld [vmem:[%s1 + $0x14] sm:$0xf]
  %v55 = vld [vmem:[%s4] sm:$0xff]
  %v56 = vld [vmem:[%s4 + $0x8] sm:$0xff]
  %v57 = vld [vmem:[%s4 + $0x10] sm:$0xff]
  %v58 = vld [vmem:[%s4 + $0x18] sm:$0xff]
  %v59 = vld [vmem:[%s4 + $0x20] sm:$0xff]
  %v60 = vld [vmem:[%s4 + $0x28] sm:$0xff]
  %v61 = vld [vmem:[%s4 + $0x30] sm:$0xff]
  %v62 = vld [vmem:[%s4 + $0x38] sm:$0xff]
  %v63 = vld [vmem:[%s4 + $0x40] sm:$0xff]
  %v64 = vld [vmem:[%s4 + $0x48] sm:$0xff]
  %v65 = vld [vmem:[%s4 + $0x50] sm:$0xff]
  %v66 = vld [vmem:[%s4 + $0x58] sm:$0xff]
  %v67 = vld [vmem:[%s4 + $0x60] sm:$0xff]
  %v68 = vld [vmem:[%s4 + $0x68] sm:$0xff]
  %v69 = vld [vmem:[%s4 + $0x70] sm:$0xff]
  %v70 = vld [vmem:[%s4 + $0x78] sm:$0xff]
  %v71 = vld [vmem:[%s4 + $0x80] sm:$0xff]
  %v72 = vld [vmem:[%s4 + $0x88] sm:$0xff]
  %v73 = vld [vmem:[%s4 + $0x90] sm:$0xff]
  %v74 = vld [vmem:[%s4 + $0x98] sm:$0xff]
  %v75 = vld [vmem:[%s4 + $0xa0] sm:$0xff]
  %v76 = vld [vmem:[%s4 + $0xa8] sm:$0xff]
  %v77 = vld [vmem:[%s4 + $0xb0] sm:$0xff]
  %v78 = vld [vmem:[%s4 + $0xb8] sm:$0xff]
  %v79 = vld [vmem:[%s4 + $0xc0] sm:$0xff]
  %v80 = vld [vmem:[%s4 + $0xc8] sm:$0xff]
  %v81 = vld [vmem:[%s4 + $0xd0] sm:$0xff]
  %v82 = vld [vmem:[%s4 + $0xd8] sm:$0xff]
  %v83 = vld [vmem:[%s4 + $0xe0] sm:$0xff]
  %v84 = vld [vmem:[%s4 + $0xe8] sm:$0xff]
  %v85 = vld [vmem:[%s4 + $0xf0] sm:$0xff]
  %v86 = vld [vmem:[%s4 + $0xf8] sm:$0xff]
  %v87 = vld [vmem:[%s4 + $0x100] sm:$0xff]
  %v88 = vld [vmem:[%s4 + $0x108] sm:$0xff]
  %v89 = vld [vmem:[%s4 + $0x110] sm:$0xff]
  %v90 = vld [vmem:[%s4 + $0x118] sm:$0xff]
  %v91 = vld [vmem:[%s4 + $0x120] sm:$0xff]
  %v92 = vld [vmem:[%s4 + $0x128] sm:$0xff]
  %v93 = vld [vmem:[%s4 + $0x130] sm:$0xff]
  %v94 = vld [vmem:[%s4 + $0x138] sm:$0xff]
  %v95 = vld [vmem:[%s4 + $0x140] sm:$0xff]
  %v96 = vld [vmem:[%s4 + $0x148] sm:$0xff]
  %v97 = vld [vmem:[%s4 + $0x150] sm:$0xff]
  %v98 = vld [vmem:[%s4 + $0x158] sm:$0xff]
  %v99 = vld [vmem:[%s4 + $0x160] sm:$0xff]
  %v100 = vld [vmem:[%s4 + $0x168] sm:$0xff]
  %v101 = vld [vmem:[%s4 + $0x170] sm:$0xff]
  %v102 = vld [vmem:[%s4 + $0x178] sm:$0xff]
  %v107 = vunpack.c.l.b16 %v51
  %v108 = vunpack.c.h.b16 %v51
  %v109 = vunpack.c.l.b16 %v52
  %v110 = vunpack.c.l.b16 %v53
  %v111 = vunpack.c.h.b16 %v53
  %v112 = vunpack.c.l.b16 %v54
  %v113 = vpack.c.b16 %v110, %v107
  %v114 = vpack.c.b16 %v111, %v108
  %v115 = vpack.c.b16 %v112, %v109
  %v167 = vunpack.c.l.b16 %v55
  %v168 = vunpack.c.h.b16 %v55
  %v169 = vunpack.c.l.b16 %v56
  %v170 = vunpack.c.h.b16 %v56
  %v171 = vunpack.c.l.b16 %v57
  %v172 = vunpack.c.h.b16 %v57
  %v173 = vunpack.c.l.b16 %v58
  %v174 = vunpack.c.h.b16 %v58
  %v175 = vunpack.c.l.b16 %v59
  %v176 = vunpack.c.h.b16 %v59
  %v177 = vunpack.c.l.b16 %v60
  %v178 = vunpack.c.h.b16 %v60
  %v179 = vunpack.c.l.b16 %v61
  %v180 = vunpack.c.h.b16 %v61
  %v181 = vunpack.c.l.b16 %v62
  %v182 = vunpack.c.h.b16 %v62
  %v183 = vunpack.c.l.b16 %v63
  %v184 = vunpack.c.h.b16 %v63
  %v185 = vunpack.c.l.b16 %v64
  %v186 = vunpack.c.h.b16 %v64
  %v187 = vunpack.c.l.b16 %v65
  %v188 = vunpack.c.h.b16 %v65
  %v189 = vunpack.c.l.b16 %v66
  %v190 = vunpack.c.h.b16 %v66
  %v191 = vunpack.c.l.b16 %v67
  %v192 = vunpack.c.h.b16 %v67
  %v193 = vunpack.c.l.b16 %v68
  %v194 = vunpack.c.h.b16 %v68
  %v195 = vunpack.c.l.b16 %v69
  %v196 = vunpack.c.h.b16 %v69
  %v197 = vunpack.c.l.b16 %v70
  %v198 = vunpack.c.h.b16 %v70
  %v199 = vunpack.c.l.b16 %v71
  %v200 = vunpack.c.h.b16 %v71
  %v201 = vunpack.c.l.b16 %v72
  %v202 = vunpack.c.h.b16 %v72
  %v203 = vunpack.c.l.b16 %v73
  %v204 = vunpack.c.h.b16 %v73
  %v205 = vunpack.c.l.b16 %v74
  %v206 = vunpack.c.h.b16 %v74
  %v207 = vunpack.c.l.b16 %v75
  %v208 = vunpack.c.h.b16 %v75
  %v209 = vunpack.c.l.b16 %v76
  %v210 = vunpack.c.h.b16 %v76
  %v211 = vunpack.c.l.b16 %v77
  %v212 = vunpack.c.h.b16 %v77
  %v213 = vunpack.c.l.b16 %v78
  %v214 = vunpack.c.h.b16 %v78
  %v215 = vunpack.c.l.b16 %v79
  %v216 = vunpack.c.h.b16 %v79
  %v217 = vunpack.c.l.b16 %v80
  %v218 = vunpack.c.h.b16 %v80
  %v219 = vunpack.c.l.b16 %v81
  %v220 = vunpack.c.h.b16 %v81
  %v221 = vunpack.c.l.b16 %v82
  %v222 = vunpack.c.h.b16 %v82
  %v223 = vunpack.c.l.b16 %v83
  %v224 = vunpack.c.h.b16 %v83
  %v225 = vunpack.c.l.b16 %v84
  %v226 = vunpack.c.h.b16 %v84
  %v227 = vunpack.c.l.b16 %v85
  %v228 = vunpack.c.h.b16 %v85
  %v229 = vunpack.c.l.b16 %v86
  %v230 = vunpack.c.h.b16 %v86
  %v231 = vunpack.c.l.b16 %v87
  %v232 = vunpack.c.h.b16 %v87
  %v233 = vunpack.c.l.b16 %v88
  %v234 = vunpack.c.h.b16 %v88
  %v235 = vunpack.c.l.b16 %v89
  %v236 = vunpack.c.h.b16 %v89
  %v237 = vunpack.c.l.b16 %v90
  %v238 = vunpack.c.h.b16 %v90
  %v239 = vunpack.c.l.b16 %v91
  %v240 = vunpack.c.h.b16 %v91
  %v241 = vunpack.c.l.b16 %v92
  %v242 = vunpack.c.h.b16 %v92
  %v243 = vunpack.c.l.b16 %v93
  %v244 = vunpack.c.h.b16 %v93
  %v245 = vunpack.c.l.b16 %v94
  %v246 = vunpack.c.h.b16 %v94
  %v247 = vunpack.c.l.b16 %v95
  %v248 = vunpack.c.h.b16 %v95
  %v249 = vunpack.c.l.b16 %v96
  %v250 = vunpack.c.h.b16 %v96
  %v251 = vunpack.c.l.b16 %v97
  %v252 = vunpack.c.h.b16 %v97
  %v253 = vunpack.c.l.b16 %v98
  %v254 = vunpack.c.h.b16 %v98
  %v255 = vunpack.c.l.b16 %v99
  %v256 = vunpack.c.h.b16 %v99
  %v257 = vunpack.c.l.b16 %v100
  %v258 = vunpack.c.h.b16 %v100
  %v259 = vunpack.c.l.b16 %v101
  %v260 = vunpack.c.h.b16 %v101
  %v261 = vunpack.c.l.b16 %v102
  %v262 = vunpack.c.h.b16 %v102
  %v263 = vpack.c.b16 %v169, %v167
  %v264 = vpack.c.b16 %v170, %v168
  %v265 = vpack.c.b16 %v173, %v171
  %v266 = vpack.c.b16 %v174, %v172
  %v267 = vpack.c.b16 %v177, %v175
  %v268 = vpack.c.b16 %v178, %v176
  %v269 = vpack.c.b16 %v181, %v179
  %v270 = vpack.c.b16 %v182, %v180
  %v271 = vpack.c.b16 %v185, %v183
  %v272 = vpack.c.b16 %v186, %v184
  %v273 = vpack.c.b16 %v189, %v187
  %v274 = vpack.c.b16 %v190, %v188
  %v275 = vpack.c.b16 %v193, %v191
  %v276 = vpack.c.b16 %v194, %v192
  %v277 = vpack.c.b16 %v197, %v195
  %v278 = vpack.c.b16 %v198, %v196
  %v279 = vpack.c.b16 %v201, %v199
  %v280 = vpack.c.b16 %v202, %v200
  %v281 = vpack.c.b16 %v205, %v203
  %v282 = vpack.c.b16 %v206, %v204
  %v283 = vpack.c.b16 %v209, %v207
  %v284 = vpack.c.b16 %v210, %v208
  %v285 = vpack.c.b16 %v213, %v211
  %v286 = vpack.c.b16 %v214, %v212
  %v287 = vpack.c.b16 %v217, %v215
  %v288 = vpack.c.b16 %v218, %v216
  %v289 = vpack.c.b16 %v221, %v219
  %v290 = vpack.c.b16 %v222, %v220
  %v291 = vpack.c.b16 %v225, %v223
  %v292 = vpack.c.b16 %v226, %v224
  %v293 = vpack.c.b16 %v229, %v227
  %v294 = vpack.c.b16 %v230, %v228
  %v295 = vpack.c.b16 %v233, %v231
  %v296 = vpack.c.b16 %v234, %v232
  %v297 = vpack.c.b16 %v237, %v235
  %v298 = vpack.c.b16 %v238, %v236
  %v299 = vpack.c.b16 %v241, %v239
  %v300 = vpack.c.b16 %v242, %v240
  %v301 = vpack.c.b16 %v245, %v243
  %v302 = vpack.c.b16 %v246, %v244
  %v303 = vpack.c.b16 %v249, %v247
  %v304 = vpack.c.b16 %v250, %v248
  %v305 = vpack.c.b16 %v253, %v251
  %v306 = vpack.c.b16 %v254, %v252
  %v307 = vpack.c.b16 %v257, %v255
  %v308 = vpack.c.b16 %v258, %v256
  %v309 = vpack.c.b16 %v261, %v259
  %v310 = vpack.c.b16 %v262, %v260
  %359 = vmatprep.subr.bf16.mxu0 %v264
  %360 = vmatpush1.bf16.msra.mxu0 %v263
  %361 = vmatprep.subr.bf16.mxu0 %v266
  %362 = vmatpush1.bf16.msra.mxu0 %v265
  %363 = vmatprep.subr.bf16.mxu0 %v268
  %364 = vmatpush1.bf16.msra.mxu0 %v267
  %365 = vmatprep.subr.bf16.mxu0 %v270
  %366 = vmatpush1.bf16.msra.mxu0 %v269
  %367 = vmatprep.subr.bf16.mxu0 %v272
  %368 = vmatpush1.bf16.msra.mxu0 %v271
  %369 = vmatprep.subr.bf16.mxu0 %v274
  %370 = vmatpush1.bf16.msra.mxu0 %v273
  %371 = vmatprep.subr.bf16.mxu0 %v276
  %372 = vmatpush1.bf16.msra.mxu0 %v275
  %373 = vmatprep.subr.bf16.mxu0 %v278
  %374 = vmatpush1.bf16.msra.mxu0 %v277
  %375 = vmatprep.subr.bf16.mxu0 %v280
  %376 = vmatpush1.bf16.msra.mxu0 %v279
  %377 = vmatprep.subr.bf16.mxu0 %v282
  %378 = vmatpush1.bf16.msra.mxu0 %v281
  %379 = vmatprep.subr.bf16.mxu0 %v284
  %380 = vmatpush1.bf16.msra.mxu0 %v283
  %381 = vmatprep.subr.bf16.mxu0 %v286
  %382 = vmatpush1.bf16.msra.mxu0 %v285
  %383 = vmatprep.subr.bf16.mxu0 %v288
  %384 = vmatpush1.bf16.msra.mxu0 %v287
  %385 = vmatprep.subr.bf16.mxu0 %v290
  %386 = vmatpush1.bf16.msra.mxu0 %v289
  %387 = vmatprep.subr.bf16.mxu0 %v292
  %388 = vmatpush1.bf16.msra.mxu0 %v291
  %389 = vmatprep.subr.bf16.mxu0 %v294
  %390 = vmatpush1.bf16.msra.mxu0 %v293
  %391 = vmatprep.mubr.bf16.mxu0 %v114
  %392 = vmatmul.mubr.bf16.gmra.mrb[0].mxu0 %v113
  %v393 = vpop.f32.mrb[0].mxu0
  %v394 = vadd.f32 0.0, %v393
  %v395 = vpop.f32.mrb[0].mxu0
  %v396 = vadd.f32 0.0, %v395
  %v397 = vpop.f32.mrb[0].mxu0
  %v398 = vadd.f32 0.0, %v397
  %v399 = vpop.f32.mrb[0].mxu0
  %v400 = vadd.f32 0.0, %v399
  %401 = vdwg.mxu0
  %402 = vmatprep.subr.bf16.mxu0 %v296
  %403 = vmatpush1.bf16.msra.mxu0 %v295
  %404 = vmatprep.subr.bf16.mxu0 %v298
  %405 = vmatpush1.bf16.msra.mxu0 %v297
  %406 = vmatprep.subr.bf16.mxu0 %v300
  %407 = vmatpush1.bf16.msra.mxu0 %v299
  %408 = vmatprep.subr.bf16.mxu0 %v302
  %409 = vmatpush1.bf16.msra.mxu0 %v301
  %410 = vmatprep.subr.bf16.mxu0 %v304
  %411 = vmatpush1.bf16.msra.mxu0 %v303
  %412 = vmatprep.subr.bf16.mxu0 %v306
  %413 = vmatpush1.bf16.msra.mxu0 %v305
  %414 = vmatprep.subr.bf16.mxu0 %v308
  %415 = vmatpush1.bf16.msra.mxu0 %v307
  %416 = vmatprep.subr.bf16.mxu0 %v310
  %417 = vmatpush1.bf16.msra.mxu0 %v309
  %418 = vmatprep.subr.bf16.mxu0 0
  %419 = vmatpush1.bf16.msra.mxu0 0
  %420 = vmatprep.subr.bf16.mxu0 0
  %421 = vmatpush1.bf16.msra.mxu0 0
  %422 = vmatprep.subr.bf16.mxu0 0
  %423 = vmatpush1.bf16.msra.mxu0 0
  %424 = vmatprep.subr.bf16.mxu0 0
  %425 = vmatpush1.bf16.msra.mxu0 0
  %426 = vmatprep.subr.bf16.mxu0 0
  %427 = vmatpush1.bf16.msra.mxu0 0
  %428 = vmatprep.subr.bf16.mxu0 0
  %429 = vmatpush1.bf16.msra.mxu0 0
  %430 = vmatprep.subr.bf16.mxu0 0
  %431 = vmatpush1.bf16.msra.mxu0 0
  %432 = vmatprep.subr.bf16.mxu0 0
  %433 = vmatpush1.bf16.msra.mxu0 0
  %434 = vmatprep.mubr.bf16.mxu0 0
  %435 = vmatmul.mubr.bf16.gmra.mrb[0].mxu0 %v115
  %v436 = vpop.f32.mrb[0].mxu0
  %v437 = vadd.f32 %v394, %v436
  %v438 = vpop.f32.mrb[0].mxu0
  %v439 = vadd.f32 %v396, %v438
  %v440 = vpop.f32.mrb[0].mxu0
  %v441 = vadd.f32 %v398, %v440
  %v442 = vpop.f32.mrb[0].mxu0
  %v443 = vadd.f32 %v400, %v442
  %444 = vdwg.mxu0
  %v447 = vunpack.c.l.b16 %v33
  %v448 = vunpack.c.l.b16 %v34
  %v449 = vpack.c.b16 %v448, %v447
  %v467 = vunpack.c.l.b16 %v35
  %v468 = vunpack.c.h.b16 %v35
  %v469 = vunpack.c.l.b16 %v36
  %v470 = vunpack.c.h.b16 %v36
  %v471 = vunpack.c.l.b16 %v37
  %v472 = vunpack.c.h.b16 %v37
  %v473 = vunpack.c.l.b16 %v38
  %v474 = vunpack.c.h.b16 %v38
  %v475 = vunpack.c.l.b16 %v39
  %v476 = vunpack.c.h.b16 %v39
  %v477 = vunpack.c.l.b16 %v40
  %v478 = vunpack.c.h.b16 %v40
  %v479 = vunpack.c.l.b16 %v41
  %v480 = vunpack.c.h.b16 %v41
  %v481 = vunpack.c.l.b16 %v42
  %v482 = vunpack.c.h.b16 %v42
  %v483 = vunpack.c.l.b16 %v43
  %v484 = vunpack.c.h.b16 %v43
  %v485 = vunpack.c.l.b16 %v44
  %v486 = vunpack.c.h.b16 %v44
  %v487 = vunpack.c.l.b16 %v45
  %v488 = vunpack.c.h.b16 %v45
  %v489 = vunpack.c.l.b16 %v46
  %v490 = vunpack.c.h.b16 %v46
  %v491 = vunpack.c.l.b16 %v47
  %v492 = vunpack.c.h.b16 %v47
  %v493 = vunpack.c.l.b16 %v48
  %v494 = vunpack.c.h.b16 %v48
  %v495 = vunpack.c.l.b16 %v49
  %v496 = vunpack.c.h.b16 %v49
  %v497 = vunpack.c.l.b16 %v50
  %v498 = vunpack.c.h.b16 %v50
  %v499 = vpack.c.b16 %v469, %v467
  %v500 = vpack.c.b16 %v470, %v468
  %v501 = vpack.c.b16 %v473, %v471
  %v502 = vpack.c.b16 %v474, %v472
  %v503 = vpack.c.b16 %v477, %v475
  %v504 = vpack.c.b16 %v478, %v476
  %v505 = vpack.c.b16 %v481, %v479
  %v506 = vpack.c.b16 %v482, %v480
  %v507 = vpack.c.b16 %v485, %v483
  %v508 = vpack.c.b16 %v486, %v484
  %v509 = vpack.c.b16 %v489, %v487
  %v510 = vpack.c.b16 %v490, %v488
  %v511 = vpack.c.b16 %v493, %v491
  %v512 = vpack.c.b16 %v494, %v492
  %v513 = vpack.c.b16 %v497, %v495
  %v514 = vpack.c.b16 %v498, %v496
  %531 = vmatprep.subr.bf16.mxu0 %v500
  %532 = vmatpush1.bf16.msra.mxu0 %v499
  %533 = vmatprep.subr.bf16.mxu0 %v502
  %534 = vmatpush1.bf16.msra.mxu0 %v501
  %535 = vmatprep.subr.bf16.mxu0 %v504
  %536 = vmatpush1.bf16.msra.mxu0 %v503
  %537 = vmatprep.subr.bf16.mxu0 %v506
  %538 = vmatpush1.bf16.msra.mxu0 %v505
  %539 = vmatprep.subr.bf16.mxu0 %v508
  %540 = vmatpush1.bf16.msra.mxu0 %v507
  %541 = vmatprep.subr.bf16.mxu0 %v510
  %542 = vmatpush1.bf16.msra.mxu0 %v509
  %543 = vmatprep.subr.bf16.mxu0 %v512
  %544 = vmatpush1.bf16.msra.mxu0 %v511
  %545 = vmatprep.subr.bf16.mxu0 %v514
  %546 = vmatpush1.bf16.msra.mxu0 %v513
  %547 = vmatprep.subr.bf16.mxu0 0
  %548 = vmatpush1.bf16.msra.mxu0 0
  %549 = vmatprep.subr.bf16.mxu0 0
  %550 = vmatpush1.bf16.msra.mxu0 0
  %551 = vmatprep.subr.bf16.mxu0 0
  %552 = vmatpush1.bf16.msra.mxu0 0
  %553 = vmatprep.subr.bf16.mxu0 0
  %554 = vmatpush1.bf16.msra.mxu0 0
  %555 = vmatprep.subr.bf16.mxu0 0
  %556 = vmatpush1.bf16.msra.mxu0 0
  %557 = vmatprep.subr.bf16.mxu0 0
  %558 = vmatpush1.bf16.msra.mxu0 0
  %559 = vmatprep.subr.bf16.mxu0 0
  %560 = vmatpush1.bf16.msra.mxu0 0
  %561 = vmatprep.subr.bf16.mxu0 0
  %562 = vmatpush1.bf16.msra.mxu0 0
  %563 = vmatprep.mubr.bf16.mxu0 0
  %564 = vmatmul.mubr.bf16.gmra.mrb[0].mxu0 %v449
  %v565 = vpop.f32.mrb[0].mxu0
  %v566 = vadd.f32 %v437, %v565
  %v567 = vpop.f32.mrb[0].mxu0
  %v568 = vadd.f32 %v439, %v567
  %v569 = vpop.f32.mrb[0].mxu0
  %v570 = vadd.f32 %v441, %v569
  %v571 = vpop.f32.mrb[0].mxu0
  %v572 = vadd.f32 %v443, %v571
  %573 = vdwg.mxu0
  %v574 = vld [vmem:[%s2] sm:$0xff]
  %v575 = vld [vmem:[%s2 + $0x8] sm:$0xff]
  %v576 = vld [vmem:[%s5] sm:$0x77]
  %578 = vset.pattern.permute.xlu0 0
  %579 = vperm.xlu0 %578, %v574
  %v580 = vpop.permute.xlu0 %579
  %583 = vset.pattern.permute.xlu0 0
  %584 = vperm.xlu0 %583, %v575
  %v585 = vpop.permute.xlu0 %584
  %v588 = vlaneseq
  %v589 = vshrl.u32 %v588, 7
  %v590 = vsub.s32 0, %v589
  %v591 = vrot.slane %v576, %v590
  %v592 = vlaneseq
  %v593 = vshrl.u32 %v592, 7
  %v594 = vsub.s32 4, %v593
  %v595 = vrot.slane %v576, %v594
  %v598 = vlaneseq
  %v599 = vshrl.u32 %v598, 7
  %v600 = vsub.s32 0, %v599
  %v601 = vrot.slane %v591, %v600
  %v602 = vlaneseq
  %v603 = vshrl.u32 %v602, 7
  %v604 = vsub.s32 0, %v603
  %v605 = vrot.slane %v595, %v604
  %v606 = vmul.f32 %v580, %v601
  %v607 = vmul.f32 %v580, %v605
  %v608 = vmul.f32 %v585, %v601
  %v609 = vmul.f32 %v585, %v605
  %v610 = vadd.f32 %v566, %v606
  %v611 = vadd.f32 %v568, %v607
  %v612 = vadd.f32 %v570, %v608
  %v613 = vadd.f32 %v572, %v609
  %614 = vset.pattern.permute.xlu0 1
  %615 = vperm.xlu0 %614, %v574
  %v616 = vpop.permute.xlu0 %615
  %618 = vset.pattern.permute.xlu0 1
  %619 = vperm.xlu0 %618, %v575
  %v620 = vpop.permute.xlu0 %619
  %v622 = vlaneseq
  %v623 = vshrl.u32 %v622, 7
  %v624 = vsub.s32 1, %v623
  %v625 = vrot.slane %v576, %v624
  %v626 = vlaneseq
  %v627 = vshrl.u32 %v626, 7
  %v628 = vsub.s32 5, %v627
  %v629 = vrot.slane %v576, %v628
  %v632 = vlaneseq
  %v633 = vshrl.u32 %v632, 7
  %v634 = vsub.s32 1, %v633
  %v635 = vrot.slane %v625, %v634
  %v636 = vlaneseq
  %v637 = vshrl.u32 %v636, 7
  %v638 = vsub.s32 1, %v637
  %v639 = vrot.slane %v629, %v638
  %v640 = vmul.f32 %v616, %v635
  %v641 = vmul.f32 %v616, %v639
  %v642 = vmul.f32 %v620, %v635
  %v643 = vmul.f32 %v620, %v639
  %v644 = vadd.f32 %v610, %v640
  %v645 = vadd.f32 %v611, %v641
  %v646 = vadd.f32 %v612, %v642
  %v647 = vadd.f32 %v613, %v643
  %648 = vset.pattern.permute.xlu0 2
  %649 = vperm.xlu0 %648, %v574
  %v650 = vpop.permute.xlu0 %649
  %652 = vset.pattern.permute.xlu0 2
  %653 = vperm.xlu0 %652, %v575
  %v654 = vpop.permute.xlu0 %653
  %v656 = vlaneseq
  %v657 = vshrl.u32 %v656, 7
  %v658 = vsub.s32 2, %v657
  %v659 = vrot.slane %v576, %v658
  %v660 = vlaneseq
  %v661 = vshrl.u32 %v660, 7
  %v662 = vsub.s32 6, %v661
  %v663 = vrot.slane %v576, %v662
  %v666 = vlaneseq
  %v667 = vshrl.u32 %v666, 7
  %v668 = vsub.s32 2, %v667
  %v669 = vrot.slane %v659, %v668
  %v670 = vlaneseq
  %v671 = vshrl.u32 %v670, 7
  %v672 = vsub.s32 2, %v671
  %v673 = vrot.slane %v663, %v672
  %v674 = vmul.f32 %v650, %v669
  %v675 = vmul.f32 %v650, %v673
  %v676 = vmul.f32 %v654, %v669
  %v677 = vmul.f32 %v654, %v673
  %v678 = vadd.f32 %v644, %v674
  %v679 = vadd.f32 %v645, %v675
  %v680 = vadd.f32 %v646, %v676
  %v681 = vadd.f32 %v647, %v677
  %v682 = vld [vmem:[%s6] sm:$0x3]
  %v684 = vlaneseq
  %v685 = vshrl.u32 %v684, 7
  %v686 = vsub.s32 0, %v685
  %v687 = vrot.slane %v682, %v686
  %v688 = vlaneseq
  %v689 = vshrl.u32 %v688, 7
  %v690 = vsub.s32 1, %v689
  %v691 = vrot.slane %v682, %v690
  %v694 = vadd.f32 %v678, %v687
  %v695 = vadd.f32 %v679, %v691
  %v696 = vadd.f32 %v680, %v687
  %v697 = vadd.f32 %v681, %v691
  %v698 = vmax.f32 %v694, 0.0
  %v699 = vmax.f32 %v695, 0.0
  %v700 = vmax.f32 %v696, 0.0
  %v701 = vmax.f32 %v697, 0.0
  %v702 = vpack.c.bf16 %v700, %v698
  %v703 = vpack.c.bf16 %v701, %v699
  %v704 = vld [vmem:[%s7] sm:$0xff]
  %v705 = vld [vmem:[%s7 + $0x8] sm:$0xf]
  %v706 = vld [vmem:[%s7 + $0xc] sm:$0xff]
  %v707 = vld [vmem:[%s7 + $0x14] sm:$0xf]
  %v708 = vld [vmem:[%s7 + $0x18] sm:$0xff]
  %v709 = vld [vmem:[%s7 + $0x20] sm:$0xf]
  %v710 = vld [vmem:[%s7 + $0x24] sm:$0xff]
  %v711 = vld [vmem:[%s7 + $0x2c] sm:$0xf]
  %v712 = vld [vmem:[%s7 + $0x30] sm:$0xff]
  %v713 = vld [vmem:[%s7 + $0x38] sm:$0xf]
  %v714 = vld [vmem:[%s7 + $0x3c] sm:$0xff]
  %v715 = vld [vmem:[%s7 + $0x44] sm:$0xf]
  %v716 = vld [vmem:[%s7 + $0x48] sm:$0xff]
  %v717 = vld [vmem:[%s7 + $0x50] sm:$0xf]
  %v718 = vld [vmem:[%s7 + $0x54] sm:$0xff]
  %v719 = vld [vmem:[%s7 + $0x5c] sm:$0xf]
  %v720 = vld [vmem:[%s7 + $0x60] sm:$0xff]
  %v721 = vld [vmem:[%s7 + $0x68] sm:$0xf]
  %v722 = vld [vmem:[%s7 + $0x6c] sm:$0xff]
  %v723 = vld [vmem:[%s7 + $0x74] sm:$0xf]
  %v724 = vld [vmem:[%s7 + $0x78] sm:$0xff]
  %v725 = vld [vmem:[%s7 + $0x80] sm:$0xf]
  %v726 = vld [vmem:[%s7 + $0x84] sm:$0xff]
  %v727 = vld [vmem:[%s7 + $0x8c] sm:$0xf]
  %v728 = vld [vmem:[%s7 + $0x90] sm:$0xff]
  %v729 = vld [vmem:[%s7 + $0x98] sm:$0xf]
  %v730 = vld [vmem:[%s7 + $0x9c] sm:$0xff]
  %v731 = vld [vmem:[%s7 + $0xa4] sm:$0xf]
  %v732 = vld [vmem:[%s7 + $0xa8] sm:$0xff]
  %v733 = vld [vmem:[%s7 + $0xb0] sm:$0xf]
  %v734 = vld [vmem:[%s7 + $0xb4] sm:$0xff]
  %v735 = vld [vmem:[%s7 + $0xbc] sm:$0xf]
  %v736 = vld [vmem:[%s7 + $0xc0] sm:$0xff]
  %v737 = vld [vmem:[%s7 + $0xc8] sm:$0xf]
  %v738 = vld [vmem:[%s7 + $0xcc] sm:$0xff]
  %v739 = vld [vmem:[%s7 + $0xd4] sm:$0xf]
  %v740 = vld [vmem:[%s7 + $0xd8] sm:$0xff]
  %v741 = vld [vmem:[%s7 + $0xe0] sm:$0xf]
  %v742 = vld [vmem:[%s7 + $0xe4] sm:$0xff]
  %v743 = vld [vmem:[%s7 + $0xec] sm:$0xf]
  %v744 = vld [vmem:[%s7 + $0xf0] sm:$0xff]
  %v745 = vld [vmem:[%s7 + $0xf8] sm:$0xf]
  %v746 = vld [vmem:[%s7 + $0xfc] sm:$0xff]
  %v747 = vld [vmem:[%s7 + $0x104] sm:$0xf]
  %v748 = vld [vmem:[%s7 + $0x108] sm:$0xff]
  %v749 = vld [vmem:[%s7 + $0x110] sm:$0xf]
  %v750 = vld [vmem:[%s7 + $0x114] sm:$0xff]
  %v751 = vld [vmem:[%s7 + $0x11c] sm:$0xf]
  %v752 = vld [vmem:[%s7 + $0x120] sm:$0xff]
  %v753 = vld [vmem:[%s7 + $0x128] sm:$0xf]
  %v754 = vld [vmem:[%s7 + $0x12c] sm:$0xff]
  %v755 = vld [vmem:[%s7 + $0x134] sm:$0xf]
  %v756 = vld [vmem:[%s7 + $0x138] sm:$0xff]
  %v757 = vld [vmem:[%s7 + $0x140] sm:$0xf]
  %v758 = vld [vmem:[%s7 + $0x144] sm:$0xff]
  %v759 = vld [vmem:[%s7 + $0x14c] sm:$0xf]
  %v760 = vld [vmem:[%s7 + $0x150] sm:$0xff]
  %v761 = vld [vmem:[%s7 + $0x158] sm:$0xf]
  %v762 = vld [vmem:[%s7 + $0x15c] sm:$0xff]
  %v763 = vld [vmem:[%s7 + $0x164] sm:$0xf]
  %v764 = vld [vmem:[%s7 + $0x168] sm:$0xff]
  %v765 = vld [vmem:[%s7 + $0x170] sm:$0xf]
  %v766 = vld [vmem:[%s7 + $0x174] sm:$0xff]
  %v767 = vld [vmem:[%s7 + $0x17c] sm:$0xf]
  %v768 = vld [vmem:[%s8] sm:$0x7]
  %v770 = vlaneseq
  %v771 = vshrl.u32 %v770, 7
  %v772 = vsub.s32 0, %v771
  %v773 = vrot.slane %v768, %v772
  %v774 = vlaneseq
  %v775 = vshrl.u32 %v774, 7
  %v776 = vsub.s32 1, %v775
  %v777 = vrot.slane %v768, %v776
  %v778 = vlaneseq
  %v779 = vshrl.u32 %v778, 7
  %v780 = vsub.s32 2, %v779
  %v781 = vrot.slane %v768, %v780
  %v849 = vunpack.c.l.b16 %v704
  %v850 = vunpack.c.h.b16 %v704
  %v851 = vunpack.c.l.b16 %v705
  %v852 = vunpack.c.l.b16 %v706
  %v853 = vunpack.c.h.b16 %v706
  %v854 = vunpack.c.l.b16 %v707
  %v855 = vunpack.c.l.b16 %v708
  %v856 = vunpack.c.h.b16 %v708
  %v857 = vunpack.c.l.b16 %v709
  %v858 = vunpack.c.l.b16 %v710
  %v859 = vunpack.c.h.b16 %v710
  %v860 = vunpack.c.l.b16 %v711
  %v861 = vunpack.c.l.b16 %v712
  %v862 = vunpack.c.h.b16 %v712
  %v863 = vunpack.c.l.b16 %v713
  %v864 = vunpack.c.l.b16 %v714
  %v865 = vunpack.c.h.b16 %v714
  %v866 = vunpack.c.l.b16 %v715
  %v867 = vunpack.c.l.b16 %v716
  %v868 = vunpack.c.h.b16 %v716
  %v869 = vunpack.c.l.b16 %v717
  %v870 = vunpack.c.l.b16 %v718
  %v871 = vunpack.c.h.b16 %v718
  %v872 = vunpack.c.l.b16 %v719
  %v873 = vunpack.c.l.b16 %v720
  %v874 = vunpack.c.h.b16 %v720
  %v875 = vunpack.c.l.b16 %v721
  %v876 = vunpack.c.l.b16 %v722
  %v877 = vunpack.c.h.b16 %v722
  %v878 = vunpack.c.l.b16 %v723
  %v879 = vunpack.c.l.b16 %v724
  %v880 = vunpack.c.h.b16 %v724
  %v881 = vunpack.c.l.b16 %v725
  %v882 = vunpack.c.l.b16 %v726
  %v883 = vunpack.c.h.b16 %v726
  %v884 = vunpack.c.l.b16 %v727
  %v885 = vunpack.c.l.b16 %v728
  %v886 = vunpack.c.h.b16 %v728
  %v887 = vunpack.c.l.b16 %v729
  %v888 = vunpack.c.l.b16 %v730
  %v889 = vunpack.c.h.b16 %v730
  %v890 = vunpack.c.l.b16 %v731
  %v891 = vunpack.c.l.b16 %v732
  %v892 = vunpack.c.h.b16 %v732
  %v893 = vunpack.c.l.b16 %v733
  %v894 = vunpack.c.l.b16 %v734
  %v895 = vunpack.c.h.b16 %v734
  %v896 = vunpack.c.l.b16 %v735
  %v897 = vunpack.c.l.b16 %v736
  %v898 = vunpack.c.h.b16 %v736
  %v899 = vunpack.c.l.b16 %v737
  %v900 = vunpack.c.l.b16 %v738
  %v901 = vunpack.c.h.b16 %v738
  %v902 = vunpack.c.l.b16 %v739
  %v903 = vunpack.c.l.b16 %v740
  %v904 = vunpack.c.h.b16 %v740
  %v905 = vunpack.c.l.b16 %v741
  %v906 = vunpack.c.l.b16 %v742
  %v907 = vunpack.c.h.b16 %v742
  %v908 = vunpack.c.l.b16 %v743
  %v909 = vunpack.c.l.b16 %v744
  %v910 = vunpack.c.h.b16 %v744
  %v911 = vunpack.c.l.b16 %v745
  %v912 = vunpack.c.l.b16 %v746
  %v913 = vunpack.c.h.b16 %v746
  %v914 = vunpack.c.l.b16 %v747
  %v915 = vunpack.c.l.b16 %v748
  %v916 = vunpack.c.h.b16 %v748
  %v917 = vunpack.c.l.b16 %v749
  %v918 = vunpack.c.l.b16 %v750
  %v919 = vunpack.c.h.b16 %v750
  %v920 = vunpack.c.l.b16 %v751
  %v921 = vunpack.c.l.b16 %v752
  %v922 = vunpack.c.h.b16 %v752
  %v923 = vunpack.c.l.b16 %v753
  %v924 = vunpack.c.l.b16 %v754
  %v925 = vunpack.c.h.b16 %v754
  %v926 = vunpack.c.l.b16 %v755
  %v927 = vunpack.c.l.b16 %v756
  %v928 = vunpack.c.h.b16 %v756
  %v929 = vunpack.c.l.b16 %v757
  %v930 = vunpack.c.l.b16 %v758
  %v931 = vunpack.c.h.b16 %v758
  %v932 = vunpack.c.l.b16 %v759
  %v933 = vunpack.c.l.b16 %v760
  %v934 = vunpack.c.h.b16 %v760
  %v935 = vunpack.c.l.b16 %v761
  %v936 = vunpack.c.l.b16 %v762
  %v937 = vunpack.c.h.b16 %v762
  %v938 = vunpack.c.l.b16 %v763
  %v939 = vunpack.c.l.b16 %v764
  %v940 = vunpack.c.h.b16 %v764
  %v941 = vunpack.c.l.b16 %v765
  %v942 = vunpack.c.l.b16 %v766
  %v943 = vunpack.c.h.b16 %v766
  %v944 = vunpack.c.l.b16 %v767
  %v945 = vpack.c.b16 %v852, %v849
  %v946 = vpack.c.b16 %v853, %v850
  %v947 = vpack.c.b16 %v854, %v851
  %v948 = vpack.c.b16 %v858, %v855
  %v949 = vpack.c.b16 %v859, %v856
  %v950 = vpack.c.b16 %v860, %v857
  %v951 = vpack.c.b16 %v864, %v861
  %v952 = vpack.c.b16 %v865, %v862
  %v953 = vpack.c.b16 %v866, %v863
  %v954 = vpack.c.b16 %v870, %v867
  %v955 = vpack.c.b16 %v871, %v868
  %v956 = vpack.c.b16 %v872, %v869
  %v957 = vpack.c.b16 %v876, %v873
  %v958 = vpack.c.b16 %v877, %v874
  %v959 = vpack.c.b16 %v878, %v875
  %v960 = vpack.c.b16 %v882, %v879
  %v961 = vpack.c.b16 %v883, %v880
  %v962 = vpack.c.b16 %v884, %v881
  %v963 = vpack.c.b16 %v888, %v885
  %v964 = vpack.c.b16 %v889, %v886
  %v965 = vpack.c.b16 %v890, %v887
  %v966 = vpack.c.b16 %v894, %v891
  %v967 = vpack.c.b16 %v895, %v892
  %v968 = vpack.c.b16 %v896, %v893
  %v969 = vpack.c.b16 %v900, %v897
  %v970 = vpack.c.b16 %v901, %v898
  %v971 = vpack.c.b16 %v902, %v899
  %v972 = vpack.c.b16 %v906, %v903
  %v973 = vpack.c.b16 %v907, %v904
  %v974 = vpack.c.b16 %v908, %v905
  %v975 = vpack.c.b16 %v912, %v909
  %v976 = vpack.c.b16 %v913, %v910
  %v977 = vpack.c.b16 %v914, %v911
  %v978 = vpack.c.b16 %v918, %v915
  %v979 = vpack.c.b16 %v919, %v916
  %v980 = vpack.c.b16 %v920, %v917
  %v981 = vpack.c.b16 %v924, %v921
  %v982 = vpack.c.b16 %v925, %v922
  %v983 = vpack.c.b16 %v926, %v923
  %v984 = vpack.c.b16 %v930, %v927
  %v985 = vpack.c.b16 %v931, %v928
  %v986 = vpack.c.b16 %v932, %v929
  %v987 = vpack.c.b16 %v936, %v933
  %v988 = vpack.c.b16 %v937, %v934
  %v989 = vpack.c.b16 %v938, %v935
  %v990 = vpack.c.b16 %v942, %v939
  %v991 = vpack.c.b16 %v943, %v940
  %v992 = vpack.c.b16 %v944, %v941
  %1041 = vmatprep.subr.bf16.mxu0 %v946
  %1042 = vmatpush1.bf16.msra.mxu0 %v945
  %1043 = vmatprep.subr.bf16.mxu0 %v949
  %1044 = vmatpush1.bf16.msra.mxu0 %v948
  %1045 = vmatprep.subr.bf16.mxu0 %v952
  %1046 = vmatpush1.bf16.msra.mxu0 %v951
  %1047 = vmatprep.subr.bf16.mxu0 %v955
  %1048 = vmatpush1.bf16.msra.mxu0 %v954
  %1049 = vmatprep.subr.bf16.mxu0 %v958
  %1050 = vmatpush1.bf16.msra.mxu0 %v957
  %1051 = vmatprep.subr.bf16.mxu0 %v961
  %1052 = vmatpush1.bf16.msra.mxu0 %v960
  %1053 = vmatprep.subr.bf16.mxu0 %v964
  %1054 = vmatpush1.bf16.msra.mxu0 %v963
  %1055 = vmatprep.subr.bf16.mxu0 %v967
  %1056 = vmatpush1.bf16.msra.mxu0 %v966
  %1057 = vmatprep.subr.bf16.mxu0 %v970
  %1058 = vmatpush1.bf16.msra.mxu0 %v969
  %1059 = vmatprep.subr.bf16.mxu0 %v973
  %1060 = vmatpush1.bf16.msra.mxu0 %v972
  %1061 = vmatprep.subr.bf16.mxu0 %v976
  %1062 = vmatpush1.bf16.msra.mxu0 %v975
  %1063 = vmatprep.subr.bf16.mxu0 %v979
  %1064 = vmatpush1.bf16.msra.mxu0 %v978
  %1065 = vmatprep.subr.bf16.mxu0 %v982
  %1066 = vmatpush1.bf16.msra.mxu0 %v981
  %1067 = vmatprep.subr.bf16.mxu0 %v985
  %1068 = vmatpush1.bf16.msra.mxu0 %v984
  %1069 = vmatprep.subr.bf16.mxu0 %v988
  %1070 = vmatpush1.bf16.msra.mxu0 %v987
  %1071 = vmatprep.subr.bf16.mxu0 %v991
  %1072 = vmatpush1.bf16.msra.mxu0 %v990
  %1073 = vmatprep.mubr.bf16.mxu0 %v703
  %1074 = vmatmul.mubr.bf16.gmra.mrb[0].mxu0 %v702
  %v1075 = vpop.f32.mrb[0].mxu0
  %v1076 = vadd.f32 %v773, %v1075
  %v1077 = vpop.f32.mrb[0].mxu0
  %v1078 = vadd.f32 %v777, %v1077
  %v1079 = vpop.f32.mrb[0].mxu0
  %v1080 = vadd.f32 %v773, %v1079
  %v1081 = vpop.f32.mrb[0].mxu0
  %v1082 = vadd.f32 %v777, %v1081
  %1083 = vdwg.mxu0
  %1084 = vmatprep.subr.bf16.mxu0 0
  %1085 = vmatpush1.bf16.msra.mxu0 %v947
  %1086 = vmatprep.subr.bf16.mxu0 0
  %1087 = vmatpush1.bf16.msra.mxu0 %v950
  %1088 = vmatprep.subr.bf16.mxu0 0
  %1089 = vmatpush1.bf16.msra.mxu0 %v953
  %1090 = vmatprep.subr.bf16.mxu0 0
  %1091 = vmatpush1.bf16.msra.mxu0 %v956
  %1092 = vmatprep.subr.bf16.mxu0 0
  %1093 = vmatpush1.bf16.msra.mxu0 %v959
  %1094 = vmatprep.subr.bf16.mxu0 0
  %1095 = vmatpush1.bf16.msra.mxu0 %v962
  %1096 = vmatprep.subr.bf16.mxu0 0
  %1097 = vmatpush1.bf16.msra.mxu0 %v965
  %1098 = vmatprep.subr.bf16.mxu0 0
  %1099 = vmatpush1.bf16.msra.mxu0 %v968
  %1100 = vmatprep.subr.bf16.mxu0 0
  %1101 = vmatpush1.bf16.msra.mxu0 %v971
  %1102 = vmatprep.subr.bf16.mxu0 0
  %1103 = vmatpush1.bf16.msra.mxu0 %v974
  %1104 = vmatprep.subr.bf16.mxu0 0
  %1105 = vmatpush1.bf16.msra.mxu0 %v977
  %1106 = vmatprep.subr.bf16.mxu0 0
  %1107 = vmatpush1.bf16.msra.mxu0 %v980
  %1108 = vmatprep.subr.bf16.mxu0 0
  %1109 = vmatpush1.bf16.msra.mxu0 %v983
  %1110 = vmatprep.subr.bf16.mxu0 0
  %1111 = vmatpush1.bf16.msra.mxu0 %v986
  %1112 = vmatprep.subr.bf16.mxu0 0
  %1113 = vmatpush1.bf16.msra.mxu0 %v989
  %1114 = vmatprep.subr.bf16.mxu0 0
  %1115 = vmatpush1.bf16.msra.mxu0 %v992
  %1116 = vmatprep.mubr.bf16.mxu0 %v703
  %1117 = vmatmul.mubr.bf16.gmra.mrb[0].mxu0 %v702
  %v1118 = vpop.f32.mrb[0].mxu0
  %v1119 = vadd.f32 %v781, %v1118
  %v1120 = vpop.f32.mrb[0].mxu0
  %v1121 = vpop.f32.mrb[0].mxu0
  %v1122 = vadd.f32 %v781, %v1121
  %v1123 = vpop.f32.mrb[0].mxu0
  %1124 = vdwg.mxu0
  %v1125 = vmax.f32 %v1076, 0.0
  %v1126 = vmax.f32 %v1078, 0.0
  %v1127 = vmax.f32 %v1119, 0.0
  %v1128 = vmax.f32 %v1080, 0.0
  %v1129 = vmax.f32 %v1082, 0.0
  %v1130 = vmax.f32 %v1122, 0.0
  %v1131 = vpack.c.bf16 %v1128, %v1125
  %v1132 = vpack.c.bf16 %v1129, %v1126
  %v1133 = vpack.c.bf16 %v1130, %v1127
  %v1137 = vunpack.c.l.b16 %v1131
  %v1138 = vunpack.c.l.b16 %v1132
  %v1139 = vunpack.c.l.b16 %v1133
  %v1140 = vunpack.c.h.b16 %v1131
  %v1141 = vunpack.c.h.b16 %v1132
  %v1142 = vunpack.c.h.b16 %v1133
  %v1143 = vpack.c.b16 %v1138, %v1137
  %v1144 = vpack.c.b16 %v1139, %v1139
  %v1145 = vpack.c.b16 %v1141, %v1140
  %v1146 = vpack.c.b16 %v1142, %v1142
  %1151 = vst [vmem:[%s9] sm:$0xff] %v1143
  %1152 = vst [vmem:[%s9 + $0x8] sm:$0xf] %v1144
  %1153 = vst [vmem:[%s9 + $0xc] sm:$0xff] %v1145
  %1154 = vst [vmem:[%s9 + $0x14] sm:$0xf] %v1146
  // Predicated region
  $region38: #{net_forward.15} parent=0 // pred_check
    _
  $region39: #{net_forward.15} parent=0 // pred_check_branch
    %1156 = sbr.rel (0) target = $region41
  $region40: #{net_forward.15} parent=0 // pred_region
    _
  $region41: #{net_forward.15} parent=0 // pred_fallthru
    _
  // Predicated region
  $region42: #{net_forward.15} parent=0 // pred_check
    _
  $region43: #{net_forward.15} parent=0 // pred_check_branch
    %1158 = sbr.rel (0) target = $region45
  $region44: #{net_forward.15} parent=0 // pred_region
    _
  $region45: #{net_forward.15} parent=0 // pred_fallthru
    _

// kernel: net_forward.16
$region0: #{net_forward.16}
  #allocation0 [shape = 'u32[]', space=smem, size = 0x4, offset = 0x4, fixed_abs, tag = 'smem constant byte address 0x4 - core index']
  #allocation1 [shape = 'u32[144,128]{1,0:T(1,128)}', space=vmem, size = 0x12000, scoped, tag = 'internal scratch']
  %s0 = inlined_call_operand.vmem [shape: bf16[16,384], index: 0, kind: input, shape index: {}]
  %s1 = inlined_call_operand.vmem [shape: bf16[16,192], index: 1, kind: input, shape index: {}]
  %s2 = inlined_call_operand.vmem [shape: f32[16,3], index: 2, kind: input, shape index: {}]
  %s3 = inlined_call_operand.vmem [shape: bf16[384,256], index: 3, kind: input, shape index: {}]
  %s4 = inlined_call_operand.vmem [shape: bf16[192,256], index: 4, kind: input, shape index: {}]
  %s5 = inlined_call_operand.vmem [shape: f32[3,256], index: 5, kind: input, shape index: {}]
  %s6 = inlined_call_operand.vmem [shape: f32[1,256], index: 6, kind: input, shape index: {}]
  %s7 = inlined_call_operand.vmem [shape: bf16[256,192], index: 7, kind: input, shape index: {}]
  %s8 = inlined_call_operand.vmem [shape: f32[1,192], index: 8, kind: input, shape index: {}]
  %s9 = inlined_call_operand.vmem [shape: bf16[16,192], index: 9, kind: output, shape index: {}]
  %s10 = sld [smem:[#allocation0]]
  $region46: #{net_forward.16} parent=0
    _
  %s12 = ssub.s32 1, %s10
  %s13 = scalar_select 0, %s12, %s10
  // Predicated region
  $region2: #{net_forward.16} parent=0 // pred_check
    _
  $region3: #{net_forward.16} parent=0 // pred_check_branch
    %15 = sbr.rel (0) target = $region5
  $region4: #{net_forward.16} parent=0 // pred_region
    _
  $region5: #{net_forward.16} parent=0 // pred_fallthru
    _
  // Predicated region
  $region6: #{net_forward.16} parent=0 // pred_check
    _
  $region7: #{net_forward.16} parent=0 // pred_check_branch
    %17 = sbr.rel (0) target = $region9
  $region8: #{net_forward.16} parent=0 // pred_region
    _
  $region9: #{net_forward.16} parent=0 // pred_fallthru
    _
  // Predicated region
  $region10: #{net_forward.16} parent=0 // pred_check
    _
  $region11: #{net_forward.16} parent=0 // pred_check_branch
    %19 = sbr.rel (0) target = $region13
  $region12: #{net_forward.16} parent=0 // pred_region
    _
  $region13: #{net_forward.16} parent=0 // pred_fallthru
    _
  // Predicated region
  $region14: #{net_forward.16} parent=0 // pred_check
    _
  $region15: #{net_forward.16} parent=0 // pred_check_branch
    %21 = sbr.rel (0) target = $region17
  $region16: #{net_forward.16} parent=0 // pred_region
    _
  $region17: #{net_forward.16} parent=0 // pred_fallthru
    _
  // Predicated region
  $region18: #{net_forward.16} parent=0 // pred_check
    _
  $region19: #{net_forward.16} parent=0 // pred_check_branch
    %23 = sbr.rel (0) target = $region21
  $region20: #{net_forward.16} parent=0 // pred_region
    _
  $region21: #{net_forward.16} parent=0 // pred_fallthru
    _
  // Predicated region
  $region22: #{net_forward.16} parent=0 // pred_check
    _
  $region23: #{net_forward.16} parent=0 // pred_check_branch
    %25 = sbr.rel (0) target = $region25
  $region24: #{net_forward.16} parent=0 // pred_region
    _
  $region25: #{net_forward.16} parent=0 // pred_fallthru
    _
  // Predicated region
  $region26: #{net_forward.16} parent=0 // pred_check
    _
  $region27: #{net_forward.16} parent=0 // pred_check_branch
    %27 = sbr.rel (0) target = $region29
  $region28: #{net_forward.16} parent=0 // pred_region
    _
  $region29: #{net_forward.16} parent=0 // pred_fallthru
    _
  // Predicated region
  $region30: #{net_forward.16} parent=0 // pred_check
    _
  $region31: #{net_forward.16} parent=0 // pred_check_branch
    %29 = sbr.rel (0) target = $region33
  $region32: #{net_forward.16} parent=0 // pred_region
    _
  $region33: #{net_forward.16} parent=0 // pred_fallthru
    _
  // Predicated region
  $region34: #{net_forward.16} parent=0 // pred_check
    _
  $region35: #{net_forward.16} parent=0 // pred_check_branch
    %31 = sbr.rel (0) target = $region37
  $region36: #{net_forward.16} parent=0 // pred_region
    _
  $region37: #{net_forward.16} parent=0 // pred_fallthru
    _
  %v33 = vld [vmem:[%s0] sm:$0xff]
  %v34 = vld [vmem:[%s0 + $0x8] sm:$0xf]
  %v35 = vld [vmem:[%s0 + $0xc] sm:$0xff]
  %v36 = vld [vmem:[%s0 + $0x14] sm:$0xf]
  %v37 = vld [vmem:[%s3] sm:$0xff]
  %v38 = vld [vmem:[%s3 + $0x8] sm:$0xff]
  %v39 = vld [vmem:[%s3 + $0x10] sm:$0xff]
  %v40 = vld [vmem:[%s3 + $0x18] sm:$0xff]
  %v41 = vld [vmem:[%s3 + $0x20] sm:$0xff]
  %v42 = vld [vmem:[%s3 + $0x28] sm:$0xff]
  %v43 = vld [vmem:[%s3 + $0x30] sm:$0xff]
  %v44 = vld [vmem:[%s3 + $0x38] sm:$0xff]
  %v45 = vld [vmem:[%s3 + $0x40] sm:$0xff]
  %v46 = vld [vmem:[%s3 + $0x48] sm:$0xff]
  %v47 = vld [vmem:[%s3 + $0x50] sm:$0xff]
  %v48 = vld [vmem:[%s3 + $0x58] sm:$0xff]
  %v49 = vld [vmem:[%s3 + $0x60] sm:$0xff]
  %v50 = vld [vmem:[%s3 + $0x68] sm:$0xff]
  %v51 = vld [vmem:[%s3 + $0x70] sm:$0xff]
  %v52 = vld [vmem:[%s3 + $0x78] sm:$0xff]
  %v53 = vld [vmem:[%s3 + $0x80] sm:$0xff]
  %v54 = vld [vmem:[%s3 + $0x88] sm:$0xff]
  %v55 = vld [vmem:[%s3 + $0x90] sm:$0xff]
  %v56 = vld [vmem:[%s3 + $0x98] sm:$0xff]
  %v57 = vld [vmem:[%s3 + $0xa0] sm:$0xff]
  %v58 = vld [vmem:[%s3 + $0xa8] sm:$0xff]
  %v59 = vld [vmem:[%s3 + $0xb0] sm:$0xff]
  %v60 = vld [vmem:[%s3 + $0xb8] sm:$0xff]
  %v61 = vld [vmem:[%s3 + $0xc0] sm:$0xff]
  %v62 = vld [vmem:[%s3 + $0xc8] sm:$0xff]
  %v63 = vld [vmem:[%s3 + $0xd0] sm:$0xff]
  %v64 = vld [vmem:[%s3 + $0xd8] sm:$0xff]
  %v65 = vld [vmem:[%s3 + $0xe0] sm:$0xff]
  %v66 = vld [vmem:[%s3 + $0xe8] sm:$0xff]
  %v67 = vld [vmem:[%s3 + $0xf0] sm:$0xff]
  %v68 = vld [vmem:[%s3 + $0xf8] sm:$0xff]
  %v69 = vld [vmem:[%s3 + $0x100] sm:$0xff]
  %v70 = vld [vmem:[%s3 + $0x108] sm:$0xff]
  %v71 = vld [vmem:[%s3 + $0x110] sm:$0xff]
  %v72 = vld [vmem:[%s3 + $0x118] sm:$0xff]
  %v73 = vld [vmem:[%s3 + $0x120] sm:$0xff]
  %v74 = vld [vmem:[%s3 + $0x128] sm:$0xff]
  %v75 = vld [vmem:[%s3 + $0x130] sm:$0xff]
  %v76 = vld [vmem:[%s3 + $0x138] sm:$0xff]
  %v77 = vld [vmem:[%s3 + $0x140] sm:$0xff]
  %v78 = vld [vmem:[%s3 + $0x148] sm:$0xff]
  %v79 = vld [vmem:[%s3 + $0x150] sm:$0xff]
  %v80 = vld [vmem:[%s3 + $0x158] sm:$0xff]
  %v81 = vld [vmem:[%s3 + $0x160] sm:$0xff]
  %v82 = vld [vmem:[%s3 + $0x168] sm:$0xff]
  %v83 = vld [vmem:[%s3 + $0x170] sm:$0xff]
  %v84 = vld [vmem:[%s3 + $0x178] sm:$0xff]
  %v85 = vld [vmem:[%s1] sm:$0xff]
  %v86 = vld [vmem:[%s1 + $0x8] sm:$0xff]
  %v87 = vld [vmem:[%s4] sm:$0xff]
  %v88 = vld [vmem:[%s4 + $0x8] sm:$0xff]
  %v89 = vld [vmem:[%s4 + $0x10] sm:$0xff]
  %v90 = vld [vmem:[%s4 + $0x18] sm:$0xff]
  %v91 = vld [vmem:[%s4 + $0x20] sm:$0xff]
  %v92 = vld [vmem:[%s4 + $0x28] sm:$0xff]
  %v93 = vld [vmem:[%s4 + $0x30] sm:$0xff]
  %v94 = vld [vmem:[%s4 + $0x38] sm:$0xff]
  %v95 = vld [vmem:[%s4 + $0x40] sm:$0xff]
  %v96 = vld [vmem:[%s4 + $0x48] sm:$0xff]
  %v97 = vld [vmem:[%s4 + $0x50] sm:$0xff]
  %v98 = vld [vmem:[%s4 + $0x58] sm:$0xff]
  %v99 = vld [vmem:[%s4 + $0x60] sm:$0xff]
  %v100 = vld [vmem:[%s4 + $0x68] sm:$0xff]
  %v101 = vld [vmem:[%s4 + $0x70] sm:$0xff]
  %v102 = vld [vmem:[%s4 + $0x78] sm:$0xff]
  %v103 = vld [vmem:[%s4 + $0x80] sm:$0xff]
  %v104 = vld [vmem:[%s4 + $0x88] sm:$0xff]
  %v105 = vld [vmem:[%s4 + $0x90] sm:$0xff]
  %v106 = vld [vmem:[%s4 + $0x98] sm:$0xff]
  %v107 = vld [vmem:[%s4 + $0xa0] sm:$0xff]
  %v108 = vld [vmem:[%s4 + $0xa8] sm:$0xff]
  %v109 = vld [vmem:[%s4 + $0xb0] sm:$0xff]
  %v110 = vld [vmem:[%s4 + $0xb8] sm:$0xff]
  %v113 = vunpack.c.l.b16 %v85
  %v114 = vunpack.c.h.b16 %v85
  %v115 = vunpack.c.l.b16 %v86
  %v116 = vunpack.c.h.b16 %v86
  %v117 = vpack.c.b16 %v115, %v113
  %v118 = vpack.c.b16 %v116, %v114
  %v144 = vunpack.c.l.b16 %v87
  %v145 = vunpack.c.h.b16 %v87
  %v146 = vunpack.c.l.b16 %v88
  %v147 = vunpack.c.h.b16 %v88
  %v148 = vunpack.c.l.b16 %v89
  %v149 = vunpack.c.h.b16 %v89
  %v150 = vunpack.c.l.b16 %v90
  %v151 = vunpack.c.h.b16 %v90
  %v152 = vunpack.c.l.b16 %v91
  %v153 = vunpack.c.h.b16 %v91
  %v154 = vunpack.c.l.b16 %v92
  %v155 = vunpack.c.h.b16 %v92
  %v156 = vunpack.c.l.b16 %v93
  %v157 = vunpack.c.h.b16 %v93
  %v158 = vunpack.c.l.b16 %v94
  %v159 = vunpack.c.h.b16 %v94
  %v160 = vunpack.c.l.b16 %v95
  %v161 = vunpack.c.h.b16 %v95
  %v162 = vunpack.c.l.b16 %v96
  %v163 = vunpack.c.h.b16 %v96
  %v164 = vunpack.c.l.b16 %v97
  %v165 = vunpack.c.h.b16 %v97
  %v166 = vunpack.c.l.b16 %v98
  %v167 = vunpack.c.h.b16 %v98
  %v168 = vunpack.c.l.b16 %v99
  %v169 = vunpack.c.h.b16 %v99
  %v170 = vunpack.c.l.b16 %v100
  %v171 = vunpack.c.h.b16 %v100
  %v172 = vunpack.c.l.b16 %v101
  %v173 = vunpack.c.h.b16 %v101
  %v174 = vunpack.c.l.b16 %v102
  %v175 = vunpack.c.h.b16 %v102
  %v176 = vunpack.c.l.b16 %v103
  %v177 = vunpack.c.h.b16 %v103
  %v178 = vunpack.c.l.b16 %v104
  %v179 = vunpack.c.h.b16 %v104
  %v180 = vunpack.c.l.b16 %v105
  %v181 = vunpack.c.h.b16 %v105
  %v182 = vunpack.c.l.b16 %v106
  %v183 = vunpack.c.h.b16 %v106
  %v184 = vunpack.c.l.b16 %v107
  %v185 = vunpack.c.h.b16 %v107
  %v186 = vunpack.c.l.b16 %v108
  %v187 = vunpack.c.h.b16 %v108
  %v188 = vunpack.c.l.b16 %v109
  %v189 = vunpack.c.h.b16 %v109
  %v190 = vunpack.c.l.b16 %v110
  %v191 = vunpack.c.h.b16 %v110
  %v192 = vpack.c.b16 %v146, %v144
  %v193 = vpack.c.b16 %v147, %v145
  %v194 = vpack.c.b16 %v150, %v148
  %v195 = vpack.c.b16 %v151, %v149
  %v196 = vpack.c.b16 %v154, %v152
  %v197 = vpack.c.b16 %v155, %v153
  %v198 = vpack.c.b16 %v158, %v156
  %v199 = vpack.c.b16 %v159, %v157
  %v200 = vpack.c.b16 %v162, %v160
  %v201 = vpack.c.b16 %v163, %v161
  %v202 = vpack.c.b16 %v166, %v164
  %v203 = vpack.c.b16 %v167, %v165
  %v204 = vpack.c.b16 %v170, %v168
  %v205 = vpack.c.b16 %v171, %v169
  %v206 = vpack.c.b16 %v174, %v172
  %v207 = vpack.c.b16 %v175, %v173
  %v208 = vpack.c.b16 %v178, %v176
  %v209 = vpack.c.b16 %v179, %v177
  %v210 = vpack.c.b16 %v182, %v180
  %v211 = vpack.c.b16 %v183, %v181
  %v212 = vpack.c.b16 %v186, %v184
  %v213 = vpack.c.b16 %v187, %v185
  %v214 = vpack.c.b16 %v190, %v188
  %v215 = vpack.c.b16 %v191, %v189
  %vm240 = vcmask 523264
  %v242 = vsel %vm240, %v118, 0
  %244 = vmatprep.subr.bf16.mxu0 %v193
  %245 = vmatpush1.bf16.msra.mxu0 %v192
  %246 = vmatprep.subr.bf16.mxu0 %v195
  %247 = vmatpush1.bf16.msra.mxu0 %v194
  %248 = vmatprep.subr.bf16.mxu0 %v197
  %249 = vmatpush1.bf16.msra.mxu0 %v196
  %250 = vmatprep.subr.bf16.mxu0 %v199
  %251 = vmatpush1.bf16.msra.mxu0 %v198
  %252 = vmatprep.subr.bf16.mxu0 %v201
  %253 = vmatpush1.bf16.msra.mxu0 %v200
  %254 = vmatprep.subr.bf16.mxu0 %v203
  %255 = vmatpush1.bf16.msra.mxu0 %v202
  %256 = vmatprep.subr.bf16.mxu0 %v205
  %257 = vmatpush1.bf16.msra.mxu0 %v204
  %258 = vmatprep.subr.bf16.mxu0 %v207
  %259 = vmatpush1.bf16.msra.mxu0 %v206
  %260 = vmatprep.subr.bf16.mxu0 %v209
  %261 = vmatpush1.bf16.msra.mxu0 %v208
  %262 = vmatprep.subr.bf16.mxu0 %v211
  %263 = vmatpush1.bf16.msra.mxu0 %v210
  %264 = vmatprep.subr.bf16.mxu0 %v213
  %265 = vmatpush1.bf16.msra.mxu0 %v212
  %266 = vmatprep.subr.bf16.mxu0 %v215
  %267 = vmatpush1.bf16.msra.mxu0 %v214
  %268 = vmatprep.subr.bf16.mxu0 0
  %269 = vmatpush1.bf16.msra.mxu0 0
  %270 = vmatprep.subr.bf16.mxu0 0
  %271 = vmatpush1.bf16.msra.mxu0 0
  %272 = vmatprep.subr.bf16.mxu0 0
  %273 = vmatpush1.bf16.msra.mxu0 0
  %274 = vmatprep.subr.bf16.mxu0 0
  %275 = vmatpush1.bf16.msra.mxu0 0
  %276 = vmatprep.mubr.bf16.mxu0 %v242
  %277 = vmatmul.mubr.bf16.gmra.mrb[0].mxu0 %v117
  %v278 = vpop.f32.mrb[0].mxu0
  %v279 = vadd.f32 0.0, %v278
  %v280 = vpop.f32.mrb[0].mxu0
  %v281 = vadd.f32 0.0, %v280
  %v282 = vpop.f32.mrb[0].mxu0
  %v283 = vadd.f32 0.0, %v282
  %v284 = vpop.f32.mrb[0].mxu0
  %v285 = vadd.f32 0.0, %v284
  %286 = vdwg.mxu0
  %v291 = vunpack.c.l.b16 %v33
  %v292 = vunpack.c.h.b16 %v33
  %v293 = vunpack.c.l.b16 %v34
  %v294 = vunpack.c.l.b16 %v35
  %v295 = vunpack.c.h.b16 %v35
  %v296 = vunpack.c.l.b16 %v36
  %v297 = vpack.c.b16 %v294, %v291
  %v298 = vpack.c.b16 %v295, %v292
  %v299 = vpack.c.b16 %v296, %v293
  %v351 = vunpack.c.l.b16 %v37
  %v352 = vunpack.c.h.b16 %v37
  %v353 = vunpack.c.l.b16 %v38
  %v354 = vunpack.c.h.b16 %v38
  %v355 = vunpack.c.l.b16 %v39
  %v356 = vunpack.c.h.b16 %v39
  %v357 = vunpack.c.l.b16 %v40
  %v358 = vunpack.c.h.b16 %v40
  %v359 = vunpack.c.l.b16 %v41
  %v360 = vunpack.c.h.b16 %v41
  %v361 = vunpack.c.l.b16 %v42
  %v362 = vunpack.c.h.b16 %v42
  %v363 = vunpack.c.l.b16 %v43
  %v364 = vunpack.c.h.b16 %v43
  %v365 = vunpack.c.l.b16 %v44
  %v366 = vunpack.c.h.b16 %v44
  %v367 = vunpack.c.l.b16 %v45
  %v368 = vunpack.c.h.b16 %v45
  %v369 = vunpack.c.l.b16 %v46
  %v370 = vunpack.c.h.b16 %v46
  %v371 = vunpack.c.l.b16 %v47
  %v372 = vunpack.c.h.b16 %v47
  %v373 = vunpack.c.l.b16 %v48
  %v374 = vunpack.c.h.b16 %v48
  %v375 = vunpack.c.l.b16 %v49
  %v376 = vunpack.c.h.b16 %v49
  %v377 = vunpack.c.l.b16 %v50
  %v378 = vunpack.c.h.b16 %v50
  %v379 = vunpack.c.l.b16 %v51
  %v380 = vunpack.c.h.b16 %v51
  %v381 = vunpack.c.l.b16 %v52
  %v382 = vunpack.c.h.b16 %v52
  %v383 = vunpack.c.l.b16 %v53
  %v384 = vunpack.c.h.b16 %v53
  %v385 = vunpack.c.l.b16 %v54
  %v386 = vunpack.c.h.b16 %v54
  %v387 = vunpack.c.l.b16 %v55
  %v388 = vunpack.c.h.b16 %v55
  %v389 = vunpack.c.l.b16 %v56
  %v390 = vunpack.c.h.b16 %v56
  %v391 = vunpack.c.l.b16 %v57
  %v392 = vunpack.c.h.b16 %v57
  %v393 = vunpack.c.l.b16 %v58
  %v394 = vunpack.c.h.b16 %v58
  %v395 = vunpack.c.l.b16 %v59
  %v396 = vunpack.c.h.b16 %v59
  %v397 = vunpack.c.l.b16 %v60
  %v398 = vunpack.c.h.b16 %v60
  %v399 = vunpack.c.l.b16 %v61
  %v400 = vunpack.c.h.b16 %v61
  %v401 = vunpack.c.l.b16 %v62
  %v402 = vunpack.c.h.b16 %v62
  %v403 = vunpack.c.l.b16 %v63
  %v404 = vunpack.c.h.b16 %v63
  %v405 = vunpack.c.l.b16 %v64
  %v406 = vunpack.c.h.b16 %v64
  %v407 = vunpack.c.l.b16 %v65
  %v408 = vunpack.c.h.b16 %v65
  %v409 = vunpack.c.l.b16 %v66
  %v410 = vunpack.c.h.b16 %v66
  %v411 = vunpack.c.l.b16 %v67
  %v412 = vunpack.c.h.b16 %v67
  %v413 = vunpack.c.l.b16 %v68
  %v414 = vunpack.c.h.b16 %v68
  %v415 = vunpack.c.l.b16 %v69
  %v416 = vunpack.c.h.b16 %v69
  %v417 = vunpack.c.l.b16 %v70
  %v418 = vunpack.c.h.b16 %v70
  %v419 = vunpack.c.l.b16 %v71
  %v420 = vunpack.c.h.b16 %v71
  %v421 = vunpack.c.l.b16 %v72
  %v422 = vunpack.c.h.b16 %v72
  %v423 = vunpack.c.l.b16 %v73
  %v424 = vunpack.c.h.b16 %v73
  %v425 = vunpack.c.l.b16 %v74
  %v426 = vunpack.c.h.b16 %v74
  %v427 = vunpack.c.l.b16 %v75
  %v428 = vunpack.c.h.b16 %v75
  %v429 = vunpack.c.l.b16 %v76
  %v430 = vunpack.c.h.b16 %v76
  %v431 = vunpack.c.l.b16 %v77
  %v432 = vunpack.c.h.b16 %v77
  %v433 = vunpack.c.l.b16 %v78
  %v434 = vunpack.c.h.b16 %v78
  %v435 = vunpack.c.l.b16 %v79
  %v436 = vunpack.c.h.b16 %v79
  %v437 = vunpack.c.l.b16 %v80
  %v438 = vunpack.c.h.b16 %v80
  %v439 = vunpack.c.l.b16 %v81
  %v440 = vunpack.c.h.b16 %v81
  %v441 = vunpack.c.l.b16 %v82
  %v442 = vunpack.c.h.b16 %v82
  %v443 = vunpack.c.l.b16 %v83
  %v444 = vunpack.c.h.b16 %v83
  %v445 = vunpack.c.l.b16 %v84
  %v446 = vunpack.c.h.b16 %v84
  %v447 = vpack.c.b16 %v353, %v351
  %v448 = vpack.c.b16 %v354, %v352
  %v449 = vpack.c.b16 %v357, %v355
  %v450 = vpack.c.b16 %v358, %v356
  %v451 = vpack.c.b16 %v361, %v359
  %v452 = vpack.c.b16 %v362, %v360
  %v453 = vpack.c.b16 %v365, %v363
  %v454 = vpack.c.b16 %v366, %v364
  %v455 = vpack.c.b16 %v369, %v367
  %v456 = vpack.c.b16 %v370, %v368
  %v457 = vpack.c.b16 %v373, %v371
  %v458 = vpack.c.b16 %v374, %v372
  %v459 = vpack.c.b16 %v377, %v375
  %v460 = vpack.c.b16 %v378, %v376
  %v461 = vpack.c.b16 %v381, %v379
  %v462 = vpack.c.b16 %v382, %v380
  %v463 = vpack.c.b16 %v385, %v383
  %v464 = vpack.c.b16 %v386, %v384
  %v465 = vpack.c.b16 %v389, %v387
  %v466 = vpack.c.b16 %v390, %v388
  %v467 = vpack.c.b16 %v393, %v391
  %v468 = vpack.c.b16 %v394, %v392
  %v469 = vpack.c.b16 %v397, %v395
  %v470 = vpack.c.b16 %v398, %v396
  %v471 = vpack.c.b16 %v401, %v399
  %v472 = vpack.c.b16 %v402, %v400
  %v473 = vpack.c.b16 %v405, %v403
  %v474 = vpack.c.b16 %v406, %v404
  %v475 = vpack.c.b16 %v409, %v407
  %v476 = vpack.c.b16 %v410, %v408
  %v477 = vpack.c.b16 %v413, %v411
  %v478 = vpack.c.b16 %v414, %v412
  %v479 = vpack.c.b16 %v417, %v415
  %v480 = vpack.c.b16 %v418, %v416
  %v481 = vpack.c.b16 %v421, %v419
  %v482 = vpack.c.b16 %v422, %v420
  %v483 = vpack.c.b16 %v425, %v423
  %v484 = vpack.c.b16 %v426, %v424
  %v485 = vpack.c.b16 %v429, %v427
  %v486 = vpack.c.b16 %v430, %v428
  %v487 = vpack.c.b16 %v433, %v431
  %v488 = vpack.c.b16 %v434, %v432
  %v489 = vpack.c.b16 %v437, %v435
  %v490 = vpack.c.b16 %v438, %v436
  %v491 = vpack.c.b16 %v441, %v439
  %v492 = vpack.c.b16 %v442, %v440
  %v493 = vpack.c.b16 %v445, %v443
  %v494 = vpack.c.b16 %v446, %v444
  %543 = vmatprep.subr.bf16.mxu0 %v448
  %544 = vmatpush1.bf16.msra.mxu0 %v447
  %545 = vmatprep.subr.bf16.mxu0 %v450
  %546 = vmatpush1.bf16.msra.mxu0 %v449
  %547 = vmatprep.subr.bf16.mxu0 %v452
  %548 = vmatpush1.bf16.msra.mxu0 %v451
  %549 = vmatprep.subr.bf16.mxu0 %v454
  %550 = vmatpush1.bf16.msra.mxu0 %v453
  %551 = vmatprep.subr.bf16.mxu0 %v456
  %552 = vmatpush1.bf16.msra.mxu0 %v455
  %553 = vmatprep.subr.bf16.mxu0 %v458
  %554 = vmatpush1.bf16.msra.mxu0 %v457
  %555 = vmatprep.subr.bf16.mxu0 %v460
  %556 = vmatpush1.bf16.msra.mxu0 %v459
  %557 = vmatprep.subr.bf16.mxu0 %v462
  %558 = vmatpush1.bf16.msra.mxu0 %v461
  %559 = vmatprep.subr.bf16.mxu0 %v464
  %560 = vmatpush1.bf16.msra.mxu0 %v463
  %561 = vmatprep.subr.bf16.mxu0 %v466
  %562 = vmatpush1.bf16.msra.mxu0 %v465
  %563 = vmatprep.subr.bf16.mxu0 %v468
  %564 = vmatpush1.bf16.msra.mxu0 %v467
  %565 = vmatprep.subr.bf16.mxu0 %v470
  %566 = vmatpush1.bf16.msra.mxu0 %v469
  %567 = vmatprep.subr.bf16.mxu0 %v472
  %568 = vmatpush1.bf16.msra.mxu0 %v471
  %569 = vmatprep.subr.bf16.mxu0 %v474
  %570 = vmatpush1.bf16.msra.mxu0 %v473
  %571 = vmatprep.subr.bf16.mxu0 %v476
  %572 = vmatpush1.bf16.msra.mxu0 %v475
  %573 = vmatprep.subr.bf16.mxu0 %v478
  %574 = vmatpush1.bf16.msra.mxu0 %v477
  %575 = vmatprep.mubr.bf16.mxu0 %v298
  %576 = vmatmul.mubr.bf16.gmra.mrb[0].mxu0 %v297
  %v577 = vpop.f32.mrb[0].mxu0
  %v578 = vadd.f32 %v279, %v577
  %v579 = vpop.f32.mrb[0].mxu0
  %v580 = vadd.f32 %v281, %v579
  %v581 = vpop.f32.mrb[0].mxu0
  %v582 = vadd.f32 %v283, %v581
  %v583 = vpop.f32.mrb[0].mxu0
  %v584 = vadd.f32 %v285, %v583
  %585 = vdwg.mxu0
  %586 = vmatprep.subr.bf16.mxu0 %v480
  %587 = vmatpush1.bf16.msra.mxu0 %v479
  %588 = vmatprep.subr.bf16.mxu0 %v482
  %589 = vmatpush1.bf16.msra.mxu0 %v481
  %590 = vmatprep.subr.bf16.mxu0 %v484
  %591 = vmatpush1.bf16.msra.mxu0 %v483
  %592 = vmatprep.subr.bf16.mxu0 %v486
  %593 = vmatpush1.bf16.msra.mxu0 %v485
  %594 = vmatprep.subr.bf16.mxu0 %v488
  %595 = vmatpush1.bf16.msra.mxu0 %v487
  %596 = vmatprep.subr.bf16.mxu0 %v490
  %597 = vmatpush1.bf16.msra.mxu0 %v489
  %598 = vmatprep.subr.bf16.mxu0 %v492
  %599 = vmatpush1.bf16.msra.mxu0 %v491
  %600 = vmatprep.subr.bf16.mxu0 %v494
  %601 = vmatpush1.bf16.msra.mxu0 %v493
  %602 = vmatprep.subr.bf16.mxu0 0
  %603 = vmatpush1.bf16.msra.mxu0 0
  %604 = vmatprep.subr.bf16.mxu0 0
  %605 = vmatpush1.bf16.msra.mxu0 0
  %606 = vmatprep.subr.bf16.mxu0 0
  %607 = vmatpush1.bf16.msra.mxu0 0
  %608 = vmatprep.subr.bf16.mxu0 0
  %609 = vmatpush1.bf16.msra.mxu0 0
  %610 = vmatprep.subr.bf16.mxu0 0
  %611 = vmatpush1.bf16.msra.mxu0 0
  %612 = vmatprep.subr.bf16.mxu0 0
  %613 = vmatpush1.bf16.msra.mxu0 0
  %614 = vmatprep.subr.bf16.mxu0 0
  %615 = vmatpush1.bf16.msra.mxu0 0
  %616 = vmatprep.subr.bf16.mxu0 0
  %617 = vmatpush1.bf16.msra.mxu0 0
  %618 = vmatprep.mubr.bf16.mxu0 0
  %619 = vmatmul.mubr.bf16.gmra.mrb[0].mxu0 %v299
  %v620 = vpop.f32.mrb[0].mxu0
  %v621 = vadd.f32 %v578, %v620
  %v622 = vpop.f32.mrb[0].mxu0
  %v623 = vadd.f32 %v580, %v622
  %v624 = vpop.f32.mrb[0].mxu0
  %v625 = vadd.f32 %v582, %v624
  %v626 = vpop.f32.mrb[0].mxu0
  %v627 = vadd.f32 %v584, %v626
  %628 = vdwg.mxu0
  %v629 = vld [vmem:[%s2] sm:$0xff]
  %v630 = vld [vmem:[%s2 + $0x8] sm:$0xff]
  %v631 = vld [vmem:[%s5] sm:$0x77]
  %633 = vset.pattern.permute.xlu0 0
  %634 = vperm.xlu0 %633, %v629
  %v635 = vpop.permute.xlu0 %634
  %638 = vset.pattern.permute.xlu0 0
  %639 = vperm.xlu0 %638, %v630
  %v640 = vpop.permute.xlu0 %639
  %v643 = vlaneseq
  %v644 = vshrl.u32 %v643, 7
  %v645 = vsub.s32 0, %v644
  %v646 = vrot.slane %v631, %v645
  %v647 = vlaneseq
  %v648 = vshrl.u32 %v647, 7
  %v649 = vsub.s32 4, %v648
  %v650 = vrot.slane %v631, %v649
  %v653 = vlaneseq
  %v654 = vshrl.u32 %v653, 7
  %v655 = vsub.s32 0, %v654
  %v656 = vrot.slane %v646, %v655
  %v657 = vlaneseq
  %v658 = vshrl.u32 %v657, 7
  %v659 = vsub.s32 0, %v658
  %v660 = vrot.slane %v650, %v659
  %v661 = vmul.f32 %v635, %v656
  %v662 = vmul.f32 %v635, %v660
  %v663 = vmul.f32 %v640, %v656
  %v664 = vmul.f32 %v640, %v660
  %v665 = vadd.f32 %v621, %v661
  %v666 = vadd.f32 %v623, %v662
  %v667 = vadd.f32 %v625, %v663
  %v668 = vadd.f32 %v627, %v664
  %669 = vset.pattern.permute.xlu0 1
  %670 = vperm.xlu0 %669, %v629
  %v671 = vpop.permute.xlu0 %670
  %673 = vset.pattern.permute.xlu0 1
  %674 = vperm.xlu0 %673, %v630
  %v675 = vpop.permute.xlu0 %674
  %v677 = vlaneseq
  %v678 = vshrl.u32 %v677, 7
  %v679 = vsub.s32 1, %v678
  %v680 = vrot.slane %v631, %v679
  %v681 = vlaneseq
  %v682 = vshrl.u32 %v681, 7
  %v683 = vsub.s32 5, %v682
  %v684 = vrot.slane %v631, %v683
  %v687 = vlaneseq
  %v688 = vshrl.u32 %v687, 7
  %v689 = vsub.s32 1, %v688
  %v690 = vrot.slane %v680, %v689
  %v691 = vlaneseq
  %v692 = vshrl.u32 %v691, 7
  %v693 = vsub.s32 1, %v692
  %v694 = vrot.slane %v684, %v693
  %v695 = vmul.f32 %v671, %v690
  %v696 = vmul.f32 %v671, %v694
  %v697 = vmul.f32 %v675, %v690
  %v698 = vmul.f32 %v675, %v694
  %v699 = vadd.f32 %v665, %v695
  %v700 = vadd.f32 %v666, %v696
  %v701 = vadd.f32 %v667, %v697
  %v702 = vadd.f32 %v668, %v698
  %703 = vset.pattern.permute.xlu0 2
  %704 = vperm.xlu0 %703, %v629
  %v705 = vpop.permute.xlu0 %704
  %707 = vset.pattern.permute.xlu0 2
  %708 = vperm.xlu0 %707, %v630
  %v709 = vpop.permute.xlu0 %708
  %v711 = vlaneseq
  %v712 = vshrl.u32 %v711, 7
  %v713 = vsub.s32 2, %v712
  %v714 = vrot.slane %v631, %v713
  %v715 = vlaneseq
  %v716 = vshrl.u32 %v715, 7
  %v717 = vsub.s32 6, %v716
  %v718 = vrot.slane %v631, %v717
  %v721 = vlaneseq
  %v722 = vshrl.u32 %v721, 7
  %v723 = vsub.s32 2, %v722
  %v724 = vrot.slane %v714, %v723
  %v725 = vlaneseq
  %v726 = vshrl.u32 %v725, 7
  %v727 = vsub.s32 2, %v726
  %v728 = vrot.slane %v718, %v727
  %v729 = vmul.f32 %v705, %v724
  %v730 = vmul.f32 %v705, %v728
  %v731 = vmul.f32 %v709, %v724
  %v732 = vmul.f32 %v709, %v728
  %v733 = vadd.f32 %v699, %v729
  %v734 = vadd.f32 %v700, %v730
  %v735 = vadd.f32 %v701, %v731
  %v736 = vadd.f32 %v702, %v732
  %v737 = vld [vmem:[%s6] sm:$0x3]
  %v739 = vlaneseq
  %v740 = vshrl.u32 %v739, 7
  %v741 = vsub.s32 0, %v740
  %v742 = vrot.slane %v737, %v741
  %v743 = vlaneseq
  %v744 = vshrl.u32 %v743, 7
  %v745 = vsub.s32 1, %v744
  %v746 = vrot.slane %v737, %v745
  %v749 = vadd.f32 %v733, %v742
  %v750 = vadd.f32 %v734, %v746
  %v751 = vadd.f32 %v735, %v742
  %v752 = vadd.f32 %v736, %v746
  %v753 = vmax.f32 %v749, 0.0
  %v754 = vmax.f32 %v750, 0.0
  %v755 = vmax.f32 %v751, 0.0
  %v756 = vmax.f32 %v752, 0.0
  %v757 = vpack.c.bf16 %v755, %v753
  %v758 = vpack.c.bf16 %v756, %v754
  %v759 = vld [vmem:[%s7] sm:$0xff]
  %v760 = vld [vmem:[%s7 + $0x8] sm:$0xff]
  %v761 = vld [vmem:[%s7 + $0x10] sm:$0xff]
  %v762 = vld [vmem:[%s7 + $0x18] sm:$0xff]
  %v763 = vld [vmem:[%s7 + $0x20] sm:$0xff]
  %v764 = vld [vmem:[%s7 + $0x28] sm:$0xff]
  %v765 = vld [vmem:[%s7 + $0x30] sm:$0xff]
  %v766 = vld [vmem:[%s7 + $0x38] sm:$0xff]
  %v767 = vld [vmem:[%s7 + $0x40] sm:$0xff]
  %v768 = vld [vmem:[%s7 + $0x48] sm:$0xff]
  %v769 = vld [vmem:[%s7 + $0x50] sm:$0xff]
  %v770 = vld [vmem:[%s7 + $0x58] sm:$0xff]
  %v771 = vld [vmem:[%s7 + $0x60] sm:$0xff]
  %v772 = vld [vmem:[%s7 + $0x68] sm:$0xff]
  %v773 = vld [vmem:[%s7 + $0x70] sm:$0xff]
  %v774 = vld [vmem:[%s7 + $0x78] sm:$0xff]
  %v775 = vld [vmem:[%s7 + $0x80] sm:$0xff]
  %v776 = vld [vmem:[%s7 + $0x88] sm:$0xff]
  %v777 = vld [vmem:[%s7 + $0x90] sm:$0xff]
  %v778 = vld [vmem:[%s7 + $0x98] sm:$0xff]
  %v779 = vld [vmem:[%s7 + $0xa0] sm:$0xff]
  %v780 = vld [vmem:[%s7 + $0xa8] sm:$0xff]
  %v781 = vld [vmem:[%s7 + $0xb0] sm:$0xff]
  %v782 = vld [vmem:[%s7 + $0xb8] sm:$0xff]
  %v783 = vld [vmem:[%s7 + $0xc0] sm:$0xff]
  %v784 = vld [vmem:[%s7 + $0xc8] sm:$0xff]
  %v785 = vld [vmem:[%s7 + $0xd0] sm:$0xff]
  %v786 = vld [vmem:[%s7 + $0xd8] sm:$0xff]
  %v787 = vld [vmem:[%s7 + $0xe0] sm:$0xff]
  %v788 = vld [vmem:[%s7 + $0xe8] sm:$0xff]
  %v789 = vld [vmem:[%s7 + $0xf0] sm:$0xff]
  %v790 = vld [vmem:[%s7 + $0xf8] sm:$0xff]
  %v791 = vld [vmem:[%s8] sm:$0x3]
  %v793 = vlaneseq
  %v794 = vshrl.u32 %v793, 7
  %v795 = vsub.s32 0, %v794
  %v796 = vrot.slane %v791, %v795
  %v797 = vlaneseq
  %v798 = vshrl.u32 %v797, 7
  %v799 = vsub.s32 1, %v798
  %v800 = vrot.slane %v791, %v799
  %v835 = vunpack.c.l.b16 %v759
  %v836 = vunpack.c.h.b16 %v759
  %v837 = vunpack.c.l.b16 %v760
  %v838 = vunpack.c.h.b16 %v760
  %v839 = vunpack.c.l.b16 %v761
  %v840 = vunpack.c.h.b16 %v761
  %v841 = vunpack.c.l.b16 %v762
  %v842 = vunpack.c.h.b16 %v762
  %v843 = vunpack.c.l.b16 %v763
  %v844 = vunpack.c.h.b16 %v763
  %v845 = vunpack.c.l.b16 %v764
  %v846 = vunpack.c.h.b16 %v764
  %v847 = vunpack.c.l.b16 %v765
  %v848 = vunpack.c.h.b16 %v765
  %v849 = vunpack.c.l.b16 %v766
  %v850 = vunpack.c.h.b16 %v766
  %v851 = vunpack.c.l.b16 %v767
  %v852 = vunpack.c.h.b16 %v767
  %v853 = vunpack.c.l.b16 %v768
  %v854 = vunpack.c.h.b16 %v768
  %v855 = vunpack.c.l.b16 %v769
  %v856 = vunpack.c.h.b16 %v769
  %v857 = vunpack.c.l.b16 %v770
  %v858 = vunpack.c.h.b16 %v770
  %v859 = vunpack.c.l.b16 %v771
  %v860 = vunpack.c.h.b16 %v771
  %v861 = vunpack.c.l.b16 %v772
  %v862 = vunpack.c.h.b16 %v772
  %v863 = vunpack.c.l.b16 %v773
  %v864 = vunpack.c.h.b16 %v773
  %v865 = vunpack.c.l.b16 %v774
  %v866 = vunpack.c.h.b16 %v774
  %v867 = vunpack.c.l.b16 %v775
  %v868 = vunpack.c.h.b16 %v775
  %v869 = vunpack.c.l.b16 %v776
  %v870 = vunpack.c.h.b16 %v776
  %v871 = vunpack.c.l.b16 %v777
  %v872 = vunpack.c.h.b16 %v777
  %v873 = vunpack.c.l.b16 %v778
  %v874 = vunpack.c.h.b16 %v778
  %v875 = vunpack.c.l.b16 %v779
  %v876 = vunpack.c.h.b16 %v779
  %v877 = vunpack.c.l.b16 %v780
  %v878 = vunpack.c.h.b16 %v780
  %v879 = vunpack.c.l.b16 %v781
  %v880 = vunpack.c.h.b16 %v781
  %v881 = vunpack.c.l.b16 %v782
  %v882 = vunpack.c.h.b16 %v782
  %v883 = vunpack.c.l.b16 %v783
  %v884 = vunpack.c.h.b16 %v783
  %v885 = vunpack.c.l.b16 %v784
  %v886 = vunpack.c.h.b16 %v784
  %v887 = vunpack.c.l.b16 %v785
  %v888 = vunpack.c.h.b16 %v785
  %v889 = vunpack.c.l.b16 %v786
  %v890 = vunpack.c.h.b16 %v786
  %v891 = vunpack.c.l.b16 %v787
  %v892 = vunpack.c.h.b16 %v787
  %v893 = vunpack.c.l.b16 %v788
  %v894 = vunpack.c.h.b16 %v788
  %v895 = vunpack.c.l.b16 %v789
  %v896 = vunpack.c.h.b16 %v789
  %v897 = vunpack.c.l.b16 %v790
  %v898 = vunpack.c.h.b16 %v790
  %v899 = vpack.c.b16 %v837, %v835
  %v900 = vpack.c.b16 %v838, %v836
  %v901 = vpack.c.b16 %v841, %v839
  %v902 = vpack.c.b16 %v842, %v840
  %v903 = vpack.c.b16 %v845, %v843
  %v904 = vpack.c.b16 %v846, %v844
  %v905 = vpack.c.b16 %v849, %v847
  %v906 = vpack.c.b16 %v850, %v848
  %v907 = vpack.c.b16 %v853, %v851
  %v908 = vpack.c.b16 %v854, %v852
  %v909 = vpack.c.b16 %v857, %v855
  %v910 = vpack.c.b16 %v858, %v856
  %v911 = vpack.c.b16 %v861, %v859
  %v912 = vpack.c.b16 %v862, %v860
  %v913 = vpack.c.b16 %v865, %v863
  %v914 = vpack.c.b16 %v866, %v864
  %v915 = vpack.c.b16 %v869, %v867
  %v916 = vpack.c.b16 %v870, %v868
  %v917 = vpack.c.b16 %v873, %v871
  %v918 = vpack.c.b16 %v874, %v872
  %v919 = vpack.c.b16 %v877, %v875
  %v920 = vpack.c.b16 %v878, %v876
  %v921 = vpack.c.b16 %v881, %v879
  %v922 = vpack.c.b16 %v882, %v880
  %v923 = vpack.c.b16 %v885, %v883
  %v924 = vpack.c.b16 %v886, %v884
  %v925 = vpack.c.b16 %v889, %v887
  %v926 = vpack.c.b16 %v890, %v888
  %v927 = vpack.c.b16 %v893, %v891
  %v928 = vpack.c.b16 %v894, %v892
  %v929 = vpack.c.b16 %v897, %v895
  %v930 = vpack.c.b16 %v898, %v896
  %963 = vmatprep.subr.bf16.mxu0 %v900
  %964 = vmatpush1.bf16.msra.mxu0 %v899
  %965 = vmatprep.subr.bf16.mxu0 %v902
  %966 = vmatpush1.bf16.msra.mxu0 %v901
  %967 = vmatprep.subr.bf16.mxu0 %v904
  %968 = vmatpush1.bf16.msra.mxu0 %v903
  %969 = vmatprep.subr.bf16.mxu0 %v906
  %970 = vmatpush1.bf16.msra.mxu0 %v905
  %971 = vmatprep.subr.bf16.mxu0 %v908
  %972 = vmatpush1.bf16.msra.mxu0 %v907
  %973 = vmatprep.subr.bf16.mxu0 %v910
  %974 = vmatpush1.bf16.msra.mxu0 %v909
  %975 = vmatprep.subr.bf16.mxu0 %v912
  %976 = vmatpush1.bf16.msra.mxu0 %v911
  %977 = vmatprep.subr.bf16.mxu0 %v914
  %978 = vmatpush1.bf16.msra.mxu0 %v913
  %979 = vmatprep.subr.bf16.mxu0 %v916
  %980 = vmatpush1.bf16.msra.mxu0 %v915
  %981 = vmatprep.subr.bf16.mxu0 %v918
  %982 = vmatpush1.bf16.msra.mxu0 %v917
  %983 = vmatprep.subr.bf16.mxu0 %v920
  %984 = vmatpush1.bf16.msra.mxu0 %v919
  %985 = vmatprep.subr.bf16.mxu0 %v922
  %986 = vmatpush1.bf16.msra.mxu0 %v921
  %987 = vmatprep.subr.bf16.mxu0 %v924
  %988 = vmatpush1.bf16.msra.mxu0 %v923
  %989 = vmatprep.subr.bf16.mxu0 %v926
  %990 = vmatpush1.bf16.msra.mxu0 %v925
  %991 = vmatprep.subr.bf16.mxu0 %v928
  %992 = vmatpush1.bf16.msra.mxu0 %v927
  %993 = vmatprep.subr.bf16.mxu0 %v930
  %994 = vmatpush1.bf16.msra.mxu0 %v929
  %995 = vmatprep.mubr.bf16.mxu0 %v758
  %996 = vmatmul.mubr.bf16.gmra.mrb[0].mxu0 %v757
  %v997 = vpop.f32.mrb[0].mxu0
  %v998 = vadd.f32 %v796, %v997
  %v999 = vpop.f32.mrb[0].mxu0
  %v1000 = vadd.f32 %v800, %v999
  %v1001 = vpop.f32.mrb[0].mxu0
  %v1002 = vadd.f32 %v796, %v1001
  %v1003 = vpop.f32.mrb[0].mxu0
  %v1004 = vadd.f32 %v800, %v1003
  %1005 = vdwg.mxu0
  %v1006 = vmax.f32 %v998, 0.0
  %v1007 = vmax.f32 %v1000, 0.0
  %v1008 = vmax.f32 %v1002, 0.0
  %v1009 = vmax.f32 %v1004, 0.0
  %v1010 = vpack.c.bf16 %v1008, %v1006
  %v1011 = vpack.c.bf16 %v1009, %v1007
  %v1014 = vunpack.c.l.b16 %v1010
  %v1015 = vunpack.c.l.b16 %v1011
  %v1016 = vunpack.c.h.b16 %v1010
  %v1017 = vunpack.c.h.b16 %v1011
  %v1018 = vpack.c.b16 %v1015, %v1014
  %v1019 = vpack.c.b16 %v1017, %v1016
  %vm1022 = vcmask 1043456
  %vm1023 = vcmask 523268
  %vm1024 = vmor %vm1023, %vm1022
  %1025 = vst.msk [vmem:[%s9] sm:$0xff] %vm1024, %v1018
  %1026 = vst.msk [vmem:[%s9 + $0x8] sm:$0xff] %vm1024, %v1019
  // Predicated region
  $region38: #{net_forward.16} parent=0 // pred_check
    _
  $region39: #{net_forward.16} parent=0 // pred_check_branch
    %1028 = sbr.rel (0) target = $region41
  $region40: #{net_forward.16} parent=0 // pred_region
    _
  $region41: #{net_forward.16} parent=0 // pred_fallthru
    _
  // Predicated region
  $region42: #{net_forward.16} parent=0 // pred_check
    _
  $region43: #{net_forward.16} parent=0 // pred_check_branch
    %1030 = sbr.rel (0) target = $region45
  $region44: #{net_forward.16} parent=0 // pred_region
    _
  $region45: #{net_forward.16} parent=0 // pred_fallthru
    _

// kernel: net_forward.17
$region0: #{net_forward.17}
  #allocation0 [shape = 'u32[]', space=smem, size = 0x4, offset = 0x4, fixed_abs, tag = 'smem constant byte address 0x4 - core index']
  #allocation1 [shape = 'u32[144,128]{1,0:T(1,128)}', space=vmem, size = 0x12000, scoped, tag = 'internal scratch']
  %s0 = inlined_call_operand.vmem [shape: bf16[24,192], index: 0, kind: input, shape index: {}]
  %s1 = inlined_call_operand.vmem [shape: bf16[24,96], index: 1, kind: input, shape index: {}]
  %s2 = inlined_call_operand.vmem [shape: f32[24,3], index: 2, kind: input, shape index: {}]
  %s3 = inlined_call_operand.vmem [shape: bf16[192,256], index: 3, kind: input, shape index: {}]
  %s4 = inlined_call_operand.vmem [shape: bf16[96,256], index: 4, kind: input, shape index: {}]
  %s5 = inlined_call_operand.vmem [shape: f32[3,256], index: 5, kind: input, shape index: {}]
  %s6 = inlined_call_operand.vmem [shape: f32[1,256], index: 6, kind: input, shape index: {}]
  %s7 = inlined_call_operand.vmem [shape: bf16[256,96], index: 7, kind: input, shape index: {}]
  %s8 = inlined_call_operand.vmem [shape: f32[1,96], index: 8, kind: input, shape index: {}]
  %s9 = inlined_call_operand.vmem [shape: bf16[24,96], index: 9, kind: output, shape index: {}]
  %s10 = sld [smem:[#allocation0]]
  $region46: #{net_forward.17} parent=0
    _
  %s12 = ssub.s32 1, %s10
  %s13 = scalar_select 0, %s12, %s10
  // Predicated region
  $region2: #{net_forward.17} parent=0 // pred_check
    _
  $region3: #{net_forward.17} parent=0 // pred_check_branch
    %15 = sbr.rel (0) target = $region5
  $region4: #{net_forward.17} parent=0 // pred_region
    _
  $region5: #{net_forward.17} parent=0 // pred_fallthru
    _
  // Predicated region
  $region6: #{net_forward.17} parent=0 // pred_check
    _
  $region7: #{net_forward.17} parent=0 // pred_check_branch
    %17 = sbr.rel (0) target = $region9
  $region8: #{net_forward.17} parent=0 // pred_region
    _
  $region9: #{net_forward.17} parent=0 // pred_fallthru
    _
  // Predicated region
  $region10: #{net_forward.17} parent=0 // pred_check
    _
  $region11: #{net_forward.17} parent=0 // pred_check_branch
    %19 = sbr.rel (0) target = $region13
  $region12: #{net_forward.17} parent=0 // pred_region
    _
  $region13: #{net_forward.17} parent=0 // pred_fallthru
    _
  // Predicated region
  $region14: #{net_forward.17} parent=0 // pred_check
    _
  $region15: #{net_forward.17} parent=0 // pred_check_branch
    %21 = sbr.rel (0) target = $region17
  $region16: #{net_forward.17} parent=0 // pred_region
    _
  $region17: #{net_forward.17} parent=0 // pred_fallthru
    _
  // Predicated region
  $region18: #{net_forward.17} parent=0 // pred_check
    _
  $region19: #{net_forward.17} parent=0 // pred_check_branch
    %23 = sbr.rel (0) target = $region21
  $region20: #{net_forward.17} parent=0 // pred_region
    _
  $region21: #{net_forward.17} parent=0 // pred_fallthru
    _
  // Predicated region
  $region22: #{net_forward.17} parent=0 // pred_check
    _
  $region23: #{net_forward.17} parent=0 // pred_check_branch
    %25 = sbr.rel (0) target = $region25
  $region24: #{net_forward.17} parent=0 // pred_region
    _
  $region25: #{net_forward.17} parent=0 // pred_fallthru
    _
  // Predicated region
  $region26: #{net_forward.17} parent=0 // pred_check
    _
  $region27: #{net_forward.17} parent=0 // pred_check_branch
    %27 = sbr.rel (0) target = $region29
  $region28: #{net_forward.17} parent=0 // pred_region
    _
  $region29: #{net_forward.17} parent=0 // pred_fallthru
    _
  // Predicated region
  $region30: #{net_forward.17} parent=0 // pred_check
    _
  $region31: #{net_forward.17} parent=0 // pred_check_branch
    %29 = sbr.rel (0) target = $region33
  $region32: #{net_forward.17} parent=0 // pred_region
    _
  $region33: #{net_forward.17} parent=0 // pred_fallthru
    _
  // Predicated region
  $region34: #{net_forward.17} parent=0 // pred_check
    _
  $region35: #{net_forward.17} parent=0 // pred_check_branch
    %31 = sbr.rel (0) target = $region37
  $region36: #{net_forward.17} parent=0 // pred_region
    _
  $region37: #{net_forward.17} parent=0 // pred_fallthru
    _
  %v33 = vld [vmem:[%s0] sm:$0xff]
  %v34 = vld [vmem:[%s0 + $0x8] sm:$0xff]
  %v35 = vld [vmem:[%s0 + $0x10] sm:$0xff]
  %v36 = vld [vmem:[%s3] sm:$0xff]
  %v37 = vld [vmem:[%s3 + $0x8] sm:$0xff]
  %v38 = vld [vmem:[%s3 + $0x10] sm:$0xff]
  %v39 = vld [vmem:[%s3 + $0x18] sm:$0xff]
  %v40 = vld [vmem:[%s3 + $0x20] sm:$0xff]
  %v41 = vld [vmem:[%s3 + $0x28] sm:$0xff]
  %v42 = vld [vmem:[%s3 + $0x30] sm:$0xff]
  %v43 = vld [vmem:[%s3 + $0x38] sm:$0xff]
  %v44 = vld [vmem:[%s3 + $0x40] sm:$0xff]
  %v45 = vld [vmem:[%s3 + $0x48] sm:$0xff]
  %v46 = vld [vmem:[%s3 + $0x50] sm:$0xff]
  %v47 = vld [vmem:[%s3 + $0x58] sm:$0xff]
  %v48 = vld [vmem:[%s3 + $0x60] sm:$0xff]
  %v49 = vld [vmem:[%s3 + $0x68] sm:$0xff]
  %v50 = vld [vmem:[%s3 + $0x70] sm:$0xff]
  %v51 = vld [vmem:[%s3 + $0x78] sm:$0xff]
  %v52 = vld [vmem:[%s3 + $0x80] sm:$0xff]
  %v53 = vld [vmem:[%s3 + $0x88] sm:$0xff]
  %v54 = vld [vmem:[%s3 + $0x90] sm:$0xff]
  %v55 = vld [vmem:[%s3 + $0x98] sm:$0xff]
  %v56 = vld [vmem:[%s3 + $0xa0] sm:$0xff]
  %v57 = vld [vmem:[%s3 + $0xa8] sm:$0xff]
  %v58 = vld [vmem:[%s3 + $0xb0] sm:$0xff]
  %v59 = vld [vmem:[%s3 + $0xb8] sm:$0xff]
  %v60 = vld [vmem:[%s1] sm:$0xf]
  %v61 = vld [vmem:[%s1 + $0x4] sm:$0xf]
  %v62 = vld [vmem:[%s1 + $0x8] sm:$0xf]
  %v63 = vld [vmem:[%s4] sm:$0xff]
  %v64 = vld [vmem:[%s4 + $0x8] sm:$0xff]
  %v65 = vld [vmem:[%s4 + $0x10] sm:$0xff]
  %v66 = vld [vmem:[%s4 + $0x18] sm:$0xff]
  %v67 = vld [vmem:[%s4 + $0x20] sm:$0xff]
  %v68 = vld [vmem:[%s4 + $0x28] sm:$0xff]
  %v69 = vld [vmem:[%s4 + $0x30] sm:$0xff]
  %v70 = vld [vmem:[%s4 + $0x38] sm:$0xff]
  %v71 = vld [vmem:[%s4 + $0x40] sm:$0xff]
  %v72 = vld [vmem:[%s4 + $0x48] sm:$0xff]
  %v73 = vld [vmem:[%s4 + $0x50] sm:$0xff]
  %v74 = vld [vmem:[%s4 + $0x58] sm:$0xff]
  %v78 = vunpack.c.l.b16 %v60
  %v79 = vunpack.c.l.b16 %v61
  %v80 = vunpack.c.l.b16 %v62
  %v81 = vpack.c.b16 %v79, %v78
  %v82 = vpack.c.b16 %v80, %v80
  %v95 = vunpack.c.l.b16 %v63
  %v96 = vunpack.c.h.b16 %v63
  %v97 = vunpack.c.l.b16 %v64
  %v98 = vunpack.c.h.b16 %v64
  %v99 = vunpack.c.l.b16 %v65
  %v100 = vunpack.c.h.b16 %v65
  %v101 = vunpack.c.l.b16 %v66
  %v102 = vunpack.c.h.b16 %v66
  %v103 = vunpack.c.l.b16 %v67
  %v104 = vunpack.c.h.b16 %v67
  %v105 = vunpack.c.l.b16 %v68
  %v106 = vunpack.c.h.b16 %v68
  %v107 = vunpack.c.l.b16 %v69
  %v108 = vunpack.c.h.b16 %v69
  %v109 = vunpack.c.l.b16 %v70
  %v110 = vunpack.c.h.b16 %v70
  %v111 = vunpack.c.l.b16 %v71
  %v112 = vunpack.c.h.b16 %v71
  %v113 = vunpack.c.l.b16 %v72
  %v114 = vunpack.c.h.b16 %v72
  %v115 = vunpack.c.l.b16 %v73
  %v116 = vunpack.c.h.b16 %v73
  %v117 = vunpack.c.l.b16 %v74
  %v118 = vunpack.c.h.b16 %v74
  %v119 = vpack.c.b16 %v97, %v95
  %v120 = vpack.c.b16 %v98, %v96
  %v121 = vpack.c.b16 %v101, %v99
  %v122 = vpack.c.b16 %v102, %v100
  %v123 = vpack.c.b16 %v105, %v103
  %v124 = vpack.c.b16 %v106, %v104
  %v125 = vpack.c.b16 %v109, %v107
  %v126 = vpack.c.b16 %v110, %v108
  %v127 = vpack.c.b16 %v113, %v111
  %v128 = vpack.c.b16 %v114, %v112
  %v129 = vpack.c.b16 %v117, %v115
  %v130 = vpack.c.b16 %v118, %v116
  %vm143 = vcmask 785408
  %v145 = vsel %vm143, %v81, 0
  %v148 = vsel %vm143, %v82, 0
  %150 = vmatprep.subr.bf16.mxu0 %v120
  %151 = vmatpush1.bf16.msra.mxu0 %v119
  %152 = vmatprep.subr.bf16.mxu0 %v122
  %153 = vmatpush1.bf16.msra.mxu0 %v121
  %154 = vmatprep.subr.bf16.mxu0 %v124
  %155 = vmatpush1.bf16.msra.mxu0 %v123
  %156 = vmatprep.subr.bf16.mxu0 %v126
  %157 = vmatpush1.bf16.msra.mxu0 %v125
  %158 = vmatprep.subr.bf16.mxu0 %v128
  %159 = vmatpush1.bf16.msra.mxu0 %v127
  %160 = vmatprep.subr.bf16.mxu0 %v130
  %161 = vmatpush1.bf16.msra.mxu0 %v129
  %162 = vmatprep.subr.bf16.mxu0 0
  %163 = vmatpush1.bf16.msra.mxu0 0
  %164 = vmatprep.subr.bf16.mxu0 0
  %165 = vmatpush1.bf16.msra.mxu0 0
  %166 = vmatprep.subr.bf16.mxu0 0
  %167 = vmatpush1.bf16.msra.mxu0 0
  %168 = vmatprep.subr.bf16.mxu0 0
  %169 = vmatpush1.bf16.msra.mxu0 0
  %170 = vmatprep.subr.bf16.mxu0 0
  %171 = vmatpush1.bf16.msra.mxu0 0
  %172 = vmatprep.subr.bf16.mxu0 0
  %173 = vmatpush1.bf16.msra.mxu0 0
  %174 = vmatprep.subr.bf16.mxu0 0
  %175 = vmatpush1.bf16.msra.mxu0 0
  %176 = vmatprep.subr.bf16.mxu0 0
  %177 = vmatpush1.bf16.msra.mxu0 0
  %178 = vmatprep.subr.bf16.mxu0 0
  %179 = vmatpush1.bf16.msra.mxu0 0
  %180 = vmatprep.subr.bf16.mxu0 0
  %181 = vmatpush1.bf16.msra.mxu0 0
  %182 = vmatprep.mubr.bf16.mxu0 0
  %183 = vmatmul.mubr.bf16.gmra.mrb[0].mxu0 %v145
  %v184 = vpop.f32.mrb[0].mxu0
  %v185 = vadd.f32 0.0, %v184
  %v186 = vpop.f32.mrb[0].mxu0
  %v187 = vadd.f32 0.0, %v186
  %v188 = vpop.f32.mrb[0].mxu0
  %v189 = vadd.f32 0.0, %v188
  %v190 = vpop.f32.mrb[0].mxu0
  %v191 = vadd.f32 0.0, %v190
  %192 = vmatprep.mubr.bf16.mxu0 0
  %193 = vmatmul.mubr.bf16.gmra.mrb[0].mxu0 %v148
  %v194 = vpop.f32.mrb[0].mxu0
  %v195 = vadd.f32 0.0, %v194
  %v196 = vpop.f32.mrb[0].mxu0
  %v197 = vadd.f32 0.0, %v196
  %v198 = vpop.f32.mrb[0].mxu0
  %v199 = vpop.f32.mrb[0].mxu0
  %200 = vdwg.mxu0
  %v204 = vunpack.c.l.b16 %v33
  %v205 = vunpack.c.h.b16 %v33
  %v206 = vunpack.c.l.b16 %v34
  %v207 = vunpack.c.h.b16 %v34
  %v208 = vunpack.c.l.b16 %v35
  %v209 = vunpack.c.h.b16 %v35
  %v210 = vpack.c.b16 %v206, %v204
  %v211 = vpack.c.b16 %v207, %v205
  %v212 = vpack.c.b16 %v208, %v208
  %v213 = vpack.c.b16 %v209, %v209
  %v240 = vunpack.c.l.b16 %v36
  %v241 = vunpack.c.h.b16 %v36
  %v242 = vunpack.c.l.b16 %v37
  %v243 = vunpack.c.h.b16 %v37
  %v244 = vunpack.c.l.b16 %v38
  %v245 = vunpack.c.h.b16 %v38
  %v246 = vunpack.c.l.b16 %v39
  %v247 = vunpack.c.h.b16 %v39
  %v248 = vunpack.c.l.b16 %v40
  %v249 = vunpack.c.h.b16 %v40
  %v250 = vunpack.c.l.b16 %v41
  %v251 = vunpack.c.h.b16 %v41
  %v252 = vunpack.c.l.b16 %v42
  %v253 = vunpack.c.h.b16 %v42
  %v254 = vunpack.c.l.b16 %v43
  %v255 = vunpack.c.h.b16 %v43
  %v256 = vunpack.c.l.b16 %v44
  %v257 = vunpack.c.h.b16 %v44
  %v258 = vunpack.c.l.b16 %v45
  %v259 = vunpack.c.h.b16 %v45
  %v260 = vunpack.c.l.b16 %v46
  %v261 = vunpack.c.h.b16 %v46
  %v262 = vunpack.c.l.b16 %v47
  %v263 = vunpack.c.h.b16 %v47
  %v264 = vunpack.c.l.b16 %v48
  %v265 = vunpack.c.h.b16 %v48
  %v266 = vunpack.c.l.b16 %v49
  %v267 = vunpack.c.h.b16 %v49
  %v268 = vunpack.c.l.b16 %v50
  %v269 = vunpack.c.h.b16 %v50
  %v270 = vunpack.c.l.b16 %v51
  %v271 = vunpack.c.h.b16 %v51
  %v272 = vunpack.c.l.b16 %v52
  %v273 = vunpack.c.h.b16 %v52
  %v274 = vunpack.c.l.b16 %v53
  %v275 = vunpack.c.h.b16 %v53
  %v276 = vunpack.c.l.b16 %v54
  %v277 = vunpack.c.h.b16 %v54
  %v278 = vunpack.c.l.b16 %v55
  %v279 = vunpack.c.h.b16 %v55
  %v280 = vunpack.c.l.b16 %v56
  %v281 = vunpack.c.h.b16 %v56
  %v282 = vunpack.c.l.b16 %v57
  %v283 = vunpack.c.h.b16 %v57
  %v284 = vunpack.c.l.b16 %v58
  %v285 = vunpack.c.h.b16 %v58
  %v286 = vunpack.c.l.b16 %v59
  %v287 = vunpack.c.h.b16 %v59
  %v288 = vpack.c.b16 %v242, %v240
  %v289 = vpack.c.b16 %v243, %v241
  %v290 = vpack.c.b16 %v246, %v244
  %v291 = vpack.c.b16 %v247, %v245
  %v292 = vpack.c.b16 %v250, %v248
  %v293 = vpack.c.b16 %v251, %v249
  %v294 = vpack.c.b16 %v254, %v252
  %v295 = vpack.c.b16 %v255, %v253
  %v296 = vpack.c.b16 %v258, %v256
  %v297 = vpack.c.b16 %v259, %v257
  %v298 = vpack.c.b16 %v262, %v260
  %v299 = vpack.c.b16 %v263, %v261
  %v300 = vpack.c.b16 %v266, %v264
  %v301 = vpack.c.b16 %v267, %v265
  %v302 = vpack.c.b16 %v270, %v268
  %v303 = vpack.c.b16 %v271, %v269
  %v304 = vpack.c.b16 %v274, %v272
  %v305 = vpack.c.b16 %v275, %v273
  %v306 = vpack.c.b16 %v278, %v276
  %v307 = vpack.c.b16 %v279, %v277
  %v308 = vpack.c.b16 %v282, %v280
  %v309 = vpack.c.b16 %v283, %v281
  %v310 = vpack.c.b16 %v286, %v284
  %v311 = vpack.c.b16 %v287, %v285
  %vm336 = vcmask 523264
  %v338 = vsel %vm336, %v211, 0
  %v341 = vsel %vm336, %v213, 0
  %343 = vmatprep.subr.bf16.mxu0 %v289
  %344 = vmatpush1.bf16.msra.mxu0 %v288
  %345 = vmatprep.subr.bf16.mxu0 %v291
  %346 = vmatpush1.bf16.msra.mxu0 %v290
  %347 = vmatprep.subr.bf16.mxu0 %v293
  %348 = vmatpush1.bf16.msra.mxu0 %v292
  %349 = vmatprep.subr.bf16.mxu0 %v295
  %350 = vmatpush1.bf16.msra.mxu0 %v294
  %351 = vmatprep.subr.bf16.mxu0 %v297
  %352 = vmatpush1.bf16.msra.mxu0 %v296
  %353 = vmatprep.subr.bf16.mxu0 %v299
  %354 = vmatpush1.bf16.msra.mxu0 %v298
  %355 = vmatprep.subr.bf16.mxu0 %v301
  %356 = vmatpush1.bf16.msra.mxu0 %v300
  %357 = vmatprep.subr.bf16.mxu0 %v303
  %358 = vmatpush1.bf16.msra.mxu0 %v302
  %359 = vmatprep.subr.bf16.mxu0 %v305
  %360 = vmatpush1.bf16.msra.mxu0 %v304
  %361 = vmatprep.subr.bf16.mxu0 %v307
  %362 = vmatpush1.bf16.msra.mxu0 %v306
  %363 = vmatprep.subr.bf16.mxu0 %v309
  %364 = vmatpush1.bf16.msra.mxu0 %v308
  %365 = vmatprep.subr.bf16.mxu0 %v311
  %366 = vmatpush1.bf16.msra.mxu0 %v310
  %367 = vmatprep.subr.bf16.mxu0 0
  %368 = vmatpush1.bf16.msra.mxu0 0
  %369 = vmatprep.subr.bf16.mxu0 0
  %370 = vmatpush1.bf16.msra.mxu0 0
  %371 = vmatprep.subr.bf16.mxu0 0
  %372 = vmatpush1.bf16.msra.mxu0 0
  %373 = vmatprep.subr.bf16.mxu0 0
  %374 = vmatpush1.bf16.msra.mxu0 0
  %375 = vmatprep.mubr.bf16.mxu0 %v338
  %376 = vmatmul.mubr.bf16.gmra.mrb[0].mxu0 %v210
  %v377 = vpop.f32.mrb[0].mxu0
  %v378 = vadd.f32 %v185, %v377
  %v379 = vpop.f32.mrb[0].mxu0
  %v380 = vadd.f32 %v187, %v379
  %v381 = vpop.f32.mrb[0].mxu0
  %v382 = vadd.f32 %v189, %v381
  %v383 = vpop.f32.mrb[0].mxu0
  %v384 = vadd.f32 %v191, %v383
  %385 = vmatprep.mubr.bf16.mxu0 %v341
  %386 = vmatmul.mubr.bf16.gmra.mrb[0].mxu0 %v212
  %v387 = vpop.f32.mrb[0].mxu0
  %v388 = vadd.f32 %v195, %v387
  %v389 = vpop.f32.mrb[0].mxu0
  %v390 = vadd.f32 %v197, %v389
  %v391 = vpop.f32.mrb[0].mxu0
  %v392 = vpop.f32.mrb[0].mxu0
  %393 = vdwg.mxu0
  %v394 = vld [vmem:[%s2] sm:$0xff]
  %v395 = vld [vmem:[%s2 + $0x8] sm:$0xff]
  %v396 = vld [vmem:[%s2 + $0x10] sm:$0xff]
  %v397 = vld [vmem:[%s5] sm:$0x77]
  %399 = vset.pattern.permute.xlu0 0
  %400 = vperm.xlu0 %399, %v394
  %v401 = vpop.permute.xlu0 %400
  %404 = vset.pattern.permute.xlu0 0
  %405 = vperm.xlu0 %404, %v395
  %v406 = vpop.permute.xlu0 %405
  %409 = vset.pattern.permute.xlu0 0
  %410 = vperm.xlu0 %409, %v396
  %v411 = vpop.permute.xlu0 %410
  %v414 = vlaneseq
  %v415 = vshrl.u32 %v414, 7
  %v416 = vsub.s32 0, %v415
  %v417 = vrot.slane %v397, %v416
  %v418 = vlaneseq
  %v419 = vshrl.u32 %v418, 7
  %v420 = vsub.s32 4, %v419
  %v421 = vrot.slane %v397, %v420
  %v424 = vlaneseq
  %v425 = vshrl.u32 %v424, 7
  %v426 = vsub.s32 0, %v425
  %v427 = vrot.slane %v417, %v426
  %v428 = vlaneseq
  %v429 = vshrl.u32 %v428, 7
  %v430 = vsub.s32 0, %v429
  %v431 = vrot.slane %v421, %v430
  %v432 = vmul.f32 %v401, %v427
  %v433 = vmul.f32 %v401, %v431
  %v434 = vmul.f32 %v406, %v427
  %v435 = vmul.f32 %v406, %v431
  %v436 = vmul.f32 %v411, %v427
  %v437 = vmul.f32 %v411, %v431
  %v438 = vadd.f32 %v378, %v432
  %v439 = vadd.f32 %v380, %v433
  %v440 = vadd.f32 %v382, %v434
  %v441 = vadd.f32 %v384, %v435
  %v442 = vadd.f32 %v388, %v436
  %v443 = vadd.f32 %v390, %v437
  %444 = vset.pattern.permute.xlu0 1
  %445 = vperm.xlu0 %444, %v394
  %v446 = vpop.permute.xlu0 %445
  %448 = vset.pattern.permute.xlu0 1
  %449 = vperm.xlu0 %448, %v395
  %v450 = vpop.permute.xlu0 %449
  %452 = vset.pattern.permute.xlu0 1
  %453 = vperm.xlu0 %452, %v396
  %v454 = vpop.permute.xlu0 %453
  %v456 = vlaneseq
  %v457 = vshrl.u32 %v456, 7
  %v458 = vsub.s32 1, %v457
  %v459 = vrot.slane %v397, %v458
  %v460 = vlaneseq
  %v461 = vshrl.u32 %v460, 7
  %v462 = vsub.s32 5, %v461
  %v463 = vrot.slane %v397, %v462
  %v466 = vlaneseq
  %v467 = vshrl.u32 %v466, 7
  %v468 = vsub.s32 1, %v467
  %v469 = vrot.slane %v459, %v468
  %v470 = vlaneseq
  %v471 = vshrl.u32 %v470, 7
  %v472 = vsub.s32 1, %v471
  %v473 = vrot.slane %v463, %v472
  %v474 = vmul.f32 %v446, %v469
  %v475 = vmul.f32 %v446, %v473
  %v476 = vmul.f32 %v450, %v469
  %v477 = vmul.f32 %v450, %v473
  %v478 = vmul.f32 %v454, %v469
  %v479 = vmul.f32 %v454, %v473
  %v480 = vadd.f32 %v438, %v474
  %v481 = vadd.f32 %v439, %v475
  %v482 = vadd.f32 %v440, %v476
  %v483 = vadd.f32 %v441, %v477
  %v484 = vadd.f32 %v442, %v478
  %v485 = vadd.f32 %v443, %v479
  %486 = vset.pattern.permute.xlu0 2
  %487 = vperm.xlu0 %486, %v394
  %v488 = vpop.permute.xlu0 %487
  %490 = vset.pattern.permute.xlu0 2
  %491 = vperm.xlu0 %490, %v395
  %v492 = vpop.permute.xlu0 %491
  %494 = vset.pattern.permute.xlu0 2
  %495 = vperm.xlu0 %494, %v396
  %v496 = vpop.permute.xlu0 %495
  %v498 = vlaneseq
  %v499 = vshrl.u32 %v498, 7
  %v500 = vsub.s32 2, %v499
  %v501 = vrot.slane %v397, %v500
  %v502 = vlaneseq
  %v503 = vshrl.u32 %v502, 7
  %v504 = vsub.s32 6, %v503
  %v505 = vrot.slane %v397, %v504
  %v508 = vlaneseq
  %v509 = vshrl.u32 %v508, 7
  %v510 = vsub.s32 2, %v509
  %v511 = vrot.slane %v501, %v510
  %v512 = vlaneseq
  %v513 = vshrl.u32 %v512, 7
  %v514 = vsub.s32 2, %v513
  %v515 = vrot.slane %v505, %v514
  %v516 = vmul.f32 %v488, %v511
  %v517 = vmul.f32 %v488, %v515
  %v518 = vmul.f32 %v492, %v511
  %v519 = vmul.f32 %v492, %v515
  %v520 = vmul.f32 %v496, %v511
  %v521 = vmul.f32 %v496, %v515
  %v522 = vadd.f32 %v480, %v516
  %v523 = vadd.f32 %v481, %v517
  %v524 = vadd.f32 %v482, %v518
  %v525 = vadd.f32 %v483, %v519
  %v526 = vadd.f32 %v484, %v520
  %v527 = vadd.f32 %v485, %v521
  %v528 = vld [vmem:[%s6] sm:$0x3]
  %v530 = vlaneseq
  %v531 = vshrl.u32 %v530, 7
  %v532 = vsub.s32 0, %v531
  %v533 = vrot.slane %v528, %v532
  %v534 = vlaneseq
  %v535 = vshrl.u32 %v534, 7
  %v536 = vsub.s32 1, %v535
  %v537 = vrot.slane %v528, %v536
  %v540 = vadd.f32 %v522, %v533
  %v541 = vadd.f32 %v523, %v537
  %v542 = vadd.f32 %v524, %v533
  %v543 = vadd.f32 %v525, %v537
  %v544 = vadd.f32 %v526, %v533
  %v545 = vadd.f32 %v527, %v537
  %v546 = vmax.f32 %v540, 0.0
  %v547 = vmax.f32 %v541, 0.0
  %v548 = vmax.f32 %v542, 0.0
  %v549 = vmax.f32 %v543, 0.0
  %v550 = vmax.f32 %v544, 0.0
  %v551 = vmax.f32 %v545, 0.0
  %v552 = vpack.c.bf16 %v548, %v546
  %v553 = vpack.c.bf16 %v549, %v547
  %v554 = vpack.c.bf16 %v550, %v550
  %v555 = vpack.c.bf16 %v551, %v551
  %v556 = vld [vmem:[%s7] sm:$0xf]
  %v557 = vld [vmem:[%s7 + $0x4] sm:$0xf]
  %v558 = vld [vmem:[%s7 + $0x8] sm:$0xf]
  %v559 = vld [vmem:[%s7 + $0xc] sm:$0xf]
  %v560 = vld [vmem:[%s7 + $0x10] sm:$0xf]
  %v561 = vld [vmem:[%s7 + $0x14] sm:$0xf]
  %v562 = vld [vmem:[%s7 + $0x18] sm:$0xf]
  %v563 = vld [vmem:[%s7 + $0x1c] sm:$0xf]
  %v564 = vld [vmem:[%s7 + $0x20] sm:$0xf]
  %v565 = vld [vmem:[%s7 + $0x24] sm:$0xf]
  %v566 = vld [vmem:[%s7 + $0x28] sm:$0xf]
  %v567 = vld [vmem:[%s7 + $0x2c] sm:$0xf]
  %v568 = vld [vmem:[%s7 + $0x30] sm:$0xf]
  %v569 = vld [vmem:[%s7 + $0x34] sm:$0xf]
  %v570 = vld [vmem:[%s7 + $0x38] sm:$0xf]
  %v571 = vld [vmem:[%s7 + $0x3c] sm:$0xf]
  %v572 = vld [vmem:[%s7 + $0x40] sm:$0xf]
  %v573 = vld [vmem:[%s7 + $0x44] sm:$0xf]
  %v574 = vld [vmem:[%s7 + $0x48] sm:$0xf]
  %v575 = vld [vmem:[%s7 + $0x4c] sm:$0xf]
  %v576 = vld [vmem:[%s7 + $0x50] sm:$0xf]
  %v577 = vld [vmem:[%s7 + $0x54] sm:$0xf]
  %v578 = vld [vmem:[%s7 + $0x58] sm:$0xf]
  %v579 = vld [vmem:[%s7 + $0x5c] sm:$0xf]
  %v580 = vld [vmem:[%s7 + $0x60] sm:$0xf]
  %v581 = vld [vmem:[%s7 + $0x64] sm:$0xf]
  %v582 = vld [vmem:[%s7 + $0x68] sm:$0xf]
  %v583 = vld [vmem:[%s7 + $0x6c] sm:$0xf]
  %v584 = vld [vmem:[%s7 + $0x70] sm:$0xf]
  %v585 = vld [vmem:[%s7 + $0x74] sm:$0xf]
  %v586 = vld [vmem:[%s7 + $0x78] sm:$0xf]
  %v587 = vld [vmem:[%s7 + $0x7c] sm:$0xf]
  %v588 = vld [vmem:[%s8] sm:$0x1]
  %v590 = vlaneseq
  %v591 = vshrl.u32 %v590, 7
  %v592 = vsub.s32 0, %v591
  %v593 = vrot.slane %v588, %v592
  %v627 = vunpack.c.l.b16 %v556
  %v628 = vunpack.c.l.b16 %v557
  %v629 = vunpack.c.l.b16 %v558
  %v630 = vunpack.c.l.b16 %v559
  %v631 = vunpack.c.l.b16 %v560
  %v632 = vunpack.c.l.b16 %v561
  %v633 = vunpack.c.l.b16 %v562
  %v634 = vunpack.c.l.b16 %v563
  %v635 = vunpack.c.l.b16 %v564
  %v636 = vunpack.c.l.b16 %v565
  %v637 = vunpack.c.l.b16 %v566
  %v638 = vunpack.c.l.b16 %v567
  %v639 = vunpack.c.l.b16 %v568
  %v640 = vunpack.c.l.b16 %v569
  %v641 = vunpack.c.l.b16 %v570
  %v642 = vunpack.c.l.b16 %v571
  %v643 = vunpack.c.l.b16 %v572
  %v644 = vunpack.c.l.b16 %v573
  %v645 = vunpack.c.l.b16 %v574
  %v646 = vunpack.c.l.b16 %v575
  %v647 = vunpack.c.l.b16 %v576
  %v648 = vunpack.c.l.b16 %v577
  %v649 = vunpack.c.l.b16 %v578
  %v650 = vunpack.c.l.b16 %v579
  %v651 = vunpack.c.l.b16 %v580
  %v652 = vunpack.c.l.b16 %v581
  %v653 = vunpack.c.l.b16 %v582
  %v654 = vunpack.c.l.b16 %v583
  %v655 = vunpack.c.l.b16 %v584
  %v656 = vunpack.c.l.b16 %v585
  %v657 = vunpack.c.l.b16 %v586
  %v658 = vunpack.c.l.b16 %v587
  %v659 = vpack.c.b16 %v628, %v627
  %v660 = vpack.c.b16 %v630, %v629
  %v661 = vpack.c.b16 %v632, %v631
  %v662 = vpack.c.b16 %v634, %v633
  %v663 = vpack.c.b16 %v636, %v635
  %v664 = vpack.c.b16 %v638, %v637
  %v665 = vpack.c.b16 %v640, %v639
  %v666 = vpack.c.b16 %v642, %v641
  %v667 = vpack.c.b16 %v644, %v643
  %v668 = vpack.c.b16 %v646, %v645
  %v669 = vpack.c.b16 %v648, %v647
  %v670 = vpack.c.b16 %v650, %v649
  %v671 = vpack.c.b16 %v652, %v651
  %v672 = vpack.c.b16 %v654, %v653
  %v673 = vpack.c.b16 %v656, %v655
  %v674 = vpack.c.b16 %v658, %v657
  %691 = vmatprep.subr.bf16.mxu0 0
  %692 = vmatpush1.bf16.msra.mxu0 %v659
  %693 = vmatprep.subr.bf16.mxu0 0
  %694 = vmatpush1.bf16.msra.mxu0 %v660
  %695 = vmatprep.subr.bf16.mxu0 0
  %696 = vmatpush1.bf16.msra.mxu0 %v661
  %697 = vmatprep.subr.bf16.mxu0 0
  %698 = vmatpush1.bf16.msra.mxu0 %v662
  %699 = vmatprep.subr.bf16.mxu0 0
  %700 = vmatpush1.bf16.msra.mxu0 %v663
  %701 = vmatprep.subr.bf16.mxu0 0
  %702 = vmatpush1.bf16.msra.mxu0 %v664
  %703 = vmatprep.subr.bf16.mxu0 0
  %704 = vmatpush1.bf16.msra.mxu0 %v665
  %705 = vmatprep.subr.bf16.mxu0 0
  %706 = vmatpush1.bf16.msra.mxu0 %v666
  %707 = vmatprep.subr.bf16.mxu0 0
  %708 = vmatpush1.bf16.msra.mxu0 %v667
  %709 = vmatprep.subr.bf16.mxu0 0
  %710 = vmatpush1.bf16.msra.mxu0 %v668
  %711 = vmatprep.subr.bf16.mxu0 0
  %712 = vmatpush1.bf16.msra.mxu0 %v669
  %713 = vmatprep.subr.bf16.mxu0 0
  %714 = vmatpush1.bf16.msra.mxu0 %v670
  %715 = vmatprep.subr.bf16.mxu0 0
  %716 = vmatpush1.bf16.msra.mxu0 %v671
  %717 = vmatprep.subr.bf16.mxu0 0
  %718 = vmatpush1.bf16.msra.mxu0 %v672
  %719 = vmatprep.subr.bf16.mxu0 0
  %720 = vmatpush1.bf16.msra.mxu0 %v673
  %721 = vmatprep.subr.bf16.mxu0 0
  %722 = vmatpush1.bf16.msra.mxu0 %v674
  %723 = vmatprep.mubr.bf16.mxu0 %v553
  %724 = vmatmul.mubr.bf16.gmra.mrb[0].mxu0 %v552
  %v725 = vpop.f32.mrb[0].mxu0
  %v726 = vadd.f32 %v593, %v725
  %v727 = vpop.f32.mrb[0].mxu0
  %v728 = vpop.f32.mrb[0].mxu0
  %v729 = vadd.f32 %v593, %v728
  %v730 = vpop.f32.mrb[0].mxu0
  %731 = vmatprep.mubr.bf16.mxu0 %v555
  %732 = vmatmul.mubr.bf16.gmra.mrb[0].mxu0 %v554
  %v733 = vpop.f32.mrb[0].mxu0
  %v734 = vadd.f32 %v593, %v733
  %v735 = vpop.f32.mrb[0].mxu0
  %v736 = vpop.f32.mrb[0].mxu0
  %v737 = vpop.f32.mrb[0].mxu0
  %738 = vdwg.mxu0
  %v739 = vmax.f32 %v726, 0.0
  %v740 = vmax.f32 %v729, 0.0
  %v741 = vmax.f32 %v734, 0.0
  %v742 = vpack.c.bf16 %v740, %v739
  %v743 = vpack.c.bf16 %v741, %v741
  %v746 = vunpack.c.l.b16 %v742
  %v747 = vunpack.c.h.b16 %v742
  %v748 = vunpack.c.l.b16 %v743
  %v749 = vpack.c.b16 %v746, %v746
  %v750 = vpack.c.b16 %v747, %v747
  %v751 = vpack.c.b16 %v748, %v748
  %vm755 = vcmask 781312
  %756 = vst.msk [vmem:[%s9] sm:$0xf] %vm755, %v749
  %757 = vst.msk [vmem:[%s9 + $0x4] sm:$0xf] %vm755, %v750
  %758 = vst.msk [vmem:[%s9 + $0x8] sm:$0xf] %vm755, %v751
  // Predicated region
  $region38: #{net_forward.17} parent=0 // pred_check
    _
  $region39: #{net_forward.17} parent=0 // pred_check_branch
    %760 = sbr.rel (0) target = $region41
  $region40: #{net_forward.17} parent=0 // pred_region
    _
  $region41: #{net_forward.17} parent=0 // pred_fallthru
    _
  // Predicated region
  $region42: #{net_forward.17} parent=0 // pred_check
    _
  $region43: #{net_forward.17} parent=0 // pred_check_branch
    %762 = sbr.rel (0) target = $region45
  $region44: #{net_forward.17} parent=0 // pred_region
    _
  $region45: #{net_forward.17} parent=0 // pred_fallthru
    _

// kernel: net_forward.19
$region0: #{net_forward.19}
  #allocation0 [shape = 'u32[]', space=smem, size = 0x4, offset = 0x4, fixed_abs, tag = 'smem constant byte address 0x4 - core index']
  #allocation1 [shape = 'u32[144,128]{1,0:T(1,128)}', space=vmem, size = 0x12000, scoped, tag = 'internal scratch']
  %s0 = inlined_call_operand.vmem [shape: bf16[64,96], index: 0, kind: input, shape index: {}]
  %s1 = inlined_call_operand.vmem [shape: bf16[96,128], index: 1, kind: input, shape index: {}]
  %s2 = inlined_call_operand.vmem [shape: f32[1,128], index: 2, kind: input, shape index: {}]
  %s3 = inlined_call_operand.vmem [shape: bf16[128,128], index: 3, kind: input, shape index: {}]
  %s4 = inlined_call_operand.vmem [shape: f32[1,128], index: 4, kind: input, shape index: {}]
  %s5 = inlined_call_operand.vmem [shape: f32[64,128], index: 5, kind: output, shape index: {}]
  %s6 = sld [smem:[#allocation0]]
  $region30: #{net_forward.19} parent=0
    _
  %s8 = ssub.s32 1, %s6
  %s9 = scalar_select 0, %s8, %s6
  // Predicated region
  $region2: #{net_forward.19} parent=0 // pred_check
    _
  $region3: #{net_forward.19} parent=0 // pred_check_branch
    %11 = sbr.rel (0) target = $region5
  $region4: #{net_forward.19} parent=0 // pred_region
    _
  $region5: #{net_forward.19} parent=0 // pred_fallthru
    _
  // Predicated region
  $region6: #{net_forward.19} parent=0 // pred_check
    _
  $region7: #{net_forward.19} parent=0 // pred_check_branch
    %13 = sbr.rel (0) target = $region9
  $region8: #{net_forward.19} parent=0 // pred_region
    _
  $region9: #{net_forward.19} parent=0 // pred_fallthru
    _
  // Predicated region
  $region10: #{net_forward.19} parent=0 // pred_check
    _
  $region11: #{net_forward.19} parent=0 // pred_check_branch
    %15 = sbr.rel (0) target = $region13
  $region12: #{net_forward.19} parent=0 // pred_region
    _
  $region13: #{net_forward.19} parent=0 // pred_fallthru
    _
  // Predicated region
  $region14: #{net_forward.19} parent=0 // pred_check
    _
  $region15: #{net_forward.19} parent=0 // pred_check_branch
    %17 = sbr.rel (0) target = $region17
  $region16: #{net_forward.19} parent=0 // pred_region
    _
  $region17: #{net_forward.19} parent=0 // pred_fallthru
    _
  // Predicated region
  $region18: #{net_forward.19} parent=0 // pred_check
    _
  $region19: #{net_forward.19} parent=0 // pred_check_branch
    %19 = sbr.rel (0) target = $region21
  $region20: #{net_forward.19} parent=0 // pred_region
    _
  $region21: #{net_forward.19} parent=0 // pred_fallthru
    _
  %v21 = vld [vmem:[%s0] sm:$0xf]
  %v22 = vld [vmem:[%s0 + $0x4] sm:$0xf]
  %v23 = vld [vmem:[%s0 + $0x8] sm:$0xf]
  %v24 = vld [vmem:[%s0 + $0xc] sm:$0xf]
  %v25 = vld [vmem:[%s0 + $0x10] sm:$0xf]
  %v26 = vld [vmem:[%s0 + $0x14] sm:$0xf]
  %v27 = vld [vmem:[%s0 + $0x18] sm:$0xf]
  %v28 = vld [vmem:[%s0 + $0x1c] sm:$0xf]
  %v29 = vld [vmem:[%s1] sm:$0xf]
  %v30 = vld [vmem:[%s1 + $0x4] sm:$0xf]
  %v31 = vld [vmem:[%s1 + $0x8] sm:$0xf]
  %v32 = vld [vmem:[%s1 + $0xc] sm:$0xf]
  %v33 = vld [vmem:[%s1 + $0x10] sm:$0xf]
  %v34 = vld [vmem:[%s1 + $0x14] sm:$0xf]
  %v35 = vld [vmem:[%s1 + $0x18] sm:$0xf]
  %v36 = vld [vmem:[%s1 + $0x1c] sm:$0xf]
  %v37 = vld [vmem:[%s1 + $0x20] sm:$0xf]
  %v38 = vld [vmem:[%s1 + $0x24] sm:$0xf]
  %v39 = vld [vmem:[%s1 + $0x28] sm:$0xf]
  %v40 = vld [vmem:[%s1 + $0x2c] sm:$0xf]
  %v41 = vld [vmem:[%s2] sm:$0x1]
  %v43 = vlaneseq
  %v44 = vshrl.u32 %v43, 7
  %v45 = vsub.s32 0, %v44
  %v46 = vrot.slane %v41, %v45
  %v56 = vunpack.c.l.b16 %v21
  %v57 = vunpack.c.l.b16 %v22
  %v58 = vunpack.c.l.b16 %v23
  %v59 = vunpack.c.l.b16 %v24
  %v60 = vunpack.c.l.b16 %v25
  %v61 = vunpack.c.l.b16 %v26
  %v62 = vunpack.c.l.b16 %v27
  %v63 = vunpack.c.l.b16 %v28
  %v64 = vpack.c.b16 %v57, %v56
  %v65 = vpack.c.b16 %v59, %v58
  %v66 = vpack.c.b16 %v61, %v60
  %v67 = vpack.c.b16 %v63, %v62
  %v80 = vunpack.c.l.b16 %v29
  %v81 = vunpack.c.l.b16 %v30
  %v82 = vunpack.c.l.b16 %v31
  %v83 = vunpack.c.l.b16 %v32
  %v84 = vunpack.c.l.b16 %v33
  %v85 = vunpack.c.l.b16 %v34
  %v86 = vunpack.c.l.b16 %v35
  %v87 = vunpack.c.l.b16 %v36
  %v88 = vunpack.c.l.b16 %v37
  %v89 = vunpack.c.l.b16 %v38
  %v90 = vunpack.c.l.b16 %v39
  %v91 = vunpack.c.l.b16 %v40
  %v92 = vpack.c.b16 %v81, %v80
  %v93 = vpack.c.b16 %v83, %v82
  %v94 = vpack.c.b16 %v85, %v84
  %v95 = vpack.c.b16 %v87, %v86
  %v96 = vpack.c.b16 %v89, %v88
  %v97 = vpack.c.b16 %v91, %v90
  %vm104 = vcmask 785408
  %v106 = vsel %vm104, %v64, 0
  %v109 = vsel %vm104, %v65, 0
  %v112 = vsel %vm104, %v66, 0
  %v115 = vsel %vm104, %v67, 0
  %117 = vmatprep.subr.bf16.mxu0 0
  %118 = vmatpush1.bf16.msra.mxu0 %v92
  %119 = vmatprep.subr.bf16.mxu0 0
  %120 = vmatpush1.bf16.msra.mxu0 %v93
  %121 = vmatprep.subr.bf16.mxu0 0
  %122 = vmatpush1.bf16.msra.mxu0 %v94
  %123 = vmatprep.subr.bf16.mxu0 0
  %124 = vmatpush1.bf16.msra.mxu0 %v95
  %125 = vmatprep.subr.bf16.mxu0 0
  %126 = vmatpush1.bf16.msra.mxu0 %v96
  %127 = vmatprep.subr.bf16.mxu0 0
  %128 = vmatpush1.bf16.msra.mxu0 %v97
  %129 = vmatprep.subr.bf16.mxu0 0
  %130 = vmatpush1.bf16.msra.mxu0 0
  %131 = vmatprep.subr.bf16.mxu0 0
  %132 = vmatpush1.bf16.msra.mxu0 0
  %133 = vmatprep.subr.bf16.mxu0 0
  %134 = vmatpush1.bf16.msra.mxu0 0
  %135 = vmatprep.subr.bf16.mxu0 0
  %136 = vmatpush1.bf16.msra.mxu0 0
  %137 = vmatprep.subr.bf16.mxu0 0
  %138 = vmatpush1.bf16.msra.mxu0 0
  %139 = vmatprep.subr.bf16.mxu0 0
  %140 = vmatpush1.bf16.msra.mxu0 0
  %141 = vmatprep.subr.bf16.mxu0 0
  %142 = vmatpush1.bf16.msra.mxu0 0
  %143 = vmatprep.subr.bf16.mxu0 0
  %144 = vmatpush1.bf16.msra.mxu0 0
  %145 = vmatprep.subr.bf16.mxu0 0
  %146 = vmatpush1.bf16.msra.mxu0 0
  %147 = vmatprep.subr.bf16.mxu0 0
  %148 = vmatpush1.bf16.msra.mxu0 0
  %149 = vmatprep.mubr.bf16.mxu0 0
  %150 = vmatmul.mubr.bf16.gmra.mrb[0].mxu0 %v106
  %v151 = vpop.f32.mrb[0].mxu0
  %v152 = vadd.f32 %v46, %v151
  %v153 = vpop.f32.mrb[0].mxu0
  %v154 = vpop.f32.mrb[0].mxu0
  %v155 = vadd.f32 %v46, %v154
  %v156 = vpop.f32.mrb[0].mxu0
  %157 = vmatprep.mubr.bf16.mxu0 0
  %158 = vmatmul.mubr.bf16.gmra.mrb[0].mxu0 %v109
  %v159 = vpop.f32.mrb[0].mxu0
  %v160 = vadd.f32 %v46, %v159
  %v161 = vpop.f32.mrb[0].mxu0
  %v162 = vpop.f32.mrb[0].mxu0
  %v163 = vadd.f32 %v46, %v162
  %v164 = vpop.f32.mrb[0].mxu0
  %165 = vmatprep.mubr.bf16.mxu0 0
  %166 = vmatmul.mubr.bf16.gmra.mrb[0].mxu0 %v112
  %v167 = vpop.f32.mrb[0].mxu0
  %v168 = vadd.f32 %v46, %v167
  %v169 = vpop.f32.mrb[0].mxu0
  %v170 = vpop.f32.mrb[0].mxu0
  %v171 = vadd.f32 %v46, %v170
  %v172 = vpop.f32.mrb[0].mxu0
  %173 = vmatprep.mubr.bf16.mxu0 0
  %174 = vmatmul.mubr.bf16.gmra.mrb[0].mxu0 %v115
  %v175 = vpop.f32.mrb[0].mxu0
  %v176 = vadd.f32 %v46, %v175
  %v177 = vpop.f32.mrb[0].mxu0
  %v178 = vpop.f32.mrb[0].mxu0
  %v179 = vadd.f32 %v46, %v178
  %v180 = vpop.f32.mrb[0].mxu0
  %181 = vdwg.mxu0
  %v182 = vmax.f32 %v152, 0.0
  %v183 = vmax.f32 %v155, 0.0
  %v184 = vmax.f32 %v160, 0.0
  %v185 = vmax.f32 %v163, 0.0
  %v186 = vmax.f32 %v168, 0.0
  %v187 = vmax.f32 %v171, 0.0
  %v188 = vmax.f32 %v176, 0.0
  %v189 = vmax.f32 %v179, 0.0
  %v190 = vpack.c.bf16 %v183, %v182
  %v191 = vpack.c.bf16 %v185, %v184
  %v192 = vpack.c.bf16 %v187, %v186
  %v193 = vpack.c.bf16 %v189, %v188
  %v194 = vld [vmem:[%s3] sm:$0xf]
  %v195 = vld [vmem:[%s3 + $0x4] sm:$0xf]
  %v196 = vld [vmem:[%s3 + $0x8] sm:$0xf]
  %v197 = vld [vmem:[%s3 + $0xc] sm:$0xf]
  %v198 = vld [vmem:[%s3 + $0x10] sm:$0xf]
  %v199 = vld [vmem:[%s3 + $0x14] sm:$0xf]
  %v200 = vld [vmem:[%s3 + $0x18] sm:$0xf]
  %v201 = vld [vmem:[%s3 + $0x1c] sm:$0xf]
  %v202 = vld [vmem:[%s3 + $0x20] sm:$0xf]
  %v203 = vld [vmem:[%s3 + $0x24] sm:$0xf]
  %v204 = vld [vmem:[%s3 + $0x28] sm:$0xf]
  %v205 = vld [vmem:[%s3 + $0x2c] sm:$0xf]
  %v206 = vld [vmem:[%s3 + $0x30] sm:$0xf]
  %v207 = vld [vmem:[%s3 + $0x34] sm:$0xf]
  %v208 = vld [vmem:[%s3 + $0x38] sm:$0xf]
  %v209 = vld [vmem:[%s3 + $0x3c] sm:$0xf]
  %v210 = vld [vmem:[%s4] sm:$0x1]
  %v212 = vlaneseq
  %v213 = vshrl.u32 %v212, 7
  %v214 = vsub.s32 0, %v213
  %v215 = vrot.slane %v210, %v214
  %v233 = vunpack.c.l.b16 %v194
  %v234 = vunpack.c.l.b16 %v195
  %v235 = vunpack.c.l.b16 %v196
  %v236 = vunpack.c.l.b16 %v197
  %v237 = vunpack.c.l.b16 %v198
  %v238 = vunpack.c.l.b16 %v199
  %v239 = vunpack.c.l.b16 %v200
  %v240 = vunpack.c.l.b16 %v201
  %v241 = vunpack.c.l.b16 %v202
  %v242 = vunpack.c.l.b16 %v203
  %v243 = vunpack.c.l.b16 %v204
  %v244 = vunpack.c.l.b16 %v205
  %v245 = vunpack.c.l.b16 %v206
  %v246 = vunpack.c.l.b16 %v207
  %v247 = vunpack.c.l.b16 %v208
  %v248 = vunpack.c.l.b16 %v209
  %v249 = vpack.c.b16 %v234, %v233
  %v250 = vpack.c.b16 %v236, %v235
  %v251 = vpack.c.b16 %v238, %v237
  %v252 = vpack.c.b16 %v240, %v239
  %v253 = vpack.c.b16 %v242, %v241
  %v254 = vpack.c.b16 %v244, %v243
  %v255 = vpack.c.b16 %v246, %v245
  %v256 = vpack.c.b16 %v248, %v247
  %265 = vmatprep.subr.bf16.mxu0 0
  %266 = vmatpush1.bf16.msra.mxu0 %v249
  %267 = vmatprep.subr.bf16.mxu0 0
  %268 = vmatpush1.bf16.msra.mxu0 %v250
  %269 = vmatprep.subr.bf16.mxu0 0
  %270 = vmatpush1.bf16.msra.mxu0 %v251
  %271 = vmatprep.subr.bf16.mxu0 0
  %272 = vmatpush1.bf16.msra.mxu0 %v252
  %273 = vmatprep.subr.bf16.mxu0 0
  %274 = vmatpush1.bf16.msra.mxu0 %v253
  %275 = vmatprep.subr.bf16.mxu0 0
  %276 = vmatpush1.bf16.msra.mxu0 %v254
  %277 = vmatprep.subr.bf16.mxu0 0
  %278 = vmatpush1.bf16.msra.mxu0 %v255
  %279 = vmatprep.subr.bf16.mxu0 0
  %280 = vmatpush1.bf16.msra.mxu0 %v256
  %281 = vmatprep.subr.bf16.mxu0 0
  %282 = vmatpush1.bf16.msra.mxu0 0
  %283 = vmatprep.subr.bf16.mxu0 0
  %284 = vmatpush1.bf16.msra.mxu0 0
  %285 = vmatprep.subr.bf16.mxu0 0
  %286 = vmatpush1.bf16.msra.mxu0 0
  %287 = vmatprep.subr.bf16.mxu0 0
  %288 = vmatpush1.bf16.msra.mxu0 0
  %289 = vmatprep.subr.bf16.mxu0 0
  %290 = vmatpush1.bf16.msra.mxu0 0
  %291 = vmatprep.subr.bf16.mxu0 0
  %292 = vmatpush1.bf16.msra.mxu0 0
  %293 = vmatprep.subr.bf16.mxu0 0
  %294 = vmatpush1.bf16.msra.mxu0 0
  %295 = vmatprep.subr.bf16.mxu0 0
  %296 = vmatpush1.bf16.msra.mxu0 0
  %297 = vmatprep.mubr.bf16.mxu0 0
  %298 = vmatmul.mubr.bf16.gmra.mrb[0].mxu0 %v190
  %v299 = vpop.f32.mrb[0].mxu0
  %v300 = vadd.f32 %v215, %v299
  %v301 = vpop.f32.mrb[0].mxu0
  %v302 = vpop.f32.mrb[0].mxu0
  %v303 = vadd.f32 %v215, %v302
  %v304 = vpop.f32.mrb[0].mxu0
  %305 = vmatprep.mubr.bf16.mxu0 0
  %306 = vmatmul.mubr.bf16.gmra.mrb[0].mxu0 %v191
  %v307 = vpop.f32.mrb[0].mxu0
  %v308 = vadd.f32 %v215, %v307
  %v309 = vpop.f32.mrb[0].mxu0
  %v310 = vpop.f32.mrb[0].mxu0
  %v311 = vadd.f32 %v215, %v310
  %v312 = vpop.f32.mrb[0].mxu0
  %313 = vmatprep.mubr.bf16.mxu0 0
  %314 = vmatmul.mubr.bf16.gmra.mrb[0].mxu0 %v192
  %v315 = vpop.f32.mrb[0].mxu0
  %v316 = vadd.f32 %v215, %v315
  %v317 = vpop.f32.mrb[0].mxu0
  %v318 = vpop.f32.mrb[0].mxu0
  %v319 = vadd.f32 %v215, %v318
  %v320 = vpop.f32.mrb[0].mxu0
  %321 = vmatprep.mubr.bf16.mxu0 0
  %322 = vmatmul.mubr.bf16.gmra.mrb[0].mxu0 %v193
  %v323 = vpop.f32.mrb[0].mxu0
  %v324 = vadd.f32 %v215, %v323
  %v325 = vpop.f32.mrb[0].mxu0
  %v326 = vpop.f32.mrb[0].mxu0
  %v327 = vadd.f32 %v215, %v326
  %v328 = vpop.f32.mrb[0].mxu0
  %329 = vdwg.mxu0
  %330 = vst [vmem:[%s5] sm:$0xff] %v300
  %331 = vst [vmem:[%s5 + $0x8] sm:$0xff] %v303
  %332 = vst [vmem:[%s5 + $0x10] sm:$0xff] %v308
  %333 = vst [vmem:[%s5 + $0x18] sm:$0xff] %v311
  %334 = vst [vmem:[%s5 + $0x20] sm:$0xff] %v316
  %335 = vst [vmem:[%s5 + $0x28] sm:$0xff] %v319
  %336 = vst [vmem:[%s5 + $0x30] sm:$0xff] %v324
  %337 = vst [vmem:[%s5 + $0x38] sm:$0xff] %v327
  // Predicated region
  $region22: #{net_forward.19} parent=0 // pred_check
    _
  $region23: #{net_forward.19} parent=0 // pred_check_branch
    %339 = sbr.rel (0) target = $region25
  $region24: #{net_forward.19} parent=0 // pred_region
    _
  $region25: #{net_forward.19} parent=0 // pred_fallthru
    _
  // Predicated region
  $region26: #{net_forward.19} parent=0 // pred_check
    _
  $region27: #{net_forward.19} parent=0 // pred_check_branch
    %341 = sbr.rel (0) target = $region29
  $region28: #{net_forward.19} parent=0 // pred_region
    _
  $region29: #{net_forward.19} parent=0 // pred_fallthru
    _

// kernel: net_forward.18
$region0: #{net_forward.18}
  #allocation0 [shape = 'u32[]', space=smem, size = 0x4, offset = 0x4, fixed_abs, tag = 'smem constant byte address 0x4 - core index']
  #allocation1 [shape = 'u32[144,128]{1,0:T(1,128)}', space=vmem, size = 0x12000, scoped, tag = 'internal scratch']
  %s0 = inlined_call_operand.vmem [shape: bf16[64,96], index: 0, kind: input, shape index: {}]
  %s1 = inlined_call_operand.vmem [shape: bf16[64,64], index: 1, kind: input, shape index: {}]
  %s2 = inlined_call_operand.vmem [shape: f32[64,3], index: 2, kind: input, shape index: {}]
  %s3 = inlined_call_operand.vmem [shape: bf16[96,256], index: 3, kind: input, shape index: {}]
  %s4 = inlined_call_operand.vmem [shape: bf16[64,256], index: 4, kind: input, shape index: {}]
  %s5 = inlined_call_operand.vmem [shape: f32[3,256], index: 5, kind: input, shape index: {}]
  %s6 = inlined_call_operand.vmem [shape: f32[1,256], index: 6, kind: input, shape index: {}]
  %s7 = inlined_call_operand.vmem [shape: bf16[256,96], index: 7, kind: input, shape index: {}]
  %s8 = inlined_call_operand.vmem [shape: f32[1,96], index: 8, kind: input, shape index: {}]
  %s9 = inlined_call_operand.vmem [shape: bf16[64,96], index: 9, kind: output, shape index: {}]
  %s10 = sld [smem:[#allocation0]]
  $region46: #{net_forward.18} parent=0
    _
  %s12 = ssub.s32 1, %s10
  %s13 = scalar_select 0, %s12, %s10
  // Predicated region
  $region2: #{net_forward.18} parent=0 // pred_check
    _
  $region3: #{net_forward.18} parent=0 // pred_check_branch
    %15 = sbr.rel (0) target = $region5
  $region4: #{net_forward.18} parent=0 // pred_region
    _
  $region5: #{net_forward.18} parent=0 // pred_fallthru
    _
  // Predicated region
  $region6: #{net_forward.18} parent=0 // pred_check
    _
  $region7: #{net_forward.18} parent=0 // pred_check_branch
    %17 = sbr.rel (0) target = $region9
  $region8: #{net_forward.18} parent=0 // pred_region
    _
  $region9: #{net_forward.18} parent=0 // pred_fallthru
    _
  // Predicated region
  $region10: #{net_forward.18} parent=0 // pred_check
    _
  $region11: #{net_forward.18} parent=0 // pred_check_branch
    %19 = sbr.rel (0) target = $region13
  $region12: #{net_forward.18} parent=0 // pred_region
    _
  $region13: #{net_forward.18} parent=0 // pred_fallthru
    _
  // Predicated region
  $region14: #{net_forward.18} parent=0 // pred_check
    _
  $region15: #{net_forward.18} parent=0 // pred_check_branch
    %21 = sbr.rel (0) target = $region17
  $region16: #{net_forward.18} parent=0 // pred_region
    _
  $region17: #{net_forward.18} parent=0 // pred_fallthru
    _
  // Predicated region
  $region18: #{net_forward.18} parent=0 // pred_check
    _
  $region19: #{net_forward.18} parent=0 // pred_check_branch
    %23 = sbr.rel (0) target = $region21
  $region20: #{net_forward.18} parent=0 // pred_region
    _
  $region21: #{net_forward.18} parent=0 // pred_fallthru
    _
  // Predicated region
  $region22: #{net_forward.18} parent=0 // pred_check
    _
  $region23: #{net_forward.18} parent=0 // pred_check_branch
    %25 = sbr.rel (0) target = $region25
  $region24: #{net_forward.18} parent=0 // pred_region
    _
  $region25: #{net_forward.18} parent=0 // pred_fallthru
    _
  // Predicated region
  $region26: #{net_forward.18} parent=0 // pred_check
    _
  $region27: #{net_forward.18} parent=0 // pred_check_branch
    %27 = sbr.rel (0) target = $region29
  $region28: #{net_forward.18} parent=0 // pred_region
    _
  $region29: #{net_forward.18} parent=0 // pred_fallthru
    _
  // Predicated region
  $region30: #{net_forward.18} parent=0 // pred_check
    _
  $region31: #{net_forward.18} parent=0 // pred_check_branch
    %29 = sbr.rel (0) target = $region33
  $region32: #{net_forward.18} parent=0 // pred_region
    _
  $region33: #{net_forward.18} parent=0 // pred_fallthru
    _
  // Predicated region
  $region34: #{net_forward.18} parent=0 // pred_check
    _
  $region35: #{net_forward.18} parent=0 // pred_check_branch
    %31 = sbr.rel (0) target = $region37
  $region36: #{net_forward.18} parent=0 // pred_region
    _
  $region37: #{net_forward.18} parent=0 // pred_fallthru
    _
  %v33 = vld [vmem:[%s0] sm:$0xf]
  %v34 = vld [vmem:[%s0 + $0x4] sm:$0xf]
  %v35 = vld [vmem:[%s0 + $0x8] sm:$0xf]
  %v36 = vld [vmem:[%s0 + $0xc] sm:$0xf]
  %v37 = vld [vmem:[%s0 + $0x10] sm:$0xf]
  %v38 = vld [vmem:[%s0 + $0x14] sm:$0xf]
  %v39 = vld [vmem:[%s0 + $0x18] sm:$0xf]
  %v40 = vld [vmem:[%s0 + $0x1c] sm:$0xf]
  %v41 = vld [vmem:[%s3] sm:$0xff]
  %v42 = vld [vmem:[%s3 + $0x8] sm:$0xff]
  %v43 = vld [vmem:[%s3 + $0x10] sm:$0xff]
  %v44 = vld [vmem:[%s3 + $0x18] sm:$0xff]
  %v45 = vld [vmem:[%s3 + $0x20] sm:$0xff]
  %v46 = vld [vmem:[%s3 + $0x28] sm:$0xff]
  %v47 = vld [vmem:[%s3 + $0x30] sm:$0xff]
  %v48 = vld [vmem:[%s3 + $0x38] sm:$0xff]
  %v49 = vld [vmem:[%s3 + $0x40] sm:$0xff]
  %v50 = vld [vmem:[%s3 + $0x48] sm:$0xff]
  %v51 = vld [vmem:[%s3 + $0x50] sm:$0xff]
  %v52 = vld [vmem:[%s3 + $0x58] sm:$0xff]
  %v53 = vld [vmem:[%s1] sm:$0xf]
  %v54 = vld [vmem:[%s1 + $0x4] sm:$0xf]
  %v55 = vld [vmem:[%s1 + $0x8] sm:$0xf]
  %v56 = vld [vmem:[%s1 + $0xc] sm:$0xf]
  %v57 = vld [vmem:[%s1 + $0x10] sm:$0xf]
  %v58 = vld [vmem:[%s1 + $0x14] sm:$0xf]
  %v59 = vld [vmem:[%s1 + $0x18] sm:$0xf]
  %v60 = vld [vmem:[%s1 + $0x1c] sm:$0xf]
  %v61 = vld [vmem:[%s4] sm:$0xff]
  %v62 = vld [vmem:[%s4 + $0x8] sm:$0xff]
  %v63 = vld [vmem:[%s4 + $0x10] sm:$0xff]
  %v64 = vld [vmem:[%s4 + $0x18] sm:$0xff]
  %v65 = vld [vmem:[%s4 + $0x20] sm:$0xff]
  %v66 = vld [vmem:[%s4 + $0x28] sm:$0xff]
  %v67 = vld [vmem:[%s4 + $0x30] sm:$0xff]
  %v68 = vld [vmem:[%s4 + $0x38] sm:$0xff]
  %v77 = vunpack.c.l.b16 %v53
  %v78 = vunpack.c.l.b16 %v54
  %v79 = vunpack.c.l.b16 %v55
  %v80 = vunpack.c.l.b16 %v56
  %v81 = vunpack.c.l.b16 %v57
  %v82 = vunpack.c.l.b16 %v58
  %v83 = vunpack.c.l.b16 %v59
  %v84 = vunpack.c.l.b16 %v60
  %v85 = vpack.c.b16 %v78, %v77
  %v86 = vpack.c.b16 %v80, %v79
  %v87 = vpack.c.b16 %v82, %v81
  %v88 = vpack.c.b16 %v84, %v83
  %v97 = vunpack.c.l.b16 %v61
  %v98 = vunpack.c.h.b16 %v61
  %v99 = vunpack.c.l.b16 %v62
  %v100 = vunpack.c.h.b16 %v62
  %v101 = vunpack.c.l.b16 %v63
  %v102 = vunpack.c.h.b16 %v63
  %v103 = vunpack.c.l.b16 %v64
  %v104 = vunpack.c.h.b16 %v64
  %v105 = vunpack.c.l.b16 %v65
  %v106 = vunpack.c.h.b16 %v65
  %v107 = vunpack.c.l.b16 %v66
  %v108 = vunpack.c.h.b16 %v66
  %v109 = vunpack.c.l.b16 %v67
  %v110 = vunpack.c.h.b16 %v67
  %v111 = vunpack.c.l.b16 %v68
  %v112 = vunpack.c.h.b16 %v68
  %v113 = vpack.c.b16 %v99, %v97
  %v114 = vpack.c.b16 %v100, %v98
  %v115 = vpack.c.b16 %v103, %v101
  %v116 = vpack.c.b16 %v104, %v102
  %v117 = vpack.c.b16 %v107, %v105
  %v118 = vpack.c.b16 %v108, %v106
  %v119 = vpack.c.b16 %v111, %v109
  %v120 = vpack.c.b16 %v112, %v110
  %vm129 = vcmask 523264
  %v131 = vsel %vm129, %v85, 0
  %v134 = vsel %vm129, %v86, 0
  %v137 = vsel %vm129, %v87, 0
  %v140 = vsel %vm129, %v88, 0
  %142 = vmatprep.subr.bf16.mxu0 %v114
  %143 = vmatpush1.bf16.msra.mxu0 %v113
  %144 = vmatprep.subr.bf16.mxu0 %v116
  %145 = vmatpush1.bf16.msra.mxu0 %v115
  %146 = vmatprep.subr.bf16.mxu0 %v118
  %147 = vmatpush1.bf16.msra.mxu0 %v117
  %148 = vmatprep.subr.bf16.mxu0 %v120
  %149 = vmatpush1.bf16.msra.mxu0 %v119
  %150 = vmatprep.subr.bf16.mxu0 0
  %151 = vmatpush1.bf16.msra.mxu0 0
  %152 = vmatprep.subr.bf16.mxu0 0
  %153 = vmatpush1.bf16.msra.mxu0 0
  %154 = vmatprep.subr.bf16.mxu0 0
  %155 = vmatpush1.bf16.msra.mxu0 0
  %156 = vmatprep.subr.bf16.mxu0 0
  %157 = vmatpush1.bf16.msra.mxu0 0
  %158 = vmatprep.subr.bf16.mxu0 0
  %159 = vmatpush1.bf16.msra.mxu0 0
  %160 = vmatprep.subr.bf16.mxu0 0
  %161 = vmatpush1.bf16.msra.mxu0 0
  %162 = vmatprep.subr.bf16.mxu0 0
  %163 = vmatpush1.bf16.msra.mxu0 0
  %164 = vmatprep.subr.bf16.mxu0 0
  %165 = vmatpush1.bf16.msra.mxu0 0
  %166 = vmatprep.subr.bf16.mxu0 0
  %167 = vmatpush1.bf16.msra.mxu0 0
  %168 = vmatprep.subr.bf16.mxu0 0
  %169 = vmatpush1.bf16.msra.mxu0 0
  %170 = vmatprep.subr.bf16.mxu0 0
  %171 = vmatpush1.bf16.msra.mxu0 0
  %172 = vmatprep.subr.bf16.mxu0 0
  %173 = vmatpush1.bf16.msra.mxu0 0
  %174 = vmatprep.mubr.bf16.mxu0 0
  %175 = vmatmul.mubr.bf16.gmra.mrb[0].mxu0 %v131
  %v176 = vpop.f32.mrb[0].mxu0
  %v177 = vadd.f32 0.0, %v176
  %v178 = vpop.f32.mrb[0].mxu0
  %v179 = vadd.f32 0.0, %v178
  %v180 = vpop.f32.mrb[0].mxu0
  %v181 = vadd.f32 0.0, %v180
  %v182 = vpop.f32.mrb[0].mxu0
  %v183 = vadd.f32 0.0, %v182
  %184 = vmatprep.mubr.bf16.mxu0 0
  %185 = vmatmul.mubr.bf16.gmra.mrb[0].mxu0 %v134
  %v186 = vpop.f32.mrb[0].mxu0
  %v187 = vadd.f32 0.0, %v186
  %v188 = vpop.f32.mrb[0].mxu0
  %v189 = vadd.f32 0.0, %v188
  %v190 = vpop.f32.mrb[0].mxu0
  %v191 = vadd.f32 0.0, %v190
  %v192 = vpop.f32.mrb[0].mxu0
  %v193 = vadd.f32 0.0, %v192
  %194 = vmatprep.mubr.bf16.mxu0 0
  %195 = vmatmul.mubr.bf16.gmra.mrb[0].mxu0 %v137
  %v196 = vpop.f32.mrb[0].mxu0
  %v197 = vadd.f32 0.0, %v196
  %v198 = vpop.f32.mrb[0].mxu0
  %v199 = vadd.f32 0.0, %v198
  %v200 = vpop.f32.mrb[0].mxu0
  %v201 = vadd.f32 0.0, %v200
  %v202 = vpop.f32.mrb[0].mxu0
  %v203 = vadd.f32 0.0, %v202
  %204 = vmatprep.mubr.bf16.mxu0 0
  %205 = vmatmul.mubr.bf16.gmra.mrb[0].mxu0 %v140
  %v206 = vpop.f32.mrb[0].mxu0
  %v207 = vadd.f32 0.0, %v206
  %v208 = vpop.f32.mrb[0].mxu0
  %v209 = vadd.f32 0.0, %v208
  %v210 = vpop.f32.mrb[0].mxu0
  %v211 = vadd.f32 0.0, %v210
  %v212 = vpop.f32.mrb[0].mxu0
  %v213 = vadd.f32 0.0, %v212
  %214 = vdwg.mxu0
  %v223 = vunpack.c.l.b16 %v33
  %v224 = vunpack.c.l.b16 %v34
  %v225 = vunpack.c.l.b16 %v35
  %v226 = vunpack.c.l.b16 %v36
  %v227 = vunpack.c.l.b16 %v37
  %v228 = vunpack.c.l.b16 %v38
  %v229 = vunpack.c.l.b16 %v39
  %v230 = vunpack.c.l.b16 %v40
  %v231 = vpack.c.b16 %v224, %v223
  %v232 = vpack.c.b16 %v226, %v225
  %v233 = vpack.c.b16 %v228, %v227
  %v234 = vpack.c.b16 %v230, %v229
  %v247 = vunpack.c.l.b16 %v41
  %v248 = vunpack.c.h.b16 %v41
  %v249 = vunpack.c.l.b16 %v42
  %v250 = vunpack.c.h.b16 %v42
  %v251 = vunpack.c.l.b16 %v43
  %v252 = vunpack.c.h.b16 %v43
  %v253 = vunpack.c.l.b16 %v44
  %v254 = vunpack.c.h.b16 %v44
  %v255 = vunpack.c.l.b16 %v45
  %v256 = vunpack.c.h.b16 %v45
  %v257 = vunpack.c.l.b16 %v46
  %v258 = vunpack.c.h.b16 %v46
  %v259 = vunpack.c.l.b16 %v47
  %v260 = vunpack.c.h.b16 %v47
  %v261 = vunpack.c.l.b16 %v48
  %v262 = vunpack.c.h.b16 %v48
  %v263 = vunpack.c.l.b16 %v49
  %v264 = vunpack.c.h.b16 %v49
  %v265 = vunpack.c.l.b16 %v50
  %v266 = vunpack.c.h.b16 %v50
  %v267 = vunpack.c.l.b16 %v51
  %v268 = vunpack.c.h.b16 %v51
  %v269 = vunpack.c.l.b16 %v52
  %v270 = vunpack.c.h.b16 %v52
  %v271 = vpack.c.b16 %v249, %v247
  %v272 = vpack.c.b16 %v250, %v248
  %v273 = vpack.c.b16 %v253, %v251
  %v274 = vpack.c.b16 %v254, %v252
  %v275 = vpack.c.b16 %v257, %v255
  %v276 = vpack.c.b16 %v258, %v256
  %v277 = vpack.c.b16 %v261, %v259
  %v278 = vpack.c.b16 %v262, %v260
  %v279 = vpack.c.b16 %v265, %v263
  %v280 = vpack.c.b16 %v266, %v264
  %v281 = vpack.c.b16 %v269, %v267
  %v282 = vpack.c.b16 %v270, %v268
  %vm295 = vcmask 785408
  %v297 = vsel %vm295, %v231, 0
  %v300 = vsel %vm295, %v232, 0
  %v303 = vsel %vm295, %v233, 0
  %v306 = vsel %vm295, %v234, 0
  %308 = vmatprep.subr.bf16.mxu0 %v272
  %309 = vmatpush1.bf16.msra.mxu0 %v271
  %310 = vmatprep.subr.bf16.mxu0 %v274
  %311 = vmatpush1.bf16.msra.mxu0 %v273
  %312 = vmatprep.subr.bf16.mxu0 %v276
  %313 = vmatpush1.bf16.msra.mxu0 %v275
  %314 = vmatprep.subr.bf16.mxu0 %v278
  %315 = vmatpush1.bf16.msra.mxu0 %v277
  %316 = vmatprep.subr.bf16.mxu0 %v280
  %317 = vmatpush1.bf16.msra.mxu0 %v279
  %318 = vmatprep.subr.bf16.mxu0 %v282
  %319 = vmatpush1.bf16.msra.mxu0 %v281
  %320 = vmatprep.subr.bf16.mxu0 0
  %321 = vmatpush1.bf16.msra.mxu0 0
  %322 = vmatprep.subr.bf16.mxu0 0
  %323 = vmatpush1.bf16.msra.mxu0 0
  %324 = vmatprep.subr.bf16.mxu0 0
  %325 = vmatpush1.bf16.msra.mxu0 0
  %326 = vmatprep.subr.bf16.mxu0 0
  %327 = vmatpush1.bf16.msra.mxu0 0
  %328 = vmatprep.subr.bf16.mxu0 0
  %329 = vmatpush1.bf16.msra.mxu0 0
  %330 = vmatprep.subr.bf16.mxu0 0
  %331 = vmatpush1.bf16.msra.mxu0 0
  %332 = vmatprep.subr.bf16.mxu0 0
  %333 = vmatpush1.bf16.msra.mxu0 0
  %334 = vmatprep.subr.bf16.mxu0 0
  %335 = vmatpush1.bf16.msra.mxu0 0
  %336 = vmatprep.subr.bf16.mxu0 0
  %337 = vmatpush1.bf16.msra.mxu0 0
  %338 = vmatprep.subr.bf16.mxu0 0
  %339 = vmatpush1.bf16.msra.mxu0 0
  %340 = vmatprep.mubr.bf16.mxu0 0
  %341 = vmatmul.mubr.bf16.gmra.mrb[0].mxu0 %v297
  %v342 = vpop.f32.mrb[0].mxu0
  %v343 = vadd.f32 %v177, %v342
  %v344 = vpop.f32.mrb[0].mxu0
  %v345 = vadd.f32 %v179, %v344
  %v346 = vpop.f32.mrb[0].mxu0
  %v347 = vadd.f32 %v181, %v346
  %v348 = vpop.f32.mrb[0].mxu0
  %v349 = vadd.f32 %v183, %v348
  %350 = vmatprep.mubr.bf16.mxu0 0
  %351 = vmatmul.mubr.bf16.gmra.mrb[0].mxu0 %v300
  %v352 = vpop.f32.mrb[0].mxu0
  %v353 = vadd.f32 %v187, %v352
  %v354 = vpop.f32.mrb[0].mxu0
  %v355 = vadd.f32 %v189, %v354
  %v356 = vpop.f32.mrb[0].mxu0
  %v357 = vadd.f32 %v191, %v356
  %v358 = vpop.f32.mrb[0].mxu0
  %v359 = vadd.f32 %v193, %v358
  %360 = vmatprep.mubr.bf16.mxu0 0
  %361 = vmatmul.mubr.bf16.gmra.mrb[0].mxu0 %v303
  %v362 = vpop.f32.mrb[0].mxu0
  %v363 = vadd.f32 %v197, %v362
  %v364 = vpop.f32.mrb[0].mxu0
  %v365 = vadd.f32 %v199, %v364
  %v366 = vpop.f32.mrb[0].mxu0
  %v367 = vadd.f32 %v201, %v366
  %v368 = vpop.f32.mrb[0].mxu0
  %v369 = vadd.f32 %v203, %v368
  %370 = vmatprep.mubr.bf16.mxu0 0
  %371 = vmatmul.mubr.bf16.gmra.mrb[0].mxu0 %v306
  %v372 = vpop.f32.mrb[0].mxu0
  %v373 = vadd.f32 %v207, %v372
  %v374 = vpop.f32.mrb[0].mxu0
  %v375 = vadd.f32 %v209, %v374
  %v376 = vpop.f32.mrb[0].mxu0
  %v377 = vadd.f32 %v211, %v376
  %v378 = vpop.f32.mrb[0].mxu0
  %v379 = vadd.f32 %v213, %v378
  %380 = vdwg.mxu0
  %v381 = vld [vmem:[%s2] sm:$0xff]
  %v382 = vld [vmem:[%s2 + $0x8] sm:$0xff]
  %v383 = vld [vmem:[%s2 + $0x10] sm:$0xff]
  %v384 = vld [vmem:[%s2 + $0x18] sm:$0xff]
  %v385 = vld [vmem:[%s2 + $0x20] sm:$0xff]
  %v386 = vld [vmem:[%s2 + $0x28] sm:$0xff]
  %v387 = vld [vmem:[%s2 + $0x30] sm:$0xff]
  %v388 = vld [vmem:[%s2 + $0x38] sm:$0xff]
  %v389 = vld [vmem:[%s5] sm:$0x77]
  %391 = vset.pattern.permute.xlu0 0
  %392 = vperm.xlu0 %391, %v381
  %v393 = vpop.permute.xlu0 %392
  %396 = vset.pattern.permute.xlu0 0
  %397 = vperm.xlu0 %396, %v382
  %v398 = vpop.permute.xlu0 %397
  %401 = vset.pattern.permute.xlu0 0
  %402 = vperm.xlu0 %401, %v383
  %v403 = vpop.permute.xlu0 %402
  %406 = vset.pattern.permute.xlu0 0
  %407 = vperm.xlu0 %406, %v384
  %v408 = vpop.permute.xlu0 %407
  %411 = vset.pattern.permute.xlu0 0
  %412 = vperm.xlu0 %411, %v385
  %v413 = vpop.permute.xlu0 %412
  %416 = vset.pattern.permute.xlu0 0
  %417 = vperm.xlu0 %416, %v386
  %v418 = vpop.permute.xlu0 %417
  %421 = vset.pattern.permute.xlu0 0
  %422 = vperm.xlu0 %421, %v387
  %v423 = vpop.permute.xlu0 %422
  %426 = vset.pattern.permute.xlu0 0
  %427 = vperm.xlu0 %426, %v388
  %v428 = vpop.permute.xlu0 %427
  %v431 = vlaneseq
  %v432 = vshrl.u32 %v431, 7
  %v433 = vsub.s32 0, %v432
  %v434 = vrot.slane %v389, %v433
  %v435 = vlaneseq
  %v436 = vshrl.u32 %v435, 7
  %v437 = vsub.s32 4, %v436
  %v438 = vrot.slane %v389, %v437
  %v441 = vlaneseq
  %v442 = vshrl.u32 %v441, 7
  %v443 = vsub.s32 0, %v442
  %v444 = vrot.slane %v434, %v443
  %v445 = vlaneseq
  %v446 = vshrl.u32 %v445, 7
  %v447 = vsub.s32 0, %v446
  %v448 = vrot.slane %v438, %v447
  %v449 = vmul.f32 %v393, %v444
  %v450 = vmul.f32 %v393, %v448
  %v451 = vmul.f32 %v398, %v444
  %v452 = vmul.f32 %v398, %v448
  %v453 = vmul.f32 %v403, %v444
  %v454 = vmul.f32 %v403, %v448
  %v455 = vmul.f32 %v408, %v444
  %v456 = vmul.f32 %v408, %v448
  %v457 = vmul.f32 %v413, %v444
  %v458 = vmul.f32 %v413, %v448
  %v459 = vmul.f32 %v418, %v444
  %v460 = vmul.f32 %v418, %v448
  %v461 = vmul.f32 %v423, %v444
  %v462 = vmul.f32 %v423, %v448
  %v463 = vmul.f32 %v428, %v444
  %v464 = vmul.f32 %v428, %v448
  %v465 = vadd.f32 %v343, %v449
  %v466 = vadd.f32 %v345, %v450
  %v467 = vadd.f32 %v347, %v451
  %v468 = vadd.f32 %v349, %v452
  %v469 = vadd.f32 %v353, %v453
  %v470 = vadd.f32 %v355, %v454
  %v471 = vadd.f32 %v357, %v455
  %v472 = vadd.f32 %v359, %v456
  %v473 = vadd.f32 %v363, %v457
  %v474 = vadd.f32 %v365, %v458
  %v475 = vadd.f32 %v367, %v459
  %v476 = vadd.f32 %v369, %v460
  %v477 = vadd.f32 %v373, %v461
  %v478 = vadd.f32 %v375, %v462
  %v479 = vadd.f32 %v377, %v463
  %v480 = vadd.f32 %v379, %v464
  %481 = vset.pattern.permute.xlu0 1
  %482 = vperm.xlu0 %481, %v381
  %v483 = vpop.permute.xlu0 %482
  %485 = vset.pattern.permute.xlu0 1
  %486 = vperm.xlu0 %485, %v382
  %v487 = vpop.permute.xlu0 %486
  %489 = vset.pattern.permute.xlu0 1
  %490 = vperm.xlu0 %489, %v383
  %v491 = vpop.permute.xlu0 %490
  %493 = vset.pattern.permute.xlu0 1
  %494 = vperm.xlu0 %493, %v384
  %v495 = vpop.permute.xlu0 %494
  %497 = vset.pattern.permute.xlu0 1
  %498 = vperm.xlu0 %497, %v385
  %v499 = vpop.permute.xlu0 %498
  %501 = vset.pattern.permute.xlu0 1
  %502 = vperm.xlu0 %501, %v386
  %v503 = vpop.permute.xlu0 %502
  %505 = vset.pattern.permute.xlu0 1
  %506 = vperm.xlu0 %505, %v387
  %v507 = vpop.permute.xlu0 %506
  %509 = vset.pattern.permute.xlu0 1
  %510 = vperm.xlu0 %509, %v388
  %v511 = vpop.permute.xlu0 %510
  %v513 = vlaneseq
  %v514 = vshrl.u32 %v513, 7
  %v515 = vsub.s32 1, %v514
  %v516 = vrot.slane %v389, %v515
  %v517 = vlaneseq
  %v518 = vshrl.u32 %v517, 7
  %v519 = vsub.s32 5, %v518
  %v520 = vrot.slane %v389, %v519
  %v523 = vlaneseq
  %v524 = vshrl.u32 %v523, 7
  %v525 = vsub.s32 1, %v524
  %v526 = vrot.slane %v516, %v525
  %v527 = vlaneseq
  %v528 = vshrl.u32 %v527, 7
  %v529 = vsub.s32 1, %v528
  %v530 = vrot.slane %v520, %v529
  %v531 = vmul.f32 %v483, %v526
  %v532 = vmul.f32 %v483, %v530
  %v533 = vmul.f32 %v487, %v526
  %v534 = vmul.f32 %v487, %v530
  %v535 = vmul.f32 %v491, %v526
  %v536 = vmul.f32 %v491, %v530
  %v537 = vmul.f32 %v495, %v526
  %v538 = vmul.f32 %v495, %v530
  %v539 = vmul.f32 %v499, %v526
  %v540 = vmul.f32 %v499, %v530
  %v541 = vmul.f32 %v503, %v526
  %v542 = vmul.f32 %v503, %v530
  %v543 = vmul.f32 %v507, %v526
  %v544 = vmul.f32 %v507, %v530
  %v545 = vmul.f32 %v511, %v526
  %v546 = vmul.f32 %v511, %v530
  %v547 = vadd.f32 %v465, %v531
  %v548 = vadd.f32 %v466, %v532
  %v549 = vadd.f32 %v467, %v533
  %v550 = vadd.f32 %v468, %v534
  %v551 = vadd.f32 %v469, %v535
  %v552 = vadd.f32 %v470, %v536
  %v553 = vadd.f32 %v471, %v537
  %v554 = vadd.f32 %v472, %v538
  %v555 = vadd.f32 %v473, %v539
  %v556 = vadd.f32 %v474, %v540
  %v557 = vadd.f32 %v475, %v541
  %v558 = vadd.f32 %v476, %v542
  %v559 = vadd.f32 %v477, %v543
  %v560 = vadd.f32 %v478, %v544
  %v561 = vadd.f32 %v479, %v545
  %v562 = vadd.f32 %v480, %v546
  %563 = vset.pattern.permute.xlu0 2
  %564 = vperm.xlu0 %563, %v381
  %v565 = vpop.permute.xlu0 %564
  %567 = vset.pattern.permute.xlu0 2
  %568 = vperm.xlu0 %567, %v382
  %v569 = vpop.permute.xlu0 %568
  %571 = vset.pattern.permute.xlu0 2
  %572 = vperm.xlu0 %571, %v383
  %v573 = vpop.permute.xlu0 %572
  %575 = vset.pattern.permute.xlu0 2
  %576 = vperm.xlu0 %575, %v384
  %v577 = vpop.permute.xlu0 %576
  %579 = vset.pattern.permute.xlu0 2
  %580 = vperm.xlu0 %579, %v385
  %v581 = vpop.permute.xlu0 %580
  %583 = vset.pattern.permute.xlu0 2
  %584 = vperm.xlu0 %583, %v386
  %v585 = vpop.permute.xlu0 %584
  %587 = vset.pattern.permute.xlu0 2
  %588 = vperm.xlu0 %587, %v387
  %v589 = vpop.permute.xlu0 %588
  %591 = vset.pattern.permute.xlu0 2
  %592 = vperm.xlu0 %591, %v388
  %v593 = vpop.permute.xlu0 %592
  %v595 = vlaneseq
  %v596 = vshrl.u32 %v595, 7
  %v597 = vsub.s32 2, %v596
  %v598 = vrot.slane %v389, %v597
  %v599 = vlaneseq
  %v600 = vshrl.u32 %v599, 7
  %v601 = vsub.s32 6, %v600
  %v602 = vrot.slane %v389, %v601
  %v605 = vlaneseq
  %v606 = vshrl.u32 %v605, 7
  %v607 = vsub.s32 2, %v606
  %v608 = vrot.slane %v598, %v607
  %v609 = vlaneseq
  %v610 = vshrl.u32 %v609, 7
  %v611 = vsub.s32 2, %v610
  %v612 = vrot.slane %v602, %v611
  %v613 = vmul.f32 %v565, %v608
  %v614 = vmul.f32 %v565, %v612
  %v615 = vmul.f32 %v569, %v608
  %v616 = vmul.f32 %v569, %v612
  %v617 = vmul.f32 %v573, %v608
  %v618 = vmul.f32 %v573, %v612
  %v619 = vmul.f32 %v577, %v608
  %v620 = vmul.f32 %v577, %v612
  %v621 = vmul.f32 %v581, %v608
  %v622 = vmul.f32 %v581, %v612
  %v623 = vmul.f32 %v585, %v608
  %v624 = vmul.f32 %v585, %v612
  %v625 = vmul.f32 %v589, %v608
  %v626 = vmul.f32 %v589, %v612
  %v627 = vmul.f32 %v593, %v608
  %v628 = vmul.f32 %v593, %v612
  %v629 = vadd.f32 %v547, %v613
  %v630 = vadd.f32 %v548, %v614
  %v631 = vadd.f32 %v549, %v615
  %v632 = vadd.f32 %v550, %v616
  %v633 = vadd.f32 %v551, %v617
  %v634 = vadd.f32 %v552, %v618
  %v635 = vadd.f32 %v553, %v619
  %v636 = vadd.f32 %v554, %v620
  %v637 = vadd.f32 %v555, %v621
  %v638 = vadd.f32 %v556, %v622
  %v639 = vadd.f32 %v557, %v623
  %v640 = vadd.f32 %v558, %v624
  %v641 = vadd.f32 %v559, %v625
  %v642 = vadd.f32 %v560, %v626
  %v643 = vadd.f32 %v561, %v627
  %v644 = vadd.f32 %v562, %v628
  %v645 = vld [vmem:[%s6] sm:$0x3]
  %v647 = vlaneseq
  %v648 = vshrl.u32 %v647, 7
  %v649 = vsub.s32 0, %v648
  %v650 = vrot.slane %v645, %v649
  %v651 = vlaneseq
  %v652 = vshrl.u32 %v651, 7
  %v653 = vsub.s32 1, %v652
  %v654 = vrot.slane %v645, %v653
  %v657 = vadd.f32 %v629, %v650
  %v658 = vadd.f32 %v630, %v654
  %v659 = vadd.f32 %v631, %v650
  %v660 = vadd.f32 %v632, %v654
  %v661 = vadd.f32 %v633, %v650
  %v662 = vadd.f32 %v634, %v654
  %v663 = vadd.f32 %v635, %v650
  %v664 = vadd.f32 %v636, %v654
  %v665 = vadd.f32 %v637, %v650
  %v666 = vadd.f32 %v638, %v654
  %v667 = vadd.f32 %v639, %v650
  %v668 = vadd.f32 %v640, %v654
  %v669 = vadd.f32 %v641, %v650
  %v670 = vadd.f32 %v642, %v654
  %v671 = vadd.f32 %v643, %v650
  %v672 = vadd.f32 %v644, %v654
  %v673 = vmax.f32 %v657, 0.0
  %v674 = vmax.f32 %v658, 0.0
  %v675 = vmax.f32 %v659, 0.0
  %v676 = vmax.f32 %v660, 0.0
  %v677 = vmax.f32 %v661, 0.0
  %v678 = vmax.f32 %v662, 0.0
  %v679 = vmax.f32 %v663, 0.0
  %v680 = vmax.f32 %v664, 0.0
  %v681 = vmax.f32 %v665, 0.0
  %v682 = vmax.f32 %v666, 0.0
  %v683 = vmax.f32 %v667, 0.0
  %v684 = vmax.f32 %v668, 0.0
  %v685 = vmax.f32 %v669, 0.0
  %v686 = vmax.f32 %v670, 0.0
  %v687 = vmax.f32 %v671, 0.0
  %v688 = vmax.f32 %v672, 0.0
  %v689 = vpack.c.bf16 %v675, %v673
  %v690 = vpack.c.bf16 %v676, %v674
  %v691 = vpack.c.bf16 %v679, %v677
  %v692 = vpack.c.bf16 %v680, %v678
  %v693 = vpack.c.bf16 %v683, %v681
  %v694 = vpack.c.bf16 %v684, %v682
  %v695 = vpack.c.bf16 %v687, %v685
  %v696 = vpack.c.bf16 %v688, %v686
  %v697 = vld [vmem:[%s7] sm:$0xf]
  %v698 = vld [vmem:[%s7 + $0x4] sm:$0xf]
  %v699 = vld [vmem:[%s7 + $0x8] sm:$0xf]
  %v700 = vld [vmem:[%s7 + $0xc] sm:$0xf]
  %v701 = vld [vmem:[%s7 + $0x10] sm:$0xf]
  %v702 = vld [vmem:[%s7 + $0x14] sm:$0xf]
  %v703 = vld [vmem:[%s7 + $0x18] sm:$0xf]
  %v704 = vld [vmem:[%s7 + $0x1c] sm:$0xf]
  %v705 = vld [vmem:[%s7 + $0x20] sm:$0xf]
  %v706 = vld [vmem:[%s7 + $0x24] sm:$0xf]
  %v707 = vld [vmem:[%s7 + $0x28] sm:$0xf]
  %v708 = vld [vmem:[%s7 + $0x2c] sm:$0xf]
  %v709 = vld [vmem:[%s7 + $0x30] sm:$0xf]
  %v710 = vld [vmem:[%s7 + $0x34] sm:$0xf]
  %v711 = vld [vmem:[%s7 + $0x38] sm:$0xf]
  %v712 = vld [vmem:[%s7 + $0x3c] sm:$0xf]
  %v713 = vld [vmem:[%s7 + $0x40] sm:$0xf]
  %v714 = vld [vmem:[%s7 + $0x44] sm:$0xf]
  %v715 = vld [vmem:[%s7 + $0x48] sm:$0xf]
  %v716 = vld [vmem:[%s7 + $0x4c] sm:$0xf]
  %v717 = vld [vmem:[%s7 + $0x50] sm:$0xf]
  %v718 = vld [vmem:[%s7 + $0x54] sm:$0xf]
  %v719 = vld [vmem:[%s7 + $0x58] sm:$0xf]
  %v720 = vld [vmem:[%s7 + $0x5c] sm:$0xf]
  %v721 = vld [vmem:[%s7 + $0x60] sm:$0xf]
  %v722 = vld [vmem:[%s7 + $0x64] sm:$0xf]
  %v723 = vld [vmem:[%s7 + $0x68] sm:$0xf]
  %v724 = vld [vmem:[%s7 + $0x6c] sm:$0xf]
  %v725 = vld [vmem:[%s7 + $0x70] sm:$0xf]
  %v726 = vld [vmem:[%s7 + $0x74] sm:$0xf]
  %v727 = vld [vmem:[%s7 + $0x78] sm:$0xf]
  %v728 = vld [vmem:[%s7 + $0x7c] sm:$0xf]
  %v729 = vld [vmem:[%s8] sm:$0x1]
  %v731 = vlaneseq
  %v732 = vshrl.u32 %v731, 7
  %v733 = vsub.s32 0, %v732
  %v734 = vrot.slane %v729, %v733
  %v768 = vunpack.c.l.b16 %v697
  %v769 = vunpack.c.l.b16 %v698
  %v770 = vunpack.c.l.b16 %v699
  %v771 = vunpack.c.l.b16 %v700
  %v772 = vunpack.c.l.b16 %v701
  %v773 = vunpack.c.l.b16 %v702
  %v774 = vunpack.c.l.b16 %v703
  %v775 = vunpack.c.l.b16 %v704
  %v776 = vunpack.c.l.b16 %v705
  %v777 = vunpack.c.l.b16 %v706
  %v778 = vunpack.c.l.b16 %v707
  %v779 = vunpack.c.l.b16 %v708
  %v780 = vunpack.c.l.b16 %v709
  %v781 = vunpack.c.l.b16 %v710
  %v782 = vunpack.c.l.b16 %v711
  %v783 = vunpack.c.l.b16 %v712
  %v784 = vunpack.c.l.b16 %v713
  %v785 = vunpack.c.l.b16 %v714
  %v786 = vunpack.c.l.b16 %v715
  %v787 = vunpack.c.l.b16 %v716
  %v788 = vunpack.c.l.b16 %v717
  %v789 = vunpack.c.l.b16 %v718
  %v790 = vunpack.c.l.b16 %v719
  %v791 = vunpack.c.l.b16 %v720
  %v792 = vunpack.c.l.b16 %v721
  %v793 = vunpack.c.l.b16 %v722
  %v794 = vunpack.c.l.b16 %v723
  %v795 = vunpack.c.l.b16 %v724
  %v796 = vunpack.c.l.b16 %v725
  %v797 = vunpack.c.l.b16 %v726
  %v798 = vunpack.c.l.b16 %v727
  %v799 = vunpack.c.l.b16 %v728
  %v800 = vpack.c.b16 %v769, %v768
  %v801 = vpack.c.b16 %v771, %v770
  %v802 = vpack.c.b16 %v773, %v772
  %v803 = vpack.c.b16 %v775, %v774
  %v804 = vpack.c.b16 %v777, %v776
  %v805 = vpack.c.b16 %v779, %v778
  %v806 = vpack.c.b16 %v781, %v780
  %v807 = vpack.c.b16 %v783, %v782
  %v808 = vpack.c.b16 %v785, %v784
  %v809 = vpack.c.b16 %v787, %v786
  %v810 = vpack.c.b16 %v789, %v788
  %v811 = vpack.c.b16 %v791, %v790
  %v812 = vpack.c.b16 %v793, %v792
  %v813 = vpack.c.b16 %v795, %v794
  %v814 = vpack.c.b16 %v797, %v796
  %v815 = vpack.c.b16 %v799, %v798
  %832 = vmatprep.subr.bf16.mxu0 0
  %833 = vmatpush1.bf16.msra.mxu0 %v800
  %834 = vmatprep.subr.bf16.mxu0 0
  %835 = vmatpush1.bf16.msra.mxu0 %v801
  %836 = vmatprep.subr.bf16.mxu0 0
  %837 = vmatpush1.bf16.msra.mxu0 %v802
  %838 = vmatprep.subr.bf16.mxu0 0
  %839 = vmatpush1.bf16.msra.mxu0 %v803
  %840 = vmatprep.subr.bf16.mxu0 0
  %841 = vmatpush1.bf16.msra.mxu0 %v804
  %842 = vmatprep.subr.bf16.mxu0 0
  %843 = vmatpush1.bf16.msra.mxu0 %v805
  %844 = vmatprep.subr.bf16.mxu0 0
  %845 = vmatpush1.bf16.msra.mxu0 %v806
  %846 = vmatprep.subr.bf16.mxu0 0
  %847 = vmatpush1.bf16.msra.mxu0 %v807
  %848 = vmatprep.subr.bf16.mxu0 0
  %849 = vmatpush1.bf16.msra.mxu0 %v808
  %850 = vmatprep.subr.bf16.mxu0 0
  %851 = vmatpush1.bf16.msra.mxu0 %v809
  %852 = vmatprep.subr.bf16.mxu0 0
  %853 = vmatpush1.bf16.msra.mxu0 %v810
  %854 = vmatprep.subr.bf16.mxu0 0
  %855 = vmatpush1.bf16.msra.mxu0 %v811
  %856 = vmatprep.subr.bf16.mxu0 0
  %857 = vmatpush1.bf16.msra.mxu0 %v812
  %858 = vmatprep.subr.bf16.mxu0 0
  %859 = vmatpush1.bf16.msra.mxu0 %v813
  %860 = vmatprep.subr.bf16.mxu0 0
  %861 = vmatpush1.bf16.msra.mxu0 %v814
  %862 = vmatprep.subr.bf16.mxu0 0
  %863 = vmatpush1.bf16.msra.mxu0 %v815
  %864 = vmatprep.mubr.bf16.mxu0 %v690
  %865 = vmatmul.mubr.bf16.gmra.mrb[0].mxu0 %v689
  %v866 = vpop.f32.mrb[0].mxu0
  %v867 = vadd.f32 %v734, %v866
  %v868 = vpop.f32.mrb[0].mxu0
  %v869 = vpop.f32.mrb[0].mxu0
  %v870 = vadd.f32 %v734, %v869
  %v871 = vpop.f32.mrb[0].mxu0
  %872 = vmatprep.mubr.bf16.mxu0 %v692
  %873 = vmatmul.mubr.bf16.gmra.mrb[0].mxu0 %v691
  %v874 = vpop.f32.mrb[0].mxu0
  %v875 = vadd.f32 %v734, %v874
  %v876 = vpop.f32.mrb[0].mxu0
  %v877 = vpop.f32.mrb[0].mxu0
  %v878 = vadd.f32 %v734, %v877
  %v879 = vpop.f32.mrb[0].mxu0
  %880 = vmatprep.mubr.bf16.mxu0 %v694
  %881 = vmatmul.mubr.bf16.gmra.mrb[0].mxu0 %v693
  %v882 = vpop.f32.mrb[0].mxu0
  %v883 = vadd.f32 %v734, %v882
  %v884 = vpop.f32.mrb[0].mxu0
  %v885 = vpop.f32.mrb[0].mxu0
  %v886 = vadd.f32 %v734, %v885
  %v887 = vpop.f32.mrb[0].mxu0
  %888 = vmatprep.mubr.bf16.mxu0 %v696
  %889 = vmatmul.mubr.bf16.gmra.mrb[0].mxu0 %v695
  %v890 = vpop.f32.mrb[0].mxu0
  %v891 = vadd.f32 %v734, %v890
  %v892 = vpop.f32.mrb[0].mxu0
  %v893 = vpop.f32.mrb[0].mxu0
  %v894 = vadd.f32 %v734, %v893
  %v895 = vpop.f32.mrb[0].mxu0
  %896 = vdwg.mxu0
  %v897 = vmax.f32 %v867, 0.0
  %v898 = vmax.f32 %v870, 0.0
  %v899 = vmax.f32 %v875, 0.0
  %v900 = vmax.f32 %v878, 0.0
  %v901 = vmax.f32 %v883, 0.0
  %v902 = vmax.f32 %v886, 0.0
  %v903 = vmax.f32 %v891, 0.0
  %v904 = vmax.f32 %v894, 0.0
  %v905 = vpack.c.bf16 %v898, %v897
  %v906 = vpack.c.bf16 %v900, %v899
  %v907 = vpack.c.bf16 %v902, %v901
  %v908 = vpack.c.bf16 %v904, %v903
  %v913 = vunpack.c.l.b16 %v905
  %v914 = vunpack.c.h.b16 %v905
  %v915 = vunpack.c.l.b16 %v906
  %v916 = vunpack.c.h.b16 %v906
  %v917 = vunpack.c.l.b16 %v907
  %v918 = vunpack.c.h.b16 %v907
  %v919 = vunpack.c.l.b16 %v908
  %v920 = vunpack.c.h.b16 %v908
  %v921 = vpack.c.b16 %v913, %v913
  %v922 = vpack.c.b16 %v914, %v914
  %v923 = vpack.c.b16 %v915, %v915
  %v924 = vpack.c.b16 %v916, %v916
  %v925 = vpack.c.b16 %v917, %v917
  %v926 = vpack.c.b16 %v918, %v918
  %v927 = vpack.c.b16 %v919, %v919
  %v928 = vpack.c.b16 %v920, %v920
  %vm937 = vcmask 781312
  %938 = vst.msk [vmem:[%s9] sm:$0xf] %vm937, %v921
  %939 = vst.msk [vmem:[%s9 + $0x4] sm:$0xf] %vm937, %v922
  %940 = vst.msk [vmem:[%s9 + $0x8] sm:$0xf] %vm937, %v923
  %941 = vst.msk [vmem:[%s9 + $0xc] sm:$0xf] %vm937, %v924
  %942 = vst.msk [vmem:[%s9 + $0x10] sm:$0xf] %vm937, %v925
  %943 = vst.msk [vmem:[%s9 + $0x14] sm:$0xf] %vm937, %v926
  %944 = vst.msk [vmem:[%s9 + $0x18] sm:$0xf] %vm937, %v927
  %945 = vst.msk [vmem:[%s9 + $0x1c] sm:$0xf] %vm937, %v928
  // Predicated region
  $region38: #{net_forward.18} parent=0 // pred_check
    _
  $region39: #{net_forward.18} parent=0 // pred_check_branch
    %947 = sbr.rel (0) target = $region41
  $region40: #{net_forward.18} parent=0 // pred_region
    _
  $region41: #{net_forward.18} parent=0 // pred_fallthru
    _
  // Predicated region
  $region42: #{net_forward.18} parent=0 // pred_check
    _
  $region43: #{net_forward.18} parent=0 // pred_check_branch
    %949 = sbr.rel (0) target = $region45
  $region44: #{net_forward.18} parent=0 // pred_region
    _
  $region45: #{net_forward.18} parent=0 // pred_fallthru
    _

</llo_original>
